<compile_context>
chip_gen: v6e
topology: v6e:2x2x1
jax: 0.10.0
libtpu: 0.0.40
codegen_flags: <defaults>
</compile_context>

<pallas_src>
import numpy as np
import jax
import jax.numpy as jnp
from jax.experimental import pallas as pl
from jax.experimental.pallas import tpu as pltpu


# ------------------------------ fused kernel ------------------------------- #
def vgg_kernel(x_ref, w1_ref, b1_ref, w2_ref, b2_ref, w3_ref, b3_ref,
               w4_ref, b4_ref, o_ref):
    f32, bf16 = jnp.float32, jnp.bfloat16

    # Stage 1: Conv3x3(4->8, pad=1) + bias + ReLU + MaxPool2 as ONE
    # (TB,1024)@(1024,2048) dot; the four 2x2-pool positions are the four
    # 512-lane column groups, so pooling is three lane-aligned f32 maxes.
    y1 = jnp.dot(x_ref[...], w1_ref[...], preferred_element_type=f32) + b1_ref[...]
    y1 = jnp.maximum(y1, 0.0)
    p1 = jnp.maximum(jnp.maximum(y1[:, 0:512], y1[:, 512:1024]),
                     jnp.maximum(y1[:, 1024:1536], y1[:, 1536:2048]))
    # p1: (TB, 512), lane = h2*64 + w2*8 + c  (8x8 spatial, 8 channels)

    # Stage 2: Conv3x3(8->16, pad=1) + bias + ReLU + MaxPool2, same scheme.
    y2 = jnp.dot(p1.astype(bf16), w2_ref[...], preferred_element_type=f32) + b2_ref[...]
    y2 = jnp.maximum(y2, 0.0)
    p2 = jnp.maximum(jnp.maximum(y2[:, 0:256], y2[:, 256:512]),
                     jnp.maximum(y2[:, 512:768], y2[:, 768:1024]))
    # p2: (TB, 256), lane = h*64 + w*16 + c  (4x4 spatial, 16 channels)

    # Classifier: Linear(256->1000 zero-padded to 1024) + ReLU
    h = jnp.dot(p2.astype(bf16), w3_ref[...], preferred_element_type=f32) + b3_ref[...]
    h = jnp.maximum(h, 0.0)
    # TODO(synk): nn.Dropout() applied as identity (inference/eval semantics).

    # Linear(1000->1): real weights live in column 0 of a (1024,128) matrix so
    # the result is a lane-dense (TB,128) slab (unmasked stores); col 0 = out.
    out = jnp.dot(h.astype(bf16), w4_ref[...], preferred_element_type=f32) + b4_ref[...]
    o_ref[...] = out.astype(o_ref.dtype)


# ------------------------------ forward pass -------------------------------- #
def _batch_tile(batch):
    return 128 if batch >= 128 else ((batch + 7) // 8) * 8


@jax.jit
def vgg_forward(x_nchw, params):
    B, C, H, W = x_nchw.shape                     # (B, 4, 16, 16)
    # Lane-pack NCHW -> (B, H*W*C) with idx = h*(W*C) + w*C + c (pure XLA).
    xf = jnp.transpose(x_nchw, (0, 2, 3, 1)).reshape(B, H * W * C)
    TB = _batch_tile(B)
    Bp = ((B + TB - 1) // TB) * TB
    xf = jnp.pad(xf, ((0, Bp - B), (0, 0))).astype(jnp.bfloat16)

    out = pl.pallas_call(
        vgg_kernel,
        out_shape=jax.ShapeDtypeStruct((Bp, 128), jnp.float32),
        grid=(Bp // TB,),
        in_specs=[
            pl.BlockSpec((TB, 1024), lambda g: (g, 0)),      # packed images
            pl.BlockSpec((1024, 2048), lambda g: (0, 0)),    # conv1+pool matrix
            pl.BlockSpec((1, 2048), lambda g: (0, 0)),       # conv1 bias
            pl.BlockSpec((512, 1024), lambda g: (0, 0)),     # conv2+pool matrix
            pl.BlockSpec((1, 1024), lambda g: (0, 0)),       # conv2 bias
            pl.BlockSpec((256, 1024), lambda g: (0, 0)),     # fc1 weight (padded)
            pl.BlockSpec((1, 1024), lambda g: (0, 0)),       # fc1 bias
            pl.BlockSpec((1024, 128), lambda g: (0, 0)),     # fc2 weight (col 0)
            pl.BlockSpec((1, 128), lambda g: (0, 0)),        # fc2 bias
        ],
        out_specs=pl.BlockSpec((TB, 128), lambda g: (g, 0)),
        compiler_params=pltpu.CompilerParams(
            dimension_semantics=("parallel",),
            vmem_limit_bytes=48 * 1024 * 1024,
        ),
    )(xf, params["w1"], params["b1"], params["w2"], params["b2"],
      params["w3"], params["b3"], params["w4"], params["b4"])
    return out[:B, 0:1]                           # column 0 holds the scalar


# ---------------------- host-side weight preprocessing ---------------------- #
def _conv_pool_matrix(wconv, H, W):
    """Fold a 3x3 same-padding conv (incl. zero padding) plus the 2x2-maxpool
    *position split* into a dense matrix acting on images flattened as
    idx_in = h*(W*Cin) + w*Cin + cin.  Output column index:
    pos*(Ho*Wo*Cout) + i*(Wo*Cout) + j*Cout + cout, where pos = ph*2 + pw and
    the conv output pixel is (2i+ph, 2j+pw)."""
    cout_n, cin_n, KH, KW = wconv.shape
    Ho, Wo = H // 2, W // 2
    M = np.zeros((H * W * cin_n, 4 * Ho * Wo * cout_n), np.float32)
    for ph in range(2):
        for pw in range(2):
            pos = ph * 2 + pw
            for i in range(Ho):
                for j in range(Wo):
                    ho, wo = 2 * i + ph, 2 * j + pw
                    col0 = pos * (Ho * Wo * cout_n) + (i * Wo + j) * cout_n
                    for kh in range(KH):
                        h = ho + kh - 1
                        if not (0 <= h < H):
                            continue
                        for kw in range(KW):
                            w = wo + kw - 1
                            if not (0 <= w < W):
                                continue
                            row0 = (h * W + w) * cin_n
                            M[row0:row0 + cin_n, col0:col0 + cout_n] = \
                                wconv[:, :, kh, kw].T
    return M


def init_params(key):
    k1, k2, k3, k4 = jax.random.split(key, 4)

    def kaiming(k, cout, cin):                    # kaiming_normal_, fan_out, relu
        std = float(np.sqrt(2.0 / (cout * 9)))
        return np.asarray(jax.random.normal(k, (cout, cin, 3, 3), jnp.float32)) * std

    conv1_w = kaiming(k1, 8, 4)                   # torch OIHW
    conv2_w = kaiming(k2, 16, 8)
    conv1_b = np.zeros(8, np.float32)             # torch constant_(0)
    conv2_b = np.zeros(16, np.float32)
    fc1_w = np.asarray(jax.random.normal(k3, (1000, 256), jnp.float32)) * 0.01
    fc1_b = np.zeros(1000, np.float32)
    fc2_w = np.asarray(jax.random.normal(k4, (1, 1000), jnp.float32)) * 0.01
    fc2_b = np.zeros(1, np.float32)

    w1 = _conv_pool_matrix(conv1_w, 16, 16)       # (1024, 2048)
    w2 = _conv_pool_matrix(conv2_w, 8, 8)         # (512, 1024)
    b1 = np.tile(conv1_b, 2048 // 8).reshape(1, 2048)      # cout fastest
    b2 = np.tile(conv2_b, 1024 // 16).reshape(1, 1024)

    # fc1: permute torch's (c,h,w) flatten order to the (h,w,c) lane order the
    # kernel produces, transpose to (in, out), zero-pad hidden 1000 -> 1024.
    w3t = fc1_w.reshape(1000, 16, 4, 4).transpose(0, 2, 3, 1).reshape(1000, 256)
    w3 = np.zeros((256, 1024), np.float32)
    w3[:, :1000] = w3t.T
    b3 = np.zeros((1, 1024), np.float32)
    b3[0, :1000] = fc1_b

    # fc2: weights in column 0 of a (1024, 128) matrix -> lane-dense output.
    w4 = np.zeros((1024, 128), np.float32)
    w4[:1000, 0] = fc2_w[0]
    b4 = np.zeros((1, 128), np.float32)
    b4[0, :] = fc2_b[0]

    bf = jnp.bfloat16
    return dict(w1=jnp.asarray(w1, bf), b1=jnp.asarray(b1),
                w2=jnp.asarray(w2, bf), b2=jnp.asarray(b2),
                w3=jnp.asarray(w3, bf), b3=jnp.asarray(b3),
                w4=jnp.asarray(w4, bf), b4=jnp.asarray(b4))


if __name__ == "__main__":
    root = jax.random.PRNGKey(0)
    k_input, k_params = jax.random.split(root)

    B, Cin, HW = 2, 4, 16
    x = jax.random.normal(k_input, (B, Cin, HW, HW), jnp.float32)     # NCHW
    params = init_params(k_params)

    out = vgg_forward(x, params)
    out = jax.block_until_ready(out)
    assert out.shape == (B, 1) and out.dtype == jnp.float32
    print("KERNEL_OK")
</pallas_src>

<mosaic_0001>
module attributes {stable_mosaic.version = 11 : i64} {
  func.func @vgg_kernel(%arg0: i32, %arg1: memref<8x1024xbf16, #tpu.memory_space<vmem>>, %arg2: memref<1024x2048xbf16, #tpu.memory_space<vmem>>, %arg3: memref<1x2048xf32, #tpu.memory_space<vmem>>, %arg4: memref<512x1024xbf16, #tpu.memory_space<vmem>>, %arg5: memref<1x1024xf32, #tpu.memory_space<vmem>>, %arg6: memref<256x1024xbf16, #tpu.memory_space<vmem>>, %arg7: memref<1x1024xf32, #tpu.memory_space<vmem>>, %arg8: memref<1024x128xbf16, #tpu.memory_space<vmem>>, %arg9: memref<1x128xf32, #tpu.memory_space<vmem>>, %arg10: memref<8x128xf32, #tpu.memory_space<vmem>>) attributes {dimension_semantics = [#tpu.dimension_semantics<parallel>], iteration_bounds = array<i64: 1>, scalar_prefetch = 0 : i64, scratch_operands = 0 : i64, tpu.core_type = #tpu.core_type<tc>, window_params = [{transform_indices = @transform_0, window_bounds = array<i64: 8, 1024>}, {pipeline_mode = #tpu.pipeline_mode<synchronous>, transform_indices = @transform_1, window_bounds = array<i64: 1024, 2048>}, {pipeline_mode = #tpu.pipeline_mode<synchronous>, transform_indices = @transform_2, window_bounds = array<i64: 1, 2048>}, {pipeline_mode = #tpu.pipeline_mode<synchronous>, transform_indices = @transform_3, window_bounds = array<i64: 512, 1024>}, {pipeline_mode = #tpu.pipeline_mode<synchronous>, transform_indices = @transform_4, window_bounds = array<i64: 1, 1024>}, {pipeline_mode = #tpu.pipeline_mode<synchronous>, transform_indices = @transform_5, window_bounds = array<i64: 256, 1024>}, {pipeline_mode = #tpu.pipeline_mode<synchronous>, transform_indices = @transform_6, window_bounds = array<i64: 1, 1024>}, {pipeline_mode = #tpu.pipeline_mode<synchronous>, transform_indices = @transform_7, window_bounds = array<i64: 1024, 128>}, {pipeline_mode = #tpu.pipeline_mode<synchronous>, transform_indices = @transform_8, window_bounds = array<i64: 1, 128>}, {transform_indices = @transform_9, window_bounds = array<i64: 8, 128>}]} {
    %c0 = arith.constant 0 : index
    %c0_0 = arith.constant 0 : index
    %0 = vector.load %arg1[%c0, %c0_0] : memref<8x1024xbf16, #tpu.memory_space<vmem>>, vector<8x1024xbf16>
    %c0_1 = arith.constant 0 : index
    %c0_2 = arith.constant 0 : index
    %1 = vector.load %arg2[%c0_1, %c0_2] : memref<1024x2048xbf16, #tpu.memory_space<vmem>>, vector<1024x2048xbf16>
    %cst = arith.constant dense<0.000000e+00> : vector<8x2048xf32>
    %2 = tpu.matmul %0, %1, %cst {dimension_numbers = #tpu.dot_dimension_numbers<[1], [0], [0], [1], [0, 0, 1, 1], [], []>} : vector<8x1024xbf16>, vector<1024x2048xbf16>, vector<8x2048xf32> -> vector<8x2048xf32>
    %c0_3 = arith.constant 0 : index
    %c0_4 = arith.constant 0 : index
    %3 = vector.load %arg3[%c0_3, %c0_4] : memref<1x2048xf32, #tpu.memory_space<vmem>>, vector<1x2048xf32>
    %4 = vector.broadcast %3 : vector<1x2048xf32> to vector<8x2048xf32>
    %5 = arith.addf %2, %4 : vector<8x2048xf32>
    %cst_5 = arith.constant 0.000000e+00 : f32
    %6 = vector.broadcast %cst_5 : f32 to vector<8x2048xf32>
    %7 = arith.maximumf %5, %6 : vector<8x2048xf32>
    %8 = vector.extract_strided_slice %7 {offsets = [0, 0], sizes = [8, 512], strides = [1, 1]} : vector<8x2048xf32> to vector<8x512xf32>
    %9 = vector.extract_strided_slice %7 {offsets = [0, 512], sizes = [8, 512], strides = [1, 1]} : vector<8x2048xf32> to vector<8x512xf32>
    %10 = arith.maximumf %8, %9 : vector<8x512xf32>
    %11 = vector.extract_strided_slice %7 {offsets = [0, 1024], sizes = [8, 512], strides = [1, 1]} : vector<8x2048xf32> to vector<8x512xf32>
    %12 = vector.extract_strided_slice %7 {offsets = [0, 1536], sizes = [8, 512], strides = [1, 1]} : vector<8x2048xf32> to vector<8x512xf32>
    %13 = arith.maximumf %11, %12 : vector<8x512xf32>
    %14 = arith.maximumf %10, %13 : vector<8x512xf32>
    %15 = arith.truncf %14 : vector<8x512xf32> to vector<8x512xbf16>
    %c0_6 = arith.constant 0 : index
    %c0_7 = arith.constant 0 : index
    %16 = vector.load %arg4[%c0_6, %c0_7] : memref<512x1024xbf16, #tpu.memory_space<vmem>>, vector<512x1024xbf16>
    %cst_8 = arith.constant dense<0.000000e+00> : vector<8x1024xf32>
    %17 = tpu.matmul %15, %16, %cst_8 {dimension_numbers = #tpu.dot_dimension_numbers<[1], [0], [0], [1], [0, 0, 1, 1], [], []>} : vector<8x512xbf16>, vector<512x1024xbf16>, vector<8x1024xf32> -> vector<8x1024xf32>
    %c0_9 = arith.constant 0 : index
    %c0_10 = arith.constant 0 : index
    %18 = vector.load %arg5[%c0_9, %c0_10] : memref<1x1024xf32, #tpu.memory_space<vmem>>, vector<1x1024xf32>
    %19 = vector.broadcast %18 : vector<1x1024xf32> to vector<8x1024xf32>
    %20 = arith.addf %17, %19 : vector<8x1024xf32>
    %cst_11 = arith.constant 0.000000e+00 : f32
    %21 = vector.broadcast %cst_11 : f32 to vector<8x1024xf32>
    %22 = arith.maximumf %20, %21 : vector<8x1024xf32>
    %23 = vector.extract_strided_slice %22 {offsets = [0, 0], sizes = [8, 256], strides = [1, 1]} : vector<8x1024xf32> to vector<8x256xf32>
    %24 = vector.extract_strided_slice %22 {offsets = [0, 256], sizes = [8, 256], strides = [1, 1]} : vector<8x1024xf32> to vector<8x256xf32>
    %25 = arith.maximumf %23, %24 : vector<8x256xf32>
    %26 = vector.extract_strided_slice %22 {offsets = [0, 512], sizes = [8, 256], strides = [1, 1]} : vector<8x1024xf32> to vector<8x256xf32>
    %27 = vector.extract_strided_slice %22 {offsets = [0, 768], sizes = [8, 256], strides = [1, 1]} : vector<8x1024xf32> to vector<8x256xf32>
    %28 = arith.maximumf %26, %27 : vector<8x256xf32>
    %29 = arith.maximumf %25, %28 : vector<8x256xf32>
    %30 = arith.truncf %29 : vector<8x256xf32> to vector<8x256xbf16>
    %c0_12 = arith.constant 0 : index
    %c0_13 = arith.constant 0 : index
    %31 = vector.load %arg6[%c0_12, %c0_13] : memref<256x1024xbf16, #tpu.memory_space<vmem>>, vector<256x1024xbf16>
    %cst_14 = arith.constant dense<0.000000e+00> : vector<8x1024xf32>
    %32 = tpu.matmul %30, %31, %cst_14 {dimension_numbers = #tpu.dot_dimension_numbers<[1], [0], [0], [1], [0, 0, 1, 1], [], []>} : vector<8x256xbf16>, vector<256x1024xbf16>, vector<8x1024xf32> -> vector<8x1024xf32>
    %c0_15 = arith.constant 0 : index
    %c0_16 = arith.constant 0 : index
    %33 = vector.load %arg7[%c0_15, %c0_16] : memref<1x1024xf32, #tpu.memory_space<vmem>>, vector<1x1024xf32>
    %34 = vector.broadcast %33 : vector<1x1024xf32> to vector<8x1024xf32>
    %35 = arith.addf %32, %34 : vector<8x1024xf32>
    %cst_17 = arith.constant 0.000000e+00 : f32
    %36 = vector.broadcast %cst_17 : f32 to vector<8x1024xf32>
    %37 = arith.maximumf %35, %36 : vector<8x1024xf32>
    %38 = arith.truncf %37 : vector<8x1024xf32> to vector<8x1024xbf16>
    %c0_18 = arith.constant 0 : index
    %c0_19 = arith.constant 0 : index
    %39 = vector.load %arg8[%c0_18, %c0_19] : memref<1024x128xbf16, #tpu.memory_space<vmem>>, vector<1024x128xbf16>
    %cst_20 = arith.constant dense<0.000000e+00> : vector<8x128xf32>
    %40 = tpu.matmul %38, %39, %cst_20 {dimension_numbers = #tpu.dot_dimension_numbers<[1], [0], [0], [1], [0, 0, 1, 1], [], []>} : vector<8x1024xbf16>, vector<1024x128xbf16>, vector<8x128xf32> -> vector<8x128xf32>
    %c0_21 = arith.constant 0 : index
    %c0_22 = arith.constant 0 : index
    %41 = vector.load %arg9[%c0_21, %c0_22] : memref<1x128xf32, #tpu.memory_space<vmem>>, vector<1x128xf32>
    %42 = vector.broadcast %41 : vector<1x128xf32> to vector<8x128xf32>
    %43 = arith.addf %40, %42 : vector<8x128xf32>
    %c0_23 = arith.constant 0 : index
    %c0_24 = arith.constant 0 : index
    %44 = vector.load %arg10[%c0_23, %c0_24] : memref<8x128xf32, #tpu.memory_space<vmem>>, vector<8x128xf32>
    tpu.vector_store %arg10[%c0_23, %c0_24], %43 {strides = array<i32>} : memref<8x128xf32, #tpu.memory_space<vmem>>, vector<8x128xf32>,
    return
  }
  func.func @transform_0(%arg0: i32) -> (i32, i32) {
    %c0_i32 = arith.constant 0 : i32
    %c0_i32_0 = arith.constant 0 : i32
    return %arg0, %c0_i32 : i32, i32
  }
  func.func @transform_1(%arg0: i32) -> (i32, i32) {
    %c0_i32 = arith.constant 0 : i32
    %c0_i32_0 = arith.constant 0 : i32
    %c0_i32_1 = arith.constant 0 : i32
    return %c0_i32, %c0_i32_0 : i32, i32
  }
  func.func @transform_2(%arg0: i32) -> (i32, i32) {
    %c0_i32 = arith.constant 0 : i32
    %c0_i32_0 = arith.constant 0 : i32
    %c0_i32_1 = arith.constant 0 : i32
    return %c0_i32, %c0_i32_0 : i32, i32
  }
  func.func @transform_3(%arg0: i32) -> (i32, i32) {
    %c0_i32 = arith.constant 0 : i32
    %c0_i32_0 = arith.constant 0 : i32
    %c0_i32_1 = arith.constant 0 : i32
    return %c0_i32, %c0_i32_0 : i32, i32
  }
  func.func @transform_4(%arg0: i32) -> (i32, i32) {
    %c0_i32 = arith.constant 0 : i32
    %c0_i32_0 = arith.constant 0 : i32
    %c0_i32_1 = arith.constant 0 : i32
    return %c0_i32, %c0_i32_0 : i32, i32
  }
  func.func @transform_5(%arg0: i32) -> (i32, i32) {
    %c0_i32 = arith.constant 0 : i32
    %c0_i32_0 = arith.constant 0 : i32
    %c0_i32_1 = arith.constant 0 : i32
    return %c0_i32, %c0_i32_0 : i32, i32
  }
  func.func @transform_6(%arg0: i32) -> (i32, i32) {
    %c0_i32 = arith.constant 0 : i32
    %c0_i32_0 = arith.constant 0 : i32
    %c0_i32_1 = arith.constant 0 : i32
    return %c0_i32, %c0_i32_0 : i32, i32
  }
  func.func @transform_7(%arg0: i32) -> (i32, i32) {
    %c0_i32 = arith.constant 0 : i32
    %c0_i32_0 = arith.constant 0 : i32
    %c0_i32_1 = arith.constant 0 : i32
    return %c0_i32, %c0_i32_0 : i32, i32
  }
  func.func @transform_8(%arg0: i32) -> (i32, i32) {
    %c0_i32 = arith.constant 0 : i32
    %c0_i32_0 = arith.constant 0 : i32
    %c0_i32_1 = arith.constant 0 : i32
    return %c0_i32, %c0_i32_0 : i32, i32
  }
  func.func @transform_9(%arg0: i32) -> (i32, i32) {
    %c0_i32 = arith.constant 0 : i32
    %c0_i32_0 = arith.constant 0 : i32
    return %arg0, %c0_i32 : i32, i32
  }
}

</mosaic_0001>

<llo_original>
// kernel: vgg_forward.1
$region0: #{vgg_forward.1}
  #allocation0 [shape = 'u32[]', space=smem, size = 0x4, offset = 0x4, fixed_abs, tag = 'smem constant byte address 0x4 - core index']
  #allocation1 [shape = 'u32[144,128]{1,0:T(1,128)}', space=vmem, size = 0x12000, scoped, tag = 'internal scratch']
  %s0 = inlined_call_operand.vmem [shape: bf16[8,1024], index: 0, kind: input, shape index: {}]
  %s1 = inlined_call_operand.hbm [shape: bf16[1024,2048], index: 1, kind: input, shape index: {}]
  %s2 = inlined_call_operand.hbm [shape: f32[1,2048], index: 2, kind: input, shape index: {}]
  %s3 = inlined_call_operand.hbm [shape: bf16[512,1024], index: 3, kind: input, shape index: {}]
  %s4 = inlined_call_operand.hbm [shape: f32[1,1024], index: 4, kind: input, shape index: {}]
  %s5 = inlined_call_operand.hbm [shape: bf16[256,1024], index: 5, kind: input, shape index: {}]
  %s6 = inlined_call_operand.hbm [shape: f32[1,1024], index: 6, kind: input, shape index: {}]
  %s7 = inlined_call_operand.hbm [shape: bf16[1024,128], index: 7, kind: input, shape index: {}]
  %s8 = inlined_call_operand.hbm [shape: f32[1,128], index: 8, kind: input, shape index: {}]
  %s9 = inlined_call_operand.vmem [shape: f32[8,128], index: 9, kind: output, shape index: {}]
  %s10 = sld [smem:[#allocation0]]
  $region78: #{vgg_forward.1} parent=0
    _
  %s12 = ssub.s32 1, %s10
  %s13 = scalar_select 0, %s12, %s10
  $region1: #{vgg_forward.1} parent=0
    #allocation2 [shape = 'u8[4194304]{0}', space=vmem, size = 0x400000, scoped, tag = 'input window, operand 1, single buffered']
    #allocation3 [shape = 's32[1]{0}', space=sflag, size = 0x4, scoped, tag = 'scoped memory for vgg_forward.1']
    #allocation4 [shape = 'u8[8192]{0}', space=vmem, size = 0x2000, scoped, tag = 'input window, operand 2, single buffered']
    #allocation5 [shape = 's32[1]{0}', space=sflag, size = 0x4, scoped, tag = 'scoped memory for vgg_forward.1']
    #allocation6 [shape = 'u8[1048576]{0}', space=vmem, size = 0x100000, scoped, tag = 'input window, operand 3, single buffered']
    #allocation7 [shape = 'u8[4096]{0}', space=vmem, size = 0x1000, scoped, tag = 'input window, operand 4, single buffered']
    #allocation8 [shape = 's32[1]{0}', space=sflag, size = 0x4, scoped, tag = 'scoped memory for vgg_forward.1']
    #allocation9 [shape = 'u8[524288]{0}', space=vmem, size = 0x80000, scoped, tag = 'input window, operand 5, single buffered']
    #allocation10 [shape = 'u8[4096]{0}', space=vmem, size = 0x1000, scoped, tag = 'input window, operand 6, single buffered']
    #allocation11 [shape = 's32[1]{0}', space=sflag, size = 0x4, scoped, tag = 'scoped memory for vgg_forward.1']
    #allocation12 [shape = 'u8[262144]{0}', space=vmem, size = 0x40000, scoped, tag = 'input window, operand 7, single buffered']
    #allocation13 [shape = 'u8[512]{0}', space=vmem, size = 0x400, scoped, tag = 'input window, operand 8, single buffered']
    #allocation14 [shape = 's32[1]{0}', space=sflag, size = 0x4, scoped, tag = 'scoped memory for vgg_forward.1']
    %14 = vsyncpa [#allocation3], 0
    %15 = vsyncpa [#allocation5], 0
    %16 = vsyncpa [#allocation8], 0
    %17 = vsyncpa [#allocation11], 0
    %18 = vsyncpa [#allocation14], 0
    // Predicated region
    $region2: #{vgg_forward.1} parent=1 // pred_check
      _
    $region3: #{vgg_forward.1} parent=1 // pred_check_branch
      %20 = sbr.rel (0) target = $region5
    $region4: #{vgg_forward.1} parent=1 // pred_region
      _
    $region5: #{vgg_forward.1} parent=1 // pred_fallthru
      _
    // Predicated region
    $region6: #{vgg_forward.1} parent=1 // pred_check
      _
    $region7: #{vgg_forward.1} parent=1 // pred_check_branch
      %22 = sbr.rel (0) target = $region9
    $region8: #{vgg_forward.1} parent=1 // pred_region
      %s24 = ssub.s32 131072, 131072
      %25 = vsyncadd [#allocation3], %s24
      %s26 = sshll.u32 [#allocation2], 4
      %s27 = int_to_ptr.vmem [resolvable:$true] %s26
      %32 = dma.hbm_to_vmem [thread:$0]  %s1, 131072, %s27, [#allocation3], 1024, 1024, 64
    $region9: #{vgg_forward.1} parent=1 // pred_fallthru
      _
    // Predicated region
    $region10: #{vgg_forward.1} parent=1 // pred_check
      _
    $region11: #{vgg_forward.1} parent=1 // pred_check_branch
      %34 = sbr.rel (0) target = $region13
    $region12: #{vgg_forward.1} parent=1 // pred_region
      %s36 = ssub.s32 256, 256
      %37 = vsyncadd [#allocation5], %s36
      %s39 = sshll.u32 [#allocation4], 4
      %s40 = int_to_ptr.vmem [resolvable:$true] %s39
      %42 = dma.hbm_to_vmem [thread:$0]  %s2, 256, %s40, [#allocation5]
    $region13: #{vgg_forward.1} parent=1 // pred_fallthru
      _
    // Predicated region
    $region14: #{vgg_forward.1} parent=1 // pred_check
      _
    $region15: #{vgg_forward.1} parent=1 // pred_check_branch
      %44 = sbr.rel (0) target = $region17
    $region16: #{vgg_forward.1} parent=1 // pred_region
      %s46 = ssub.s32 32768, 32768
      %47 = vsyncadd [#allocation5], %s46
      %s48 = sshll.u32 [#allocation6], 4
      %s49 = int_to_ptr.vmem [resolvable:$true] %s48
      %54 = dma.hbm_to_vmem [thread:$0]  %s3, 32768, %s49, [#allocation5], 512, 512, 32
    $region17: #{vgg_forward.1} parent=1 // pred_fallthru
      _
    // Predicated region
    $region18: #{vgg_forward.1} parent=1 // pred_check
      _
    $region19: #{vgg_forward.1} parent=1 // pred_check_branch
      %56 = sbr.rel (0) target = $region21
    $region20: #{vgg_forward.1} parent=1 // pred_region
      %s58 = ssub.s32 128, 128
      %59 = vsyncadd [#allocation8], %s58
      %s61 = sshll.u32 [#allocation7], 4
      %s62 = int_to_ptr.vmem [resolvable:$true] %s61
      %64 = dma.hbm_to_vmem [thread:$0]  %s4, 128, %s62, [#allocation8]
    $region21: #{vgg_forward.1} parent=1 // pred_fallthru
      _
    // Predicated region
    $region22: #{vgg_forward.1} parent=1 // pred_check
      _
    $region23: #{vgg_forward.1} parent=1 // pred_check_branch
      %66 = sbr.rel (0) target = $region25
    $region24: #{vgg_forward.1} parent=1 // pred_region
      %s68 = ssub.s32 16384, 16384
      %69 = vsyncadd [#allocation8], %s68
      %s70 = sshll.u32 [#allocation9], 4
      %s71 = int_to_ptr.vmem [resolvable:$true] %s70
      %76 = dma.hbm_to_vmem [thread:$0]  %s5, 16384, %s71, [#allocation8], 512, 512, 32
    $region25: #{vgg_forward.1} parent=1 // pred_fallthru
      _
    // Predicated region
    $region26: #{vgg_forward.1} parent=1 // pred_check
      _
    $region27: #{vgg_forward.1} parent=1 // pred_check_branch
      %78 = sbr.rel (0) target = $region29
    $region28: #{vgg_forward.1} parent=1 // pred_region
      %s80 = ssub.s32 128, 128
      %81 = vsyncadd [#allocation11], %s80
      %s83 = sshll.u32 [#allocation10], 4
      %s84 = int_to_ptr.vmem [resolvable:$true] %s83
      %86 = dma.hbm_to_vmem [thread:$0]  %s6, 128, %s84, [#allocation11]
    $region29: #{vgg_forward.1} parent=1 // pred_fallthru
      _
    // Predicated region
    $region30: #{vgg_forward.1} parent=1 // pred_check
      _
    $region31: #{vgg_forward.1} parent=1 // pred_check_branch
      %88 = sbr.rel (0) target = $region33
    $region32: #{vgg_forward.1} parent=1 // pred_region
      %s90 = ssub.s32 8192, 8192
      %91 = vsyncadd [#allocation11], %s90
      %s92 = sshll.u32 [#allocation12], 4
      %s93 = int_to_ptr.vmem [resolvable:$true] %s92
      %98 = dma.hbm_to_vmem [thread:$0]  %s7, 8192, %s93, [#allocation11], 64, 64, 4
    $region33: #{vgg_forward.1} parent=1 // pred_fallthru
      _
    // Predicated region
    $region34: #{vgg_forward.1} parent=1 // pred_check
      _
    $region35: #{vgg_forward.1} parent=1 // pred_check_branch
      %100 = sbr.rel (0) target = $region37
    $region36: #{vgg_forward.1} parent=1 // pred_region
      %s102 = ssub.s32 16, 16
      %103 = vsyncadd [#allocation14], %s102
      %s105 = sshll.u32 [#allocation13], 4
      %s106 = int_to_ptr.vmem [resolvable:$true] %s105
      %108 = dma.hbm_to_vmem [thread:$0]  %s8, 16, %s106, [#allocation14]
    $region37: #{vgg_forward.1} parent=1 // pred_fallthru
      _
    // Predicated region
    $region38: #{vgg_forward.1} parent=1 // pred_check
      _
    $region39: #{vgg_forward.1} parent=1 // pred_check_branch
      %110 = sbr.rel (0) target = $region41
    $region40: #{vgg_forward.1} parent=1 // pred_region
      %111 = dma.done [#allocation3], 131072
    $region41: #{vgg_forward.1} parent=1 // pred_fallthru
      _
    // Predicated region
    $region42: #{vgg_forward.1} parent=1 // pred_check
      _
    $region43: #{vgg_forward.1} parent=1 // pred_check_branch
      %113 = sbr.rel (0) target = $region45
    $region44: #{vgg_forward.1} parent=1 // pred_region
      %114 = dma.done [#allocation5], 256
    $region45: #{vgg_forward.1} parent=1 // pred_fallthru
      _
    // Predicated region
    $region46: #{vgg_forward.1} parent=1 // pred_check
      _
    $region47: #{vgg_forward.1} parent=1 // pred_check_branch
      %116 = sbr.rel (0) target = $region49
    $region48: #{vgg_forward.1} parent=1 // pred_region
      %117 = dma.done [#allocation5], 32768
    $region49: #{vgg_forward.1} parent=1 // pred_fallthru
      _
    // Predicated region
    $region50: #{vgg_forward.1} parent=1 // pred_check
      _
    $region51: #{vgg_forward.1} parent=1 // pred_check_branch
      %119 = sbr.rel (0) target = $region53
    $region52: #{vgg_forward.1} parent=1 // pred_region
      %120 = dma.done [#allocation8], 128
    $region53: #{vgg_forward.1} parent=1 // pred_fallthru
      _
    // Predicated region
    $region54: #{vgg_forward.1} parent=1 // pred_check
      _
    $region55: #{vgg_forward.1} parent=1 // pred_check_branch
      %122 = sbr.rel (0) target = $region57
    $region56: #{vgg_forward.1} parent=1 // pred_region
      %123 = dma.done [#allocation8], 16384
    $region57: #{vgg_forward.1} parent=1 // pred_fallthru
      _
    // Predicated region
    $region58: #{vgg_forward.1} parent=1 // pred_check
      _
    $region59: #{vgg_forward.1} parent=1 // pred_check_branch
      %125 = sbr.rel (0) target = $region61
    $region60: #{vgg_forward.1} parent=1 // pred_region
      %126 = dma.done [#allocation11], 128
    $region61: #{vgg_forward.1} parent=1 // pred_fallthru
      _
    // Predicated region
    $region62: #{vgg_forward.1} parent=1 // pred_check
      _
    $region63: #{vgg_forward.1} parent=1 // pred_check_branch
      %128 = sbr.rel (0) target = $region65
    $region64: #{vgg_forward.1} parent=1 // pred_region
      %129 = dma.done [#allocation11], 8192
    $region65: #{vgg_forward.1} parent=1 // pred_fallthru
      _
    // Predicated region
    $region66: #{vgg_forward.1} parent=1 // pred_check
      _
    $region67: #{vgg_forward.1} parent=1 // pred_check_branch
      %131 = sbr.rel (0) target = $region69
    $region68: #{vgg_forward.1} parent=1 // pred_region
      %132 = dma.done [#allocation14], 16
    $region69: #{vgg_forward.1} parent=1 // pred_fallthru
      _
    %v134 = vld [vmem:[%s0] sm:$0xff]
    %v135 = vld [vmem:[%s0 + $0x8] sm:$0xff]
    %v136 = vld [vmem:[%s0 + $0x10] sm:$0xff]
    %v137 = vld [vmem:[%s0 + $0x18] sm:$0xff]
    %v138 = vld [vmem:[#allocation2] sm:$0xff]
    %v139 = vld [vmem:[#allocation2 + $0x8] sm:$0xff]
    %v140 = vld [vmem:[#allocation2 + $0x10] sm:$0xff]
    %v141 = vld [vmem:[#allocation2 + $0x18] sm:$0xff]
    %v142 = vld [vmem:[#allocation2 + $0x20] sm:$0xff]
    %v143 = vld [vmem:[#allocation2 + $0x28] sm:$0xff]
    %v144 = vld [vmem:[#allocation2 + $0x30] sm:$0xff]
    %v145 = vld [vmem:[#allocation2 + $0x38] sm:$0xff]
    %v146 = vld [vmem:[#allocation2 + $0x40] sm:$0xff]
    %v147 = vld [vmem:[#allocation2 + $0x48] sm:$0xff]
    %v148 = vld [vmem:[#allocation2 + $0x50] sm:$0xff]
    %v149 = vld [vmem:[#allocation2 + $0x58] sm:$0xff]
    %v150 = vld [vmem:[#allocation2 + $0x60] sm:$0xff]
    %v151 = vld [vmem:[#allocation2 + $0x68] sm:$0xff]
    %v152 = vld [vmem:[#allocation2 + $0x70] sm:$0xff]
    %v153 = vld [vmem:[#allocation2 + $0x78] sm:$0xff]
    %v154 = vld [vmem:[#allocation2 + $0x80] sm:$0xff]
    %v155 = vld [vmem:[#allocation2 + $0x88] sm:$0xff]
    %v156 = vld [vmem:[#allocation2 + $0x90] sm:$0xff]
    %v157 = vld [vmem:[#allocation2 + $0x98] sm:$0xff]
    %v158 = vld [vmem:[#allocation2 + $0xa0] sm:$0xff]
    %v159 = vld [vmem:[#allocation2 + $0xa8] sm:$0xff]
    %v160 = vld [vmem:[#allocation2 + $0xb0] sm:$0xff]
    %v161 = vld [vmem:[#allocation2 + $0xb8] sm:$0xff]
    %v162 = vld [vmem:[#allocation2 + $0xc0] sm:$0xff]
    %v163 = vld [vmem:[#allocation2 + $0xc8] sm:$0xff]
    %v164 = vld [vmem:[#allocation2 + $0xd0] sm:$0xff]
    %v165 = vld [vmem:[#allocation2 + $0xd8] sm:$0xff]
    %v166 = vld [vmem:[#allocation2 + $0xe0] sm:$0xff]
    %v167 = vld [vmem:[#allocation2 + $0xe8] sm:$0xff]
    %v168 = vld [vmem:[#allocation2 + $0xf0] sm:$0xff]
    %v169 = vld [vmem:[#allocation2 + $0xf8] sm:$0xff]
    %v170 = vld [vmem:[#allocation2 + $0x100] sm:$0xff]
    %v171 = vld [vmem:[#allocation2 + $0x108] sm:$0xff]
    %v172 = vld [vmem:[#allocation2 + $0x110] sm:$0xff]
    %v173 = vld [vmem:[#allocation2 + $0x118] sm:$0xff]
    %v174 = vld [vmem:[#allocation2 + $0x120] sm:$0xff]
    %v175 = vld [vmem:[#allocation2 + $0x128] sm:$0xff]
    %v176 = vld [vmem:[#allocation2 + $0x130] sm:$0xff]
    %v177 = vld [vmem:[#allocation2 + $0x138] sm:$0xff]
    %v178 = vld [vmem:[#allocation2 + $0x140] sm:$0xff]
    %v179 = vld [vmem:[#allocation2 + $0x148] sm:$0xff]
    %v180 = vld [vmem:[#allocation2 + $0x150] sm:$0xff]
    %v181 = vld [vmem:[#allocation2 + $0x158] sm:$0xff]
    %v182 = vld [vmem:[#allocation2 + $0x160] sm:$0xff]
    %v183 = vld [vmem:[#allocation2 + $0x168] sm:$0xff]
    %v184 = vld [vmem:[#allocation2 + $0x170] sm:$0xff]
    %v185 = vld [vmem:[#allocation2 + $0x178] sm:$0xff]
    %v186 = vld [vmem:[#allocation2 + $0x180] sm:$0xff]
    %v187 = vld [vmem:[#allocation2 + $0x188] sm:$0xff]
    %v188 = vld [vmem:[#allocation2 + $0x190] sm:$0xff]
    %v189 = vld [vmem:[#allocation2 + $0x198] sm:$0xff]
    %v190 = vld [vmem:[#allocation2 + $0x1a0] sm:$0xff]
    %v191 = vld [vmem:[#allocation2 + $0x1a8] sm:$0xff]
    %v192 = vld [vmem:[#allocation2 + $0x1b0] sm:$0xff]
    %v193 = vld [vmem:[#allocation2 + $0x1b8] sm:$0xff]
    %v194 = vld [vmem:[#allocation2 + $0x1c0] sm:$0xff]
    %v195 = vld [vmem:[#allocation2 + $0x1c8] sm:$0xff]
    %v196 = vld [vmem:[#allocation2 + $0x1d0] sm:$0xff]
    %v197 = vld [vmem:[#allocation2 + $0x1d8] sm:$0xff]
    %v198 = vld [vmem:[#allocation2 + $0x1e0] sm:$0xff]
    %v199 = vld [vmem:[#allocation2 + $0x1e8] sm:$0xff]
    %v200 = vld [vmem:[#allocation2 + $0x1f0] sm:$0xff]
    %v201 = vld [vmem:[#allocation2 + $0x1f8] sm:$0xff]
    %v202 = vld [vmem:[#allocation2 + $0x200] sm:$0xff]
    %v203 = vld [vmem:[#allocation2 + $0x208] sm:$0xff]
    %v204 = vld [vmem:[#allocation2 + $0x210] sm:$0xff]
    %v205 = vld [vmem:[#allocation2 + $0x218] sm:$0xff]
    %v206 = vld [vmem:[#allocation2 + $0x220] sm:$0xff]
    %v207 = vld [vmem:[#allocation2 + $0x228] sm:$0xff]
    %v208 = vld [vmem:[#allocation2 + $0x230] sm:$0xff]
    %v209 = vld [vmem:[#allocation2 + $0x238] sm:$0xff]
    %v210 = vld [vmem:[#allocation2 + $0x240] sm:$0xff]
    %v211 = vld [vmem:[#allocation2 + $0x248] sm:$0xff]
    %v212 = vld [vmem:[#allocation2 + $0x250] sm:$0xff]
    %v213 = vld [vmem:[#allocation2 + $0x258] sm:$0xff]
    %v214 = vld [vmem:[#allocation2 + $0x260] sm:$0xff]
    %v215 = vld [vmem:[#allocation2 + $0x268] sm:$0xff]
    %v216 = vld [vmem:[#allocation2 + $0x270] sm:$0xff]
    %v217 = vld [vmem:[#allocation2 + $0x278] sm:$0xff]
    %v218 = vld [vmem:[#allocation2 + $0x280] sm:$0xff]
    %v219 = vld [vmem:[#allocation2 + $0x288] sm:$0xff]
    %v220 = vld [vmem:[#allocation2 + $0x290] sm:$0xff]
    %v221 = vld [vmem:[#allocation2 + $0x298] sm:$0xff]
    %v222 = vld [vmem:[#allocation2 + $0x2a0] sm:$0xff]
    %v223 = vld [vmem:[#allocation2 + $0x2a8] sm:$0xff]
    %v224 = vld [vmem:[#allocation2 + $0x2b0] sm:$0xff]
    %v225 = vld [vmem:[#allocation2 + $0x2b8] sm:$0xff]
    %v226 = vld [vmem:[#allocation2 + $0x2c0] sm:$0xff]
    %v227 = vld [vmem:[#allocation2 + $0x2c8] sm:$0xff]
    %v228 = vld [vmem:[#allocation2 + $0x2d0] sm:$0xff]
    %v229 = vld [vmem:[#allocation2 + $0x2d8] sm:$0xff]
    %v230 = vld [vmem:[#allocation2 + $0x2e0] sm:$0xff]
    %v231 = vld [vmem:[#allocation2 + $0x2e8] sm:$0xff]
    %v232 = vld [vmem:[#allocation2 + $0x2f0] sm:$0xff]
    %v233 = vld [vmem:[#allocation2 + $0x2f8] sm:$0xff]
    %v234 = vld [vmem:[#allocation2 + $0x300] sm:$0xff]
    %v235 = vld [vmem:[#allocation2 + $0x308] sm:$0xff]
    %v236 = vld [vmem:[#allocation2 + $0x310] sm:$0xff]
    %v237 = vld [vmem:[#allocation2 + $0x318] sm:$0xff]
    %v238 = vld [vmem:[#allocation2 + $0x320] sm:$0xff]
    %v239 = vld [vmem:[#allocation2 + $0x328] sm:$0xff]
    %v240 = vld [vmem:[#allocation2 + $0x330] sm:$0xff]
    %v241 = vld [vmem:[#allocation2 + $0x338] sm:$0xff]
    %v242 = vld [vmem:[#allocation2 + $0x340] sm:$0xff]
    %v243 = vld [vmem:[#allocation2 + $0x348] sm:$0xff]
    %v244 = vld [vmem:[#allocation2 + $0x350] sm:$0xff]
    %v245 = vld [vmem:[#allocation2 + $0x358] sm:$0xff]
    %v246 = vld [vmem:[#allocation2 + $0x360] sm:$0xff]
    %v247 = vld [vmem:[#allocation2 + $0x368] sm:$0xff]
    %v248 = vld [vmem:[#allocation2 + $0x370] sm:$0xff]
    %v249 = vld [vmem:[#allocation2 + $0x378] sm:$0xff]
    %v250 = vld [vmem:[#allocation2 + $0x380] sm:$0xff]
    %v251 = vld [vmem:[#allocation2 + $0x388] sm:$0xff]
    %v252 = vld [vmem:[#allocation2 + $0x390] sm:$0xff]
    %v253 = vld [vmem:[#allocation2 + $0x398] sm:$0xff]
    %v254 = vld [vmem:[#allocation2 + $0x3a0] sm:$0xff]
    %v255 = vld [vmem:[#allocation2 + $0x3a8] sm:$0xff]
    %v256 = vld [vmem:[#allocation2 + $0x3b0] sm:$0xff]
    %v257 = vld [vmem:[#allocation2 + $0x3b8] sm:$0xff]
    %v258 = vld [vmem:[#allocation2 + $0x3c0] sm:$0xff]
    %v259 = vld [vmem:[#allocation2 + $0x3c8] sm:$0xff]
    %v260 = vld [vmem:[#allocation2 + $0x3d0] sm:$0xff]
    %v261 = vld [vmem:[#allocation2 + $0x3d8] sm:$0xff]
    %v262 = vld [vmem:[#allocation2 + $0x3e0] sm:$0xff]
    %v263 = vld [vmem:[#allocation2 + $0x3e8] sm:$0xff]
    %v264 = vld [vmem:[#allocation2 + $0x3f0] sm:$0xff]
    %v265 = vld [vmem:[#allocation2 + $0x3f8] sm:$0xff]
    %v266 = vld [vmem:[#allocation2 + $0x400] sm:$0xff]
    %v267 = vld [vmem:[#allocation2 + $0x408] sm:$0xff]
    %v268 = vld [vmem:[#allocation2 + $0x410] sm:$0xff]
    %v269 = vld [vmem:[#allocation2 + $0x418] sm:$0xff]
    %v270 = vld [vmem:[#allocation2 + $0x420] sm:$0xff]
    %v271 = vld [vmem:[#allocation2 + $0x428] sm:$0xff]
    %v272 = vld [vmem:[#allocation2 + $0x430] sm:$0xff]
    %v273 = vld [vmem:[#allocation2 + $0x438] sm:$0xff]
    %v274 = vld [vmem:[#allocation2 + $0x440] sm:$0xff]
    %v275 = vld [vmem:[#allocation2 + $0x448] sm:$0xff]
    %v276 = vld [vmem:[#allocation2 + $0x450] sm:$0xff]
    %v277 = vld [vmem:[#allocation2 + $0x458] sm:$0xff]
    %v278 = vld [vmem:[#allocation2 + $0x460] sm:$0xff]
    %v279 = vld [vmem:[#allocation2 + $0x468] sm:$0xff]
    %v280 = vld [vmem:[#allocation2 + $0x470] sm:$0xff]
    %v281 = vld [vmem:[#allocation2 + $0x478] sm:$0xff]
    %v282 = vld [vmem:[#allocation2 + $0x480] sm:$0xff]
    %v283 = vld [vmem:[#allocation2 + $0x488] sm:$0xff]
    %v284 = vld [vmem:[#allocation2 + $0x490] sm:$0xff]
    %v285 = vld [vmem:[#allocation2 + $0x498] sm:$0xff]
    %v286 = vld [vmem:[#allocation2 + $0x4a0] sm:$0xff]
    %v287 = vld [vmem:[#allocation2 + $0x4a8] sm:$0xff]
    %v288 = vld [vmem:[#allocation2 + $0x4b0] sm:$0xff]
    %v289 = vld [vmem:[#allocation2 + $0x4b8] sm:$0xff]
    %v290 = vld [vmem:[#allocation2 + $0x4c0] sm:$0xff]
    %v291 = vld [vmem:[#allocation2 + $0x4c8] sm:$0xff]
    %v292 = vld [vmem:[#allocation2 + $0x4d0] sm:$0xff]
    %v293 = vld [vmem:[#allocation2 + $0x4d8] sm:$0xff]
    %v294 = vld [vmem:[#allocation2 + $0x4e0] sm:$0xff]
    %v295 = vld [vmem:[#allocation2 + $0x4e8] sm:$0xff]
    %v296 = vld [vmem:[#allocation2 + $0x4f0] sm:$0xff]
    %v297 = vld [vmem:[#allocation2 + $0x4f8] sm:$0xff]
    %v298 = vld [vmem:[#allocation2 + $0x500] sm:$0xff]
    %v299 = vld [vmem:[#allocation2 + $0x508] sm:$0xff]
    %v300 = vld [vmem:[#allocation2 + $0x510] sm:$0xff]
    %v301 = vld [vmem:[#allocation2 + $0x518] sm:$0xff]
    %v302 = vld [vmem:[#allocation2 + $0x520] sm:$0xff]
    %v303 = vld [vmem:[#allocation2 + $0x528] sm:$0xff]
    %v304 = vld [vmem:[#allocation2 + $0x530] sm:$0xff]
    %v305 = vld [vmem:[#allocation2 + $0x538] sm:$0xff]
    %v306 = vld [vmem:[#allocation2 + $0x540] sm:$0xff]
    %v307 = vld [vmem:[#allocation2 + $0x548] sm:$0xff]
    %v308 = vld [vmem:[#allocation2 + $0x550] sm:$0xff]
    %v309 = vld [vmem:[#allocation2 + $0x558] sm:$0xff]
    %v310 = vld [vmem:[#allocation2 + $0x560] sm:$0xff]
    %v311 = vld [vmem:[#allocation2 + $0x568] sm:$0xff]
    %v312 = vld [vmem:[#allocation2 + $0x570] sm:$0xff]
    %v313 = vld [vmem:[#allocation2 + $0x578] sm:$0xff]
    %v314 = vld [vmem:[#allocation2 + $0x580] sm:$0xff]
    %v315 = vld [vmem:[#allocation2 + $0x588] sm:$0xff]
    %v316 = vld [vmem:[#allocation2 + $0x590] sm:$0xff]
    %v317 = vld [vmem:[#allocation2 + $0x598] sm:$0xff]
    %v318 = vld [vmem:[#allocation2 + $0x5a0] sm:$0xff]
    %v319 = vld [vmem:[#allocation2 + $0x5a8] sm:$0xff]
    %v320 = vld [vmem:[#allocation2 + $0x5b0] sm:$0xff]
    %v321 = vld [vmem:[#allocation2 + $0x5b8] sm:$0xff]
    %v322 = vld [vmem:[#allocation2 + $0x5c0] sm:$0xff]
    %v323 = vld [vmem:[#allocation2 + $0x5c8] sm:$0xff]
    %v324 = vld [vmem:[#allocation2 + $0x5d0] sm:$0xff]
    %v325 = vld [vmem:[#allocation2 + $0x5d8] sm:$0xff]
    %v326 = vld [vmem:[#allocation2 + $0x5e0] sm:$0xff]
    %v327 = vld [vmem:[#allocation2 + $0x5e8] sm:$0xff]
    %v328 = vld [vmem:[#allocation2 + $0x5f0] sm:$0xff]
    %v329 = vld [vmem:[#allocation2 + $0x5f8] sm:$0xff]
    %v330 = vld [vmem:[#allocation2 + $0x600] sm:$0xff]
    %v331 = vld [vmem:[#allocation2 + $0x608] sm:$0xff]
    %v332 = vld [vmem:[#allocation2 + $0x610] sm:$0xff]
    %v333 = vld [vmem:[#allocation2 + $0x618] sm:$0xff]
    %v334 = vld [vmem:[#allocation2 + $0x620] sm:$0xff]
    %v335 = vld [vmem:[#allocation2 + $0x628] sm:$0xff]
    %v336 = vld [vmem:[#allocation2 + $0x630] sm:$0xff]
    %v337 = vld [vmem:[#allocation2 + $0x638] sm:$0xff]
    %v338 = vld [vmem:[#allocation2 + $0x640] sm:$0xff]
    %v339 = vld [vmem:[#allocation2 + $0x648] sm:$0xff]
    %v340 = vld [vmem:[#allocation2 + $0x650] sm:$0xff]
    %v341 = vld [vmem:[#allocation2 + $0x658] sm:$0xff]
    %v342 = vld [vmem:[#allocation2 + $0x660] sm:$0xff]
    %v343 = vld [vmem:[#allocation2 + $0x668] sm:$0xff]
    %v344 = vld [vmem:[#allocation2 + $0x670] sm:$0xff]
    %v345 = vld [vmem:[#allocation2 + $0x678] sm:$0xff]
    %v346 = vld [vmem:[#allocation2 + $0x680] sm:$0xff]
    %v347 = vld [vmem:[#allocation2 + $0x688] sm:$0xff]
    %v348 = vld [vmem:[#allocation2 + $0x690] sm:$0xff]
    %v349 = vld [vmem:[#allocation2 + $0x698] sm:$0xff]
    %v350 = vld [vmem:[#allocation2 + $0x6a0] sm:$0xff]
    %v351 = vld [vmem:[#allocation2 + $0x6a8] sm:$0xff]
    %v352 = vld [vmem:[#allocation2 + $0x6b0] sm:$0xff]
    %v353 = vld [vmem:[#allocation2 + $0x6b8] sm:$0xff]
    %v354 = vld [vmem:[#allocation2 + $0x6c0] sm:$0xff]
    %v355 = vld [vmem:[#allocation2 + $0x6c8] sm:$0xff]
    %v356 = vld [vmem:[#allocation2 + $0x6d0] sm:$0xff]
    %v357 = vld [vmem:[#allocation2 + $0x6d8] sm:$0xff]
    %v358 = vld [vmem:[#allocation2 + $0x6e0] sm:$0xff]
    %v359 = vld [vmem:[#allocation2 + $0x6e8] sm:$0xff]
    %v360 = vld [vmem:[#allocation2 + $0x6f0] sm:$0xff]
    %v361 = vld [vmem:[#allocation2 + $0x6f8] sm:$0xff]
    %v362 = vld [vmem:[#allocation2 + $0x700] sm:$0xff]
    %v363 = vld [vmem:[#allocation2 + $0x708] sm:$0xff]
    %v364 = vld [vmem:[#allocation2 + $0x710] sm:$0xff]
    %v365 = vld [vmem:[#allocation2 + $0x718] sm:$0xff]
    %v366 = vld [vmem:[#allocation2 + $0x720] sm:$0xff]
    %v367 = vld [vmem:[#allocation2 + $0x728] sm:$0xff]
    %v368 = vld [vmem:[#allocation2 + $0x730] sm:$0xff]
    %v369 = vld [vmem:[#allocation2 + $0x738] sm:$0xff]
    %v370 = vld [vmem:[#allocation2 + $0x740] sm:$0xff]
    %v371 = vld [vmem:[#allocation2 + $0x748] sm:$0xff]
    %v372 = vld [vmem:[#allocation2 + $0x750] sm:$0xff]
    %v373 = vld [vmem:[#allocation2 + $0x758] sm:$0xff]
    %v374 = vld [vmem:[#allocation2 + $0x760] sm:$0xff]
    %v375 = vld [vmem:[#allocation2 + $0x768] sm:$0xff]
    %v376 = vld [vmem:[#allocation2 + $0x770] sm:$0xff]
    %v377 = vld [vmem:[#allocation2 + $0x778] sm:$0xff]
    %v378 = vld [vmem:[#allocation2 + $0x780] sm:$0xff]
    %v379 = vld [vmem:[#allocation2 + $0x788] sm:$0xff]
    %v380 = vld [vmem:[#allocation2 + $0x790] sm:$0xff]
    %v381 = vld [vmem:[#allocation2 + $0x798] sm:$0xff]
    %v382 = vld [vmem:[#allocation2 + $0x7a0] sm:$0xff]
    %v383 = vld [vmem:[#allocation2 + $0x7a8] sm:$0xff]
    %v384 = vld [vmem:[#allocation2 + $0x7b0] sm:$0xff]
    %v385 = vld [vmem:[#allocation2 + $0x7b8] sm:$0xff]
    %v386 = vld [vmem:[#allocation2 + $0x7c0] sm:$0xff]
    %v387 = vld [vmem:[#allocation2 + $0x7c8] sm:$0xff]
    %v388 = vld [vmem:[#allocation2 + $0x7d0] sm:$0xff]
    %v389 = vld [vmem:[#allocation2 + $0x7d8] sm:$0xff]
    %v390 = vld [vmem:[#allocation2 + $0x7e0] sm:$0xff]
    %v391 = vld [vmem:[#allocation2 + $0x7e8] sm:$0xff]
    %v392 = vld [vmem:[#allocation2 + $0x7f0] sm:$0xff]
    %v393 = vld [vmem:[#allocation2 + $0x7f8] sm:$0xff]
    %v394 = vld [vmem:[#allocation2 + $0x800] sm:$0xff]
    %v395 = vld [vmem:[#allocation2 + $0x808] sm:$0xff]
    %v396 = vld [vmem:[#allocation2 + $0x810] sm:$0xff]
    %v397 = vld [vmem:[#allocation2 + $0x818] sm:$0xff]
    %v398 = vld [vmem:[#allocation2 + $0x820] sm:$0xff]
    %v399 = vld [vmem:[#allocation2 + $0x828] sm:$0xff]
    %v400 = vld [vmem:[#allocation2 + $0x830] sm:$0xff]
    %v401 = vld [vmem:[#allocation2 + $0x838] sm:$0xff]
    %v402 = vld [vmem:[#allocation2 + $0x840] sm:$0xff]
    %v403 = vld [vmem:[#allocation2 + $0x848] sm:$0xff]
    %v404 = vld [vmem:[#allocation2 + $0x850] sm:$0xff]
    %v405 = vld [vmem:[#allocation2 + $0x858] sm:$0xff]
    %v406 = vld [vmem:[#allocation2 + $0x860] sm:$0xff]
    %v407 = vld [vmem:[#allocation2 + $0x868] sm:$0xff]
    %v408 = vld [vmem:[#allocation2 + $0x870] sm:$0xff]
    %v409 = vld [vmem:[#allocation2 + $0x878] sm:$0xff]
    %v410 = vld [vmem:[#allocation2 + $0x880] sm:$0xff]
    %v411 = vld [vmem:[#allocation2 + $0x888] sm:$0xff]
    %v412 = vld [vmem:[#allocation2 + $0x890] sm:$0xff]
    %v413 = vld [vmem:[#allocation2 + $0x898] sm:$0xff]
    %v414 = vld [vmem:[#allocation2 + $0x8a0] sm:$0xff]
    %v415 = vld [vmem:[#allocation2 + $0x8a8] sm:$0xff]
    %v416 = vld [vmem:[#allocation2 + $0x8b0] sm:$0xff]
    %v417 = vld [vmem:[#allocation2 + $0x8b8] sm:$0xff]
    %v418 = vld [vmem:[#allocation2 + $0x8c0] sm:$0xff]
    %v419 = vld [vmem:[#allocation2 + $0x8c8] sm:$0xff]
    %v420 = vld [vmem:[#allocation2 + $0x8d0] sm:$0xff]
    %v421 = vld [vmem:[#allocation2 + $0x8d8] sm:$0xff]
    %v422 = vld [vmem:[#allocation2 + $0x8e0] sm:$0xff]
    %v423 = vld [vmem:[#allocation2 + $0x8e8] sm:$0xff]
    %v424 = vld [vmem:[#allocation2 + $0x8f0] sm:$0xff]
    %v425 = vld [vmem:[#allocation2 + $0x8f8] sm:$0xff]
    %v426 = vld [vmem:[#allocation2 + $0x900] sm:$0xff]
    %v427 = vld [vmem:[#allocation2 + $0x908] sm:$0xff]
    %v428 = vld [vmem:[#allocation2 + $0x910] sm:$0xff]
    %v429 = vld [vmem:[#allocation2 + $0x918] sm:$0xff]
    %v430 = vld [vmem:[#allocation2 + $0x920] sm:$0xff]
    %v431 = vld [vmem:[#allocation2 + $0x928] sm:$0xff]
    %v432 = vld [vmem:[#allocation2 + $0x930] sm:$0xff]
    %v433 = vld [vmem:[#allocation2 + $0x938] sm:$0xff]
    %v434 = vld [vmem:[#allocation2 + $0x940] sm:$0xff]
    %v435 = vld [vmem:[#allocation2 + $0x948] sm:$0xff]
    %v436 = vld [vmem:[#allocation2 + $0x950] sm:$0xff]
    %v437 = vld [vmem:[#allocation2 + $0x958] sm:$0xff]
    %v438 = vld [vmem:[#allocation2 + $0x960] sm:$0xff]
    %v439 = vld [vmem:[#allocation2 + $0x968] sm:$0xff]
    %v440 = vld [vmem:[#allocation2 + $0x970] sm:$0xff]
    %v441 = vld [vmem:[#allocation2 + $0x978] sm:$0xff]
    %v442 = vld [vmem:[#allocation2 + $0x980] sm:$0xff]
    %v443 = vld [vmem:[#allocation2 + $0x988] sm:$0xff]
    %v444 = vld [vmem:[#allocation2 + $0x990] sm:$0xff]
    %v445 = vld [vmem:[#allocation2 + $0x998] sm:$0xff]
    %v446 = vld [vmem:[#allocation2 + $0x9a0] sm:$0xff]
    %v447 = vld [vmem:[#allocation2 + $0x9a8] sm:$0xff]
    %v448 = vld [vmem:[#allocation2 + $0x9b0] sm:$0xff]
    %v449 = vld [vmem:[#allocation2 + $0x9b8] sm:$0xff]
    %v450 = vld [vmem:[#allocation2 + $0x9c0] sm:$0xff]
    %v451 = vld [vmem:[#allocation2 + $0x9c8] sm:$0xff]
    %v452 = vld [vmem:[#allocation2 + $0x9d0] sm:$0xff]
    %v453 = vld [vmem:[#allocation2 + $0x9d8] sm:$0xff]
    %v454 = vld [vmem:[#allocation2 + $0x9e0] sm:$0xff]
    %v455 = vld [vmem:[#allocation2 + $0x9e8] sm:$0xff]
    %v456 = vld [vmem:[#allocation2 + $0x9f0] sm:$0xff]
    %v457 = vld [vmem:[#allocation2 + $0x9f8] sm:$0xff]
    %v458 = vld [vmem:[#allocation2 + $0xa00] sm:$0xff]
    %v459 = vld [vmem:[#allocation2 + $0xa08] sm:$0xff]
    %v460 = vld [vmem:[#allocation2 + $0xa10] sm:$0xff]
    %v461 = vld [vmem:[#allocation2 + $0xa18] sm:$0xff]
    %v462 = vld [vmem:[#allocation2 + $0xa20] sm:$0xff]
    %v463 = vld [vmem:[#allocation2 + $0xa28] sm:$0xff]
    %v464 = vld [vmem:[#allocation2 + $0xa30] sm:$0xff]
    %v465 = vld [vmem:[#allocation2 + $0xa38] sm:$0xff]
    %v466 = vld [vmem:[#allocation2 + $0xa40] sm:$0xff]
    %v467 = vld [vmem:[#allocation2 + $0xa48] sm:$0xff]
    %v468 = vld [vmem:[#allocation2 + $0xa50] sm:$0xff]
    %v469 = vld [vmem:[#allocation2 + $0xa58] sm:$0xff]
    %v470 = vld [vmem:[#allocation2 + $0xa60] sm:$0xff]
    %v471 = vld [vmem:[#allocation2 + $0xa68] sm:$0xff]
    %v472 = vld [vmem:[#allocation2 + $0xa70] sm:$0xff]
    %v473 = vld [vmem:[#allocation2 + $0xa78] sm:$0xff]
    %v474 = vld [vmem:[#allocation2 + $0xa80] sm:$0xff]
    %v475 = vld [vmem:[#allocation2 + $0xa88] sm:$0xff]
    %v476 = vld [vmem:[#allocation2 + $0xa90] sm:$0xff]
    %v477 = vld [vmem:[#allocation2 + $0xa98] sm:$0xff]
    %v478 = vld [vmem:[#allocation2 + $0xaa0] sm:$0xff]
    %v479 = vld [vmem:[#allocation2 + $0xaa8] sm:$0xff]
    %v480 = vld [vmem:[#allocation2 + $0xab0] sm:$0xff]
    %v481 = vld [vmem:[#allocation2 + $0xab8] sm:$0xff]
    %v482 = vld [vmem:[#allocation2 + $0xac0] sm:$0xff]
    %v483 = vld [vmem:[#allocation2 + $0xac8] sm:$0xff]
    %v484 = vld [vmem:[#allocation2 + $0xad0] sm:$0xff]
    %v485 = vld [vmem:[#allocation2 + $0xad8] sm:$0xff]
    %v486 = vld [vmem:[#allocation2 + $0xae0] sm:$0xff]
    %v487 = vld [vmem:[#allocation2 + $0xae8] sm:$0xff]
    %v488 = vld [vmem:[#allocation2 + $0xaf0] sm:$0xff]
    %v489 = vld [vmem:[#allocation2 + $0xaf8] sm:$0xff]
    %v490 = vld [vmem:[#allocation2 + $0xb00] sm:$0xff]
    %v491 = vld [vmem:[#allocation2 + $0xb08] sm:$0xff]
    %v492 = vld [vmem:[#allocation2 + $0xb10] sm:$0xff]
    %v493 = vld [vmem:[#allocation2 + $0xb18] sm:$0xff]
    %v494 = vld [vmem:[#allocation2 + $0xb20] sm:$0xff]
    %v495 = vld [vmem:[#allocation2 + $0xb28] sm:$0xff]
    %v496 = vld [vmem:[#allocation2 + $0xb30] sm:$0xff]
    %v497 = vld [vmem:[#allocation2 + $0xb38] sm:$0xff]
    %v498 = vld [vmem:[#allocation2 + $0xb40] sm:$0xff]
    %v499 = vld [vmem:[#allocation2 + $0xb48] sm:$0xff]
    %v500 = vld [vmem:[#allocation2 + $0xb50] sm:$0xff]
    %v501 = vld [vmem:[#allocation2 + $0xb58] sm:$0xff]
    %v502 = vld [vmem:[#allocation2 + $0xb60] sm:$0xff]
    %v503 = vld [vmem:[#allocation2 + $0xb68] sm:$0xff]
    %v504 = vld [vmem:[#allocation2 + $0xb70] sm:$0xff]
    %v505 = vld [vmem:[#allocation2 + $0xb78] sm:$0xff]
    %v506 = vld [vmem:[#allocation2 + $0xb80] sm:$0xff]
    %v507 = vld [vmem:[#allocation2 + $0xb88] sm:$0xff]
    %v508 = vld [vmem:[#allocation2 + $0xb90] sm:$0xff]
    %v509 = vld [vmem:[#allocation2 + $0xb98] sm:$0xff]
    %v510 = vld [vmem:[#allocation2 + $0xba0] sm:$0xff]
    %v511 = vld [vmem:[#allocation2 + $0xba8] sm:$0xff]
    %v512 = vld [vmem:[#allocation2 + $0xbb0] sm:$0xff]
    %v513 = vld [vmem:[#allocation2 + $0xbb8] sm:$0xff]
    %v514 = vld [vmem:[#allocation2 + $0xbc0] sm:$0xff]
    %v515 = vld [vmem:[#allocation2 + $0xbc8] sm:$0xff]
    %v516 = vld [vmem:[#allocation2 + $0xbd0] sm:$0xff]
    %v517 = vld [vmem:[#allocation2 + $0xbd8] sm:$0xff]
    %v518 = vld [vmem:[#allocation2 + $0xbe0] sm:$0xff]
    %v519 = vld [vmem:[#allocation2 + $0xbe8] sm:$0xff]
    %v520 = vld [vmem:[#allocation2 + $0xbf0] sm:$0xff]
    %v521 = vld [vmem:[#allocation2 + $0xbf8] sm:$0xff]
    %v522 = vld [vmem:[#allocation2 + $0xc00] sm:$0xff]
    %v523 = vld [vmem:[#allocation2 + $0xc08] sm:$0xff]
    %v524 = vld [vmem:[#allocation2 + $0xc10] sm:$0xff]
    %v525 = vld [vmem:[#allocation2 + $0xc18] sm:$0xff]
    %v526 = vld [vmem:[#allocation2 + $0xc20] sm:$0xff]
    %v527 = vld [vmem:[#allocation2 + $0xc28] sm:$0xff]
    %v528 = vld [vmem:[#allocation2 + $0xc30] sm:$0xff]
    %v529 = vld [vmem:[#allocation2 + $0xc38] sm:$0xff]
    %v530 = vld [vmem:[#allocation2 + $0xc40] sm:$0xff]
    %v531 = vld [vmem:[#allocation2 + $0xc48] sm:$0xff]
    %v532 = vld [vmem:[#allocation2 + $0xc50] sm:$0xff]
    %v533 = vld [vmem:[#allocation2 + $0xc58] sm:$0xff]
    %v534 = vld [vmem:[#allocation2 + $0xc60] sm:$0xff]
    %v535 = vld [vmem:[#allocation2 + $0xc68] sm:$0xff]
    %v536 = vld [vmem:[#allocation2 + $0xc70] sm:$0xff]
    %v537 = vld [vmem:[#allocation2 + $0xc78] sm:$0xff]
    %v538 = vld [vmem:[#allocation2 + $0xc80] sm:$0xff]
    %v539 = vld [vmem:[#allocation2 + $0xc88] sm:$0xff]
    %v540 = vld [vmem:[#allocation2 + $0xc90] sm:$0xff]
    %v541 = vld [vmem:[#allocation2 + $0xc98] sm:$0xff]
    %v542 = vld [vmem:[#allocation2 + $0xca0] sm:$0xff]
    %v543 = vld [vmem:[#allocation2 + $0xca8] sm:$0xff]
    %v544 = vld [vmem:[#allocation2 + $0xcb0] sm:$0xff]
    %v545 = vld [vmem:[#allocation2 + $0xcb8] sm:$0xff]
    %v546 = vld [vmem:[#allocation2 + $0xcc0] sm:$0xff]
    %v547 = vld [vmem:[#allocation2 + $0xcc8] sm:$0xff]
    %v548 = vld [vmem:[#allocation2 + $0xcd0] sm:$0xff]
    %v549 = vld [vmem:[#allocation2 + $0xcd8] sm:$0xff]
    %v550 = vld [vmem:[#allocation2 + $0xce0] sm:$0xff]
    %v551 = vld [vmem:[#allocation2 + $0xce8] sm:$0xff]
    %v552 = vld [vmem:[#allocation2 + $0xcf0] sm:$0xff]
    %v553 = vld [vmem:[#allocation2 + $0xcf8] sm:$0xff]
    %v554 = vld [vmem:[#allocation2 + $0xd00] sm:$0xff]
    %v555 = vld [vmem:[#allocation2 + $0xd08] sm:$0xff]
    %v556 = vld [vmem:[#allocation2 + $0xd10] sm:$0xff]
    %v557 = vld [vmem:[#allocation2 + $0xd18] sm:$0xff]
    %v558 = vld [vmem:[#allocation2 + $0xd20] sm:$0xff]
    %v559 = vld [vmem:[#allocation2 + $0xd28] sm:$0xff]
    %v560 = vld [vmem:[#allocation2 + $0xd30] sm:$0xff]
    %v561 = vld [vmem:[#allocation2 + $0xd38] sm:$0xff]
    %v562 = vld [vmem:[#allocation2 + $0xd40] sm:$0xff]
    %v563 = vld [vmem:[#allocation2 + $0xd48] sm:$0xff]
    %v564 = vld [vmem:[#allocation2 + $0xd50] sm:$0xff]
    %v565 = vld [vmem:[#allocation2 + $0xd58] sm:$0xff]
    %v566 = vld [vmem:[#allocation2 + $0xd60] sm:$0xff]
    %v567 = vld [vmem:[#allocation2 + $0xd68] sm:$0xff]
    %v568 = vld [vmem:[#allocation2 + $0xd70] sm:$0xff]
    %v569 = vld [vmem:[#allocation2 + $0xd78] sm:$0xff]
    %v570 = vld [vmem:[#allocation2 + $0xd80] sm:$0xff]
    %v571 = vld [vmem:[#allocation2 + $0xd88] sm:$0xff]
    %v572 = vld [vmem:[#allocation2 + $0xd90] sm:$0xff]
    %v573 = vld [vmem:[#allocation2 + $0xd98] sm:$0xff]
    %v574 = vld [vmem:[#allocation2 + $0xda0] sm:$0xff]
    %v575 = vld [vmem:[#allocation2 + $0xda8] sm:$0xff]
    %v576 = vld [vmem:[#allocation2 + $0xdb0] sm:$0xff]
    %v577 = vld [vmem:[#allocation2 + $0xdb8] sm:$0xff]
    %v578 = vld [vmem:[#allocation2 + $0xdc0] sm:$0xff]
    %v579 = vld [vmem:[#allocation2 + $0xdc8] sm:$0xff]
    %v580 = vld [vmem:[#allocation2 + $0xdd0] sm:$0xff]
    %v581 = vld [vmem:[#allocation2 + $0xdd8] sm:$0xff]
    %v582 = vld [vmem:[#allocation2 + $0xde0] sm:$0xff]
    %v583 = vld [vmem:[#allocation2 + $0xde8] sm:$0xff]
    %v584 = vld [vmem:[#allocation2 + $0xdf0] sm:$0xff]
    %v585 = vld [vmem:[#allocation2 + $0xdf8] sm:$0xff]
    %v586 = vld [vmem:[#allocation2 + $0xe00] sm:$0xff]
    %v587 = vld [vmem:[#allocation2 + $0xe08] sm:$0xff]
    %v588 = vld [vmem:[#allocation2 + $0xe10] sm:$0xff]
    %v589 = vld [vmem:[#allocation2 + $0xe18] sm:$0xff]
    %v590 = vld [vmem:[#allocation2 + $0xe20] sm:$0xff]
    %v591 = vld [vmem:[#allocation2 + $0xe28] sm:$0xff]
    %v592 = vld [vmem:[#allocation2 + $0xe30] sm:$0xff]
    %v593 = vld [vmem:[#allocation2 + $0xe38] sm:$0xff]
    %v594 = vld [vmem:[#allocation2 + $0xe40] sm:$0xff]
    %v595 = vld [vmem:[#allocation2 + $0xe48] sm:$0xff]
    %v596 = vld [vmem:[#allocation2 + $0xe50] sm:$0xff]
    %v597 = vld [vmem:[#allocation2 + $0xe58] sm:$0xff]
    %v598 = vld [vmem:[#allocation2 + $0xe60] sm:$0xff]
    %v599 = vld [vmem:[#allocation2 + $0xe68] sm:$0xff]
    %v600 = vld [vmem:[#allocation2 + $0xe70] sm:$0xff]
    %v601 = vld [vmem:[#allocation2 + $0xe78] sm:$0xff]
    %v602 = vld [vmem:[#allocation2 + $0xe80] sm:$0xff]
    %v603 = vld [vmem:[#allocation2 + $0xe88] sm:$0xff]
    %v604 = vld [vmem:[#allocation2 + $0xe90] sm:$0xff]
    %v605 = vld [vmem:[#allocation2 + $0xe98] sm:$0xff]
    %v606 = vld [vmem:[#allocation2 + $0xea0] sm:$0xff]
    %v607 = vld [vmem:[#allocation2 + $0xea8] sm:$0xff]
    %v608 = vld [vmem:[#allocation2 + $0xeb0] sm:$0xff]
    %v609 = vld [vmem:[#allocation2 + $0xeb8] sm:$0xff]
    %v610 = vld [vmem:[#allocation2 + $0xec0] sm:$0xff]
    %v611 = vld [vmem:[#allocation2 + $0xec8] sm:$0xff]
    %v612 = vld [vmem:[#allocation2 + $0xed0] sm:$0xff]
    %v613 = vld [vmem:[#allocation2 + $0xed8] sm:$0xff]
    %v614 = vld [vmem:[#allocation2 + $0xee0] sm:$0xff]
    %v615 = vld [vmem:[#allocation2 + $0xee8] sm:$0xff]
    %v616 = vld [vmem:[#allocation2 + $0xef0] sm:$0xff]
    %v617 = vld [vmem:[#allocation2 + $0xef8] sm:$0xff]
    %v618 = vld [vmem:[#allocation2 + $0xf00] sm:$0xff]
    %v619 = vld [vmem:[#allocation2 + $0xf08] sm:$0xff]
    %v620 = vld [vmem:[#allocation2 + $0xf10] sm:$0xff]
    %v621 = vld [vmem:[#allocation2 + $0xf18] sm:$0xff]
    %v622 = vld [vmem:[#allocation2 + $0xf20] sm:$0xff]
    %v623 = vld [vmem:[#allocation2 + $0xf28] sm:$0xff]
    %v624 = vld [vmem:[#allocation2 + $0xf30] sm:$0xff]
    %v625 = vld [vmem:[#allocation2 + $0xf38] sm:$0xff]
    %v626 = vld [vmem:[#allocation2 + $0xf40] sm:$0xff]
    %v627 = vld [vmem:[#allocation2 + $0xf48] sm:$0xff]
    %v628 = vld [vmem:[#allocation2 + $0xf50] sm:$0xff]
    %v629 = vld [vmem:[#allocation2 + $0xf58] sm:$0xff]
    %v630 = vld [vmem:[#allocation2 + $0xf60] sm:$0xff]
    %v631 = vld [vmem:[#allocation2 + $0xf68] sm:$0xff]
    %v632 = vld [vmem:[#allocation2 + $0xf70] sm:$0xff]
    %v633 = vld [vmem:[#allocation2 + $0xf78] sm:$0xff]
    %v634 = vld [vmem:[#allocation2 + $0xf80] sm:$0xff]
    %v635 = vld [vmem:[#allocation2 + $0xf88] sm:$0xff]
    %v636 = vld [vmem:[#allocation2 + $0xf90] sm:$0xff]
    %v637 = vld [vmem:[#allocation2 + $0xf98] sm:$0xff]
    %v638 = vld [vmem:[#allocation2 + $0xfa0] sm:$0xff]
    %v639 = vld [vmem:[#allocation2 + $0xfa8] sm:$0xff]
    %v640 = vld [vmem:[#allocation2 + $0xfb0] sm:$0xff]
    %v641 = vld [vmem:[#allocation2 + $0xfb8] sm:$0xff]
    %v642 = vld [vmem:[#allocation2 + $0xfc0] sm:$0xff]
    %v643 = vld [vmem:[#allocation2 + $0xfc8] sm:$0xff]
    %v644 = vld [vmem:[#allocation2 + $0xfd0] sm:$0xff]
    %v645 = vld [vmem:[#allocation2 + $0xfd8] sm:$0xff]
    %v646 = vld [vmem:[#allocation2 + $0xfe0] sm:$0xff]
    %v647 = vld [vmem:[#allocation2 + $0xfe8] sm:$0xff]
    %v648 = vld [vmem:[#allocation2 + $0xff0] sm:$0xff]
    %v649 = vld [vmem:[#allocation2 + $0xff8] sm:$0xff]
    %v650 = vld [vmem:[#allocation2 + $0x1000] sm:$0xff]
    %v651 = vld [vmem:[#allocation2 + $0x1008] sm:$0xff]
    %v652 = vld [vmem:[#allocation2 + $0x1010] sm:$0xff]
    %v653 = vld [vmem:[#allocation2 + $0x1018] sm:$0xff]
    %v654 = vld [vmem:[#allocation2 + $0x1020] sm:$0xff]
    %v655 = vld [vmem:[#allocation2 + $0x1028] sm:$0xff]
    %v656 = vld [vmem:[#allocation2 + $0x1030] sm:$0xff]
    %v657 = vld [vmem:[#allocation2 + $0x1038] sm:$0xff]
    %v658 = vld [vmem:[#allocation2 + $0x1040] sm:$0xff]
    %v659 = vld [vmem:[#allocation2 + $0x1048] sm:$0xff]
    %v660 = vld [vmem:[#allocation2 + $0x1050] sm:$0xff]
    %v661 = vld [vmem:[#allocation2 + $0x1058] sm:$0xff]
    %v662 = vld [vmem:[#allocation2 + $0x1060] sm:$0xff]
    %v663 = vld [vmem:[#allocation2 + $0x1068] sm:$0xff]
    %v664 = vld [vmem:[#allocation2 + $0x1070] sm:$0xff]
    %v665 = vld [vmem:[#allocation2 + $0x1078] sm:$0xff]
    %v666 = vld [vmem:[#allocation2 + $0x1080] sm:$0xff]
    %v667 = vld [vmem:[#allocation2 + $0x1088] sm:$0xff]
    %v668 = vld [vmem:[#allocation2 + $0x1090] sm:$0xff]
    %v669 = vld [vmem:[#allocation2 + $0x1098] sm:$0xff]
    %v670 = vld [vmem:[#allocation2 + $0x10a0] sm:$0xff]
    %v671 = vld [vmem:[#allocation2 + $0x10a8] sm:$0xff]
    %v672 = vld [vmem:[#allocation2 + $0x10b0] sm:$0xff]
    %v673 = vld [vmem:[#allocation2 + $0x10b8] sm:$0xff]
    %v674 = vld [vmem:[#allocation2 + $0x10c0] sm:$0xff]
    %v675 = vld [vmem:[#allocation2 + $0x10c8] sm:$0xff]
    %v676 = vld [vmem:[#allocation2 + $0x10d0] sm:$0xff]
    %v677 = vld [vmem:[#allocation2 + $0x10d8] sm:$0xff]
    %v678 = vld [vmem:[#allocation2 + $0x10e0] sm:$0xff]
    %v679 = vld [vmem:[#allocation2 + $0x10e8] sm:$0xff]
    %v680 = vld [vmem:[#allocation2 + $0x10f0] sm:$0xff]
    %v681 = vld [vmem:[#allocation2 + $0x10f8] sm:$0xff]
    %v682 = vld [vmem:[#allocation2 + $0x1100] sm:$0xff]
    %v683 = vld [vmem:[#allocation2 + $0x1108] sm:$0xff]
    %v684 = vld [vmem:[#allocation2 + $0x1110] sm:$0xff]
    %v685 = vld [vmem:[#allocation2 + $0x1118] sm:$0xff]
    %v686 = vld [vmem:[#allocation2 + $0x1120] sm:$0xff]
    %v687 = vld [vmem:[#allocation2 + $0x1128] sm:$0xff]
    %v688 = vld [vmem:[#allocation2 + $0x1130] sm:$0xff]
    %v689 = vld [vmem:[#allocation2 + $0x1138] sm:$0xff]
    %v690 = vld [vmem:[#allocation2 + $0x1140] sm:$0xff]
    %v691 = vld [vmem:[#allocation2 + $0x1148] sm:$0xff]
    %v692 = vld [vmem:[#allocation2 + $0x1150] sm:$0xff]
    %v693 = vld [vmem:[#allocation2 + $0x1158] sm:$0xff]
    %v694 = vld [vmem:[#allocation2 + $0x1160] sm:$0xff]
    %v695 = vld [vmem:[#allocation2 + $0x1168] sm:$0xff]
    %v696 = vld [vmem:[#allocation2 + $0x1170] sm:$0xff]
    %v697 = vld [vmem:[#allocation2 + $0x1178] sm:$0xff]
    %v698 = vld [vmem:[#allocation2 + $0x1180] sm:$0xff]
    %v699 = vld [vmem:[#allocation2 + $0x1188] sm:$0xff]
    %v700 = vld [vmem:[#allocation2 + $0x1190] sm:$0xff]
    %v701 = vld [vmem:[#allocation2 + $0x1198] sm:$0xff]
    %v702 = vld [vmem:[#allocation2 + $0x11a0] sm:$0xff]
    %v703 = vld [vmem:[#allocation2 + $0x11a8] sm:$0xff]
    %v704 = vld [vmem:[#allocation2 + $0x11b0] sm:$0xff]
    %v705 = vld [vmem:[#allocation2 + $0x11b8] sm:$0xff]
    %v706 = vld [vmem:[#allocation2 + $0x11c0] sm:$0xff]
    %v707 = vld [vmem:[#allocation2 + $0x11c8] sm:$0xff]
    %v708 = vld [vmem:[#allocation2 + $0x11d0] sm:$0xff]
    %v709 = vld [vmem:[#allocation2 + $0x11d8] sm:$0xff]
    %v710 = vld [vmem:[#allocation2 + $0x11e0] sm:$0xff]
    %v711 = vld [vmem:[#allocation2 + $0x11e8] sm:$0xff]
    %v712 = vld [vmem:[#allocation2 + $0x11f0] sm:$0xff]
    %v713 = vld [vmem:[#allocation2 + $0x11f8] sm:$0xff]
    %v714 = vld [vmem:[#allocation2 + $0x1200] sm:$0xff]
    %v715 = vld [vmem:[#allocation2 + $0x1208] sm:$0xff]
    %v716 = vld [vmem:[#allocation2 + $0x1210] sm:$0xff]
    %v717 = vld [vmem:[#allocation2 + $0x1218] sm:$0xff]
    %v718 = vld [vmem:[#allocation2 + $0x1220] sm:$0xff]
    %v719 = vld [vmem:[#allocation2 + $0x1228] sm:$0xff]
    %v720 = vld [vmem:[#allocation2 + $0x1230] sm:$0xff]
    %v721 = vld [vmem:[#allocation2 + $0x1238] sm:$0xff]
    %v722 = vld [vmem:[#allocation2 + $0x1240] sm:$0xff]
    %v723 = vld [vmem:[#allocation2 + $0x1248] sm:$0xff]
    %v724 = vld [vmem:[#allocation2 + $0x1250] sm:$0xff]
    %v725 = vld [vmem:[#allocation2 + $0x1258] sm:$0xff]
    %v726 = vld [vmem:[#allocation2 + $0x1260] sm:$0xff]
    %v727 = vld [vmem:[#allocation2 + $0x1268] sm:$0xff]
    %v728 = vld [vmem:[#allocation2 + $0x1270] sm:$0xff]
    %v729 = vld [vmem:[#allocation2 + $0x1278] sm:$0xff]
    %v730 = vld [vmem:[#allocation2 + $0x1280] sm:$0xff]
    %v731 = vld [vmem:[#allocation2 + $0x1288] sm:$0xff]
    %v732 = vld [vmem:[#allocation2 + $0x1290] sm:$0xff]
    %v733 = vld [vmem:[#allocation2 + $0x1298] sm:$0xff]
    %v734 = vld [vmem:[#allocation2 + $0x12a0] sm:$0xff]
    %v735 = vld [vmem:[#allocation2 + $0x12a8] sm:$0xff]
    %v736 = vld [vmem:[#allocation2 + $0x12b0] sm:$0xff]
    %v737 = vld [vmem:[#allocation2 + $0x12b8] sm:$0xff]
    %v738 = vld [vmem:[#allocation2 + $0x12c0] sm:$0xff]
    %v739 = vld [vmem:[#allocation2 + $0x12c8] sm:$0xff]
    %v740 = vld [vmem:[#allocation2 + $0x12d0] sm:$0xff]
    %v741 = vld [vmem:[#allocation2 + $0x12d8] sm:$0xff]
    %v742 = vld [vmem:[#allocation2 + $0x12e0] sm:$0xff]
    %v743 = vld [vmem:[#allocation2 + $0x12e8] sm:$0xff]
    %v744 = vld [vmem:[#allocation2 + $0x12f0] sm:$0xff]
    %v745 = vld [vmem:[#allocation2 + $0x12f8] sm:$0xff]
    %v746 = vld [vmem:[#allocation2 + $0x1300] sm:$0xff]
    %v747 = vld [vmem:[#allocation2 + $0x1308] sm:$0xff]
    %v748 = vld [vmem:[#allocation2 + $0x1310] sm:$0xff]
    %v749 = vld [vmem:[#allocation2 + $0x1318] sm:$0xff]
    %v750 = vld [vmem:[#allocation2 + $0x1320] sm:$0xff]
    %v751 = vld [vmem:[#allocation2 + $0x1328] sm:$0xff]
    %v752 = vld [vmem:[#allocation2 + $0x1330] sm:$0xff]
    %v753 = vld [vmem:[#allocation2 + $0x1338] sm:$0xff]
    %v754 = vld [vmem:[#allocation2 + $0x1340] sm:$0xff]
    %v755 = vld [vmem:[#allocation2 + $0x1348] sm:$0xff]
    %v756 = vld [vmem:[#allocation2 + $0x1350] sm:$0xff]
    %v757 = vld [vmem:[#allocation2 + $0x1358] sm:$0xff]
    %v758 = vld [vmem:[#allocation2 + $0x1360] sm:$0xff]
    %v759 = vld [vmem:[#allocation2 + $0x1368] sm:$0xff]
    %v760 = vld [vmem:[#allocation2 + $0x1370] sm:$0xff]
    %v761 = vld [vmem:[#allocation2 + $0x1378] sm:$0xff]
    %v762 = vld [vmem:[#allocation2 + $0x1380] sm:$0xff]
    %v763 = vld [vmem:[#allocation2 + $0x1388] sm:$0xff]
    %v764 = vld [vmem:[#allocation2 + $0x1390] sm:$0xff]
    %v765 = vld [vmem:[#allocation2 + $0x1398] sm:$0xff]
    %v766 = vld [vmem:[#allocation2 + $0x13a0] sm:$0xff]
    %v767 = vld [vmem:[#allocation2 + $0x13a8] sm:$0xff]
    %v768 = vld [vmem:[#allocation2 + $0x13b0] sm:$0xff]
    %v769 = vld [vmem:[#allocation2 + $0x13b8] sm:$0xff]
    %v770 = vld [vmem:[#allocation2 + $0x13c0] sm:$0xff]
    %v771 = vld [vmem:[#allocation2 + $0x13c8] sm:$0xff]
    %v772 = vld [vmem:[#allocation2 + $0x13d0] sm:$0xff]
    %v773 = vld [vmem:[#allocation2 + $0x13d8] sm:$0xff]
    %v774 = vld [vmem:[#allocation2 + $0x13e0] sm:$0xff]
    %v775 = vld [vmem:[#allocation2 + $0x13e8] sm:$0xff]
    %v776 = vld [vmem:[#allocation2 + $0x13f0] sm:$0xff]
    %v777 = vld [vmem:[#allocation2 + $0x13f8] sm:$0xff]
    %v778 = vld [vmem:[#allocation2 + $0x1400] sm:$0xff]
    %v779 = vld [vmem:[#allocation2 + $0x1408] sm:$0xff]
    %v780 = vld [vmem:[#allocation2 + $0x1410] sm:$0xff]
    %v781 = vld [vmem:[#allocation2 + $0x1418] sm:$0xff]
    %v782 = vld [vmem:[#allocation2 + $0x1420] sm:$0xff]
    %v783 = vld [vmem:[#allocation2 + $0x1428] sm:$0xff]
    %v784 = vld [vmem:[#allocation2 + $0x1430] sm:$0xff]
    %v785 = vld [vmem:[#allocation2 + $0x1438] sm:$0xff]
    %v786 = vld [vmem:[#allocation2 + $0x1440] sm:$0xff]
    %v787 = vld [vmem:[#allocation2 + $0x1448] sm:$0xff]
    %v788 = vld [vmem:[#allocation2 + $0x1450] sm:$0xff]
    %v789 = vld [vmem:[#allocation2 + $0x1458] sm:$0xff]
    %v790 = vld [vmem:[#allocation2 + $0x1460] sm:$0xff]
    %v791 = vld [vmem:[#allocation2 + $0x1468] sm:$0xff]
    %v792 = vld [vmem:[#allocation2 + $0x1470] sm:$0xff]
    %v793 = vld [vmem:[#allocation2 + $0x1478] sm:$0xff]
    %v794 = vld [vmem:[#allocation2 + $0x1480] sm:$0xff]
    %v795 = vld [vmem:[#allocation2 + $0x1488] sm:$0xff]
    %v796 = vld [vmem:[#allocation2 + $0x1490] sm:$0xff]
    %v797 = vld [vmem:[#allocation2 + $0x1498] sm:$0xff]
    %v798 = vld [vmem:[#allocation2 + $0x14a0] sm:$0xff]
    %v799 = vld [vmem:[#allocation2 + $0x14a8] sm:$0xff]
    %v800 = vld [vmem:[#allocation2 + $0x14b0] sm:$0xff]
    %v801 = vld [vmem:[#allocation2 + $0x14b8] sm:$0xff]
    %v802 = vld [vmem:[#allocation2 + $0x14c0] sm:$0xff]
    %v803 = vld [vmem:[#allocation2 + $0x14c8] sm:$0xff]
    %v804 = vld [vmem:[#allocation2 + $0x14d0] sm:$0xff]
    %v805 = vld [vmem:[#allocation2 + $0x14d8] sm:$0xff]
    %v806 = vld [vmem:[#allocation2 + $0x14e0] sm:$0xff]
    %v807 = vld [vmem:[#allocation2 + $0x14e8] sm:$0xff]
    %v808 = vld [vmem:[#allocation2 + $0x14f0] sm:$0xff]
    %v809 = vld [vmem:[#allocation2 + $0x14f8] sm:$0xff]
    %v810 = vld [vmem:[#allocation2 + $0x1500] sm:$0xff]
    %v811 = vld [vmem:[#allocation2 + $0x1508] sm:$0xff]
    %v812 = vld [vmem:[#allocation2 + $0x1510] sm:$0xff]
    %v813 = vld [vmem:[#allocation2 + $0x1518] sm:$0xff]
    %v814 = vld [vmem:[#allocation2 + $0x1520] sm:$0xff]
    %v815 = vld [vmem:[#allocation2 + $0x1528] sm:$0xff]
    %v816 = vld [vmem:[#allocation2 + $0x1530] sm:$0xff]
    %v817 = vld [vmem:[#allocation2 + $0x1538] sm:$0xff]
    %v818 = vld [vmem:[#allocation2 + $0x1540] sm:$0xff]
    %v819 = vld [vmem:[#allocation2 + $0x1548] sm:$0xff]
    %v820 = vld [vmem:[#allocation2 + $0x1550] sm:$0xff]
    %v821 = vld [vmem:[#allocation2 + $0x1558] sm:$0xff]
    %v822 = vld [vmem:[#allocation2 + $0x1560] sm:$0xff]
    %v823 = vld [vmem:[#allocation2 + $0x1568] sm:$0xff]
    %v824 = vld [vmem:[#allocation2 + $0x1570] sm:$0xff]
    %v825 = vld [vmem:[#allocation2 + $0x1578] sm:$0xff]
    %v826 = vld [vmem:[#allocation2 + $0x1580] sm:$0xff]
    %v827 = vld [vmem:[#allocation2 + $0x1588] sm:$0xff]
    %v828 = vld [vmem:[#allocation2 + $0x1590] sm:$0xff]
    %v829 = vld [vmem:[#allocation2 + $0x1598] sm:$0xff]
    %v830 = vld [vmem:[#allocation2 + $0x15a0] sm:$0xff]
    %v831 = vld [vmem:[#allocation2 + $0x15a8] sm:$0xff]
    %v832 = vld [vmem:[#allocation2 + $0x15b0] sm:$0xff]
    %v833 = vld [vmem:[#allocation2 + $0x15b8] sm:$0xff]
    %v834 = vld [vmem:[#allocation2 + $0x15c0] sm:$0xff]
    %v835 = vld [vmem:[#allocation2 + $0x15c8] sm:$0xff]
    %v836 = vld [vmem:[#allocation2 + $0x15d0] sm:$0xff]
    %v837 = vld [vmem:[#allocation2 + $0x15d8] sm:$0xff]
    %v838 = vld [vmem:[#allocation2 + $0x15e0] sm:$0xff]
    %v839 = vld [vmem:[#allocation2 + $0x15e8] sm:$0xff]
    %v840 = vld [vmem:[#allocation2 + $0x15f0] sm:$0xff]
    %v841 = vld [vmem:[#allocation2 + $0x15f8] sm:$0xff]
    %v842 = vld [vmem:[#allocation2 + $0x1600] sm:$0xff]
    %v843 = vld [vmem:[#allocation2 + $0x1608] sm:$0xff]
    %v844 = vld [vmem:[#allocation2 + $0x1610] sm:$0xff]
    %v845 = vld [vmem:[#allocation2 + $0x1618] sm:$0xff]
    %v846 = vld [vmem:[#allocation2 + $0x1620] sm:$0xff]
    %v847 = vld [vmem:[#allocation2 + $0x1628] sm:$0xff]
    %v848 = vld [vmem:[#allocation2 + $0x1630] sm:$0xff]
    %v849 = vld [vmem:[#allocation2 + $0x1638] sm:$0xff]
    %v850 = vld [vmem:[#allocation2 + $0x1640] sm:$0xff]
    %v851 = vld [vmem:[#allocation2 + $0x1648] sm:$0xff]
    %v852 = vld [vmem:[#allocation2 + $0x1650] sm:$0xff]
    %v853 = vld [vmem:[#allocation2 + $0x1658] sm:$0xff]
    %v854 = vld [vmem:[#allocation2 + $0x1660] sm:$0xff]
    %v855 = vld [vmem:[#allocation2 + $0x1668] sm:$0xff]
    %v856 = vld [vmem:[#allocation2 + $0x1670] sm:$0xff]
    %v857 = vld [vmem:[#allocation2 + $0x1678] sm:$0xff]
    %v858 = vld [vmem:[#allocation2 + $0x1680] sm:$0xff]
    %v859 = vld [vmem:[#allocation2 + $0x1688] sm:$0xff]
    %v860 = vld [vmem:[#allocation2 + $0x1690] sm:$0xff]
    %v861 = vld [vmem:[#allocation2 + $0x1698] sm:$0xff]
    %v862 = vld [vmem:[#allocation2 + $0x16a0] sm:$0xff]
    %v863 = vld [vmem:[#allocation2 + $0x16a8] sm:$0xff]
    %v864 = vld [vmem:[#allocation2 + $0x16b0] sm:$0xff]
    %v865 = vld [vmem:[#allocation2 + $0x16b8] sm:$0xff]
    %v866 = vld [vmem:[#allocation2 + $0x16c0] sm:$0xff]
    %v867 = vld [vmem:[#allocation2 + $0x16c8] sm:$0xff]
    %v868 = vld [vmem:[#allocation2 + $0x16d0] sm:$0xff]
    %v869 = vld [vmem:[#allocation2 + $0x16d8] sm:$0xff]
    %v870 = vld [vmem:[#allocation2 + $0x16e0] sm:$0xff]
    %v871 = vld [vmem:[#allocation2 + $0x16e8] sm:$0xff]
    %v872 = vld [vmem:[#allocation2 + $0x16f0] sm:$0xff]
    %v873 = vld [vmem:[#allocation2 + $0x16f8] sm:$0xff]
    %v874 = vld [vmem:[#allocation2 + $0x1700] sm:$0xff]
    %v875 = vld [vmem:[#allocation2 + $0x1708] sm:$0xff]
    %v876 = vld [vmem:[#allocation2 + $0x1710] sm:$0xff]
    %v877 = vld [vmem:[#allocation2 + $0x1718] sm:$0xff]
    %v878 = vld [vmem:[#allocation2 + $0x1720] sm:$0xff]
    %v879 = vld [vmem:[#allocation2 + $0x1728] sm:$0xff]
    %v880 = vld [vmem:[#allocation2 + $0x1730] sm:$0xff]
    %v881 = vld [vmem:[#allocation2 + $0x1738] sm:$0xff]
    %v882 = vld [vmem:[#allocation2 + $0x1740] sm:$0xff]
    %v883 = vld [vmem:[#allocation2 + $0x1748] sm:$0xff]
    %v884 = vld [vmem:[#allocation2 + $0x1750] sm:$0xff]
    %v885 = vld [vmem:[#allocation2 + $0x1758] sm:$0xff]
    %v886 = vld [vmem:[#allocation2 + $0x1760] sm:$0xff]
    %v887 = vld [vmem:[#allocation2 + $0x1768] sm:$0xff]
    %v888 = vld [vmem:[#allocation2 + $0x1770] sm:$0xff]
    %v889 = vld [vmem:[#allocation2 + $0x1778] sm:$0xff]
    %v890 = vld [vmem:[#allocation2 + $0x1780] sm:$0xff]
    %v891 = vld [vmem:[#allocation2 + $0x1788] sm:$0xff]
    %v892 = vld [vmem:[#allocation2 + $0x1790] sm:$0xff]
    %v893 = vld [vmem:[#allocation2 + $0x1798] sm:$0xff]
    %v894 = vld [vmem:[#allocation2 + $0x17a0] sm:$0xff]
    %v895 = vld [vmem:[#allocation2 + $0x17a8] sm:$0xff]
    %v896 = vld [vmem:[#allocation2 + $0x17b0] sm:$0xff]
    %v897 = vld [vmem:[#allocation2 + $0x17b8] sm:$0xff]
    %v898 = vld [vmem:[#allocation2 + $0x17c0] sm:$0xff]
    %v899 = vld [vmem:[#allocation2 + $0x17c8] sm:$0xff]
    %v900 = vld [vmem:[#allocation2 + $0x17d0] sm:$0xff]
    %v901 = vld [vmem:[#allocation2 + $0x17d8] sm:$0xff]
    %v902 = vld [vmem:[#allocation2 + $0x17e0] sm:$0xff]
    %v903 = vld [vmem:[#allocation2 + $0x17e8] sm:$0xff]
    %v904 = vld [vmem:[#allocation2 + $0x17f0] sm:$0xff]
    %v905 = vld [vmem:[#allocation2 + $0x17f8] sm:$0xff]
    %v906 = vld [vmem:[#allocation2 + $0x1800] sm:$0xff]
    %v907 = vld [vmem:[#allocation2 + $0x1808] sm:$0xff]
    %v908 = vld [vmem:[#allocation2 + $0x1810] sm:$0xff]
    %v909 = vld [vmem:[#allocation2 + $0x1818] sm:$0xff]
    %v910 = vld [vmem:[#allocation2 + $0x1820] sm:$0xff]
    %v911 = vld [vmem:[#allocation2 + $0x1828] sm:$0xff]
    %v912 = vld [vmem:[#allocation2 + $0x1830] sm:$0xff]
    %v913 = vld [vmem:[#allocation2 + $0x1838] sm:$0xff]
    %v914 = vld [vmem:[#allocation2 + $0x1840] sm:$0xff]
    %v915 = vld [vmem:[#allocation2 + $0x1848] sm:$0xff]
    %v916 = vld [vmem:[#allocation2 + $0x1850] sm:$0xff]
    %v917 = vld [vmem:[#allocation2 + $0x1858] sm:$0xff]
    %v918 = vld [vmem:[#allocation2 + $0x1860] sm:$0xff]
    %v919 = vld [vmem:[#allocation2 + $0x1868] sm:$0xff]
    %v920 = vld [vmem:[#allocation2 + $0x1870] sm:$0xff]
    %v921 = vld [vmem:[#allocation2 + $0x1878] sm:$0xff]
    %v922 = vld [vmem:[#allocation2 + $0x1880] sm:$0xff]
    %v923 = vld [vmem:[#allocation2 + $0x1888] sm:$0xff]
    %v924 = vld [vmem:[#allocation2 + $0x1890] sm:$0xff]
    %v925 = vld [vmem:[#allocation2 + $0x1898] sm:$0xff]
    %v926 = vld [vmem:[#allocation2 + $0x18a0] sm:$0xff]
    %v927 = vld [vmem:[#allocation2 + $0x18a8] sm:$0xff]
    %v928 = vld [vmem:[#allocation2 + $0x18b0] sm:$0xff]
    %v929 = vld [vmem:[#allocation2 + $0x18b8] sm:$0xff]
    %v930 = vld [vmem:[#allocation2 + $0x18c0] sm:$0xff]
    %v931 = vld [vmem:[#allocation2 + $0x18c8] sm:$0xff]
    %v932 = vld [vmem:[#allocation2 + $0x18d0] sm:$0xff]
    %v933 = vld [vmem:[#allocation2 + $0x18d8] sm:$0xff]
    %v934 = vld [vmem:[#allocation2 + $0x18e0] sm:$0xff]
    %v935 = vld [vmem:[#allocation2 + $0x18e8] sm:$0xff]
    %v936 = vld [vmem:[#allocation2 + $0x18f0] sm:$0xff]
    %v937 = vld [vmem:[#allocation2 + $0x18f8] sm:$0xff]
    %v938 = vld [vmem:[#allocation2 + $0x1900] sm:$0xff]
    %v939 = vld [vmem:[#allocation2 + $0x1908] sm:$0xff]
    %v940 = vld [vmem:[#allocation2 + $0x1910] sm:$0xff]
    %v941 = vld [vmem:[#allocation2 + $0x1918] sm:$0xff]
    %v942 = vld [vmem:[#allocation2 + $0x1920] sm:$0xff]
    %v943 = vld [vmem:[#allocation2 + $0x1928] sm:$0xff]
    %v944 = vld [vmem:[#allocation2 + $0x1930] sm:$0xff]
    %v945 = vld [vmem:[#allocation2 + $0x1938] sm:$0xff]
    %v946 = vld [vmem:[#allocation2 + $0x1940] sm:$0xff]
    %v947 = vld [vmem:[#allocation2 + $0x1948] sm:$0xff]
    %v948 = vld [vmem:[#allocation2 + $0x1950] sm:$0xff]
    %v949 = vld [vmem:[#allocation2 + $0x1958] sm:$0xff]
    %v950 = vld [vmem:[#allocation2 + $0x1960] sm:$0xff]
    %v951 = vld [vmem:[#allocation2 + $0x1968] sm:$0xff]
    %v952 = vld [vmem:[#allocation2 + $0x1970] sm:$0xff]
    %v953 = vld [vmem:[#allocation2 + $0x1978] sm:$0xff]
    %v954 = vld [vmem:[#allocation2 + $0x1980] sm:$0xff]
    %v955 = vld [vmem:[#allocation2 + $0x1988] sm:$0xff]
    %v956 = vld [vmem:[#allocation2 + $0x1990] sm:$0xff]
    %v957 = vld [vmem:[#allocation2 + $0x1998] sm:$0xff]
    %v958 = vld [vmem:[#allocation2 + $0x19a0] sm:$0xff]
    %v959 = vld [vmem:[#allocation2 + $0x19a8] sm:$0xff]
    %v960 = vld [vmem:[#allocation2 + $0x19b0] sm:$0xff]
    %v961 = vld [vmem:[#allocation2 + $0x19b8] sm:$0xff]
    %v962 = vld [vmem:[#allocation2 + $0x19c0] sm:$0xff]
    %v963 = vld [vmem:[#allocation2 + $0x19c8] sm:$0xff]
    %v964 = vld [vmem:[#allocation2 + $0x19d0] sm:$0xff]
    %v965 = vld [vmem:[#allocation2 + $0x19d8] sm:$0xff]
    %v966 = vld [vmem:[#allocation2 + $0x19e0] sm:$0xff]
    %v967 = vld [vmem:[#allocation2 + $0x19e8] sm:$0xff]
    %v968 = vld [vmem:[#allocation2 + $0x19f0] sm:$0xff]
    %v969 = vld [vmem:[#allocation2 + $0x19f8] sm:$0xff]
    %v970 = vld [vmem:[#allocation2 + $0x1a00] sm:$0xff]
    %v971 = vld [vmem:[#allocation2 + $0x1a08] sm:$0xff]
    %v972 = vld [vmem:[#allocation2 + $0x1a10] sm:$0xff]
    %v973 = vld [vmem:[#allocation2 + $0x1a18] sm:$0xff]
    %v974 = vld [vmem:[#allocation2 + $0x1a20] sm:$0xff]
    %v975 = vld [vmem:[#allocation2 + $0x1a28] sm:$0xff]
    %v976 = vld [vmem:[#allocation2 + $0x1a30] sm:$0xff]
    %v977 = vld [vmem:[#allocation2 + $0x1a38] sm:$0xff]
    %v978 = vld [vmem:[#allocation2 + $0x1a40] sm:$0xff]
    %v979 = vld [vmem:[#allocation2 + $0x1a48] sm:$0xff]
    %v980 = vld [vmem:[#allocation2 + $0x1a50] sm:$0xff]
    %v981 = vld [vmem:[#allocation2 + $0x1a58] sm:$0xff]
    %v982 = vld [vmem:[#allocation2 + $0x1a60] sm:$0xff]
    %v983 = vld [vmem:[#allocation2 + $0x1a68] sm:$0xff]
    %v984 = vld [vmem:[#allocation2 + $0x1a70] sm:$0xff]
    %v985 = vld [vmem:[#allocation2 + $0x1a78] sm:$0xff]
    %v986 = vld [vmem:[#allocation2 + $0x1a80] sm:$0xff]
    %v987 = vld [vmem:[#allocation2 + $0x1a88] sm:$0xff]
    %v988 = vld [vmem:[#allocation2 + $0x1a90] sm:$0xff]
    %v989 = vld [vmem:[#allocation2 + $0x1a98] sm:$0xff]
    %v990 = vld [vmem:[#allocation2 + $0x1aa0] sm:$0xff]
    %v991 = vld [vmem:[#allocation2 + $0x1aa8] sm:$0xff]
    %v992 = vld [vmem:[#allocation2 + $0x1ab0] sm:$0xff]
    %v993 = vld [vmem:[#allocation2 + $0x1ab8] sm:$0xff]
    %v994 = vld [vmem:[#allocation2 + $0x1ac0] sm:$0xff]
    %v995 = vld [vmem:[#allocation2 + $0x1ac8] sm:$0xff]
    %v996 = vld [vmem:[#allocation2 + $0x1ad0] sm:$0xff]
    %v997 = vld [vmem:[#allocation2 + $0x1ad8] sm:$0xff]
    %v998 = vld [vmem:[#allocation2 + $0x1ae0] sm:$0xff]
    %v999 = vld [vmem:[#allocation2 + $0x1ae8] sm:$0xff]
    %v1000 = vld [vmem:[#allocation2 + $0x1af0] sm:$0xff]
    %v1001 = vld [vmem:[#allocation2 + $0x1af8] sm:$0xff]
    %v1002 = vld [vmem:[#allocation2 + $0x1b00] sm:$0xff]
    %v1003 = vld [vmem:[#allocation2 + $0x1b08] sm:$0xff]
    %v1004 = vld [vmem:[#allocation2 + $0x1b10] sm:$0xff]
    %v1005 = vld [vmem:[#allocation2 + $0x1b18] sm:$0xff]
    %v1006 = vld [vmem:[#allocation2 + $0x1b20] sm:$0xff]
    %v1007 = vld [vmem:[#allocation2 + $0x1b28] sm:$0xff]
    %v1008 = vld [vmem:[#allocation2 + $0x1b30] sm:$0xff]
    %v1009 = vld [vmem:[#allocation2 + $0x1b38] sm:$0xff]
    %v1010 = vld [vmem:[#allocation2 + $0x1b40] sm:$0xff]
    %v1011 = vld [vmem:[#allocation2 + $0x1b48] sm:$0xff]
    %v1012 = vld [vmem:[#allocation2 + $0x1b50] sm:$0xff]
    %v1013 = vld [vmem:[#allocation2 + $0x1b58] sm:$0xff]
    %v1014 = vld [vmem:[#allocation2 + $0x1b60] sm:$0xff]
    %v1015 = vld [vmem:[#allocation2 + $0x1b68] sm:$0xff]
    %v1016 = vld [vmem:[#allocation2 + $0x1b70] sm:$0xff]
    %v1017 = vld [vmem:[#allocation2 + $0x1b78] sm:$0xff]
    %v1018 = vld [vmem:[#allocation2 + $0x1b80] sm:$0xff]
    %v1019 = vld [vmem:[#allocation2 + $0x1b88] sm:$0xff]
    %v1020 = vld [vmem:[#allocation2 + $0x1b90] sm:$0xff]
    %v1021 = vld [vmem:[#allocation2 + $0x1b98] sm:$0xff]
    %v1022 = vld [vmem:[#allocation2 + $0x1ba0] sm:$0xff]
    %v1023 = vld [vmem:[#allocation2 + $0x1ba8] sm:$0xff]
    %v1024 = vld [vmem:[#allocation2 + $0x1bb0] sm:$0xff]
    %v1025 = vld [vmem:[#allocation2 + $0x1bb8] sm:$0xff]
    %v1026 = vld [vmem:[#allocation2 + $0x1bc0] sm:$0xff]
    %v1027 = vld [vmem:[#allocation2 + $0x1bc8] sm:$0xff]
    %v1028 = vld [vmem:[#allocation2 + $0x1bd0] sm:$0xff]
    %v1029 = vld [vmem:[#allocation2 + $0x1bd8] sm:$0xff]
    %v1030 = vld [vmem:[#allocation2 + $0x1be0] sm:$0xff]
    %v1031 = vld [vmem:[#allocation2 + $0x1be8] sm:$0xff]
    %v1032 = vld [vmem:[#allocation2 + $0x1bf0] sm:$0xff]
    %v1033 = vld [vmem:[#allocation2 + $0x1bf8] sm:$0xff]
    %v1034 = vld [vmem:[#allocation2 + $0x1c00] sm:$0xff]
    %v1035 = vld [vmem:[#allocation2 + $0x1c08] sm:$0xff]
    %v1036 = vld [vmem:[#allocation2 + $0x1c10] sm:$0xff]
    %v1037 = vld [vmem:[#allocation2 + $0x1c18] sm:$0xff]
    %v1038 = vld [vmem:[#allocation2 + $0x1c20] sm:$0xff]
    %v1039 = vld [vmem:[#allocation2 + $0x1c28] sm:$0xff]
    %v1040 = vld [vmem:[#allocation2 + $0x1c30] sm:$0xff]
    %v1041 = vld [vmem:[#allocation2 + $0x1c38] sm:$0xff]
    %v1042 = vld [vmem:[#allocation2 + $0x1c40] sm:$0xff]
    %v1043 = vld [vmem:[#allocation2 + $0x1c48] sm:$0xff]
    %v1044 = vld [vmem:[#allocation2 + $0x1c50] sm:$0xff]
    %v1045 = vld [vmem:[#allocation2 + $0x1c58] sm:$0xff]
    %v1046 = vld [vmem:[#allocation2 + $0x1c60] sm:$0xff]
    %v1047 = vld [vmem:[#allocation2 + $0x1c68] sm:$0xff]
    %v1048 = vld [vmem:[#allocation2 + $0x1c70] sm:$0xff]
    %v1049 = vld [vmem:[#allocation2 + $0x1c78] sm:$0xff]
    %v1050 = vld [vmem:[#allocation2 + $0x1c80] sm:$0xff]
    %v1051 = vld [vmem:[#allocation2 + $0x1c88] sm:$0xff]
    %v1052 = vld [vmem:[#allocation2 + $0x1c90] sm:$0xff]
    %v1053 = vld [vmem:[#allocation2 + $0x1c98] sm:$0xff]
    %v1054 = vld [vmem:[#allocation2 + $0x1ca0] sm:$0xff]
    %v1055 = vld [vmem:[#allocation2 + $0x1ca8] sm:$0xff]
    %v1056 = vld [vmem:[#allocation2 + $0x1cb0] sm:$0xff]
    %v1057 = vld [vmem:[#allocation2 + $0x1cb8] sm:$0xff]
    %v1058 = vld [vmem:[#allocation2 + $0x1cc0] sm:$0xff]
    %v1059 = vld [vmem:[#allocation2 + $0x1cc8] sm:$0xff]
    %v1060 = vld [vmem:[#allocation2 + $0x1cd0] sm:$0xff]
    %v1061 = vld [vmem:[#allocation2 + $0x1cd8] sm:$0xff]
    %v1062 = vld [vmem:[#allocation2 + $0x1ce0] sm:$0xff]
    %v1063 = vld [vmem:[#allocation2 + $0x1ce8] sm:$0xff]
    %v1064 = vld [vmem:[#allocation2 + $0x1cf0] sm:$0xff]
    %v1065 = vld [vmem:[#allocation2 + $0x1cf8] sm:$0xff]
    %v1066 = vld [vmem:[#allocation2 + $0x1d00] sm:$0xff]
    %v1067 = vld [vmem:[#allocation2 + $0x1d08] sm:$0xff]
    %v1068 = vld [vmem:[#allocation2 + $0x1d10] sm:$0xff]
    %v1069 = vld [vmem:[#allocation2 + $0x1d18] sm:$0xff]
    %v1070 = vld [vmem:[#allocation2 + $0x1d20] sm:$0xff]
    %v1071 = vld [vmem:[#allocation2 + $0x1d28] sm:$0xff]
    %v1072 = vld [vmem:[#allocation2 + $0x1d30] sm:$0xff]
    %v1073 = vld [vmem:[#allocation2 + $0x1d38] sm:$0xff]
    %v1074 = vld [vmem:[#allocation2 + $0x1d40] sm:$0xff]
    %v1075 = vld [vmem:[#allocation2 + $0x1d48] sm:$0xff]
    %v1076 = vld [vmem:[#allocation2 + $0x1d50] sm:$0xff]
    %v1077 = vld [vmem:[#allocation2 + $0x1d58] sm:$0xff]
    %v1078 = vld [vmem:[#allocation2 + $0x1d60] sm:$0xff]
    %v1079 = vld [vmem:[#allocation2 + $0x1d68] sm:$0xff]
    %v1080 = vld [vmem:[#allocation2 + $0x1d70] sm:$0xff]
    %v1081 = vld [vmem:[#allocation2 + $0x1d78] sm:$0xff]
    %v1082 = vld [vmem:[#allocation2 + $0x1d80] sm:$0xff]
    %v1083 = vld [vmem:[#allocation2 + $0x1d88] sm:$0xff]
    %v1084 = vld [vmem:[#allocation2 + $0x1d90] sm:$0xff]
    %v1085 = vld [vmem:[#allocation2 + $0x1d98] sm:$0xff]
    %v1086 = vld [vmem:[#allocation2 + $0x1da0] sm:$0xff]
    %v1087 = vld [vmem:[#allocation2 + $0x1da8] sm:$0xff]
    %v1088 = vld [vmem:[#allocation2 + $0x1db0] sm:$0xff]
    %v1089 = vld [vmem:[#allocation2 + $0x1db8] sm:$0xff]
    %v1090 = vld [vmem:[#allocation2 + $0x1dc0] sm:$0xff]
    %v1091 = vld [vmem:[#allocation2 + $0x1dc8] sm:$0xff]
    %v1092 = vld [vmem:[#allocation2 + $0x1dd0] sm:$0xff]
    %v1093 = vld [vmem:[#allocation2 + $0x1dd8] sm:$0xff]
    %v1094 = vld [vmem:[#allocation2 + $0x1de0] sm:$0xff]
    %v1095 = vld [vmem:[#allocation2 + $0x1de8] sm:$0xff]
    %v1096 = vld [vmem:[#allocation2 + $0x1df0] sm:$0xff]
    %v1097 = vld [vmem:[#allocation2 + $0x1df8] sm:$0xff]
    %v1098 = vld [vmem:[#allocation2 + $0x1e00] sm:$0xff]
    %v1099 = vld [vmem:[#allocation2 + $0x1e08] sm:$0xff]
    %v1100 = vld [vmem:[#allocation2 + $0x1e10] sm:$0xff]
    %v1101 = vld [vmem:[#allocation2 + $0x1e18] sm:$0xff]
    %v1102 = vld [vmem:[#allocation2 + $0x1e20] sm:$0xff]
    %v1103 = vld [vmem:[#allocation2 + $0x1e28] sm:$0xff]
    %v1104 = vld [vmem:[#allocation2 + $0x1e30] sm:$0xff]
    %v1105 = vld [vmem:[#allocation2 + $0x1e38] sm:$0xff]
    %v1106 = vld [vmem:[#allocation2 + $0x1e40] sm:$0xff]
    %v1107 = vld [vmem:[#allocation2 + $0x1e48] sm:$0xff]
    %v1108 = vld [vmem:[#allocation2 + $0x1e50] sm:$0xff]
    %v1109 = vld [vmem:[#allocation2 + $0x1e58] sm:$0xff]
    %v1110 = vld [vmem:[#allocation2 + $0x1e60] sm:$0xff]
    %v1111 = vld [vmem:[#allocation2 + $0x1e68] sm:$0xff]
    %v1112 = vld [vmem:[#allocation2 + $0x1e70] sm:$0xff]
    %v1113 = vld [vmem:[#allocation2 + $0x1e78] sm:$0xff]
    %v1114 = vld [vmem:[#allocation2 + $0x1e80] sm:$0xff]
    %v1115 = vld [vmem:[#allocation2 + $0x1e88] sm:$0xff]
    %v1116 = vld [vmem:[#allocation2 + $0x1e90] sm:$0xff]
    %v1117 = vld [vmem:[#allocation2 + $0x1e98] sm:$0xff]
    %v1118 = vld [vmem:[#allocation2 + $0x1ea0] sm:$0xff]
    %v1119 = vld [vmem:[#allocation2 + $0x1ea8] sm:$0xff]
    %v1120 = vld [vmem:[#allocation2 + $0x1eb0] sm:$0xff]
    %v1121 = vld [vmem:[#allocation2 + $0x1eb8] sm:$0xff]
    %v1122 = vld [vmem:[#allocation2 + $0x1ec0] sm:$0xff]
    %v1123 = vld [vmem:[#allocation2 + $0x1ec8] sm:$0xff]
    %v1124 = vld [vmem:[#allocation2 + $0x1ed0] sm:$0xff]
    %v1125 = vld [vmem:[#allocation2 + $0x1ed8] sm:$0xff]
    %v1126 = vld [vmem:[#allocation2 + $0x1ee0] sm:$0xff]
    %v1127 = vld [vmem:[#allocation2 + $0x1ee8] sm:$0xff]
    %v1128 = vld [vmem:[#allocation2 + $0x1ef0] sm:$0xff]
    %v1129 = vld [vmem:[#allocation2 + $0x1ef8] sm:$0xff]
    %v1130 = vld [vmem:[#allocation2 + $0x1f00] sm:$0xff]
    %v1131 = vld [vmem:[#allocation2 + $0x1f08] sm:$0xff]
    %v1132 = vld [vmem:[#allocation2 + $0x1f10] sm:$0xff]
    %v1133 = vld [vmem:[#allocation2 + $0x1f18] sm:$0xff]
    %v1134 = vld [vmem:[#allocation2 + $0x1f20] sm:$0xff]
    %v1135 = vld [vmem:[#allocation2 + $0x1f28] sm:$0xff]
    %v1136 = vld [vmem:[#allocation2 + $0x1f30] sm:$0xff]
    %v1137 = vld [vmem:[#allocation2 + $0x1f38] sm:$0xff]
    %v1138 = vld [vmem:[#allocation2 + $0x1f40] sm:$0xff]
    %v1139 = vld [vmem:[#allocation2 + $0x1f48] sm:$0xff]
    %v1140 = vld [vmem:[#allocation2 + $0x1f50] sm:$0xff]
    %v1141 = vld [vmem:[#allocation2 + $0x1f58] sm:$0xff]
    %v1142 = vld [vmem:[#allocation2 + $0x1f60] sm:$0xff]
    %v1143 = vld [vmem:[#allocation2 + $0x1f68] sm:$0xff]
    %v1144 = vld [vmem:[#allocation2 + $0x1f70] sm:$0xff]
    %v1145 = vld [vmem:[#allocation2 + $0x1f78] sm:$0xff]
    %v1146 = vld [vmem:[#allocation2 + $0x1f80] sm:$0xff]
    %v1147 = vld [vmem:[#allocation2 + $0x1f88] sm:$0xff]
    %v1148 = vld [vmem:[#allocation2 + $0x1f90] sm:$0xff]
    %v1149 = vld [vmem:[#allocation2 + $0x1f98] sm:$0xff]
    %v1150 = vld [vmem:[#allocation2 + $0x1fa0] sm:$0xff]
    %v1151 = vld [vmem:[#allocation2 + $0x1fa8] sm:$0xff]
    %v1152 = vld [vmem:[#allocation2 + $0x1fb0] sm:$0xff]
    %v1153 = vld [vmem:[#allocation2 + $0x1fb8] sm:$0xff]
    %v1154 = vld [vmem:[#allocation2 + $0x1fc0] sm:$0xff]
    %v1155 = vld [vmem:[#allocation2 + $0x1fc8] sm:$0xff]
    %v1156 = vld [vmem:[#allocation2 + $0x1fd0] sm:$0xff]
    %v1157 = vld [vmem:[#allocation2 + $0x1fd8] sm:$0xff]
    %v1158 = vld [vmem:[#allocation2 + $0x1fe0] sm:$0xff]
    %v1159 = vld [vmem:[#allocation2 + $0x1fe8] sm:$0xff]
    %v1160 = vld [vmem:[#allocation2 + $0x1ff0] sm:$0xff]
    %v1161 = vld [vmem:[#allocation2 + $0x1ff8] sm:$0xff]
    %v1162 = vld [vmem:[#allocation4] sm:$0xff]
    %v1163 = vld [vmem:[#allocation4 + $0x8] sm:$0xff]
    %v1166 = vlaneseq
    %v1167 = vshrl.u32 %v1166, 7
    %v1168 = vsub.s32 0, %v1167
    %v1169 = vrot.slane %v1162, %v1168
    %v1170 = vlaneseq
    %v1171 = vshrl.u32 %v1170, 7
    %v1172 = vsub.s32 1, %v1171
    %v1173 = vrot.slane %v1162, %v1172
    %v1174 = vlaneseq
    %v1175 = vshrl.u32 %v1174, 7
    %v1176 = vsub.s32 2, %v1175
    %v1177 = vrot.slane %v1162, %v1176
    %v1178 = vlaneseq
    %v1179 = vshrl.u32 %v1178, 7
    %v1180 = vsub.s32 3, %v1179
    %v1181 = vrot.slane %v1162, %v1180
    %v1182 = vlaneseq
    %v1183 = vshrl.u32 %v1182, 7
    %v1184 = vsub.s32 4, %v1183
    %v1185 = vrot.slane %v1162, %v1184
    %v1186 = vlaneseq
    %v1187 = vshrl.u32 %v1186, 7
    %v1188 = vsub.s32 5, %v1187
    %v1189 = vrot.slane %v1162, %v1188
    %v1190 = vlaneseq
    %v1191 = vshrl.u32 %v1190, 7
    %v1192 = vsub.s32 6, %v1191
    %v1193 = vrot.slane %v1162, %v1192
    %v1194 = vlaneseq
    %v1195 = vshrl.u32 %v1194, 7
    %v1196 = vsub.s32 7, %v1195
    %v1197 = vrot.slane %v1162, %v1196
    %v1198 = vlaneseq
    %v1199 = vshrl.u32 %v1198, 7
    %v1200 = vsub.s32 0, %v1199
    %v1201 = vrot.slane %v1163, %v1200
    %v1202 = vlaneseq
    %v1203 = vshrl.u32 %v1202, 7
    %v1204 = vsub.s32 1, %v1203
    %v1205 = vrot.slane %v1163, %v1204
    %v1206 = vlaneseq
    %v1207 = vshrl.u32 %v1206, 7
    %v1208 = vsub.s32 2, %v1207
    %v1209 = vrot.slane %v1163, %v1208
    %v1210 = vlaneseq
    %v1211 = vshrl.u32 %v1210, 7
    %v1212 = vsub.s32 3, %v1211
    %v1213 = vrot.slane %v1163, %v1212
    %v1214 = vlaneseq
    %v1215 = vshrl.u32 %v1214, 7
    %v1216 = vsub.s32 4, %v1215
    %v1217 = vrot.slane %v1163, %v1216
    %v1218 = vlaneseq
    %v1219 = vshrl.u32 %v1218, 7
    %v1220 = vsub.s32 5, %v1219
    %v1221 = vrot.slane %v1163, %v1220
    %v1222 = vlaneseq
    %v1223 = vshrl.u32 %v1222, 7
    %v1224 = vsub.s32 6, %v1223
    %v1225 = vrot.slane %v1163, %v1224
    %v1226 = vlaneseq
    %v1227 = vshrl.u32 %v1226, 7
    %v1228 = vsub.s32 7, %v1227
    %v1229 = vrot.slane %v1163, %v1228
    %v1250 = vunpack.c.l.b16 %v134
    %v1251 = vunpack.c.h.b16 %v134
    %v1252 = vunpack.c.l.b16 %v135
    %v1253 = vunpack.c.h.b16 %v135
    %v1254 = vunpack.c.l.b16 %v136
    %v1255 = vunpack.c.h.b16 %v136
    %v1256 = vunpack.c.l.b16 %v137
    %v1257 = vunpack.c.h.b16 %v137
    %v1258 = vpack.c.b16 %v1250, %v1250
    %v1259 = vpack.c.b16 %v1251, %v1251
    %v1260 = vpack.c.b16 %v1252, %v1252
    %v1261 = vpack.c.b16 %v1253, %v1253
    %v1262 = vpack.c.b16 %v1254, %v1254
    %v1263 = vpack.c.b16 %v1255, %v1255
    %v1264 = vpack.c.b16 %v1256, %v1256
    %v1265 = vpack.c.b16 %v1257, %v1257
    %v2298 = vunpack.c.l.b16 %v138
    %v2299 = vunpack.c.h.b16 %v138
    %v2300 = vunpack.c.l.b16 %v139
    %v2301 = vunpack.c.h.b16 %v139
    %v2302 = vunpack.c.l.b16 %v140
    %v2303 = vunpack.c.h.b16 %v140
    %v2304 = vunpack.c.l.b16 %v141
    %v2305 = vunpack.c.h.b16 %v141
    %v2306 = vunpack.c.l.b16 %v142
    %v2307 = vunpack.c.h.b16 %v142
    %v2308 = vunpack.c.l.b16 %v143
    %v2309 = vunpack.c.h.b16 %v143
    %v2310 = vunpack.c.l.b16 %v144
    %v2311 = vunpack.c.h.b16 %v144
    %v2312 = vunpack.c.l.b16 %v145
    %v2313 = vunpack.c.h.b16 %v145
    %v2314 = vunpack.c.l.b16 %v146
    %v2315 = vunpack.c.h.b16 %v146
    %v2316 = vunpack.c.l.b16 %v147
    %v2317 = vunpack.c.h.b16 %v147
    %v2318 = vunpack.c.l.b16 %v148
    %v2319 = vunpack.c.h.b16 %v148
    %v2320 = vunpack.c.l.b16 %v149
    %v2321 = vunpack.c.h.b16 %v149
    %v2322 = vunpack.c.l.b16 %v150
    %v2323 = vunpack.c.h.b16 %v150
    %v2324 = vunpack.c.l.b16 %v151
    %v2325 = vunpack.c.h.b16 %v151
    %v2326 = vunpack.c.l.b16 %v152
    %v2327 = vunpack.c.h.b16 %v152
    %v2328 = vunpack.c.l.b16 %v153
    %v2329 = vunpack.c.h.b16 %v153
    %v2330 = vunpack.c.l.b16 %v154
    %v2331 = vunpack.c.h.b16 %v154
    %v2332 = vunpack.c.l.b16 %v155
    %v2333 = vunpack.c.h.b16 %v155
    %v2334 = vunpack.c.l.b16 %v156
    %v2335 = vunpack.c.h.b16 %v156
    %v2336 = vunpack.c.l.b16 %v157
    %v2337 = vunpack.c.h.b16 %v157
    %v2338 = vunpack.c.l.b16 %v158
    %v2339 = vunpack.c.h.b16 %v158
    %v2340 = vunpack.c.l.b16 %v159
    %v2341 = vunpack.c.h.b16 %v159
    %v2342 = vunpack.c.l.b16 %v160
    %v2343 = vunpack.c.h.b16 %v160
    %v2344 = vunpack.c.l.b16 %v161
    %v2345 = vunpack.c.h.b16 %v161
    %v2346 = vunpack.c.l.b16 %v162
    %v2347 = vunpack.c.h.b16 %v162
    %v2348 = vunpack.c.l.b16 %v163
    %v2349 = vunpack.c.h.b16 %v163
    %v2350 = vunpack.c.l.b16 %v164
    %v2351 = vunpack.c.h.b16 %v164
    %v2352 = vunpack.c.l.b16 %v165
    %v2353 = vunpack.c.h.b16 %v165
    %v2354 = vunpack.c.l.b16 %v166
    %v2355 = vunpack.c.h.b16 %v166
    %v2356 = vunpack.c.l.b16 %v167
    %v2357 = vunpack.c.h.b16 %v167
    %v2358 = vunpack.c.l.b16 %v168
    %v2359 = vunpack.c.h.b16 %v168
    %v2360 = vunpack.c.l.b16 %v169
    %v2361 = vunpack.c.h.b16 %v169
    %v2362 = vunpack.c.l.b16 %v170
    %v2363 = vunpack.c.h.b16 %v170
    %v2364 = vunpack.c.l.b16 %v171
    %v2365 = vunpack.c.h.b16 %v171
    %v2366 = vunpack.c.l.b16 %v172
    %v2367 = vunpack.c.h.b16 %v172
    %v2368 = vunpack.c.l.b16 %v173
    %v2369 = vunpack.c.h.b16 %v173
    %v2370 = vunpack.c.l.b16 %v174
    %v2371 = vunpack.c.h.b16 %v174
    %v2372 = vunpack.c.l.b16 %v175
    %v2373 = vunpack.c.h.b16 %v175
    %v2374 = vunpack.c.l.b16 %v176
    %v2375 = vunpack.c.h.b16 %v176
    %v2376 = vunpack.c.l.b16 %v177
    %v2377 = vunpack.c.h.b16 %v177
    %v2378 = vunpack.c.l.b16 %v178
    %v2379 = vunpack.c.h.b16 %v178
    %v2380 = vunpack.c.l.b16 %v179
    %v2381 = vunpack.c.h.b16 %v179
    %v2382 = vunpack.c.l.b16 %v180
    %v2383 = vunpack.c.h.b16 %v180
    %v2384 = vunpack.c.l.b16 %v181
    %v2385 = vunpack.c.h.b16 %v181
    %v2386 = vunpack.c.l.b16 %v182
    %v2387 = vunpack.c.h.b16 %v182
    %v2388 = vunpack.c.l.b16 %v183
    %v2389 = vunpack.c.h.b16 %v183
    %v2390 = vunpack.c.l.b16 %v184
    %v2391 = vunpack.c.h.b16 %v184
    %v2392 = vunpack.c.l.b16 %v185
    %v2393 = vunpack.c.h.b16 %v185
    %v2394 = vunpack.c.l.b16 %v186
    %v2395 = vunpack.c.h.b16 %v186
    %v2396 = vunpack.c.l.b16 %v187
    %v2397 = vunpack.c.h.b16 %v187
    %v2398 = vunpack.c.l.b16 %v188
    %v2399 = vunpack.c.h.b16 %v188
    %v2400 = vunpack.c.l.b16 %v189
    %v2401 = vunpack.c.h.b16 %v189
    %v2402 = vunpack.c.l.b16 %v190
    %v2403 = vunpack.c.h.b16 %v190
    %v2404 = vunpack.c.l.b16 %v191
    %v2405 = vunpack.c.h.b16 %v191
    %v2406 = vunpack.c.l.b16 %v192
    %v2407 = vunpack.c.h.b16 %v192
    %v2408 = vunpack.c.l.b16 %v193
    %v2409 = vunpack.c.h.b16 %v193
    %v2410 = vunpack.c.l.b16 %v194
    %v2411 = vunpack.c.h.b16 %v194
    %v2412 = vunpack.c.l.b16 %v195
    %v2413 = vunpack.c.h.b16 %v195
    %v2414 = vunpack.c.l.b16 %v196
    %v2415 = vunpack.c.h.b16 %v196
    %v2416 = vunpack.c.l.b16 %v197
    %v2417 = vunpack.c.h.b16 %v197
    %v2418 = vunpack.c.l.b16 %v198
    %v2419 = vunpack.c.h.b16 %v198
    %v2420 = vunpack.c.l.b16 %v199
    %v2421 = vunpack.c.h.b16 %v199
    %v2422 = vunpack.c.l.b16 %v200
    %v2423 = vunpack.c.h.b16 %v200
    %v2424 = vunpack.c.l.b16 %v201
    %v2425 = vunpack.c.h.b16 %v201
    %v2426 = vunpack.c.l.b16 %v202
    %v2427 = vunpack.c.h.b16 %v202
    %v2428 = vunpack.c.l.b16 %v203
    %v2429 = vunpack.c.h.b16 %v203
    %v2430 = vunpack.c.l.b16 %v204
    %v2431 = vunpack.c.h.b16 %v204
    %v2432 = vunpack.c.l.b16 %v205
    %v2433 = vunpack.c.h.b16 %v205
    %v2434 = vunpack.c.l.b16 %v206
    %v2435 = vunpack.c.h.b16 %v206
    %v2436 = vunpack.c.l.b16 %v207
    %v2437 = vunpack.c.h.b16 %v207
    %v2438 = vunpack.c.l.b16 %v208
    %v2439 = vunpack.c.h.b16 %v208
    %v2440 = vunpack.c.l.b16 %v209
    %v2441 = vunpack.c.h.b16 %v209
    %v2442 = vunpack.c.l.b16 %v210
    %v2443 = vunpack.c.h.b16 %v210
    %v2444 = vunpack.c.l.b16 %v211
    %v2445 = vunpack.c.h.b16 %v211
    %v2446 = vunpack.c.l.b16 %v212
    %v2447 = vunpack.c.h.b16 %v212
    %v2448 = vunpack.c.l.b16 %v213
    %v2449 = vunpack.c.h.b16 %v213
    %v2450 = vunpack.c.l.b16 %v214
    %v2451 = vunpack.c.h.b16 %v214
    %v2452 = vunpack.c.l.b16 %v215
    %v2453 = vunpack.c.h.b16 %v215
    %v2454 = vunpack.c.l.b16 %v216
    %v2455 = vunpack.c.h.b16 %v216
    %v2456 = vunpack.c.l.b16 %v217
    %v2457 = vunpack.c.h.b16 %v217
    %v2458 = vunpack.c.l.b16 %v218
    %v2459 = vunpack.c.h.b16 %v218
    %v2460 = vunpack.c.l.b16 %v219
    %v2461 = vunpack.c.h.b16 %v219
    %v2462 = vunpack.c.l.b16 %v220
    %v2463 = vunpack.c.h.b16 %v220
    %v2464 = vunpack.c.l.b16 %v221
    %v2465 = vunpack.c.h.b16 %v221
    %v2466 = vunpack.c.l.b16 %v222
    %v2467 = vunpack.c.h.b16 %v222
    %v2468 = vunpack.c.l.b16 %v223
    %v2469 = vunpack.c.h.b16 %v223
    %v2470 = vunpack.c.l.b16 %v224
    %v2471 = vunpack.c.h.b16 %v224
    %v2472 = vunpack.c.l.b16 %v225
    %v2473 = vunpack.c.h.b16 %v225
    %v2474 = vunpack.c.l.b16 %v226
    %v2475 = vunpack.c.h.b16 %v226
    %v2476 = vunpack.c.l.b16 %v227
    %v2477 = vunpack.c.h.b16 %v227
    %v2478 = vunpack.c.l.b16 %v228
    %v2479 = vunpack.c.h.b16 %v228
    %v2480 = vunpack.c.l.b16 %v229
    %v2481 = vunpack.c.h.b16 %v229
    %v2482 = vunpack.c.l.b16 %v230
    %v2483 = vunpack.c.h.b16 %v230
    %v2484 = vunpack.c.l.b16 %v231
    %v2485 = vunpack.c.h.b16 %v231
    %v2486 = vunpack.c.l.b16 %v232
    %v2487 = vunpack.c.h.b16 %v232
    %v2488 = vunpack.c.l.b16 %v233
    %v2489 = vunpack.c.h.b16 %v233
    %v2490 = vunpack.c.l.b16 %v234
    %v2491 = vunpack.c.h.b16 %v234
    %v2492 = vunpack.c.l.b16 %v235
    %v2493 = vunpack.c.h.b16 %v235
    %v2494 = vunpack.c.l.b16 %v236
    %v2495 = vunpack.c.h.b16 %v236
    %v2496 = vunpack.c.l.b16 %v237
    %v2497 = vunpack.c.h.b16 %v237
    %v2498 = vunpack.c.l.b16 %v238
    %v2499 = vunpack.c.h.b16 %v238
    %v2500 = vunpack.c.l.b16 %v239
    %v2501 = vunpack.c.h.b16 %v239
    %v2502 = vunpack.c.l.b16 %v240
    %v2503 = vunpack.c.h.b16 %v240
    %v2504 = vunpack.c.l.b16 %v241
    %v2505 = vunpack.c.h.b16 %v241
    %v2506 = vunpack.c.l.b16 %v242
    %v2507 = vunpack.c.h.b16 %v242
    %v2508 = vunpack.c.l.b16 %v243
    %v2509 = vunpack.c.h.b16 %v243
    %v2510 = vunpack.c.l.b16 %v244
    %v2511 = vunpack.c.h.b16 %v244
    %v2512 = vunpack.c.l.b16 %v245
    %v2513 = vunpack.c.h.b16 %v245
    %v2514 = vunpack.c.l.b16 %v246
    %v2515 = vunpack.c.h.b16 %v246
    %v2516 = vunpack.c.l.b16 %v247
    %v2517 = vunpack.c.h.b16 %v247
    %v2518 = vunpack.c.l.b16 %v248
    %v2519 = vunpack.c.h.b16 %v248
    %v2520 = vunpack.c.l.b16 %v249
    %v2521 = vunpack.c.h.b16 %v249
    %v2522 = vunpack.c.l.b16 %v250
    %v2523 = vunpack.c.h.b16 %v250
    %v2524 = vunpack.c.l.b16 %v251
    %v2525 = vunpack.c.h.b16 %v251
    %v2526 = vunpack.c.l.b16 %v252
    %v2527 = vunpack.c.h.b16 %v252
    %v2528 = vunpack.c.l.b16 %v253
    %v2529 = vunpack.c.h.b16 %v253
    %v2530 = vunpack.c.l.b16 %v254
    %v2531 = vunpack.c.h.b16 %v254
    %v2532 = vunpack.c.l.b16 %v255
    %v2533 = vunpack.c.h.b16 %v255
    %v2534 = vunpack.c.l.b16 %v256
    %v2535 = vunpack.c.h.b16 %v256
    %v2536 = vunpack.c.l.b16 %v257
    %v2537 = vunpack.c.h.b16 %v257
    %v2538 = vunpack.c.l.b16 %v258
    %v2539 = vunpack.c.h.b16 %v258
    %v2540 = vunpack.c.l.b16 %v259
    %v2541 = vunpack.c.h.b16 %v259
    %v2542 = vunpack.c.l.b16 %v260
    %v2543 = vunpack.c.h.b16 %v260
    %v2544 = vunpack.c.l.b16 %v261
    %v2545 = vunpack.c.h.b16 %v261
    %v2546 = vunpack.c.l.b16 %v262
    %v2547 = vunpack.c.h.b16 %v262
    %v2548 = vunpack.c.l.b16 %v263
    %v2549 = vunpack.c.h.b16 %v263
    %v2550 = vunpack.c.l.b16 %v264
    %v2551 = vunpack.c.h.b16 %v264
    %v2552 = vunpack.c.l.b16 %v265
    %v2553 = vunpack.c.h.b16 %v265
    %v2554 = vunpack.c.l.b16 %v266
    %v2555 = vunpack.c.h.b16 %v266
    %v2556 = vunpack.c.l.b16 %v267
    %v2557 = vunpack.c.h.b16 %v267
    %v2558 = vunpack.c.l.b16 %v268
    %v2559 = vunpack.c.h.b16 %v268
    %v2560 = vunpack.c.l.b16 %v269
    %v2561 = vunpack.c.h.b16 %v269
    %v2562 = vunpack.c.l.b16 %v270
    %v2563 = vunpack.c.h.b16 %v270
    %v2564 = vunpack.c.l.b16 %v271
    %v2565 = vunpack.c.h.b16 %v271
    %v2566 = vunpack.c.l.b16 %v272
    %v2567 = vunpack.c.h.b16 %v272
    %v2568 = vunpack.c.l.b16 %v273
    %v2569 = vunpack.c.h.b16 %v273
    %v2570 = vunpack.c.l.b16 %v274
    %v2571 = vunpack.c.h.b16 %v274
    %v2572 = vunpack.c.l.b16 %v275
    %v2573 = vunpack.c.h.b16 %v275
    %v2574 = vunpack.c.l.b16 %v276
    %v2575 = vunpack.c.h.b16 %v276
    %v2576 = vunpack.c.l.b16 %v277
    %v2577 = vunpack.c.h.b16 %v277
    %v2578 = vunpack.c.l.b16 %v278
    %v2579 = vunpack.c.h.b16 %v278
    %v2580 = vunpack.c.l.b16 %v279
    %v2581 = vunpack.c.h.b16 %v279
    %v2582 = vunpack.c.l.b16 %v280
    %v2583 = vunpack.c.h.b16 %v280
    %v2584 = vunpack.c.l.b16 %v281
    %v2585 = vunpack.c.h.b16 %v281
    %v2586 = vunpack.c.l.b16 %v282
    %v2587 = vunpack.c.h.b16 %v282
    %v2588 = vunpack.c.l.b16 %v283
    %v2589 = vunpack.c.h.b16 %v283
    %v2590 = vunpack.c.l.b16 %v284
    %v2591 = vunpack.c.h.b16 %v284
    %v2592 = vunpack.c.l.b16 %v285
    %v2593 = vunpack.c.h.b16 %v285
    %v2594 = vunpack.c.l.b16 %v286
    %v2595 = vunpack.c.h.b16 %v286
    %v2596 = vunpack.c.l.b16 %v287
    %v2597 = vunpack.c.h.b16 %v287
    %v2598 = vunpack.c.l.b16 %v288
    %v2599 = vunpack.c.h.b16 %v288
    %v2600 = vunpack.c.l.b16 %v289
    %v2601 = vunpack.c.h.b16 %v289
    %v2602 = vunpack.c.l.b16 %v290
    %v2603 = vunpack.c.h.b16 %v290
    %v2604 = vunpack.c.l.b16 %v291
    %v2605 = vunpack.c.h.b16 %v291
    %v2606 = vunpack.c.l.b16 %v292
    %v2607 = vunpack.c.h.b16 %v292
    %v2608 = vunpack.c.l.b16 %v293
    %v2609 = vunpack.c.h.b16 %v293
    %v2610 = vunpack.c.l.b16 %v294
    %v2611 = vunpack.c.h.b16 %v294
    %v2612 = vunpack.c.l.b16 %v295
    %v2613 = vunpack.c.h.b16 %v295
    %v2614 = vunpack.c.l.b16 %v296
    %v2615 = vunpack.c.h.b16 %v296
    %v2616 = vunpack.c.l.b16 %v297
    %v2617 = vunpack.c.h.b16 %v297
    %v2618 = vunpack.c.l.b16 %v298
    %v2619 = vunpack.c.h.b16 %v298
    %v2620 = vunpack.c.l.b16 %v299
    %v2621 = vunpack.c.h.b16 %v299
    %v2622 = vunpack.c.l.b16 %v300
    %v2623 = vunpack.c.h.b16 %v300
    %v2624 = vunpack.c.l.b16 %v301
    %v2625 = vunpack.c.h.b16 %v301
    %v2626 = vunpack.c.l.b16 %v302
    %v2627 = vunpack.c.h.b16 %v302
    %v2628 = vunpack.c.l.b16 %v303
    %v2629 = vunpack.c.h.b16 %v303
    %v2630 = vunpack.c.l.b16 %v304
    %v2631 = vunpack.c.h.b16 %v304
    %v2632 = vunpack.c.l.b16 %v305
    %v2633 = vunpack.c.h.b16 %v305
    %v2634 = vunpack.c.l.b16 %v306
    %v2635 = vunpack.c.h.b16 %v306
    %v2636 = vunpack.c.l.b16 %v307
    %v2637 = vunpack.c.h.b16 %v307
    %v2638 = vunpack.c.l.b16 %v308
    %v2639 = vunpack.c.h.b16 %v308
    %v2640 = vunpack.c.l.b16 %v309
    %v2641 = vunpack.c.h.b16 %v309
    %v2642 = vunpack.c.l.b16 %v310
    %v2643 = vunpack.c.h.b16 %v310
    %v2644 = vunpack.c.l.b16 %v311
    %v2645 = vunpack.c.h.b16 %v311
    %v2646 = vunpack.c.l.b16 %v312
    %v2647 = vunpack.c.h.b16 %v312
    %v2648 = vunpack.c.l.b16 %v313
    %v2649 = vunpack.c.h.b16 %v313
    %v2650 = vunpack.c.l.b16 %v314
    %v2651 = vunpack.c.h.b16 %v314
    %v2652 = vunpack.c.l.b16 %v315
    %v2653 = vunpack.c.h.b16 %v315
    %v2654 = vunpack.c.l.b16 %v316
    %v2655 = vunpack.c.h.b16 %v316
    %v2656 = vunpack.c.l.b16 %v317
    %v2657 = vunpack.c.h.b16 %v317
    %v2658 = vunpack.c.l.b16 %v318
    %v2659 = vunpack.c.h.b16 %v318
    %v2660 = vunpack.c.l.b16 %v319
    %v2661 = vunpack.c.h.b16 %v319
    %v2662 = vunpack.c.l.b16 %v320
    %v2663 = vunpack.c.h.b16 %v320
    %v2664 = vunpack.c.l.b16 %v321
    %v2665 = vunpack.c.h.b16 %v321
    %v2666 = vunpack.c.l.b16 %v322
    %v2667 = vunpack.c.h.b16 %v322
    %v2668 = vunpack.c.l.b16 %v323
    %v2669 = vunpack.c.h.b16 %v323
    %v2670 = vunpack.c.l.b16 %v324
    %v2671 = vunpack.c.h.b16 %v324
    %v2672 = vunpack.c.l.b16 %v325
    %v2673 = vunpack.c.h.b16 %v325
    %v2674 = vunpack.c.l.b16 %v326
    %v2675 = vunpack.c.h.b16 %v326
    %v2676 = vunpack.c.l.b16 %v327
    %v2677 = vunpack.c.h.b16 %v327
    %v2678 = vunpack.c.l.b16 %v328
    %v2679 = vunpack.c.h.b16 %v328
    %v2680 = vunpack.c.l.b16 %v329
    %v2681 = vunpack.c.h.b16 %v329
    %v2682 = vunpack.c.l.b16 %v330
    %v2683 = vunpack.c.h.b16 %v330
    %v2684 = vunpack.c.l.b16 %v331
    %v2685 = vunpack.c.h.b16 %v331
    %v2686 = vunpack.c.l.b16 %v332
    %v2687 = vunpack.c.h.b16 %v332
    %v2688 = vunpack.c.l.b16 %v333
    %v2689 = vunpack.c.h.b16 %v333
    %v2690 = vunpack.c.l.b16 %v334
    %v2691 = vunpack.c.h.b16 %v334
    %v2692 = vunpack.c.l.b16 %v335
    %v2693 = vunpack.c.h.b16 %v335
    %v2694 = vunpack.c.l.b16 %v336
    %v2695 = vunpack.c.h.b16 %v336
    %v2696 = vunpack.c.l.b16 %v337
    %v2697 = vunpack.c.h.b16 %v337
    %v2698 = vunpack.c.l.b16 %v338
    %v2699 = vunpack.c.h.b16 %v338
    %v2700 = vunpack.c.l.b16 %v339
    %v2701 = vunpack.c.h.b16 %v339
    %v2702 = vunpack.c.l.b16 %v340
    %v2703 = vunpack.c.h.b16 %v340
    %v2704 = vunpack.c.l.b16 %v341
    %v2705 = vunpack.c.h.b16 %v341
    %v2706 = vunpack.c.l.b16 %v342
    %v2707 = vunpack.c.h.b16 %v342
    %v2708 = vunpack.c.l.b16 %v343
    %v2709 = vunpack.c.h.b16 %v343
    %v2710 = vunpack.c.l.b16 %v344
    %v2711 = vunpack.c.h.b16 %v344
    %v2712 = vunpack.c.l.b16 %v345
    %v2713 = vunpack.c.h.b16 %v345
    %v2714 = vunpack.c.l.b16 %v346
    %v2715 = vunpack.c.h.b16 %v346
    %v2716 = vunpack.c.l.b16 %v347
    %v2717 = vunpack.c.h.b16 %v347
    %v2718 = vunpack.c.l.b16 %v348
    %v2719 = vunpack.c.h.b16 %v348
    %v2720 = vunpack.c.l.b16 %v349
    %v2721 = vunpack.c.h.b16 %v349
    %v2722 = vunpack.c.l.b16 %v350
    %v2723 = vunpack.c.h.b16 %v350
    %v2724 = vunpack.c.l.b16 %v351
    %v2725 = vunpack.c.h.b16 %v351
    %v2726 = vunpack.c.l.b16 %v352
    %v2727 = vunpack.c.h.b16 %v352
    %v2728 = vunpack.c.l.b16 %v353
    %v2729 = vunpack.c.h.b16 %v353
    %v2730 = vunpack.c.l.b16 %v354
    %v2731 = vunpack.c.h.b16 %v354
    %v2732 = vunpack.c.l.b16 %v355
    %v2733 = vunpack.c.h.b16 %v355
    %v2734 = vunpack.c.l.b16 %v356
    %v2735 = vunpack.c.h.b16 %v356
    %v2736 = vunpack.c.l.b16 %v357
    %v2737 = vunpack.c.h.b16 %v357
    %v2738 = vunpack.c.l.b16 %v358
    %v2739 = vunpack.c.h.b16 %v358
    %v2740 = vunpack.c.l.b16 %v359
    %v2741 = vunpack.c.h.b16 %v359
    %v2742 = vunpack.c.l.b16 %v360
    %v2743 = vunpack.c.h.b16 %v360
    %v2744 = vunpack.c.l.b16 %v361
    %v2745 = vunpack.c.h.b16 %v361
    %v2746 = vunpack.c.l.b16 %v362
    %v2747 = vunpack.c.h.b16 %v362
    %v2748 = vunpack.c.l.b16 %v363
    %v2749 = vunpack.c.h.b16 %v363
    %v2750 = vunpack.c.l.b16 %v364
    %v2751 = vunpack.c.h.b16 %v364
    %v2752 = vunpack.c.l.b16 %v365
    %v2753 = vunpack.c.h.b16 %v365
    %v2754 = vunpack.c.l.b16 %v366
    %v2755 = vunpack.c.h.b16 %v366
    %v2756 = vunpack.c.l.b16 %v367
    %v2757 = vunpack.c.h.b16 %v367
    %v2758 = vunpack.c.l.b16 %v368
    %v2759 = vunpack.c.h.b16 %v368
    %v2760 = vunpack.c.l.b16 %v369
    %v2761 = vunpack.c.h.b16 %v369
    %v2762 = vunpack.c.l.b16 %v370
    %v2763 = vunpack.c.h.b16 %v370
    %v2764 = vunpack.c.l.b16 %v371
    %v2765 = vunpack.c.h.b16 %v371
    %v2766 = vunpack.c.l.b16 %v372
    %v2767 = vunpack.c.h.b16 %v372
    %v2768 = vunpack.c.l.b16 %v373
    %v2769 = vunpack.c.h.b16 %v373
    %v2770 = vunpack.c.l.b16 %v374
    %v2771 = vunpack.c.h.b16 %v374
    %v2772 = vunpack.c.l.b16 %v375
    %v2773 = vunpack.c.h.b16 %v375
    %v2774 = vunpack.c.l.b16 %v376
    %v2775 = vunpack.c.h.b16 %v376
    %v2776 = vunpack.c.l.b16 %v377
    %v2777 = vunpack.c.h.b16 %v377
    %v2778 = vunpack.c.l.b16 %v378
    %v2779 = vunpack.c.h.b16 %v378
    %v2780 = vunpack.c.l.b16 %v379
    %v2781 = vunpack.c.h.b16 %v379
    %v2782 = vunpack.c.l.b16 %v380
    %v2783 = vunpack.c.h.b16 %v380
    %v2784 = vunpack.c.l.b16 %v381
    %v2785 = vunpack.c.h.b16 %v381
    %v2786 = vunpack.c.l.b16 %v382
    %v2787 = vunpack.c.h.b16 %v382
    %v2788 = vunpack.c.l.b16 %v383
    %v2789 = vunpack.c.h.b16 %v383
    %v2790 = vunpack.c.l.b16 %v384
    %v2791 = vunpack.c.h.b16 %v384
    %v2792 = vunpack.c.l.b16 %v385
    %v2793 = vunpack.c.h.b16 %v385
    %v2794 = vunpack.c.l.b16 %v386
    %v2795 = vunpack.c.h.b16 %v386
    %v2796 = vunpack.c.l.b16 %v387
    %v2797 = vunpack.c.h.b16 %v387
    %v2798 = vunpack.c.l.b16 %v388
    %v2799 = vunpack.c.h.b16 %v388
    %v2800 = vunpack.c.l.b16 %v389
    %v2801 = vunpack.c.h.b16 %v389
    %v2802 = vunpack.c.l.b16 %v390
    %v2803 = vunpack.c.h.b16 %v390
    %v2804 = vunpack.c.l.b16 %v391
    %v2805 = vunpack.c.h.b16 %v391
    %v2806 = vunpack.c.l.b16 %v392
    %v2807 = vunpack.c.h.b16 %v392
    %v2808 = vunpack.c.l.b16 %v393
    %v2809 = vunpack.c.h.b16 %v393
    %v2810 = vunpack.c.l.b16 %v394
    %v2811 = vunpack.c.h.b16 %v394
    %v2812 = vunpack.c.l.b16 %v395
    %v2813 = vunpack.c.h.b16 %v395
    %v2814 = vunpack.c.l.b16 %v396
    %v2815 = vunpack.c.h.b16 %v396
    %v2816 = vunpack.c.l.b16 %v397
    %v2817 = vunpack.c.h.b16 %v397
    %v2818 = vunpack.c.l.b16 %v398
    %v2819 = vunpack.c.h.b16 %v398
    %v2820 = vunpack.c.l.b16 %v399
    %v2821 = vunpack.c.h.b16 %v399
    %v2822 = vunpack.c.l.b16 %v400
    %v2823 = vunpack.c.h.b16 %v400
    %v2824 = vunpack.c.l.b16 %v401
    %v2825 = vunpack.c.h.b16 %v401
    %v2826 = vunpack.c.l.b16 %v402
    %v2827 = vunpack.c.h.b16 %v402
    %v2828 = vunpack.c.l.b16 %v403
    %v2829 = vunpack.c.h.b16 %v403
    %v2830 = vunpack.c.l.b16 %v404
    %v2831 = vunpack.c.h.b16 %v404
    %v2832 = vunpack.c.l.b16 %v405
    %v2833 = vunpack.c.h.b16 %v405
    %v2834 = vunpack.c.l.b16 %v406
    %v2835 = vunpack.c.h.b16 %v406
    %v2836 = vunpack.c.l.b16 %v407
    %v2837 = vunpack.c.h.b16 %v407
    %v2838 = vunpack.c.l.b16 %v408
    %v2839 = vunpack.c.h.b16 %v408
    %v2840 = vunpack.c.l.b16 %v409
    %v2841 = vunpack.c.h.b16 %v409
    %v2842 = vunpack.c.l.b16 %v410
    %v2843 = vunpack.c.h.b16 %v410
    %v2844 = vunpack.c.l.b16 %v411
    %v2845 = vunpack.c.h.b16 %v411
    %v2846 = vunpack.c.l.b16 %v412
    %v2847 = vunpack.c.h.b16 %v412
    %v2848 = vunpack.c.l.b16 %v413
    %v2849 = vunpack.c.h.b16 %v413
    %v2850 = vunpack.c.l.b16 %v414
    %v2851 = vunpack.c.h.b16 %v414
    %v2852 = vunpack.c.l.b16 %v415
    %v2853 = vunpack.c.h.b16 %v415
    %v2854 = vunpack.c.l.b16 %v416
    %v2855 = vunpack.c.h.b16 %v416
    %v2856 = vunpack.c.l.b16 %v417
    %v2857 = vunpack.c.h.b16 %v417
    %v2858 = vunpack.c.l.b16 %v418
    %v2859 = vunpack.c.h.b16 %v418
    %v2860 = vunpack.c.l.b16 %v419
    %v2861 = vunpack.c.h.b16 %v419
    %v2862 = vunpack.c.l.b16 %v420
    %v2863 = vunpack.c.h.b16 %v420
    %v2864 = vunpack.c.l.b16 %v421
    %v2865 = vunpack.c.h.b16 %v421
    %v2866 = vunpack.c.l.b16 %v422
    %v2867 = vunpack.c.h.b16 %v422
    %v2868 = vunpack.c.l.b16 %v423
    %v2869 = vunpack.c.h.b16 %v423
    %v2870 = vunpack.c.l.b16 %v424
    %v2871 = vunpack.c.h.b16 %v424
    %v2872 = vunpack.c.l.b16 %v425
    %v2873 = vunpack.c.h.b16 %v425
    %v2874 = vunpack.c.l.b16 %v426
    %v2875 = vunpack.c.h.b16 %v426
    %v2876 = vunpack.c.l.b16 %v427
    %v2877 = vunpack.c.h.b16 %v427
    %v2878 = vunpack.c.l.b16 %v428
    %v2879 = vunpack.c.h.b16 %v428
    %v2880 = vunpack.c.l.b16 %v429
    %v2881 = vunpack.c.h.b16 %v429
    %v2882 = vunpack.c.l.b16 %v430
    %v2883 = vunpack.c.h.b16 %v430
    %v2884 = vunpack.c.l.b16 %v431
    %v2885 = vunpack.c.h.b16 %v431
    %v2886 = vunpack.c.l.b16 %v432
    %v2887 = vunpack.c.h.b16 %v432
    %v2888 = vunpack.c.l.b16 %v433
    %v2889 = vunpack.c.h.b16 %v433
    %v2890 = vunpack.c.l.b16 %v434
    %v2891 = vunpack.c.h.b16 %v434
    %v2892 = vunpack.c.l.b16 %v435
    %v2893 = vunpack.c.h.b16 %v435
    %v2894 = vunpack.c.l.b16 %v436
    %v2895 = vunpack.c.h.b16 %v436
    %v2896 = vunpack.c.l.b16 %v437
    %v2897 = vunpack.c.h.b16 %v437
    %v2898 = vunpack.c.l.b16 %v438
    %v2899 = vunpack.c.h.b16 %v438
    %v2900 = vunpack.c.l.b16 %v439
    %v2901 = vunpack.c.h.b16 %v439
    %v2902 = vunpack.c.l.b16 %v440
    %v2903 = vunpack.c.h.b16 %v440
    %v2904 = vunpack.c.l.b16 %v441
    %v2905 = vunpack.c.h.b16 %v441
    %v2906 = vunpack.c.l.b16 %v442
    %v2907 = vunpack.c.h.b16 %v442
    %v2908 = vunpack.c.l.b16 %v443
    %v2909 = vunpack.c.h.b16 %v443
    %v2910 = vunpack.c.l.b16 %v444
    %v2911 = vunpack.c.h.b16 %v444
    %v2912 = vunpack.c.l.b16 %v445
    %v2913 = vunpack.c.h.b16 %v445
    %v2914 = vunpack.c.l.b16 %v446
    %v2915 = vunpack.c.h.b16 %v446
    %v2916 = vunpack.c.l.b16 %v447
    %v2917 = vunpack.c.h.b16 %v447
    %v2918 = vunpack.c.l.b16 %v448
    %v2919 = vunpack.c.h.b16 %v448
    %v2920 = vunpack.c.l.b16 %v449
    %v2921 = vunpack.c.h.b16 %v449
    %v2922 = vunpack.c.l.b16 %v450
    %v2923 = vunpack.c.h.b16 %v450
    %v2924 = vunpack.c.l.b16 %v451
    %v2925 = vunpack.c.h.b16 %v451
    %v2926 = vunpack.c.l.b16 %v452
    %v2927 = vunpack.c.h.b16 %v452
    %v2928 = vunpack.c.l.b16 %v453
    %v2929 = vunpack.c.h.b16 %v453
    %v2930 = vunpack.c.l.b16 %v454
    %v2931 = vunpack.c.h.b16 %v454
    %v2932 = vunpack.c.l.b16 %v455
    %v2933 = vunpack.c.h.b16 %v455
    %v2934 = vunpack.c.l.b16 %v456
    %v2935 = vunpack.c.h.b16 %v456
    %v2936 = vunpack.c.l.b16 %v457
    %v2937 = vunpack.c.h.b16 %v457
    %v2938 = vunpack.c.l.b16 %v458
    %v2939 = vunpack.c.h.b16 %v458
    %v2940 = vunpack.c.l.b16 %v459
    %v2941 = vunpack.c.h.b16 %v459
    %v2942 = vunpack.c.l.b16 %v460
    %v2943 = vunpack.c.h.b16 %v460
    %v2944 = vunpack.c.l.b16 %v461
    %v2945 = vunpack.c.h.b16 %v461
    %v2946 = vunpack.c.l.b16 %v462
    %v2947 = vunpack.c.h.b16 %v462
    %v2948 = vunpack.c.l.b16 %v463
    %v2949 = vunpack.c.h.b16 %v463
    %v2950 = vunpack.c.l.b16 %v464
    %v2951 = vunpack.c.h.b16 %v464
    %v2952 = vunpack.c.l.b16 %v465
    %v2953 = vunpack.c.h.b16 %v465
    %v2954 = vunpack.c.l.b16 %v466
    %v2955 = vunpack.c.h.b16 %v466
    %v2956 = vunpack.c.l.b16 %v467
    %v2957 = vunpack.c.h.b16 %v467
    %v2958 = vunpack.c.l.b16 %v468
    %v2959 = vunpack.c.h.b16 %v468
    %v2960 = vunpack.c.l.b16 %v469
    %v2961 = vunpack.c.h.b16 %v469
    %v2962 = vunpack.c.l.b16 %v470
    %v2963 = vunpack.c.h.b16 %v470
    %v2964 = vunpack.c.l.b16 %v471
    %v2965 = vunpack.c.h.b16 %v471
    %v2966 = vunpack.c.l.b16 %v472
    %v2967 = vunpack.c.h.b16 %v472
    %v2968 = vunpack.c.l.b16 %v473
    %v2969 = vunpack.c.h.b16 %v473
    %v2970 = vunpack.c.l.b16 %v474
    %v2971 = vunpack.c.h.b16 %v474
    %v2972 = vunpack.c.l.b16 %v475
    %v2973 = vunpack.c.h.b16 %v475
    %v2974 = vunpack.c.l.b16 %v476
    %v2975 = vunpack.c.h.b16 %v476
    %v2976 = vunpack.c.l.b16 %v477
    %v2977 = vunpack.c.h.b16 %v477
    %v2978 = vunpack.c.l.b16 %v478
    %v2979 = vunpack.c.h.b16 %v478
    %v2980 = vunpack.c.l.b16 %v479
    %v2981 = vunpack.c.h.b16 %v479
    %v2982 = vunpack.c.l.b16 %v480
    %v2983 = vunpack.c.h.b16 %v480
    %v2984 = vunpack.c.l.b16 %v481
    %v2985 = vunpack.c.h.b16 %v481
    %v2986 = vunpack.c.l.b16 %v482
    %v2987 = vunpack.c.h.b16 %v482
    %v2988 = vunpack.c.l.b16 %v483
    %v2989 = vunpack.c.h.b16 %v483
    %v2990 = vunpack.c.l.b16 %v484
    %v2991 = vunpack.c.h.b16 %v484
    %v2992 = vunpack.c.l.b16 %v485
    %v2993 = vunpack.c.h.b16 %v485
    %v2994 = vunpack.c.l.b16 %v486
    %v2995 = vunpack.c.h.b16 %v486
    %v2996 = vunpack.c.l.b16 %v487
    %v2997 = vunpack.c.h.b16 %v487
    %v2998 = vunpack.c.l.b16 %v488
    %v2999 = vunpack.c.h.b16 %v488
    %v3000 = vunpack.c.l.b16 %v489
    %v3001 = vunpack.c.h.b16 %v489
    %v3002 = vunpack.c.l.b16 %v490
    %v3003 = vunpack.c.h.b16 %v490
    %v3004 = vunpack.c.l.b16 %v491
    %v3005 = vunpack.c.h.b16 %v491
    %v3006 = vunpack.c.l.b16 %v492
    %v3007 = vunpack.c.h.b16 %v492
    %v3008 = vunpack.c.l.b16 %v493
    %v3009 = vunpack.c.h.b16 %v493
    %v3010 = vunpack.c.l.b16 %v494
    %v3011 = vunpack.c.h.b16 %v494
    %v3012 = vunpack.c.l.b16 %v495
    %v3013 = vunpack.c.h.b16 %v495
    %v3014 = vunpack.c.l.b16 %v496
    %v3015 = vunpack.c.h.b16 %v496
    %v3016 = vunpack.c.l.b16 %v497
    %v3017 = vunpack.c.h.b16 %v497
    %v3018 = vunpack.c.l.b16 %v498
    %v3019 = vunpack.c.h.b16 %v498
    %v3020 = vunpack.c.l.b16 %v499
    %v3021 = vunpack.c.h.b16 %v499
    %v3022 = vunpack.c.l.b16 %v500
    %v3023 = vunpack.c.h.b16 %v500
    %v3024 = vunpack.c.l.b16 %v501
    %v3025 = vunpack.c.h.b16 %v501
    %v3026 = vunpack.c.l.b16 %v502
    %v3027 = vunpack.c.h.b16 %v502
    %v3028 = vunpack.c.l.b16 %v503
    %v3029 = vunpack.c.h.b16 %v503
    %v3030 = vunpack.c.l.b16 %v504
    %v3031 = vunpack.c.h.b16 %v504
    %v3032 = vunpack.c.l.b16 %v505
    %v3033 = vunpack.c.h.b16 %v505
    %v3034 = vunpack.c.l.b16 %v506
    %v3035 = vunpack.c.h.b16 %v506
    %v3036 = vunpack.c.l.b16 %v507
    %v3037 = vunpack.c.h.b16 %v507
    %v3038 = vunpack.c.l.b16 %v508
    %v3039 = vunpack.c.h.b16 %v508
    %v3040 = vunpack.c.l.b16 %v509
    %v3041 = vunpack.c.h.b16 %v509
    %v3042 = vunpack.c.l.b16 %v510
    %v3043 = vunpack.c.h.b16 %v510
    %v3044 = vunpack.c.l.b16 %v511
    %v3045 = vunpack.c.h.b16 %v511
    %v3046 = vunpack.c.l.b16 %v512
    %v3047 = vunpack.c.h.b16 %v512
    %v3048 = vunpack.c.l.b16 %v513
    %v3049 = vunpack.c.h.b16 %v513
    %v3050 = vunpack.c.l.b16 %v514
    %v3051 = vunpack.c.h.b16 %v514
    %v3052 = vunpack.c.l.b16 %v515
    %v3053 = vunpack.c.h.b16 %v515
    %v3054 = vunpack.c.l.b16 %v516
    %v3055 = vunpack.c.h.b16 %v516
    %v3056 = vunpack.c.l.b16 %v517
    %v3057 = vunpack.c.h.b16 %v517
    %v3058 = vunpack.c.l.b16 %v518
    %v3059 = vunpack.c.h.b16 %v518
    %v3060 = vunpack.c.l.b16 %v519
    %v3061 = vunpack.c.h.b16 %v519
    %v3062 = vunpack.c.l.b16 %v520
    %v3063 = vunpack.c.h.b16 %v520
    %v3064 = vunpack.c.l.b16 %v521
    %v3065 = vunpack.c.h.b16 %v521
    %v3066 = vunpack.c.l.b16 %v522
    %v3067 = vunpack.c.h.b16 %v522
    %v3068 = vunpack.c.l.b16 %v523
    %v3069 = vunpack.c.h.b16 %v523
    %v3070 = vunpack.c.l.b16 %v524
    %v3071 = vunpack.c.h.b16 %v524
    %v3072 = vunpack.c.l.b16 %v525
    %v3073 = vunpack.c.h.b16 %v525
    %v3074 = vunpack.c.l.b16 %v526
    %v3075 = vunpack.c.h.b16 %v526
    %v3076 = vunpack.c.l.b16 %v527
    %v3077 = vunpack.c.h.b16 %v527
    %v3078 = vunpack.c.l.b16 %v528
    %v3079 = vunpack.c.h.b16 %v528
    %v3080 = vunpack.c.l.b16 %v529
    %v3081 = vunpack.c.h.b16 %v529
    %v3082 = vunpack.c.l.b16 %v530
    %v3083 = vunpack.c.h.b16 %v530
    %v3084 = vunpack.c.l.b16 %v531
    %v3085 = vunpack.c.h.b16 %v531
    %v3086 = vunpack.c.l.b16 %v532
    %v3087 = vunpack.c.h.b16 %v532
    %v3088 = vunpack.c.l.b16 %v533
    %v3089 = vunpack.c.h.b16 %v533
    %v3090 = vunpack.c.l.b16 %v534
    %v3091 = vunpack.c.h.b16 %v534
    %v3092 = vunpack.c.l.b16 %v535
    %v3093 = vunpack.c.h.b16 %v535
    %v3094 = vunpack.c.l.b16 %v536
    %v3095 = vunpack.c.h.b16 %v536
    %v3096 = vunpack.c.l.b16 %v537
    %v3097 = vunpack.c.h.b16 %v537
    %v3098 = vunpack.c.l.b16 %v538
    %v3099 = vunpack.c.h.b16 %v538
    %v3100 = vunpack.c.l.b16 %v539
    %v3101 = vunpack.c.h.b16 %v539
    %v3102 = vunpack.c.l.b16 %v540
    %v3103 = vunpack.c.h.b16 %v540
    %v3104 = vunpack.c.l.b16 %v541
    %v3105 = vunpack.c.h.b16 %v541
    %v3106 = vunpack.c.l.b16 %v542
    %v3107 = vunpack.c.h.b16 %v542
    %v3108 = vunpack.c.l.b16 %v543
    %v3109 = vunpack.c.h.b16 %v543
    %v3110 = vunpack.c.l.b16 %v544
    %v3111 = vunpack.c.h.b16 %v544
    %v3112 = vunpack.c.l.b16 %v545
    %v3113 = vunpack.c.h.b16 %v545
    %v3114 = vunpack.c.l.b16 %v546
    %v3115 = vunpack.c.h.b16 %v546
    %v3116 = vunpack.c.l.b16 %v547
    %v3117 = vunpack.c.h.b16 %v547
    %v3118 = vunpack.c.l.b16 %v548
    %v3119 = vunpack.c.h.b16 %v548
    %v3120 = vunpack.c.l.b16 %v549
    %v3121 = vunpack.c.h.b16 %v549
    %v3122 = vunpack.c.l.b16 %v550
    %v3123 = vunpack.c.h.b16 %v550
    %v3124 = vunpack.c.l.b16 %v551
    %v3125 = vunpack.c.h.b16 %v551
    %v3126 = vunpack.c.l.b16 %v552
    %v3127 = vunpack.c.h.b16 %v552
    %v3128 = vunpack.c.l.b16 %v553
    %v3129 = vunpack.c.h.b16 %v553
    %v3130 = vunpack.c.l.b16 %v554
    %v3131 = vunpack.c.h.b16 %v554
    %v3132 = vunpack.c.l.b16 %v555
    %v3133 = vunpack.c.h.b16 %v555
    %v3134 = vunpack.c.l.b16 %v556
    %v3135 = vunpack.c.h.b16 %v556
    %v3136 = vunpack.c.l.b16 %v557
    %v3137 = vunpack.c.h.b16 %v557
    %v3138 = vunpack.c.l.b16 %v558
    %v3139 = vunpack.c.h.b16 %v558
    %v3140 = vunpack.c.l.b16 %v559
    %v3141 = vunpack.c.h.b16 %v559
    %v3142 = vunpack.c.l.b16 %v560
    %v3143 = vunpack.c.h.b16 %v560
    %v3144 = vunpack.c.l.b16 %v561
    %v3145 = vunpack.c.h.b16 %v561
    %v3146 = vunpack.c.l.b16 %v562
    %v3147 = vunpack.c.h.b16 %v562
    %v3148 = vunpack.c.l.b16 %v563
    %v3149 = vunpack.c.h.b16 %v563
    %v3150 = vunpack.c.l.b16 %v564
    %v3151 = vunpack.c.h.b16 %v564
    %v3152 = vunpack.c.l.b16 %v565
    %v3153 = vunpack.c.h.b16 %v565
    %v3154 = vunpack.c.l.b16 %v566
    %v3155 = vunpack.c.h.b16 %v566
    %v3156 = vunpack.c.l.b16 %v567
    %v3157 = vunpack.c.h.b16 %v567
    %v3158 = vunpack.c.l.b16 %v568
    %v3159 = vunpack.c.h.b16 %v568
    %v3160 = vunpack.c.l.b16 %v569
    %v3161 = vunpack.c.h.b16 %v569
    %v3162 = vunpack.c.l.b16 %v570
    %v3163 = vunpack.c.h.b16 %v570
    %v3164 = vunpack.c.l.b16 %v571
    %v3165 = vunpack.c.h.b16 %v571
    %v3166 = vunpack.c.l.b16 %v572
    %v3167 = vunpack.c.h.b16 %v572
    %v3168 = vunpack.c.l.b16 %v573
    %v3169 = vunpack.c.h.b16 %v573
    %v3170 = vunpack.c.l.b16 %v574
    %v3171 = vunpack.c.h.b16 %v574
    %v3172 = vunpack.c.l.b16 %v575
    %v3173 = vunpack.c.h.b16 %v575
    %v3174 = vunpack.c.l.b16 %v576
    %v3175 = vunpack.c.h.b16 %v576
    %v3176 = vunpack.c.l.b16 %v577
    %v3177 = vunpack.c.h.b16 %v577
    %v3178 = vunpack.c.l.b16 %v578
    %v3179 = vunpack.c.h.b16 %v578
    %v3180 = vunpack.c.l.b16 %v579
    %v3181 = vunpack.c.h.b16 %v579
    %v3182 = vunpack.c.l.b16 %v580
    %v3183 = vunpack.c.h.b16 %v580
    %v3184 = vunpack.c.l.b16 %v581
    %v3185 = vunpack.c.h.b16 %v581
    %v3186 = vunpack.c.l.b16 %v582
    %v3187 = vunpack.c.h.b16 %v582
    %v3188 = vunpack.c.l.b16 %v583
    %v3189 = vunpack.c.h.b16 %v583
    %v3190 = vunpack.c.l.b16 %v584
    %v3191 = vunpack.c.h.b16 %v584
    %v3192 = vunpack.c.l.b16 %v585
    %v3193 = vunpack.c.h.b16 %v585
    %v3194 = vunpack.c.l.b16 %v586
    %v3195 = vunpack.c.h.b16 %v586
    %v3196 = vunpack.c.l.b16 %v587
    %v3197 = vunpack.c.h.b16 %v587
    %v3198 = vunpack.c.l.b16 %v588
    %v3199 = vunpack.c.h.b16 %v588
    %v3200 = vunpack.c.l.b16 %v589
    %v3201 = vunpack.c.h.b16 %v589
    %v3202 = vunpack.c.l.b16 %v590
    %v3203 = vunpack.c.h.b16 %v590
    %v3204 = vunpack.c.l.b16 %v591
    %v3205 = vunpack.c.h.b16 %v591
    %v3206 = vunpack.c.l.b16 %v592
    %v3207 = vunpack.c.h.b16 %v592
    %v3208 = vunpack.c.l.b16 %v593
    %v3209 = vunpack.c.h.b16 %v593
    %v3210 = vunpack.c.l.b16 %v594
    %v3211 = vunpack.c.h.b16 %v594
    %v3212 = vunpack.c.l.b16 %v595
    %v3213 = vunpack.c.h.b16 %v595
    %v3214 = vunpack.c.l.b16 %v596
    %v3215 = vunpack.c.h.b16 %v596
    %v3216 = vunpack.c.l.b16 %v597
    %v3217 = vunpack.c.h.b16 %v597
    %v3218 = vunpack.c.l.b16 %v598
    %v3219 = vunpack.c.h.b16 %v598
    %v3220 = vunpack.c.l.b16 %v599
    %v3221 = vunpack.c.h.b16 %v599
    %v3222 = vunpack.c.l.b16 %v600
    %v3223 = vunpack.c.h.b16 %v600
    %v3224 = vunpack.c.l.b16 %v601
    %v3225 = vunpack.c.h.b16 %v601
    %v3226 = vunpack.c.l.b16 %v602
    %v3227 = vunpack.c.h.b16 %v602
    %v3228 = vunpack.c.l.b16 %v603
    %v3229 = vunpack.c.h.b16 %v603
    %v3230 = vunpack.c.l.b16 %v604
    %v3231 = vunpack.c.h.b16 %v604
    %v3232 = vunpack.c.l.b16 %v605
    %v3233 = vunpack.c.h.b16 %v605
    %v3234 = vunpack.c.l.b16 %v606
    %v3235 = vunpack.c.h.b16 %v606
    %v3236 = vunpack.c.l.b16 %v607
    %v3237 = vunpack.c.h.b16 %v607
    %v3238 = vunpack.c.l.b16 %v608
    %v3239 = vunpack.c.h.b16 %v608
    %v3240 = vunpack.c.l.b16 %v609
    %v3241 = vunpack.c.h.b16 %v609
    %v3242 = vunpack.c.l.b16 %v610
    %v3243 = vunpack.c.h.b16 %v610
    %v3244 = vunpack.c.l.b16 %v611
    %v3245 = vunpack.c.h.b16 %v611
    %v3246 = vunpack.c.l.b16 %v612
    %v3247 = vunpack.c.h.b16 %v612
    %v3248 = vunpack.c.l.b16 %v613
    %v3249 = vunpack.c.h.b16 %v613
    %v3250 = vunpack.c.l.b16 %v614
    %v3251 = vunpack.c.h.b16 %v614
    %v3252 = vunpack.c.l.b16 %v615
    %v3253 = vunpack.c.h.b16 %v615
    %v3254 = vunpack.c.l.b16 %v616
    %v3255 = vunpack.c.h.b16 %v616
    %v3256 = vunpack.c.l.b16 %v617
    %v3257 = vunpack.c.h.b16 %v617
    %v3258 = vunpack.c.l.b16 %v618
    %v3259 = vunpack.c.h.b16 %v618
    %v3260 = vunpack.c.l.b16 %v619
    %v3261 = vunpack.c.h.b16 %v619
    %v3262 = vunpack.c.l.b16 %v620
    %v3263 = vunpack.c.h.b16 %v620
    %v3264 = vunpack.c.l.b16 %v621
    %v3265 = vunpack.c.h.b16 %v621
    %v3266 = vunpack.c.l.b16 %v622
    %v3267 = vunpack.c.h.b16 %v622
    %v3268 = vunpack.c.l.b16 %v623
    %v3269 = vunpack.c.h.b16 %v623
    %v3270 = vunpack.c.l.b16 %v624
    %v3271 = vunpack.c.h.b16 %v624
    %v3272 = vunpack.c.l.b16 %v625
    %v3273 = vunpack.c.h.b16 %v625
    %v3274 = vunpack.c.l.b16 %v626
    %v3275 = vunpack.c.h.b16 %v626
    %v3276 = vunpack.c.l.b16 %v627
    %v3277 = vunpack.c.h.b16 %v627
    %v3278 = vunpack.c.l.b16 %v628
    %v3279 = vunpack.c.h.b16 %v628
    %v3280 = vunpack.c.l.b16 %v629
    %v3281 = vunpack.c.h.b16 %v629
    %v3282 = vunpack.c.l.b16 %v630
    %v3283 = vunpack.c.h.b16 %v630
    %v3284 = vunpack.c.l.b16 %v631
    %v3285 = vunpack.c.h.b16 %v631
    %v3286 = vunpack.c.l.b16 %v632
    %v3287 = vunpack.c.h.b16 %v632
    %v3288 = vunpack.c.l.b16 %v633
    %v3289 = vunpack.c.h.b16 %v633
    %v3290 = vunpack.c.l.b16 %v634
    %v3291 = vunpack.c.h.b16 %v634
    %v3292 = vunpack.c.l.b16 %v635
    %v3293 = vunpack.c.h.b16 %v635
    %v3294 = vunpack.c.l.b16 %v636
    %v3295 = vunpack.c.h.b16 %v636
    %v3296 = vunpack.c.l.b16 %v637
    %v3297 = vunpack.c.h.b16 %v637
    %v3298 = vunpack.c.l.b16 %v638
    %v3299 = vunpack.c.h.b16 %v638
    %v3300 = vunpack.c.l.b16 %v639
    %v3301 = vunpack.c.h.b16 %v639
    %v3302 = vunpack.c.l.b16 %v640
    %v3303 = vunpack.c.h.b16 %v640
    %v3304 = vunpack.c.l.b16 %v641
    %v3305 = vunpack.c.h.b16 %v641
    %v3306 = vunpack.c.l.b16 %v642
    %v3307 = vunpack.c.h.b16 %v642
    %v3308 = vunpack.c.l.b16 %v643
    %v3309 = vunpack.c.h.b16 %v643
    %v3310 = vunpack.c.l.b16 %v644
    %v3311 = vunpack.c.h.b16 %v644
    %v3312 = vunpack.c.l.b16 %v645
    %v3313 = vunpack.c.h.b16 %v645
    %v3314 = vunpack.c.l.b16 %v646
    %v3315 = vunpack.c.h.b16 %v646
    %v3316 = vunpack.c.l.b16 %v647
    %v3317 = vunpack.c.h.b16 %v647
    %v3318 = vunpack.c.l.b16 %v648
    %v3319 = vunpack.c.h.b16 %v648
    %v3320 = vunpack.c.l.b16 %v649
    %v3321 = vunpack.c.h.b16 %v649
    %v3322 = vunpack.c.l.b16 %v650
    %v3323 = vunpack.c.h.b16 %v650
    %v3324 = vunpack.c.l.b16 %v651
    %v3325 = vunpack.c.h.b16 %v651
    %v3326 = vunpack.c.l.b16 %v652
    %v3327 = vunpack.c.h.b16 %v652
    %v3328 = vunpack.c.l.b16 %v653
    %v3329 = vunpack.c.h.b16 %v653
    %v3330 = vunpack.c.l.b16 %v654
    %v3331 = vunpack.c.h.b16 %v654
    %v3332 = vunpack.c.l.b16 %v655
    %v3333 = vunpack.c.h.b16 %v655
    %v3334 = vunpack.c.l.b16 %v656
    %v3335 = vunpack.c.h.b16 %v656
    %v3336 = vunpack.c.l.b16 %v657
    %v3337 = vunpack.c.h.b16 %v657
    %v3338 = vunpack.c.l.b16 %v658
    %v3339 = vunpack.c.h.b16 %v658
    %v3340 = vunpack.c.l.b16 %v659
    %v3341 = vunpack.c.h.b16 %v659
    %v3342 = vunpack.c.l.b16 %v660
    %v3343 = vunpack.c.h.b16 %v660
    %v3344 = vunpack.c.l.b16 %v661
    %v3345 = vunpack.c.h.b16 %v661
    %v3346 = vunpack.c.l.b16 %v662
    %v3347 = vunpack.c.h.b16 %v662
    %v3348 = vunpack.c.l.b16 %v663
    %v3349 = vunpack.c.h.b16 %v663
    %v3350 = vunpack.c.l.b16 %v664
    %v3351 = vunpack.c.h.b16 %v664
    %v3352 = vunpack.c.l.b16 %v665
    %v3353 = vunpack.c.h.b16 %v665
    %v3354 = vunpack.c.l.b16 %v666
    %v3355 = vunpack.c.h.b16 %v666
    %v3356 = vunpack.c.l.b16 %v667
    %v3357 = vunpack.c.h.b16 %v667
    %v3358 = vunpack.c.l.b16 %v668
    %v3359 = vunpack.c.h.b16 %v668
    %v3360 = vunpack.c.l.b16 %v669
    %v3361 = vunpack.c.h.b16 %v669
    %v3362 = vunpack.c.l.b16 %v670
    %v3363 = vunpack.c.h.b16 %v670
    %v3364 = vunpack.c.l.b16 %v671
    %v3365 = vunpack.c.h.b16 %v671
    %v3366 = vunpack.c.l.b16 %v672
    %v3367 = vunpack.c.h.b16 %v672
    %v3368 = vunpack.c.l.b16 %v673
    %v3369 = vunpack.c.h.b16 %v673
    %v3370 = vunpack.c.l.b16 %v674
    %v3371 = vunpack.c.h.b16 %v674
    %v3372 = vunpack.c.l.b16 %v675
    %v3373 = vunpack.c.h.b16 %v675
    %v3374 = vunpack.c.l.b16 %v676
    %v3375 = vunpack.c.h.b16 %v676
    %v3376 = vunpack.c.l.b16 %v677
    %v3377 = vunpack.c.h.b16 %v677
    %v3378 = vunpack.c.l.b16 %v678
    %v3379 = vunpack.c.h.b16 %v678
    %v3380 = vunpack.c.l.b16 %v679
    %v3381 = vunpack.c.h.b16 %v679
    %v3382 = vunpack.c.l.b16 %v680
    %v3383 = vunpack.c.h.b16 %v680
    %v3384 = vunpack.c.l.b16 %v681
    %v3385 = vunpack.c.h.b16 %v681
    %v3386 = vunpack.c.l.b16 %v682
    %v3387 = vunpack.c.h.b16 %v682
    %v3388 = vunpack.c.l.b16 %v683
    %v3389 = vunpack.c.h.b16 %v683
    %v3390 = vunpack.c.l.b16 %v684
    %v3391 = vunpack.c.h.b16 %v684
    %v3392 = vunpack.c.l.b16 %v685
    %v3393 = vunpack.c.h.b16 %v685
    %v3394 = vunpack.c.l.b16 %v686
    %v3395 = vunpack.c.h.b16 %v686
    %v3396 = vunpack.c.l.b16 %v687
    %v3397 = vunpack.c.h.b16 %v687
    %v3398 = vunpack.c.l.b16 %v688
    %v3399 = vunpack.c.h.b16 %v688
    %v3400 = vunpack.c.l.b16 %v689
    %v3401 = vunpack.c.h.b16 %v689
    %v3402 = vunpack.c.l.b16 %v690
    %v3403 = vunpack.c.h.b16 %v690
    %v3404 = vunpack.c.l.b16 %v691
    %v3405 = vunpack.c.h.b16 %v691
    %v3406 = vunpack.c.l.b16 %v692
    %v3407 = vunpack.c.h.b16 %v692
    %v3408 = vunpack.c.l.b16 %v693
    %v3409 = vunpack.c.h.b16 %v693
    %v3410 = vunpack.c.l.b16 %v694
    %v3411 = vunpack.c.h.b16 %v694
    %v3412 = vunpack.c.l.b16 %v695
    %v3413 = vunpack.c.h.b16 %v695
    %v3414 = vunpack.c.l.b16 %v696
    %v3415 = vunpack.c.h.b16 %v696
    %v3416 = vunpack.c.l.b16 %v697
    %v3417 = vunpack.c.h.b16 %v697
    %v3418 = vunpack.c.l.b16 %v698
    %v3419 = vunpack.c.h.b16 %v698
    %v3420 = vunpack.c.l.b16 %v699
    %v3421 = vunpack.c.h.b16 %v699
    %v3422 = vunpack.c.l.b16 %v700
    %v3423 = vunpack.c.h.b16 %v700
    %v3424 = vunpack.c.l.b16 %v701
    %v3425 = vunpack.c.h.b16 %v701
    %v3426 = vunpack.c.l.b16 %v702
    %v3427 = vunpack.c.h.b16 %v702
    %v3428 = vunpack.c.l.b16 %v703
    %v3429 = vunpack.c.h.b16 %v703
    %v3430 = vunpack.c.l.b16 %v704
    %v3431 = vunpack.c.h.b16 %v704
    %v3432 = vunpack.c.l.b16 %v705
    %v3433 = vunpack.c.h.b16 %v705
    %v3434 = vunpack.c.l.b16 %v706
    %v3435 = vunpack.c.h.b16 %v706
    %v3436 = vunpack.c.l.b16 %v707
    %v3437 = vunpack.c.h.b16 %v707
    %v3438 = vunpack.c.l.b16 %v708
    %v3439 = vunpack.c.h.b16 %v708
    %v3440 = vunpack.c.l.b16 %v709
    %v3441 = vunpack.c.h.b16 %v709
    %v3442 = vunpack.c.l.b16 %v710
    %v3443 = vunpack.c.h.b16 %v710
    %v3444 = vunpack.c.l.b16 %v711
    %v3445 = vunpack.c.h.b16 %v711
    %v3446 = vunpack.c.l.b16 %v712
    %v3447 = vunpack.c.h.b16 %v712
    %v3448 = vunpack.c.l.b16 %v713
    %v3449 = vunpack.c.h.b16 %v713
    %v3450 = vunpack.c.l.b16 %v714
    %v3451 = vunpack.c.h.b16 %v714
    %v3452 = vunpack.c.l.b16 %v715
    %v3453 = vunpack.c.h.b16 %v715
    %v3454 = vunpack.c.l.b16 %v716
    %v3455 = vunpack.c.h.b16 %v716
    %v3456 = vunpack.c.l.b16 %v717
    %v3457 = vunpack.c.h.b16 %v717
    %v3458 = vunpack.c.l.b16 %v718
    %v3459 = vunpack.c.h.b16 %v718
    %v3460 = vunpack.c.l.b16 %v719
    %v3461 = vunpack.c.h.b16 %v719
    %v3462 = vunpack.c.l.b16 %v720
    %v3463 = vunpack.c.h.b16 %v720
    %v3464 = vunpack.c.l.b16 %v721
    %v3465 = vunpack.c.h.b16 %v721
    %v3466 = vunpack.c.l.b16 %v722
    %v3467 = vunpack.c.h.b16 %v722
    %v3468 = vunpack.c.l.b16 %v723
    %v3469 = vunpack.c.h.b16 %v723
    %v3470 = vunpack.c.l.b16 %v724
    %v3471 = vunpack.c.h.b16 %v724
    %v3472 = vunpack.c.l.b16 %v725
    %v3473 = vunpack.c.h.b16 %v725
    %v3474 = vunpack.c.l.b16 %v726
    %v3475 = vunpack.c.h.b16 %v726
    %v3476 = vunpack.c.l.b16 %v727
    %v3477 = vunpack.c.h.b16 %v727
    %v3478 = vunpack.c.l.b16 %v728
    %v3479 = vunpack.c.h.b16 %v728
    %v3480 = vunpack.c.l.b16 %v729
    %v3481 = vunpack.c.h.b16 %v729
    %v3482 = vunpack.c.l.b16 %v730
    %v3483 = vunpack.c.h.b16 %v730
    %v3484 = vunpack.c.l.b16 %v731
    %v3485 = vunpack.c.h.b16 %v731
    %v3486 = vunpack.c.l.b16 %v732
    %v3487 = vunpack.c.h.b16 %v732
    %v3488 = vunpack.c.l.b16 %v733
    %v3489 = vunpack.c.h.b16 %v733
    %v3490 = vunpack.c.l.b16 %v734
    %v3491 = vunpack.c.h.b16 %v734
    %v3492 = vunpack.c.l.b16 %v735
    %v3493 = vunpack.c.h.b16 %v735
    %v3494 = vunpack.c.l.b16 %v736
    %v3495 = vunpack.c.h.b16 %v736
    %v3496 = vunpack.c.l.b16 %v737
    %v3497 = vunpack.c.h.b16 %v737
    %v3498 = vunpack.c.l.b16 %v738
    %v3499 = vunpack.c.h.b16 %v738
    %v3500 = vunpack.c.l.b16 %v739
    %v3501 = vunpack.c.h.b16 %v739
    %v3502 = vunpack.c.l.b16 %v740
    %v3503 = vunpack.c.h.b16 %v740
    %v3504 = vunpack.c.l.b16 %v741
    %v3505 = vunpack.c.h.b16 %v741
    %v3506 = vunpack.c.l.b16 %v742
    %v3507 = vunpack.c.h.b16 %v742
    %v3508 = vunpack.c.l.b16 %v743
    %v3509 = vunpack.c.h.b16 %v743
    %v3510 = vunpack.c.l.b16 %v744
    %v3511 = vunpack.c.h.b16 %v744
    %v3512 = vunpack.c.l.b16 %v745
    %v3513 = vunpack.c.h.b16 %v745
    %v3514 = vunpack.c.l.b16 %v746
    %v3515 = vunpack.c.h.b16 %v746
    %v3516 = vunpack.c.l.b16 %v747
    %v3517 = vunpack.c.h.b16 %v747
    %v3518 = vunpack.c.l.b16 %v748
    %v3519 = vunpack.c.h.b16 %v748
    %v3520 = vunpack.c.l.b16 %v749
    %v3521 = vunpack.c.h.b16 %v749
    %v3522 = vunpack.c.l.b16 %v750
    %v3523 = vunpack.c.h.b16 %v750
    %v3524 = vunpack.c.l.b16 %v751
    %v3525 = vunpack.c.h.b16 %v751
    %v3526 = vunpack.c.l.b16 %v752
    %v3527 = vunpack.c.h.b16 %v752
    %v3528 = vunpack.c.l.b16 %v753
    %v3529 = vunpack.c.h.b16 %v753
    %v3530 = vunpack.c.l.b16 %v754
    %v3531 = vunpack.c.h.b16 %v754
    %v3532 = vunpack.c.l.b16 %v755
    %v3533 = vunpack.c.h.b16 %v755
    %v3534 = vunpack.c.l.b16 %v756
    %v3535 = vunpack.c.h.b16 %v756
    %v3536 = vunpack.c.l.b16 %v757
    %v3537 = vunpack.c.h.b16 %v757
    %v3538 = vunpack.c.l.b16 %v758
    %v3539 = vunpack.c.h.b16 %v758
    %v3540 = vunpack.c.l.b16 %v759
    %v3541 = vunpack.c.h.b16 %v759
    %v3542 = vunpack.c.l.b16 %v760
    %v3543 = vunpack.c.h.b16 %v760
    %v3544 = vunpack.c.l.b16 %v761
    %v3545 = vunpack.c.h.b16 %v761
    %v3546 = vunpack.c.l.b16 %v762
    %v3547 = vunpack.c.h.b16 %v762
    %v3548 = vunpack.c.l.b16 %v763
    %v3549 = vunpack.c.h.b16 %v763
    %v3550 = vunpack.c.l.b16 %v764
    %v3551 = vunpack.c.h.b16 %v764
    %v3552 = vunpack.c.l.b16 %v765
    %v3553 = vunpack.c.h.b16 %v765
    %v3554 = vunpack.c.l.b16 %v766
    %v3555 = vunpack.c.h.b16 %v766
    %v3556 = vunpack.c.l.b16 %v767
    %v3557 = vunpack.c.h.b16 %v767
    %v3558 = vunpack.c.l.b16 %v768
    %v3559 = vunpack.c.h.b16 %v768
    %v3560 = vunpack.c.l.b16 %v769
    %v3561 = vunpack.c.h.b16 %v769
    %v3562 = vunpack.c.l.b16 %v770
    %v3563 = vunpack.c.h.b16 %v770
    %v3564 = vunpack.c.l.b16 %v771
    %v3565 = vunpack.c.h.b16 %v771
    %v3566 = vunpack.c.l.b16 %v772
    %v3567 = vunpack.c.h.b16 %v772
    %v3568 = vunpack.c.l.b16 %v773
    %v3569 = vunpack.c.h.b16 %v773
    %v3570 = vunpack.c.l.b16 %v774
    %v3571 = vunpack.c.h.b16 %v774
    %v3572 = vunpack.c.l.b16 %v775
    %v3573 = vunpack.c.h.b16 %v775
    %v3574 = vunpack.c.l.b16 %v776
    %v3575 = vunpack.c.h.b16 %v776
    %v3576 = vunpack.c.l.b16 %v777
    %v3577 = vunpack.c.h.b16 %v777
    %v3578 = vunpack.c.l.b16 %v778
    %v3579 = vunpack.c.h.b16 %v778
    %v3580 = vunpack.c.l.b16 %v779
    %v3581 = vunpack.c.h.b16 %v779
    %v3582 = vunpack.c.l.b16 %v780
    %v3583 = vunpack.c.h.b16 %v780
    %v3584 = vunpack.c.l.b16 %v781
    %v3585 = vunpack.c.h.b16 %v781
    %v3586 = vunpack.c.l.b16 %v782
    %v3587 = vunpack.c.h.b16 %v782
    %v3588 = vunpack.c.l.b16 %v783
    %v3589 = vunpack.c.h.b16 %v783
    %v3590 = vunpack.c.l.b16 %v784
    %v3591 = vunpack.c.h.b16 %v784
    %v3592 = vunpack.c.l.b16 %v785
    %v3593 = vunpack.c.h.b16 %v785
    %v3594 = vunpack.c.l.b16 %v786
    %v3595 = vunpack.c.h.b16 %v786
    %v3596 = vunpack.c.l.b16 %v787
    %v3597 = vunpack.c.h.b16 %v787
    %v3598 = vunpack.c.l.b16 %v788
    %v3599 = vunpack.c.h.b16 %v788
    %v3600 = vunpack.c.l.b16 %v789
    %v3601 = vunpack.c.h.b16 %v789
    %v3602 = vunpack.c.l.b16 %v790
    %v3603 = vunpack.c.h.b16 %v790
    %v3604 = vunpack.c.l.b16 %v791
    %v3605 = vunpack.c.h.b16 %v791
    %v3606 = vunpack.c.l.b16 %v792
    %v3607 = vunpack.c.h.b16 %v792
    %v3608 = vunpack.c.l.b16 %v793
    %v3609 = vunpack.c.h.b16 %v793
    %v3610 = vunpack.c.l.b16 %v794
    %v3611 = vunpack.c.h.b16 %v794
    %v3612 = vunpack.c.l.b16 %v795
    %v3613 = vunpack.c.h.b16 %v795
    %v3614 = vunpack.c.l.b16 %v796
    %v3615 = vunpack.c.h.b16 %v796
    %v3616 = vunpack.c.l.b16 %v797
    %v3617 = vunpack.c.h.b16 %v797
    %v3618 = vunpack.c.l.b16 %v798
    %v3619 = vunpack.c.h.b16 %v798
    %v3620 = vunpack.c.l.b16 %v799
    %v3621 = vunpack.c.h.b16 %v799
    %v3622 = vunpack.c.l.b16 %v800
    %v3623 = vunpack.c.h.b16 %v800
    %v3624 = vunpack.c.l.b16 %v801
    %v3625 = vunpack.c.h.b16 %v801
    %v3626 = vunpack.c.l.b16 %v802
    %v3627 = vunpack.c.h.b16 %v802
    %v3628 = vunpack.c.l.b16 %v803
    %v3629 = vunpack.c.h.b16 %v803
    %v3630 = vunpack.c.l.b16 %v804
    %v3631 = vunpack.c.h.b16 %v804
    %v3632 = vunpack.c.l.b16 %v805
    %v3633 = vunpack.c.h.b16 %v805
    %v3634 = vunpack.c.l.b16 %v806
    %v3635 = vunpack.c.h.b16 %v806
    %v3636 = vunpack.c.l.b16 %v807
    %v3637 = vunpack.c.h.b16 %v807
    %v3638 = vunpack.c.l.b16 %v808
    %v3639 = vunpack.c.h.b16 %v808
    %v3640 = vunpack.c.l.b16 %v809
    %v3641 = vunpack.c.h.b16 %v809
    %v3642 = vunpack.c.l.b16 %v810
    %v3643 = vunpack.c.h.b16 %v810
    %v3644 = vunpack.c.l.b16 %v811
    %v3645 = vunpack.c.h.b16 %v811
    %v3646 = vunpack.c.l.b16 %v812
    %v3647 = vunpack.c.h.b16 %v812
    %v3648 = vunpack.c.l.b16 %v813
    %v3649 = vunpack.c.h.b16 %v813
    %v3650 = vunpack.c.l.b16 %v814
    %v3651 = vunpack.c.h.b16 %v814
    %v3652 = vunpack.c.l.b16 %v815
    %v3653 = vunpack.c.h.b16 %v815
    %v3654 = vunpack.c.l.b16 %v816
    %v3655 = vunpack.c.h.b16 %v816
    %v3656 = vunpack.c.l.b16 %v817
    %v3657 = vunpack.c.h.b16 %v817
    %v3658 = vunpack.c.l.b16 %v818
    %v3659 = vunpack.c.h.b16 %v818
    %v3660 = vunpack.c.l.b16 %v819
    %v3661 = vunpack.c.h.b16 %v819
    %v3662 = vunpack.c.l.b16 %v820
    %v3663 = vunpack.c.h.b16 %v820
    %v3664 = vunpack.c.l.b16 %v821
    %v3665 = vunpack.c.h.b16 %v821
    %v3666 = vunpack.c.l.b16 %v822
    %v3667 = vunpack.c.h.b16 %v822
    %v3668 = vunpack.c.l.b16 %v823
    %v3669 = vunpack.c.h.b16 %v823
    %v3670 = vunpack.c.l.b16 %v824
    %v3671 = vunpack.c.h.b16 %v824
    %v3672 = vunpack.c.l.b16 %v825
    %v3673 = vunpack.c.h.b16 %v825
    %v3674 = vunpack.c.l.b16 %v826
    %v3675 = vunpack.c.h.b16 %v826
    %v3676 = vunpack.c.l.b16 %v827
    %v3677 = vunpack.c.h.b16 %v827
    %v3678 = vunpack.c.l.b16 %v828
    %v3679 = vunpack.c.h.b16 %v828
    %v3680 = vunpack.c.l.b16 %v829
    %v3681 = vunpack.c.h.b16 %v829
    %v3682 = vunpack.c.l.b16 %v830
    %v3683 = vunpack.c.h.b16 %v830
    %v3684 = vunpack.c.l.b16 %v831
    %v3685 = vunpack.c.h.b16 %v831
    %v3686 = vunpack.c.l.b16 %v832
    %v3687 = vunpack.c.h.b16 %v832
    %v3688 = vunpack.c.l.b16 %v833
    %v3689 = vunpack.c.h.b16 %v833
    %v3690 = vunpack.c.l.b16 %v834
    %v3691 = vunpack.c.h.b16 %v834
    %v3692 = vunpack.c.l.b16 %v835
    %v3693 = vunpack.c.h.b16 %v835
    %v3694 = vunpack.c.l.b16 %v836
    %v3695 = vunpack.c.h.b16 %v836
    %v3696 = vunpack.c.l.b16 %v837
    %v3697 = vunpack.c.h.b16 %v837
    %v3698 = vunpack.c.l.b16 %v838
    %v3699 = vunpack.c.h.b16 %v838
    %v3700 = vunpack.c.l.b16 %v839
    %v3701 = vunpack.c.h.b16 %v839
    %v3702 = vunpack.c.l.b16 %v840
    %v3703 = vunpack.c.h.b16 %v840
    %v3704 = vunpack.c.l.b16 %v841
    %v3705 = vunpack.c.h.b16 %v841
    %v3706 = vunpack.c.l.b16 %v842
    %v3707 = vunpack.c.h.b16 %v842
    %v3708 = vunpack.c.l.b16 %v843
    %v3709 = vunpack.c.h.b16 %v843
    %v3710 = vunpack.c.l.b16 %v844
    %v3711 = vunpack.c.h.b16 %v844
    %v3712 = vunpack.c.l.b16 %v845
    %v3713 = vunpack.c.h.b16 %v845
    %v3714 = vunpack.c.l.b16 %v846
    %v3715 = vunpack.c.h.b16 %v846
    %v3716 = vunpack.c.l.b16 %v847
    %v3717 = vunpack.c.h.b16 %v847
    %v3718 = vunpack.c.l.b16 %v848
    %v3719 = vunpack.c.h.b16 %v848
    %v3720 = vunpack.c.l.b16 %v849
    %v3721 = vunpack.c.h.b16 %v849
    %v3722 = vunpack.c.l.b16 %v850
    %v3723 = vunpack.c.h.b16 %v850
    %v3724 = vunpack.c.l.b16 %v851
    %v3725 = vunpack.c.h.b16 %v851
    %v3726 = vunpack.c.l.b16 %v852
    %v3727 = vunpack.c.h.b16 %v852
    %v3728 = vunpack.c.l.b16 %v853
    %v3729 = vunpack.c.h.b16 %v853
    %v3730 = vunpack.c.l.b16 %v854
    %v3731 = vunpack.c.h.b16 %v854
    %v3732 = vunpack.c.l.b16 %v855
    %v3733 = vunpack.c.h.b16 %v855
    %v3734 = vunpack.c.l.b16 %v856
    %v3735 = vunpack.c.h.b16 %v856
    %v3736 = vunpack.c.l.b16 %v857
    %v3737 = vunpack.c.h.b16 %v857
    %v3738 = vunpack.c.l.b16 %v858
    %v3739 = vunpack.c.h.b16 %v858
    %v3740 = vunpack.c.l.b16 %v859
    %v3741 = vunpack.c.h.b16 %v859
    %v3742 = vunpack.c.l.b16 %v860
    %v3743 = vunpack.c.h.b16 %v860
    %v3744 = vunpack.c.l.b16 %v861
    %v3745 = vunpack.c.h.b16 %v861
    %v3746 = vunpack.c.l.b16 %v862
    %v3747 = vunpack.c.h.b16 %v862
    %v3748 = vunpack.c.l.b16 %v863
    %v3749 = vunpack.c.h.b16 %v863
    %v3750 = vunpack.c.l.b16 %v864
    %v3751 = vunpack.c.h.b16 %v864
    %v3752 = vunpack.c.l.b16 %v865
    %v3753 = vunpack.c.h.b16 %v865
    %v3754 = vunpack.c.l.b16 %v866
    %v3755 = vunpack.c.h.b16 %v866
    %v3756 = vunpack.c.l.b16 %v867
    %v3757 = vunpack.c.h.b16 %v867
    %v3758 = vunpack.c.l.b16 %v868
    %v3759 = vunpack.c.h.b16 %v868
    %v3760 = vunpack.c.l.b16 %v869
    %v3761 = vunpack.c.h.b16 %v869
    %v3762 = vunpack.c.l.b16 %v870
    %v3763 = vunpack.c.h.b16 %v870
    %v3764 = vunpack.c.l.b16 %v871
    %v3765 = vunpack.c.h.b16 %v871
    %v3766 = vunpack.c.l.b16 %v872
    %v3767 = vunpack.c.h.b16 %v872
    %v3768 = vunpack.c.l.b16 %v873
    %v3769 = vunpack.c.h.b16 %v873
    %v3770 = vunpack.c.l.b16 %v874
    %v3771 = vunpack.c.h.b16 %v874
    %v3772 = vunpack.c.l.b16 %v875
    %v3773 = vunpack.c.h.b16 %v875
    %v3774 = vunpack.c.l.b16 %v876
    %v3775 = vunpack.c.h.b16 %v876
    %v3776 = vunpack.c.l.b16 %v877
    %v3777 = vunpack.c.h.b16 %v877
    %v3778 = vunpack.c.l.b16 %v878
    %v3779 = vunpack.c.h.b16 %v878
    %v3780 = vunpack.c.l.b16 %v879
    %v3781 = vunpack.c.h.b16 %v879
    %v3782 = vunpack.c.l.b16 %v880
    %v3783 = vunpack.c.h.b16 %v880
    %v3784 = vunpack.c.l.b16 %v881
    %v3785 = vunpack.c.h.b16 %v881
    %v3786 = vunpack.c.l.b16 %v882
    %v3787 = vunpack.c.h.b16 %v882
    %v3788 = vunpack.c.l.b16 %v883
    %v3789 = vunpack.c.h.b16 %v883
    %v3790 = vunpack.c.l.b16 %v884
    %v3791 = vunpack.c.h.b16 %v884
    %v3792 = vunpack.c.l.b16 %v885
    %v3793 = vunpack.c.h.b16 %v885
    %v3794 = vunpack.c.l.b16 %v886
    %v3795 = vunpack.c.h.b16 %v886
    %v3796 = vunpack.c.l.b16 %v887
    %v3797 = vunpack.c.h.b16 %v887
    %v3798 = vunpack.c.l.b16 %v888
    %v3799 = vunpack.c.h.b16 %v888
    %v3800 = vunpack.c.l.b16 %v889
    %v3801 = vunpack.c.h.b16 %v889
    %v3802 = vunpack.c.l.b16 %v890
    %v3803 = vunpack.c.h.b16 %v890
    %v3804 = vunpack.c.l.b16 %v891
    %v3805 = vunpack.c.h.b16 %v891
    %v3806 = vunpack.c.l.b16 %v892
    %v3807 = vunpack.c.h.b16 %v892
    %v3808 = vunpack.c.l.b16 %v893
    %v3809 = vunpack.c.h.b16 %v893
    %v3810 = vunpack.c.l.b16 %v894
    %v3811 = vunpack.c.h.b16 %v894
    %v3812 = vunpack.c.l.b16 %v895
    %v3813 = vunpack.c.h.b16 %v895
    %v3814 = vunpack.c.l.b16 %v896
    %v3815 = vunpack.c.h.b16 %v896
    %v3816 = vunpack.c.l.b16 %v897
    %v3817 = vunpack.c.h.b16 %v897
    %v3818 = vunpack.c.l.b16 %v898
    %v3819 = vunpack.c.h.b16 %v898
    %v3820 = vunpack.c.l.b16 %v899
    %v3821 = vunpack.c.h.b16 %v899
    %v3822 = vunpack.c.l.b16 %v900
    %v3823 = vunpack.c.h.b16 %v900
    %v3824 = vunpack.c.l.b16 %v901
    %v3825 = vunpack.c.h.b16 %v901
    %v3826 = vunpack.c.l.b16 %v902
    %v3827 = vunpack.c.h.b16 %v902
    %v3828 = vunpack.c.l.b16 %v903
    %v3829 = vunpack.c.h.b16 %v903
    %v3830 = vunpack.c.l.b16 %v904
    %v3831 = vunpack.c.h.b16 %v904
    %v3832 = vunpack.c.l.b16 %v905
    %v3833 = vunpack.c.h.b16 %v905
    %v3834 = vunpack.c.l.b16 %v906
    %v3835 = vunpack.c.h.b16 %v906
    %v3836 = vunpack.c.l.b16 %v907
    %v3837 = vunpack.c.h.b16 %v907
    %v3838 = vunpack.c.l.b16 %v908
    %v3839 = vunpack.c.h.b16 %v908
    %v3840 = vunpack.c.l.b16 %v909
    %v3841 = vunpack.c.h.b16 %v909
    %v3842 = vunpack.c.l.b16 %v910
    %v3843 = vunpack.c.h.b16 %v910
    %v3844 = vunpack.c.l.b16 %v911
    %v3845 = vunpack.c.h.b16 %v911
    %v3846 = vunpack.c.l.b16 %v912
    %v3847 = vunpack.c.h.b16 %v912
    %v3848 = vunpack.c.l.b16 %v913
    %v3849 = vunpack.c.h.b16 %v913
    %v3850 = vunpack.c.l.b16 %v914
    %v3851 = vunpack.c.h.b16 %v914
    %v3852 = vunpack.c.l.b16 %v915
    %v3853 = vunpack.c.h.b16 %v915
    %v3854 = vunpack.c.l.b16 %v916
    %v3855 = vunpack.c.h.b16 %v916
    %v3856 = vunpack.c.l.b16 %v917
    %v3857 = vunpack.c.h.b16 %v917
    %v3858 = vunpack.c.l.b16 %v918
    %v3859 = vunpack.c.h.b16 %v918
    %v3860 = vunpack.c.l.b16 %v919
    %v3861 = vunpack.c.h.b16 %v919
    %v3862 = vunpack.c.l.b16 %v920
    %v3863 = vunpack.c.h.b16 %v920
    %v3864 = vunpack.c.l.b16 %v921
    %v3865 = vunpack.c.h.b16 %v921
    %v3866 = vunpack.c.l.b16 %v922
    %v3867 = vunpack.c.h.b16 %v922
    %v3868 = vunpack.c.l.b16 %v923
    %v3869 = vunpack.c.h.b16 %v923
    %v3870 = vunpack.c.l.b16 %v924
    %v3871 = vunpack.c.h.b16 %v924
    %v3872 = vunpack.c.l.b16 %v925
    %v3873 = vunpack.c.h.b16 %v925
    %v3874 = vunpack.c.l.b16 %v926
    %v3875 = vunpack.c.h.b16 %v926
    %v3876 = vunpack.c.l.b16 %v927
    %v3877 = vunpack.c.h.b16 %v927
    %v3878 = vunpack.c.l.b16 %v928
    %v3879 = vunpack.c.h.b16 %v928
    %v3880 = vunpack.c.l.b16 %v929
    %v3881 = vunpack.c.h.b16 %v929
    %v3882 = vunpack.c.l.b16 %v930
    %v3883 = vunpack.c.h.b16 %v930
    %v3884 = vunpack.c.l.b16 %v931
    %v3885 = vunpack.c.h.b16 %v931
    %v3886 = vunpack.c.l.b16 %v932
    %v3887 = vunpack.c.h.b16 %v932
    %v3888 = vunpack.c.l.b16 %v933
    %v3889 = vunpack.c.h.b16 %v933
    %v3890 = vunpack.c.l.b16 %v934
    %v3891 = vunpack.c.h.b16 %v934
    %v3892 = vunpack.c.l.b16 %v935
    %v3893 = vunpack.c.h.b16 %v935
    %v3894 = vunpack.c.l.b16 %v936
    %v3895 = vunpack.c.h.b16 %v936
    %v3896 = vunpack.c.l.b16 %v937
    %v3897 = vunpack.c.h.b16 %v937
    %v3898 = vunpack.c.l.b16 %v938
    %v3899 = vunpack.c.h.b16 %v938
    %v3900 = vunpack.c.l.b16 %v939
    %v3901 = vunpack.c.h.b16 %v939
    %v3902 = vunpack.c.l.b16 %v940
    %v3903 = vunpack.c.h.b16 %v940
    %v3904 = vunpack.c.l.b16 %v941
    %v3905 = vunpack.c.h.b16 %v941
    %v3906 = vunpack.c.l.b16 %v942
    %v3907 = vunpack.c.h.b16 %v942
    %v3908 = vunpack.c.l.b16 %v943
    %v3909 = vunpack.c.h.b16 %v943
    %v3910 = vunpack.c.l.b16 %v944
    %v3911 = vunpack.c.h.b16 %v944
    %v3912 = vunpack.c.l.b16 %v945
    %v3913 = vunpack.c.h.b16 %v945
    %v3914 = vunpack.c.l.b16 %v946
    %v3915 = vunpack.c.h.b16 %v946
    %v3916 = vunpack.c.l.b16 %v947
    %v3917 = vunpack.c.h.b16 %v947
    %v3918 = vunpack.c.l.b16 %v948
    %v3919 = vunpack.c.h.b16 %v948
    %v3920 = vunpack.c.l.b16 %v949
    %v3921 = vunpack.c.h.b16 %v949
    %v3922 = vunpack.c.l.b16 %v950
    %v3923 = vunpack.c.h.b16 %v950
    %v3924 = vunpack.c.l.b16 %v951
    %v3925 = vunpack.c.h.b16 %v951
    %v3926 = vunpack.c.l.b16 %v952
    %v3927 = vunpack.c.h.b16 %v952
    %v3928 = vunpack.c.l.b16 %v953
    %v3929 = vunpack.c.h.b16 %v953
    %v3930 = vunpack.c.l.b16 %v954
    %v3931 = vunpack.c.h.b16 %v954
    %v3932 = vunpack.c.l.b16 %v955
    %v3933 = vunpack.c.h.b16 %v955
    %v3934 = vunpack.c.l.b16 %v956
    %v3935 = vunpack.c.h.b16 %v956
    %v3936 = vunpack.c.l.b16 %v957
    %v3937 = vunpack.c.h.b16 %v957
    %v3938 = vunpack.c.l.b16 %v958
    %v3939 = vunpack.c.h.b16 %v958
    %v3940 = vunpack.c.l.b16 %v959
    %v3941 = vunpack.c.h.b16 %v959
    %v3942 = vunpack.c.l.b16 %v960
    %v3943 = vunpack.c.h.b16 %v960
    %v3944 = vunpack.c.l.b16 %v961
    %v3945 = vunpack.c.h.b16 %v961
    %v3946 = vunpack.c.l.b16 %v962
    %v3947 = vunpack.c.h.b16 %v962
    %v3948 = vunpack.c.l.b16 %v963
    %v3949 = vunpack.c.h.b16 %v963
    %v3950 = vunpack.c.l.b16 %v964
    %v3951 = vunpack.c.h.b16 %v964
    %v3952 = vunpack.c.l.b16 %v965
    %v3953 = vunpack.c.h.b16 %v965
    %v3954 = vunpack.c.l.b16 %v966
    %v3955 = vunpack.c.h.b16 %v966
    %v3956 = vunpack.c.l.b16 %v967
    %v3957 = vunpack.c.h.b16 %v967
    %v3958 = vunpack.c.l.b16 %v968
    %v3959 = vunpack.c.h.b16 %v968
    %v3960 = vunpack.c.l.b16 %v969
    %v3961 = vunpack.c.h.b16 %v969
    %v3962 = vunpack.c.l.b16 %v970
    %v3963 = vunpack.c.h.b16 %v970
    %v3964 = vunpack.c.l.b16 %v971
    %v3965 = vunpack.c.h.b16 %v971
    %v3966 = vunpack.c.l.b16 %v972
    %v3967 = vunpack.c.h.b16 %v972
    %v3968 = vunpack.c.l.b16 %v973
    %v3969 = vunpack.c.h.b16 %v973
    %v3970 = vunpack.c.l.b16 %v974
    %v3971 = vunpack.c.h.b16 %v974
    %v3972 = vunpack.c.l.b16 %v975
    %v3973 = vunpack.c.h.b16 %v975
    %v3974 = vunpack.c.l.b16 %v976
    %v3975 = vunpack.c.h.b16 %v976
    %v3976 = vunpack.c.l.b16 %v977
    %v3977 = vunpack.c.h.b16 %v977
    %v3978 = vunpack.c.l.b16 %v978
    %v3979 = vunpack.c.h.b16 %v978
    %v3980 = vunpack.c.l.b16 %v979
    %v3981 = vunpack.c.h.b16 %v979
    %v3982 = vunpack.c.l.b16 %v980
    %v3983 = vunpack.c.h.b16 %v980
    %v3984 = vunpack.c.l.b16 %v981
    %v3985 = vunpack.c.h.b16 %v981
    %v3986 = vunpack.c.l.b16 %v982
    %v3987 = vunpack.c.h.b16 %v982
    %v3988 = vunpack.c.l.b16 %v983
    %v3989 = vunpack.c.h.b16 %v983
    %v3990 = vunpack.c.l.b16 %v984
    %v3991 = vunpack.c.h.b16 %v984
    %v3992 = vunpack.c.l.b16 %v985
    %v3993 = vunpack.c.h.b16 %v985
    %v3994 = vunpack.c.l.b16 %v986
    %v3995 = vunpack.c.h.b16 %v986
    %v3996 = vunpack.c.l.b16 %v987
    %v3997 = vunpack.c.h.b16 %v987
    %v3998 = vunpack.c.l.b16 %v988
    %v3999 = vunpack.c.h.b16 %v988
    %v4000 = vunpack.c.l.b16 %v989
    %v4001 = vunpack.c.h.b16 %v989
    %v4002 = vunpack.c.l.b16 %v990
    %v4003 = vunpack.c.h.b16 %v990
    %v4004 = vunpack.c.l.b16 %v991
    %v4005 = vunpack.c.h.b16 %v991
    %v4006 = vunpack.c.l.b16 %v992
    %v4007 = vunpack.c.h.b16 %v992
    %v4008 = vunpack.c.l.b16 %v993
    %v4009 = vunpack.c.h.b16 %v993
    %v4010 = vunpack.c.l.b16 %v994
    %v4011 = vunpack.c.h.b16 %v994
    %v4012 = vunpack.c.l.b16 %v995
    %v4013 = vunpack.c.h.b16 %v995
    %v4014 = vunpack.c.l.b16 %v996
    %v4015 = vunpack.c.h.b16 %v996
    %v4016 = vunpack.c.l.b16 %v997
    %v4017 = vunpack.c.h.b16 %v997
    %v4018 = vunpack.c.l.b16 %v998
    %v4019 = vunpack.c.h.b16 %v998
    %v4020 = vunpack.c.l.b16 %v999
    %v4021 = vunpack.c.h.b16 %v999
    %v4022 = vunpack.c.l.b16 %v1000
    %v4023 = vunpack.c.h.b16 %v1000
    %v4024 = vunpack.c.l.b16 %v1001
    %v4025 = vunpack.c.h.b16 %v1001
    %v4026 = vunpack.c.l.b16 %v1002
    %v4027 = vunpack.c.h.b16 %v1002
    %v4028 = vunpack.c.l.b16 %v1003
    %v4029 = vunpack.c.h.b16 %v1003
    %v4030 = vunpack.c.l.b16 %v1004
    %v4031 = vunpack.c.h.b16 %v1004
    %v4032 = vunpack.c.l.b16 %v1005
    %v4033 = vunpack.c.h.b16 %v1005
    %v4034 = vunpack.c.l.b16 %v1006
    %v4035 = vunpack.c.h.b16 %v1006
    %v4036 = vunpack.c.l.b16 %v1007
    %v4037 = vunpack.c.h.b16 %v1007
    %v4038 = vunpack.c.l.b16 %v1008
    %v4039 = vunpack.c.h.b16 %v1008
    %v4040 = vunpack.c.l.b16 %v1009
    %v4041 = vunpack.c.h.b16 %v1009
    %v4042 = vunpack.c.l.b16 %v1010
    %v4043 = vunpack.c.h.b16 %v1010
    %v4044 = vunpack.c.l.b16 %v1011
    %v4045 = vunpack.c.h.b16 %v1011
    %v4046 = vunpack.c.l.b16 %v1012
    %v4047 = vunpack.c.h.b16 %v1012
    %v4048 = vunpack.c.l.b16 %v1013
    %v4049 = vunpack.c.h.b16 %v1013
    %v4050 = vunpack.c.l.b16 %v1014
    %v4051 = vunpack.c.h.b16 %v1014
    %v4052 = vunpack.c.l.b16 %v1015
    %v4053 = vunpack.c.h.b16 %v1015
    %v4054 = vunpack.c.l.b16 %v1016
    %v4055 = vunpack.c.h.b16 %v1016
    %v4056 = vunpack.c.l.b16 %v1017
    %v4057 = vunpack.c.h.b16 %v1017
    %v4058 = vunpack.c.l.b16 %v1018
    %v4059 = vunpack.c.h.b16 %v1018
    %v4060 = vunpack.c.l.b16 %v1019
    %v4061 = vunpack.c.h.b16 %v1019
    %v4062 = vunpack.c.l.b16 %v1020
    %v4063 = vunpack.c.h.b16 %v1020
    %v4064 = vunpack.c.l.b16 %v1021
    %v4065 = vunpack.c.h.b16 %v1021
    %v4066 = vunpack.c.l.b16 %v1022
    %v4067 = vunpack.c.h.b16 %v1022
    %v4068 = vunpack.c.l.b16 %v1023
    %v4069 = vunpack.c.h.b16 %v1023
    %v4070 = vunpack.c.l.b16 %v1024
    %v4071 = vunpack.c.h.b16 %v1024
    %v4072 = vunpack.c.l.b16 %v1025
    %v4073 = vunpack.c.h.b16 %v1025
    %v4074 = vunpack.c.l.b16 %v1026
    %v4075 = vunpack.c.h.b16 %v1026
    %v4076 = vunpack.c.l.b16 %v1027
    %v4077 = vunpack.c.h.b16 %v1027
    %v4078 = vunpack.c.l.b16 %v1028
    %v4079 = vunpack.c.h.b16 %v1028
    %v4080 = vunpack.c.l.b16 %v1029
    %v4081 = vunpack.c.h.b16 %v1029
    %v4082 = vunpack.c.l.b16 %v1030
    %v4083 = vunpack.c.h.b16 %v1030
    %v4084 = vunpack.c.l.b16 %v1031
    %v4085 = vunpack.c.h.b16 %v1031
    %v4086 = vunpack.c.l.b16 %v1032
    %v4087 = vunpack.c.h.b16 %v1032
    %v4088 = vunpack.c.l.b16 %v1033
    %v4089 = vunpack.c.h.b16 %v1033
    %v4090 = vunpack.c.l.b16 %v1034
    %v4091 = vunpack.c.h.b16 %v1034
    %v4092 = vunpack.c.l.b16 %v1035
    %v4093 = vunpack.c.h.b16 %v1035
    %v4094 = vunpack.c.l.b16 %v1036
    %v4095 = vunpack.c.h.b16 %v1036
    %v4096 = vunpack.c.l.b16 %v1037
    %v4097 = vunpack.c.h.b16 %v1037
    %v4098 = vunpack.c.l.b16 %v1038
    %v4099 = vunpack.c.h.b16 %v1038
    %v4100 = vunpack.c.l.b16 %v1039
    %v4101 = vunpack.c.h.b16 %v1039
    %v4102 = vunpack.c.l.b16 %v1040
    %v4103 = vunpack.c.h.b16 %v1040
    %v4104 = vunpack.c.l.b16 %v1041
    %v4105 = vunpack.c.h.b16 %v1041
    %v4106 = vunpack.c.l.b16 %v1042
    %v4107 = vunpack.c.h.b16 %v1042
    %v4108 = vunpack.c.l.b16 %v1043
    %v4109 = vunpack.c.h.b16 %v1043
    %v4110 = vunpack.c.l.b16 %v1044
    %v4111 = vunpack.c.h.b16 %v1044
    %v4112 = vunpack.c.l.b16 %v1045
    %v4113 = vunpack.c.h.b16 %v1045
    %v4114 = vunpack.c.l.b16 %v1046
    %v4115 = vunpack.c.h.b16 %v1046
    %v4116 = vunpack.c.l.b16 %v1047
    %v4117 = vunpack.c.h.b16 %v1047
    %v4118 = vunpack.c.l.b16 %v1048
    %v4119 = vunpack.c.h.b16 %v1048
    %v4120 = vunpack.c.l.b16 %v1049
    %v4121 = vunpack.c.h.b16 %v1049
    %v4122 = vunpack.c.l.b16 %v1050
    %v4123 = vunpack.c.h.b16 %v1050
    %v4124 = vunpack.c.l.b16 %v1051
    %v4125 = vunpack.c.h.b16 %v1051
    %v4126 = vunpack.c.l.b16 %v1052
    %v4127 = vunpack.c.h.b16 %v1052
    %v4128 = vunpack.c.l.b16 %v1053
    %v4129 = vunpack.c.h.b16 %v1053
    %v4130 = vunpack.c.l.b16 %v1054
    %v4131 = vunpack.c.h.b16 %v1054
    %v4132 = vunpack.c.l.b16 %v1055
    %v4133 = vunpack.c.h.b16 %v1055
    %v4134 = vunpack.c.l.b16 %v1056
    %v4135 = vunpack.c.h.b16 %v1056
    %v4136 = vunpack.c.l.b16 %v1057
    %v4137 = vunpack.c.h.b16 %v1057
    %v4138 = vunpack.c.l.b16 %v1058
    %v4139 = vunpack.c.h.b16 %v1058
    %v4140 = vunpack.c.l.b16 %v1059
    %v4141 = vunpack.c.h.b16 %v1059
    %v4142 = vunpack.c.l.b16 %v1060
    %v4143 = vunpack.c.h.b16 %v1060
    %v4144 = vunpack.c.l.b16 %v1061
    %v4145 = vunpack.c.h.b16 %v1061
    %v4146 = vunpack.c.l.b16 %v1062
    %v4147 = vunpack.c.h.b16 %v1062
    %v4148 = vunpack.c.l.b16 %v1063
    %v4149 = vunpack.c.h.b16 %v1063
    %v4150 = vunpack.c.l.b16 %v1064
    %v4151 = vunpack.c.h.b16 %v1064
    %v4152 = vunpack.c.l.b16 %v1065
    %v4153 = vunpack.c.h.b16 %v1065
    %v4154 = vunpack.c.l.b16 %v1066
    %v4155 = vunpack.c.h.b16 %v1066
    %v4156 = vunpack.c.l.b16 %v1067
    %v4157 = vunpack.c.h.b16 %v1067
    %v4158 = vunpack.c.l.b16 %v1068
    %v4159 = vunpack.c.h.b16 %v1068
    %v4160 = vunpack.c.l.b16 %v1069
    %v4161 = vunpack.c.h.b16 %v1069
    %v4162 = vunpack.c.l.b16 %v1070
    %v4163 = vunpack.c.h.b16 %v1070
    %v4164 = vunpack.c.l.b16 %v1071
    %v4165 = vunpack.c.h.b16 %v1071
    %v4166 = vunpack.c.l.b16 %v1072
    %v4167 = vunpack.c.h.b16 %v1072
    %v4168 = vunpack.c.l.b16 %v1073
    %v4169 = vunpack.c.h.b16 %v1073
    %v4170 = vunpack.c.l.b16 %v1074
    %v4171 = vunpack.c.h.b16 %v1074
    %v4172 = vunpack.c.l.b16 %v1075
    %v4173 = vunpack.c.h.b16 %v1075
    %v4174 = vunpack.c.l.b16 %v1076
    %v4175 = vunpack.c.h.b16 %v1076
    %v4176 = vunpack.c.l.b16 %v1077
    %v4177 = vunpack.c.h.b16 %v1077
    %v4178 = vunpack.c.l.b16 %v1078
    %v4179 = vunpack.c.h.b16 %v1078
    %v4180 = vunpack.c.l.b16 %v1079
    %v4181 = vunpack.c.h.b16 %v1079
    %v4182 = vunpack.c.l.b16 %v1080
    %v4183 = vunpack.c.h.b16 %v1080
    %v4184 = vunpack.c.l.b16 %v1081
    %v4185 = vunpack.c.h.b16 %v1081
    %v4186 = vunpack.c.l.b16 %v1082
    %v4187 = vunpack.c.h.b16 %v1082
    %v4188 = vunpack.c.l.b16 %v1083
    %v4189 = vunpack.c.h.b16 %v1083
    %v4190 = vunpack.c.l.b16 %v1084
    %v4191 = vunpack.c.h.b16 %v1084
    %v4192 = vunpack.c.l.b16 %v1085
    %v4193 = vunpack.c.h.b16 %v1085
    %v4194 = vunpack.c.l.b16 %v1086
    %v4195 = vunpack.c.h.b16 %v1086
    %v4196 = vunpack.c.l.b16 %v1087
    %v4197 = vunpack.c.h.b16 %v1087
    %v4198 = vunpack.c.l.b16 %v1088
    %v4199 = vunpack.c.h.b16 %v1088
    %v4200 = vunpack.c.l.b16 %v1089
    %v4201 = vunpack.c.h.b16 %v1089
    %v4202 = vunpack.c.l.b16 %v1090
    %v4203 = vunpack.c.h.b16 %v1090
    %v4204 = vunpack.c.l.b16 %v1091
    %v4205 = vunpack.c.h.b16 %v1091
    %v4206 = vunpack.c.l.b16 %v1092
    %v4207 = vunpack.c.h.b16 %v1092
    %v4208 = vunpack.c.l.b16 %v1093
    %v4209 = vunpack.c.h.b16 %v1093
    %v4210 = vunpack.c.l.b16 %v1094
    %v4211 = vunpack.c.h.b16 %v1094
    %v4212 = vunpack.c.l.b16 %v1095
    %v4213 = vunpack.c.h.b16 %v1095
    %v4214 = vunpack.c.l.b16 %v1096
    %v4215 = vunpack.c.h.b16 %v1096
    %v4216 = vunpack.c.l.b16 %v1097
    %v4217 = vunpack.c.h.b16 %v1097
    %v4218 = vunpack.c.l.b16 %v1098
    %v4219 = vunpack.c.h.b16 %v1098
    %v4220 = vunpack.c.l.b16 %v1099
    %v4221 = vunpack.c.h.b16 %v1099
    %v4222 = vunpack.c.l.b16 %v1100
    %v4223 = vunpack.c.h.b16 %v1100
    %v4224 = vunpack.c.l.b16 %v1101
    %v4225 = vunpack.c.h.b16 %v1101
    %v4226 = vunpack.c.l.b16 %v1102
    %v4227 = vunpack.c.h.b16 %v1102
    %v4228 = vunpack.c.l.b16 %v1103
    %v4229 = vunpack.c.h.b16 %v1103
    %v4230 = vunpack.c.l.b16 %v1104
    %v4231 = vunpack.c.h.b16 %v1104
    %v4232 = vunpack.c.l.b16 %v1105
    %v4233 = vunpack.c.h.b16 %v1105
    %v4234 = vunpack.c.l.b16 %v1106
    %v4235 = vunpack.c.h.b16 %v1106
    %v4236 = vunpack.c.l.b16 %v1107
    %v4237 = vunpack.c.h.b16 %v1107
    %v4238 = vunpack.c.l.b16 %v1108
    %v4239 = vunpack.c.h.b16 %v1108
    %v4240 = vunpack.c.l.b16 %v1109
    %v4241 = vunpack.c.h.b16 %v1109
    %v4242 = vunpack.c.l.b16 %v1110
    %v4243 = vunpack.c.h.b16 %v1110
    %v4244 = vunpack.c.l.b16 %v1111
    %v4245 = vunpack.c.h.b16 %v1111
    %v4246 = vunpack.c.l.b16 %v1112
    %v4247 = vunpack.c.h.b16 %v1112
    %v4248 = vunpack.c.l.b16 %v1113
    %v4249 = vunpack.c.h.b16 %v1113
    %v4250 = vunpack.c.l.b16 %v1114
    %v4251 = vunpack.c.h.b16 %v1114
    %v4252 = vunpack.c.l.b16 %v1115
    %v4253 = vunpack.c.h.b16 %v1115
    %v4254 = vunpack.c.l.b16 %v1116
    %v4255 = vunpack.c.h.b16 %v1116
    %v4256 = vunpack.c.l.b16 %v1117
    %v4257 = vunpack.c.h.b16 %v1117
    %v4258 = vunpack.c.l.b16 %v1118
    %v4259 = vunpack.c.h.b16 %v1118
    %v4260 = vunpack.c.l.b16 %v1119
    %v4261 = vunpack.c.h.b16 %v1119
    %v4262 = vunpack.c.l.b16 %v1120
    %v4263 = vunpack.c.h.b16 %v1120
    %v4264 = vunpack.c.l.b16 %v1121
    %v4265 = vunpack.c.h.b16 %v1121
    %v4266 = vunpack.c.l.b16 %v1122
    %v4267 = vunpack.c.h.b16 %v1122
    %v4268 = vunpack.c.l.b16 %v1123
    %v4269 = vunpack.c.h.b16 %v1123
    %v4270 = vunpack.c.l.b16 %v1124
    %v4271 = vunpack.c.h.b16 %v1124
    %v4272 = vunpack.c.l.b16 %v1125
    %v4273 = vunpack.c.h.b16 %v1125
    %v4274 = vunpack.c.l.b16 %v1126
    %v4275 = vunpack.c.h.b16 %v1126
    %v4276 = vunpack.c.l.b16 %v1127
    %v4277 = vunpack.c.h.b16 %v1127
    %v4278 = vunpack.c.l.b16 %v1128
    %v4279 = vunpack.c.h.b16 %v1128
    %v4280 = vunpack.c.l.b16 %v1129
    %v4281 = vunpack.c.h.b16 %v1129
    %v4282 = vunpack.c.l.b16 %v1130
    %v4283 = vunpack.c.h.b16 %v1130
    %v4284 = vunpack.c.l.b16 %v1131
    %v4285 = vunpack.c.h.b16 %v1131
    %v4286 = vunpack.c.l.b16 %v1132
    %v4287 = vunpack.c.h.b16 %v1132
    %v4288 = vunpack.c.l.b16 %v1133
    %v4289 = vunpack.c.h.b16 %v1133
    %v4290 = vunpack.c.l.b16 %v1134
    %v4291 = vunpack.c.h.b16 %v1134
    %v4292 = vunpack.c.l.b16 %v1135
    %v4293 = vunpack.c.h.b16 %v1135
    %v4294 = vunpack.c.l.b16 %v1136
    %v4295 = vunpack.c.h.b16 %v1136
    %v4296 = vunpack.c.l.b16 %v1137
    %v4297 = vunpack.c.h.b16 %v1137
    %v4298 = vunpack.c.l.b16 %v1138
    %v4299 = vunpack.c.h.b16 %v1138
    %v4300 = vunpack.c.l.b16 %v1139
    %v4301 = vunpack.c.h.b16 %v1139
    %v4302 = vunpack.c.l.b16 %v1140
    %v4303 = vunpack.c.h.b16 %v1140
    %v4304 = vunpack.c.l.b16 %v1141
    %v4305 = vunpack.c.h.b16 %v1141
    %v4306 = vunpack.c.l.b16 %v1142
    %v4307 = vunpack.c.h.b16 %v1142
    %v4308 = vunpack.c.l.b16 %v1143
    %v4309 = vunpack.c.h.b16 %v1143
    %v4310 = vunpack.c.l.b16 %v1144
    %v4311 = vunpack.c.h.b16 %v1144
    %v4312 = vunpack.c.l.b16 %v1145
    %v4313 = vunpack.c.h.b16 %v1145
    %v4314 = vunpack.c.l.b16 %v1146
    %v4315 = vunpack.c.h.b16 %v1146
    %v4316 = vunpack.c.l.b16 %v1147
    %v4317 = vunpack.c.h.b16 %v1147
    %v4318 = vunpack.c.l.b16 %v1148
    %v4319 = vunpack.c.h.b16 %v1148
    %v4320 = vunpack.c.l.b16 %v1149
    %v4321 = vunpack.c.h.b16 %v1149
    %v4322 = vunpack.c.l.b16 %v1150
    %v4323 = vunpack.c.h.b16 %v1150
    %v4324 = vunpack.c.l.b16 %v1151
    %v4325 = vunpack.c.h.b16 %v1151
    %v4326 = vunpack.c.l.b16 %v1152
    %v4327 = vunpack.c.h.b16 %v1152
    %v4328 = vunpack.c.l.b16 %v1153
    %v4329 = vunpack.c.h.b16 %v1153
    %v4330 = vunpack.c.l.b16 %v1154
    %v4331 = vunpack.c.h.b16 %v1154
    %v4332 = vunpack.c.l.b16 %v1155
    %v4333 = vunpack.c.h.b16 %v1155
    %v4334 = vunpack.c.l.b16 %v1156
    %v4335 = vunpack.c.h.b16 %v1156
    %v4336 = vunpack.c.l.b16 %v1157
    %v4337 = vunpack.c.h.b16 %v1157
    %v4338 = vunpack.c.l.b16 %v1158
    %v4339 = vunpack.c.h.b16 %v1158
    %v4340 = vunpack.c.l.b16 %v1159
    %v4341 = vunpack.c.h.b16 %v1159
    %v4342 = vunpack.c.l.b16 %v1160
    %v4343 = vunpack.c.h.b16 %v1160
    %v4344 = vunpack.c.l.b16 %v1161
    %v4345 = vunpack.c.h.b16 %v1161
    %v4346 = vpack.c.b16 %v2314, %v2298
    %v4347 = vpack.c.b16 %v2315, %v2299
    %v4348 = vpack.c.b16 %v2316, %v2300
    %v4349 = vpack.c.b16 %v2317, %v2301
    %v4350 = vpack.c.b16 %v2318, %v2302
    %v4351 = vpack.c.b16 %v2319, %v2303
    %v4352 = vpack.c.b16 %v2320, %v2304
    %v4353 = vpack.c.b16 %v2321, %v2305
    %v4354 = vpack.c.b16 %v2322, %v2306
    %v4355 = vpack.c.b16 %v2323, %v2307
    %v4356 = vpack.c.b16 %v2324, %v2308
    %v4357 = vpack.c.b16 %v2325, %v2309
    %v4358 = vpack.c.b16 %v2326, %v2310
    %v4359 = vpack.c.b16 %v2327, %v2311
    %v4360 = vpack.c.b16 %v2328, %v2312
    %v4361 = vpack.c.b16 %v2329, %v2313
    %v4362 = vpack.c.b16 %v2346, %v2330
    %v4363 = vpack.c.b16 %v2347, %v2331
    %v4364 = vpack.c.b16 %v2348, %v2332
    %v4365 = vpack.c.b16 %v2349, %v2333
    %v4366 = vpack.c.b16 %v2350, %v2334
    %v4367 = vpack.c.b16 %v2351, %v2335
    %v4368 = vpack.c.b16 %v2352, %v2336
    %v4369 = vpack.c.b16 %v2353, %v2337
    %v4370 = vpack.c.b16 %v2354, %v2338
    %v4371 = vpack.c.b16 %v2355, %v2339
    %v4372 = vpack.c.b16 %v2356, %v2340
    %v4373 = vpack.c.b16 %v2357, %v2341
    %v4374 = vpack.c.b16 %v2358, %v2342
    %v4375 = vpack.c.b16 %v2359, %v2343
    %v4376 = vpack.c.b16 %v2360, %v2344
    %v4377 = vpack.c.b16 %v2361, %v2345
    %v4378 = vpack.c.b16 %v2378, %v2362
    %v4379 = vpack.c.b16 %v2379, %v2363
    %v4380 = vpack.c.b16 %v2380, %v2364
    %v4381 = vpack.c.b16 %v2381, %v2365
    %v4382 = vpack.c.b16 %v2382, %v2366
    %v4383 = vpack.c.b16 %v2383, %v2367
    %v4384 = vpack.c.b16 %v2384, %v2368
    %v4385 = vpack.c.b16 %v2385, %v2369
    %v4386 = vpack.c.b16 %v2386, %v2370
    %v4387 = vpack.c.b16 %v2387, %v2371
    %v4388 = vpack.c.b16 %v2388, %v2372
    %v4389 = vpack.c.b16 %v2389, %v2373
    %v4390 = vpack.c.b16 %v2390, %v2374
    %v4391 = vpack.c.b16 %v2391, %v2375
    %v4392 = vpack.c.b16 %v2392, %v2376
    %v4393 = vpack.c.b16 %v2393, %v2377
    %v4394 = vpack.c.b16 %v2410, %v2394
    %v4395 = vpack.c.b16 %v2411, %v2395
    %v4396 = vpack.c.b16 %v2412, %v2396
    %v4397 = vpack.c.b16 %v2413, %v2397
    %v4398 = vpack.c.b16 %v2414, %v2398
    %v4399 = vpack.c.b16 %v2415, %v2399
    %v4400 = vpack.c.b16 %v2416, %v2400
    %v4401 = vpack.c.b16 %v2417, %v2401
    %v4402 = vpack.c.b16 %v2418, %v2402
    %v4403 = vpack.c.b16 %v2419, %v2403
    %v4404 = vpack.c.b16 %v2420, %v2404
    %v4405 = vpack.c.b16 %v2421, %v2405
    %v4406 = vpack.c.b16 %v2422, %v2406
    %v4407 = vpack.c.b16 %v2423, %v2407
    %v4408 = vpack.c.b16 %v2424, %v2408
    %v4409 = vpack.c.b16 %v2425, %v2409
    %v4410 = vpack.c.b16 %v2442, %v2426
    %v4411 = vpack.c.b16 %v2443, %v2427
    %v4412 = vpack.c.b16 %v2444, %v2428
    %v4413 = vpack.c.b16 %v2445, %v2429
    %v4414 = vpack.c.b16 %v2446, %v2430
    %v4415 = vpack.c.b16 %v2447, %v2431
    %v4416 = vpack.c.b16 %v2448, %v2432
    %v4417 = vpack.c.b16 %v2449, %v2433
    %v4418 = vpack.c.b16 %v2450, %v2434
    %v4419 = vpack.c.b16 %v2451, %v2435
    %v4420 = vpack.c.b16 %v2452, %v2436
    %v4421 = vpack.c.b16 %v2453, %v2437
    %v4422 = vpack.c.b16 %v2454, %v2438
    %v4423 = vpack.c.b16 %v2455, %v2439
    %v4424 = vpack.c.b16 %v2456, %v2440
    %v4425 = vpack.c.b16 %v2457, %v2441
    %v4426 = vpack.c.b16 %v2474, %v2458
    %v4427 = vpack.c.b16 %v2475, %v2459
    %v4428 = vpack.c.b16 %v2476, %v2460
    %v4429 = vpack.c.b16 %v2477, %v2461
    %v4430 = vpack.c.b16 %v2478, %v2462
    %v4431 = vpack.c.b16 %v2479, %v2463
    %v4432 = vpack.c.b16 %v2480, %v2464
    %v4433 = vpack.c.b16 %v2481, %v2465
    %v4434 = vpack.c.b16 %v2482, %v2466
    %v4435 = vpack.c.b16 %v2483, %v2467
    %v4436 = vpack.c.b16 %v2484, %v2468
    %v4437 = vpack.c.b16 %v2485, %v2469
    %v4438 = vpack.c.b16 %v2486, %v2470
    %v4439 = vpack.c.b16 %v2487, %v2471
    %v4440 = vpack.c.b16 %v2488, %v2472
    %v4441 = vpack.c.b16 %v2489, %v2473
    %v4442 = vpack.c.b16 %v2506, %v2490
    %v4443 = vpack.c.b16 %v2507, %v2491
    %v4444 = vpack.c.b16 %v2508, %v2492
    %v4445 = vpack.c.b16 %v2509, %v2493
    %v4446 = vpack.c.b16 %v2510, %v2494
    %v4447 = vpack.c.b16 %v2511, %v2495
    %v4448 = vpack.c.b16 %v2512, %v2496
    %v4449 = vpack.c.b16 %v2513, %v2497
    %v4450 = vpack.c.b16 %v2514, %v2498
    %v4451 = vpack.c.b16 %v2515, %v2499
    %v4452 = vpack.c.b16 %v2516, %v2500
    %v4453 = vpack.c.b16 %v2517, %v2501
    %v4454 = vpack.c.b16 %v2518, %v2502
    %v4455 = vpack.c.b16 %v2519, %v2503
    %v4456 = vpack.c.b16 %v2520, %v2504
    %v4457 = vpack.c.b16 %v2521, %v2505
    %v4458 = vpack.c.b16 %v2538, %v2522
    %v4459 = vpack.c.b16 %v2539, %v2523
    %v4460 = vpack.c.b16 %v2540, %v2524
    %v4461 = vpack.c.b16 %v2541, %v2525
    %v4462 = vpack.c.b16 %v2542, %v2526
    %v4463 = vpack.c.b16 %v2543, %v2527
    %v4464 = vpack.c.b16 %v2544, %v2528
    %v4465 = vpack.c.b16 %v2545, %v2529
    %v4466 = vpack.c.b16 %v2546, %v2530
    %v4467 = vpack.c.b16 %v2547, %v2531
    %v4468 = vpack.c.b16 %v2548, %v2532
    %v4469 = vpack.c.b16 %v2549, %v2533
    %v4470 = vpack.c.b16 %v2550, %v2534
    %v4471 = vpack.c.b16 %v2551, %v2535
    %v4472 = vpack.c.b16 %v2552, %v2536
    %v4473 = vpack.c.b16 %v2553, %v2537
    %v4474 = vpack.c.b16 %v2570, %v2554
    %v4475 = vpack.c.b16 %v2571, %v2555
    %v4476 = vpack.c.b16 %v2572, %v2556
    %v4477 = vpack.c.b16 %v2573, %v2557
    %v4478 = vpack.c.b16 %v2574, %v2558
    %v4479 = vpack.c.b16 %v2575, %v2559
    %v4480 = vpack.c.b16 %v2576, %v2560
    %v4481 = vpack.c.b16 %v2577, %v2561
    %v4482 = vpack.c.b16 %v2578, %v2562
    %v4483 = vpack.c.b16 %v2579, %v2563
    %v4484 = vpack.c.b16 %v2580, %v2564
    %v4485 = vpack.c.b16 %v2581, %v2565
    %v4486 = vpack.c.b16 %v2582, %v2566
    %v4487 = vpack.c.b16 %v2583, %v2567
    %v4488 = vpack.c.b16 %v2584, %v2568
    %v4489 = vpack.c.b16 %v2585, %v2569
    %v4490 = vpack.c.b16 %v2602, %v2586
    %v4491 = vpack.c.b16 %v2603, %v2587
    %v4492 = vpack.c.b16 %v2604, %v2588
    %v4493 = vpack.c.b16 %v2605, %v2589
    %v4494 = vpack.c.b16 %v2606, %v2590
    %v4495 = vpack.c.b16 %v2607, %v2591
    %v4496 = vpack.c.b16 %v2608, %v2592
    %v4497 = vpack.c.b16 %v2609, %v2593
    %v4498 = vpack.c.b16 %v2610, %v2594
    %v4499 = vpack.c.b16 %v2611, %v2595
    %v4500 = vpack.c.b16 %v2612, %v2596
    %v4501 = vpack.c.b16 %v2613, %v2597
    %v4502 = vpack.c.b16 %v2614, %v2598
    %v4503 = vpack.c.b16 %v2615, %v2599
    %v4504 = vpack.c.b16 %v2616, %v2600
    %v4505 = vpack.c.b16 %v2617, %v2601
    %v4506 = vpack.c.b16 %v2634, %v2618
    %v4507 = vpack.c.b16 %v2635, %v2619
    %v4508 = vpack.c.b16 %v2636, %v2620
    %v4509 = vpack.c.b16 %v2637, %v2621
    %v4510 = vpack.c.b16 %v2638, %v2622
    %v4511 = vpack.c.b16 %v2639, %v2623
    %v4512 = vpack.c.b16 %v2640, %v2624
    %v4513 = vpack.c.b16 %v2641, %v2625
    %v4514 = vpack.c.b16 %v2642, %v2626
    %v4515 = vpack.c.b16 %v2643, %v2627
    %v4516 = vpack.c.b16 %v2644, %v2628
    %v4517 = vpack.c.b16 %v2645, %v2629
    %v4518 = vpack.c.b16 %v2646, %v2630
    %v4519 = vpack.c.b16 %v2647, %v2631
    %v4520 = vpack.c.b16 %v2648, %v2632
    %v4521 = vpack.c.b16 %v2649, %v2633
    %v4522 = vpack.c.b16 %v2666, %v2650
    %v4523 = vpack.c.b16 %v2667, %v2651
    %v4524 = vpack.c.b16 %v2668, %v2652
    %v4525 = vpack.c.b16 %v2669, %v2653
    %v4526 = vpack.c.b16 %v2670, %v2654
    %v4527 = vpack.c.b16 %v2671, %v2655
    %v4528 = vpack.c.b16 %v2672, %v2656
    %v4529 = vpack.c.b16 %v2673, %v2657
    %v4530 = vpack.c.b16 %v2674, %v2658
    %v4531 = vpack.c.b16 %v2675, %v2659
    %v4532 = vpack.c.b16 %v2676, %v2660
    %v4533 = vpack.c.b16 %v2677, %v2661
    %v4534 = vpack.c.b16 %v2678, %v2662
    %v4535 = vpack.c.b16 %v2679, %v2663
    %v4536 = vpack.c.b16 %v2680, %v2664
    %v4537 = vpack.c.b16 %v2681, %v2665
    %v4538 = vpack.c.b16 %v2698, %v2682
    %v4539 = vpack.c.b16 %v2699, %v2683
    %v4540 = vpack.c.b16 %v2700, %v2684
    %v4541 = vpack.c.b16 %v2701, %v2685
    %v4542 = vpack.c.b16 %v2702, %v2686
    %v4543 = vpack.c.b16 %v2703, %v2687
    %v4544 = vpack.c.b16 %v2704, %v2688
    %v4545 = vpack.c.b16 %v2705, %v2689
    %v4546 = vpack.c.b16 %v2706, %v2690
    %v4547 = vpack.c.b16 %v2707, %v2691
    %v4548 = vpack.c.b16 %v2708, %v2692
    %v4549 = vpack.c.b16 %v2709, %v2693
    %v4550 = vpack.c.b16 %v2710, %v2694
    %v4551 = vpack.c.b16 %v2711, %v2695
    %v4552 = vpack.c.b16 %v2712, %v2696
    %v4553 = vpack.c.b16 %v2713, %v2697
    %v4554 = vpack.c.b16 %v2730, %v2714
    %v4555 = vpack.c.b16 %v2731, %v2715
    %v4556 = vpack.c.b16 %v2732, %v2716
    %v4557 = vpack.c.b16 %v2733, %v2717
    %v4558 = vpack.c.b16 %v2734, %v2718
    %v4559 = vpack.c.b16 %v2735, %v2719
    %v4560 = vpack.c.b16 %v2736, %v2720
    %v4561 = vpack.c.b16 %v2737, %v2721
    %v4562 = vpack.c.b16 %v2738, %v2722
    %v4563 = vpack.c.b16 %v2739, %v2723
    %v4564 = vpack.c.b16 %v2740, %v2724
    %v4565 = vpack.c.b16 %v2741, %v2725
    %v4566 = vpack.c.b16 %v2742, %v2726
    %v4567 = vpack.c.b16 %v2743, %v2727
    %v4568 = vpack.c.b16 %v2744, %v2728
    %v4569 = vpack.c.b16 %v2745, %v2729
    %v4570 = vpack.c.b16 %v2762, %v2746
    %v4571 = vpack.c.b16 %v2763, %v2747
    %v4572 = vpack.c.b16 %v2764, %v2748
    %v4573 = vpack.c.b16 %v2765, %v2749
    %v4574 = vpack.c.b16 %v2766, %v2750
    %v4575 = vpack.c.b16 %v2767, %v2751
    %v4576 = vpack.c.b16 %v2768, %v2752
    %v4577 = vpack.c.b16 %v2769, %v2753
    %v4578 = vpack.c.b16 %v2770, %v2754
    %v4579 = vpack.c.b16 %v2771, %v2755
    %v4580 = vpack.c.b16 %v2772, %v2756
    %v4581 = vpack.c.b16 %v2773, %v2757
    %v4582 = vpack.c.b16 %v2774, %v2758
    %v4583 = vpack.c.b16 %v2775, %v2759
    %v4584 = vpack.c.b16 %v2776, %v2760
    %v4585 = vpack.c.b16 %v2777, %v2761
    %v4586 = vpack.c.b16 %v2794, %v2778
    %v4587 = vpack.c.b16 %v2795, %v2779
    %v4588 = vpack.c.b16 %v2796, %v2780
    %v4589 = vpack.c.b16 %v2797, %v2781
    %v4590 = vpack.c.b16 %v2798, %v2782
    %v4591 = vpack.c.b16 %v2799, %v2783
    %v4592 = vpack.c.b16 %v2800, %v2784
    %v4593 = vpack.c.b16 %v2801, %v2785
    %v4594 = vpack.c.b16 %v2802, %v2786
    %v4595 = vpack.c.b16 %v2803, %v2787
    %v4596 = vpack.c.b16 %v2804, %v2788
    %v4597 = vpack.c.b16 %v2805, %v2789
    %v4598 = vpack.c.b16 %v2806, %v2790
    %v4599 = vpack.c.b16 %v2807, %v2791
    %v4600 = vpack.c.b16 %v2808, %v2792
    %v4601 = vpack.c.b16 %v2809, %v2793
    %v4602 = vpack.c.b16 %v2826, %v2810
    %v4603 = vpack.c.b16 %v2827, %v2811
    %v4604 = vpack.c.b16 %v2828, %v2812
    %v4605 = vpack.c.b16 %v2829, %v2813
    %v4606 = vpack.c.b16 %v2830, %v2814
    %v4607 = vpack.c.b16 %v2831, %v2815
    %v4608 = vpack.c.b16 %v2832, %v2816
    %v4609 = vpack.c.b16 %v2833, %v2817
    %v4610 = vpack.c.b16 %v2834, %v2818
    %v4611 = vpack.c.b16 %v2835, %v2819
    %v4612 = vpack.c.b16 %v2836, %v2820
    %v4613 = vpack.c.b16 %v2837, %v2821
    %v4614 = vpack.c.b16 %v2838, %v2822
    %v4615 = vpack.c.b16 %v2839, %v2823
    %v4616 = vpack.c.b16 %v2840, %v2824
    %v4617 = vpack.c.b16 %v2841, %v2825
    %v4618 = vpack.c.b16 %v2858, %v2842
    %v4619 = vpack.c.b16 %v2859, %v2843
    %v4620 = vpack.c.b16 %v2860, %v2844
    %v4621 = vpack.c.b16 %v2861, %v2845
    %v4622 = vpack.c.b16 %v2862, %v2846
    %v4623 = vpack.c.b16 %v2863, %v2847
    %v4624 = vpack.c.b16 %v2864, %v2848
    %v4625 = vpack.c.b16 %v2865, %v2849
    %v4626 = vpack.c.b16 %v2866, %v2850
    %v4627 = vpack.c.b16 %v2867, %v2851
    %v4628 = vpack.c.b16 %v2868, %v2852
    %v4629 = vpack.c.b16 %v2869, %v2853
    %v4630 = vpack.c.b16 %v2870, %v2854
    %v4631 = vpack.c.b16 %v2871, %v2855
    %v4632 = vpack.c.b16 %v2872, %v2856
    %v4633 = vpack.c.b16 %v2873, %v2857
    %v4634 = vpack.c.b16 %v2890, %v2874
    %v4635 = vpack.c.b16 %v2891, %v2875
    %v4636 = vpack.c.b16 %v2892, %v2876
    %v4637 = vpack.c.b16 %v2893, %v2877
    %v4638 = vpack.c.b16 %v2894, %v2878
    %v4639 = vpack.c.b16 %v2895, %v2879
    %v4640 = vpack.c.b16 %v2896, %v2880
    %v4641 = vpack.c.b16 %v2897, %v2881
    %v4642 = vpack.c.b16 %v2898, %v2882
    %v4643 = vpack.c.b16 %v2899, %v2883
    %v4644 = vpack.c.b16 %v2900, %v2884
    %v4645 = vpack.c.b16 %v2901, %v2885
    %v4646 = vpack.c.b16 %v2902, %v2886
    %v4647 = vpack.c.b16 %v2903, %v2887
    %v4648 = vpack.c.b16 %v2904, %v2888
    %v4649 = vpack.c.b16 %v2905, %v2889
    %v4650 = vpack.c.b16 %v2922, %v2906
    %v4651 = vpack.c.b16 %v2923, %v2907
    %v4652 = vpack.c.b16 %v2924, %v2908
    %v4653 = vpack.c.b16 %v2925, %v2909
    %v4654 = vpack.c.b16 %v2926, %v2910
    %v4655 = vpack.c.b16 %v2927, %v2911
    %v4656 = vpack.c.b16 %v2928, %v2912
    %v4657 = vpack.c.b16 %v2929, %v2913
    %v4658 = vpack.c.b16 %v2930, %v2914
    %v4659 = vpack.c.b16 %v2931, %v2915
    %v4660 = vpack.c.b16 %v2932, %v2916
    %v4661 = vpack.c.b16 %v2933, %v2917
    %v4662 = vpack.c.b16 %v2934, %v2918
    %v4663 = vpack.c.b16 %v2935, %v2919
    %v4664 = vpack.c.b16 %v2936, %v2920
    %v4665 = vpack.c.b16 %v2937, %v2921
    %v4666 = vpack.c.b16 %v2954, %v2938
    %v4667 = vpack.c.b16 %v2955, %v2939
    %v4668 = vpack.c.b16 %v2956, %v2940
    %v4669 = vpack.c.b16 %v2957, %v2941
    %v4670 = vpack.c.b16 %v2958, %v2942
    %v4671 = vpack.c.b16 %v2959, %v2943
    %v4672 = vpack.c.b16 %v2960, %v2944
    %v4673 = vpack.c.b16 %v2961, %v2945
    %v4674 = vpack.c.b16 %v2962, %v2946
    %v4675 = vpack.c.b16 %v2963, %v2947
    %v4676 = vpack.c.b16 %v2964, %v2948
    %v4677 = vpack.c.b16 %v2965, %v2949
    %v4678 = vpack.c.b16 %v2966, %v2950
    %v4679 = vpack.c.b16 %v2967, %v2951
    %v4680 = vpack.c.b16 %v2968, %v2952
    %v4681 = vpack.c.b16 %v2969, %v2953
    %v4682 = vpack.c.b16 %v2986, %v2970
    %v4683 = vpack.c.b16 %v2987, %v2971
    %v4684 = vpack.c.b16 %v2988, %v2972
    %v4685 = vpack.c.b16 %v2989, %v2973
    %v4686 = vpack.c.b16 %v2990, %v2974
    %v4687 = vpack.c.b16 %v2991, %v2975
    %v4688 = vpack.c.b16 %v2992, %v2976
    %v4689 = vpack.c.b16 %v2993, %v2977
    %v4690 = vpack.c.b16 %v2994, %v2978
    %v4691 = vpack.c.b16 %v2995, %v2979
    %v4692 = vpack.c.b16 %v2996, %v2980
    %v4693 = vpack.c.b16 %v2997, %v2981
    %v4694 = vpack.c.b16 %v2998, %v2982
    %v4695 = vpack.c.b16 %v2999, %v2983
    %v4696 = vpack.c.b16 %v3000, %v2984
    %v4697 = vpack.c.b16 %v3001, %v2985
    %v4698 = vpack.c.b16 %v3018, %v3002
    %v4699 = vpack.c.b16 %v3019, %v3003
    %v4700 = vpack.c.b16 %v3020, %v3004
    %v4701 = vpack.c.b16 %v3021, %v3005
    %v4702 = vpack.c.b16 %v3022, %v3006
    %v4703 = vpack.c.b16 %v3023, %v3007
    %v4704 = vpack.c.b16 %v3024, %v3008
    %v4705 = vpack.c.b16 %v3025, %v3009
    %v4706 = vpack.c.b16 %v3026, %v3010
    %v4707 = vpack.c.b16 %v3027, %v3011
    %v4708 = vpack.c.b16 %v3028, %v3012
    %v4709 = vpack.c.b16 %v3029, %v3013
    %v4710 = vpack.c.b16 %v3030, %v3014
    %v4711 = vpack.c.b16 %v3031, %v3015
    %v4712 = vpack.c.b16 %v3032, %v3016
    %v4713 = vpack.c.b16 %v3033, %v3017
    %v4714 = vpack.c.b16 %v3050, %v3034
    %v4715 = vpack.c.b16 %v3051, %v3035
    %v4716 = vpack.c.b16 %v3052, %v3036
    %v4717 = vpack.c.b16 %v3053, %v3037
    %v4718 = vpack.c.b16 %v3054, %v3038
    %v4719 = vpack.c.b16 %v3055, %v3039
    %v4720 = vpack.c.b16 %v3056, %v3040
    %v4721 = vpack.c.b16 %v3057, %v3041
    %v4722 = vpack.c.b16 %v3058, %v3042
    %v4723 = vpack.c.b16 %v3059, %v3043
    %v4724 = vpack.c.b16 %v3060, %v3044
    %v4725 = vpack.c.b16 %v3061, %v3045
    %v4726 = vpack.c.b16 %v3062, %v3046
    %v4727 = vpack.c.b16 %v3063, %v3047
    %v4728 = vpack.c.b16 %v3064, %v3048
    %v4729 = vpack.c.b16 %v3065, %v3049
    %v4730 = vpack.c.b16 %v3082, %v3066
    %v4731 = vpack.c.b16 %v3083, %v3067
    %v4732 = vpack.c.b16 %v3084, %v3068
    %v4733 = vpack.c.b16 %v3085, %v3069
    %v4734 = vpack.c.b16 %v3086, %v3070
    %v4735 = vpack.c.b16 %v3087, %v3071
    %v4736 = vpack.c.b16 %v3088, %v3072
    %v4737 = vpack.c.b16 %v3089, %v3073
    %v4738 = vpack.c.b16 %v3090, %v3074
    %v4739 = vpack.c.b16 %v3091, %v3075
    %v4740 = vpack.c.b16 %v3092, %v3076
    %v4741 = vpack.c.b16 %v3093, %v3077
    %v4742 = vpack.c.b16 %v3094, %v3078
    %v4743 = vpack.c.b16 %v3095, %v3079
    %v4744 = vpack.c.b16 %v3096, %v3080
    %v4745 = vpack.c.b16 %v3097, %v3081
    %v4746 = vpack.c.b16 %v3114, %v3098
    %v4747 = vpack.c.b16 %v3115, %v3099
    %v4748 = vpack.c.b16 %v3116, %v3100
    %v4749 = vpack.c.b16 %v3117, %v3101
    %v4750 = vpack.c.b16 %v3118, %v3102
    %v4751 = vpack.c.b16 %v3119, %v3103
    %v4752 = vpack.c.b16 %v3120, %v3104
    %v4753 = vpack.c.b16 %v3121, %v3105
    %v4754 = vpack.c.b16 %v3122, %v3106
    %v4755 = vpack.c.b16 %v3123, %v3107
    %v4756 = vpack.c.b16 %v3124, %v3108
    %v4757 = vpack.c.b16 %v3125, %v3109
    %v4758 = vpack.c.b16 %v3126, %v3110
    %v4759 = vpack.c.b16 %v3127, %v3111
    %v4760 = vpack.c.b16 %v3128, %v3112
    %v4761 = vpack.c.b16 %v3129, %v3113
    %v4762 = vpack.c.b16 %v3146, %v3130
    %v4763 = vpack.c.b16 %v3147, %v3131
    %v4764 = vpack.c.b16 %v3148, %v3132
    %v4765 = vpack.c.b16 %v3149, %v3133
    %v4766 = vpack.c.b16 %v3150, %v3134
    %v4767 = vpack.c.b16 %v3151, %v3135
    %v4768 = vpack.c.b16 %v3152, %v3136
    %v4769 = vpack.c.b16 %v3153, %v3137
    %v4770 = vpack.c.b16 %v3154, %v3138
    %v4771 = vpack.c.b16 %v3155, %v3139
    %v4772 = vpack.c.b16 %v3156, %v3140
    %v4773 = vpack.c.b16 %v3157, %v3141
    %v4774 = vpack.c.b16 %v3158, %v3142
    %v4775 = vpack.c.b16 %v3159, %v3143
    %v4776 = vpack.c.b16 %v3160, %v3144
    %v4777 = vpack.c.b16 %v3161, %v3145
    %v4778 = vpack.c.b16 %v3178, %v3162
    %v4779 = vpack.c.b16 %v3179, %v3163
    %v4780 = vpack.c.b16 %v3180, %v3164
    %v4781 = vpack.c.b16 %v3181, %v3165
    %v4782 = vpack.c.b16 %v3182, %v3166
    %v4783 = vpack.c.b16 %v3183, %v3167
    %v4784 = vpack.c.b16 %v3184, %v3168
    %v4785 = vpack.c.b16 %v3185, %v3169
    %v4786 = vpack.c.b16 %v3186, %v3170
    %v4787 = vpack.c.b16 %v3187, %v3171
    %v4788 = vpack.c.b16 %v3188, %v3172
    %v4789 = vpack.c.b16 %v3189, %v3173
    %v4790 = vpack.c.b16 %v3190, %v3174
    %v4791 = vpack.c.b16 %v3191, %v3175
    %v4792 = vpack.c.b16 %v3192, %v3176
    %v4793 = vpack.c.b16 %v3193, %v3177
    %v4794 = vpack.c.b16 %v3210, %v3194
    %v4795 = vpack.c.b16 %v3211, %v3195
    %v4796 = vpack.c.b16 %v3212, %v3196
    %v4797 = vpack.c.b16 %v3213, %v3197
    %v4798 = vpack.c.b16 %v3214, %v3198
    %v4799 = vpack.c.b16 %v3215, %v3199
    %v4800 = vpack.c.b16 %v3216, %v3200
    %v4801 = vpack.c.b16 %v3217, %v3201
    %v4802 = vpack.c.b16 %v3218, %v3202
    %v4803 = vpack.c.b16 %v3219, %v3203
    %v4804 = vpack.c.b16 %v3220, %v3204
    %v4805 = vpack.c.b16 %v3221, %v3205
    %v4806 = vpack.c.b16 %v3222, %v3206
    %v4807 = vpack.c.b16 %v3223, %v3207
    %v4808 = vpack.c.b16 %v3224, %v3208
    %v4809 = vpack.c.b16 %v3225, %v3209
    %v4810 = vpack.c.b16 %v3242, %v3226
    %v4811 = vpack.c.b16 %v3243, %v3227
    %v4812 = vpack.c.b16 %v3244, %v3228
    %v4813 = vpack.c.b16 %v3245, %v3229
    %v4814 = vpack.c.b16 %v3246, %v3230
    %v4815 = vpack.c.b16 %v3247, %v3231
    %v4816 = vpack.c.b16 %v3248, %v3232
    %v4817 = vpack.c.b16 %v3249, %v3233
    %v4818 = vpack.c.b16 %v3250, %v3234
    %v4819 = vpack.c.b16 %v3251, %v3235
    %v4820 = vpack.c.b16 %v3252, %v3236
    %v4821 = vpack.c.b16 %v3253, %v3237
    %v4822 = vpack.c.b16 %v3254, %v3238
    %v4823 = vpack.c.b16 %v3255, %v3239
    %v4824 = vpack.c.b16 %v3256, %v3240
    %v4825 = vpack.c.b16 %v3257, %v3241
    %v4826 = vpack.c.b16 %v3274, %v3258
    %v4827 = vpack.c.b16 %v3275, %v3259
    %v4828 = vpack.c.b16 %v3276, %v3260
    %v4829 = vpack.c.b16 %v3277, %v3261
    %v4830 = vpack.c.b16 %v3278, %v3262
    %v4831 = vpack.c.b16 %v3279, %v3263
    %v4832 = vpack.c.b16 %v3280, %v3264
    %v4833 = vpack.c.b16 %v3281, %v3265
    %v4834 = vpack.c.b16 %v3282, %v3266
    %v4835 = vpack.c.b16 %v3283, %v3267
    %v4836 = vpack.c.b16 %v3284, %v3268
    %v4837 = vpack.c.b16 %v3285, %v3269
    %v4838 = vpack.c.b16 %v3286, %v3270
    %v4839 = vpack.c.b16 %v3287, %v3271
    %v4840 = vpack.c.b16 %v3288, %v3272
    %v4841 = vpack.c.b16 %v3289, %v3273
    %v4842 = vpack.c.b16 %v3306, %v3290
    %v4843 = vpack.c.b16 %v3307, %v3291
    %v4844 = vpack.c.b16 %v3308, %v3292
    %v4845 = vpack.c.b16 %v3309, %v3293
    %v4846 = vpack.c.b16 %v3310, %v3294
    %v4847 = vpack.c.b16 %v3311, %v3295
    %v4848 = vpack.c.b16 %v3312, %v3296
    %v4849 = vpack.c.b16 %v3313, %v3297
    %v4850 = vpack.c.b16 %v3314, %v3298
    %v4851 = vpack.c.b16 %v3315, %v3299
    %v4852 = vpack.c.b16 %v3316, %v3300
    %v4853 = vpack.c.b16 %v3317, %v3301
    %v4854 = vpack.c.b16 %v3318, %v3302
    %v4855 = vpack.c.b16 %v3319, %v3303
    %v4856 = vpack.c.b16 %v3320, %v3304
    %v4857 = vpack.c.b16 %v3321, %v3305
    %v4858 = vpack.c.b16 %v3338, %v3322
    %v4859 = vpack.c.b16 %v3339, %v3323
    %v4860 = vpack.c.b16 %v3340, %v3324
    %v4861 = vpack.c.b16 %v3341, %v3325
    %v4862 = vpack.c.b16 %v3342, %v3326
    %v4863 = vpack.c.b16 %v3343, %v3327
    %v4864 = vpack.c.b16 %v3344, %v3328
    %v4865 = vpack.c.b16 %v3345, %v3329
    %v4866 = vpack.c.b16 %v3346, %v3330
    %v4867 = vpack.c.b16 %v3347, %v3331
    %v4868 = vpack.c.b16 %v3348, %v3332
    %v4869 = vpack.c.b16 %v3349, %v3333
    %v4870 = vpack.c.b16 %v3350, %v3334
    %v4871 = vpack.c.b16 %v3351, %v3335
    %v4872 = vpack.c.b16 %v3352, %v3336
    %v4873 = vpack.c.b16 %v3353, %v3337
    %v4874 = vpack.c.b16 %v3370, %v3354
    %v4875 = vpack.c.b16 %v3371, %v3355
    %v4876 = vpack.c.b16 %v3372, %v3356
    %v4877 = vpack.c.b16 %v3373, %v3357
    %v4878 = vpack.c.b16 %v3374, %v3358
    %v4879 = vpack.c.b16 %v3375, %v3359
    %v4880 = vpack.c.b16 %v3376, %v3360
    %v4881 = vpack.c.b16 %v3377, %v3361
    %v4882 = vpack.c.b16 %v3378, %v3362
    %v4883 = vpack.c.b16 %v3379, %v3363
    %v4884 = vpack.c.b16 %v3380, %v3364
    %v4885 = vpack.c.b16 %v3381, %v3365
    %v4886 = vpack.c.b16 %v3382, %v3366
    %v4887 = vpack.c.b16 %v3383, %v3367
    %v4888 = vpack.c.b16 %v3384, %v3368
    %v4889 = vpack.c.b16 %v3385, %v3369
    %v4890 = vpack.c.b16 %v3402, %v3386
    %v4891 = vpack.c.b16 %v3403, %v3387
    %v4892 = vpack.c.b16 %v3404, %v3388
    %v4893 = vpack.c.b16 %v3405, %v3389
    %v4894 = vpack.c.b16 %v3406, %v3390
    %v4895 = vpack.c.b16 %v3407, %v3391
    %v4896 = vpack.c.b16 %v3408, %v3392
    %v4897 = vpack.c.b16 %v3409, %v3393
    %v4898 = vpack.c.b16 %v3410, %v3394
    %v4899 = vpack.c.b16 %v3411, %v3395
    %v4900 = vpack.c.b16 %v3412, %v3396
    %v4901 = vpack.c.b16 %v3413, %v3397
    %v4902 = vpack.c.b16 %v3414, %v3398
    %v4903 = vpack.c.b16 %v3415, %v3399
    %v4904 = vpack.c.b16 %v3416, %v3400
    %v4905 = vpack.c.b16 %v3417, %v3401
    %v4906 = vpack.c.b16 %v3434, %v3418
    %v4907 = vpack.c.b16 %v3435, %v3419
    %v4908 = vpack.c.b16 %v3436, %v3420
    %v4909 = vpack.c.b16 %v3437, %v3421
    %v4910 = vpack.c.b16 %v3438, %v3422
    %v4911 = vpack.c.b16 %v3439, %v3423
    %v4912 = vpack.c.b16 %v3440, %v3424
    %v4913 = vpack.c.b16 %v3441, %v3425
    %v4914 = vpack.c.b16 %v3442, %v3426
    %v4915 = vpack.c.b16 %v3443, %v3427
    %v4916 = vpack.c.b16 %v3444, %v3428
    %v4917 = vpack.c.b16 %v3445, %v3429
    %v4918 = vpack.c.b16 %v3446, %v3430
    %v4919 = vpack.c.b16 %v3447, %v3431
    %v4920 = vpack.c.b16 %v3448, %v3432
    %v4921 = vpack.c.b16 %v3449, %v3433
    %v4922 = vpack.c.b16 %v3466, %v3450
    %v4923 = vpack.c.b16 %v3467, %v3451
    %v4924 = vpack.c.b16 %v3468, %v3452
    %v4925 = vpack.c.b16 %v3469, %v3453
    %v4926 = vpack.c.b16 %v3470, %v3454
    %v4927 = vpack.c.b16 %v3471, %v3455
    %v4928 = vpack.c.b16 %v3472, %v3456
    %v4929 = vpack.c.b16 %v3473, %v3457
    %v4930 = vpack.c.b16 %v3474, %v3458
    %v4931 = vpack.c.b16 %v3475, %v3459
    %v4932 = vpack.c.b16 %v3476, %v3460
    %v4933 = vpack.c.b16 %v3477, %v3461
    %v4934 = vpack.c.b16 %v3478, %v3462
    %v4935 = vpack.c.b16 %v3479, %v3463
    %v4936 = vpack.c.b16 %v3480, %v3464
    %v4937 = vpack.c.b16 %v3481, %v3465
    %v4938 = vpack.c.b16 %v3498, %v3482
    %v4939 = vpack.c.b16 %v3499, %v3483
    %v4940 = vpack.c.b16 %v3500, %v3484
    %v4941 = vpack.c.b16 %v3501, %v3485
    %v4942 = vpack.c.b16 %v3502, %v3486
    %v4943 = vpack.c.b16 %v3503, %v3487
    %v4944 = vpack.c.b16 %v3504, %v3488
    %v4945 = vpack.c.b16 %v3505, %v3489
    %v4946 = vpack.c.b16 %v3506, %v3490
    %v4947 = vpack.c.b16 %v3507, %v3491
    %v4948 = vpack.c.b16 %v3508, %v3492
    %v4949 = vpack.c.b16 %v3509, %v3493
    %v4950 = vpack.c.b16 %v3510, %v3494
    %v4951 = vpack.c.b16 %v3511, %v3495
    %v4952 = vpack.c.b16 %v3512, %v3496
    %v4953 = vpack.c.b16 %v3513, %v3497
    %v4954 = vpack.c.b16 %v3530, %v3514
    %v4955 = vpack.c.b16 %v3531, %v3515
    %v4956 = vpack.c.b16 %v3532, %v3516
    %v4957 = vpack.c.b16 %v3533, %v3517
    %v4958 = vpack.c.b16 %v3534, %v3518
    %v4959 = vpack.c.b16 %v3535, %v3519
    %v4960 = vpack.c.b16 %v3536, %v3520
    %v4961 = vpack.c.b16 %v3537, %v3521
    %v4962 = vpack.c.b16 %v3538, %v3522
    %v4963 = vpack.c.b16 %v3539, %v3523
    %v4964 = vpack.c.b16 %v3540, %v3524
    %v4965 = vpack.c.b16 %v3541, %v3525
    %v4966 = vpack.c.b16 %v3542, %v3526
    %v4967 = vpack.c.b16 %v3543, %v3527
    %v4968 = vpack.c.b16 %v3544, %v3528
    %v4969 = vpack.c.b16 %v3545, %v3529
    %v4970 = vpack.c.b16 %v3562, %v3546
    %v4971 = vpack.c.b16 %v3563, %v3547
    %v4972 = vpack.c.b16 %v3564, %v3548
    %v4973 = vpack.c.b16 %v3565, %v3549
    %v4974 = vpack.c.b16 %v3566, %v3550
    %v4975 = vpack.c.b16 %v3567, %v3551
    %v4976 = vpack.c.b16 %v3568, %v3552
    %v4977 = vpack.c.b16 %v3569, %v3553
    %v4978 = vpack.c.b16 %v3570, %v3554
    %v4979 = vpack.c.b16 %v3571, %v3555
    %v4980 = vpack.c.b16 %v3572, %v3556
    %v4981 = vpack.c.b16 %v3573, %v3557
    %v4982 = vpack.c.b16 %v3574, %v3558
    %v4983 = vpack.c.b16 %v3575, %v3559
    %v4984 = vpack.c.b16 %v3576, %v3560
    %v4985 = vpack.c.b16 %v3577, %v3561
    %v4986 = vpack.c.b16 %v3594, %v3578
    %v4987 = vpack.c.b16 %v3595, %v3579
    %v4988 = vpack.c.b16 %v3596, %v3580
    %v4989 = vpack.c.b16 %v3597, %v3581
    %v4990 = vpack.c.b16 %v3598, %v3582
    %v4991 = vpack.c.b16 %v3599, %v3583
    %v4992 = vpack.c.b16 %v3600, %v3584
    %v4993 = vpack.c.b16 %v3601, %v3585
    %v4994 = vpack.c.b16 %v3602, %v3586
    %v4995 = vpack.c.b16 %v3603, %v3587
    %v4996 = vpack.c.b16 %v3604, %v3588
    %v4997 = vpack.c.b16 %v3605, %v3589
    %v4998 = vpack.c.b16 %v3606, %v3590
    %v4999 = vpack.c.b16 %v3607, %v3591
    %v5000 = vpack.c.b16 %v3608, %v3592
    %v5001 = vpack.c.b16 %v3609, %v3593
    %v5002 = vpack.c.b16 %v3626, %v3610
    %v5003 = vpack.c.b16 %v3627, %v3611
    %v5004 = vpack.c.b16 %v3628, %v3612
    %v5005 = vpack.c.b16 %v3629, %v3613
    %v5006 = vpack.c.b16 %v3630, %v3614
    %v5007 = vpack.c.b16 %v3631, %v3615
    %v5008 = vpack.c.b16 %v3632, %v3616
    %v5009 = vpack.c.b16 %v3633, %v3617
    %v5010 = vpack.c.b16 %v3634, %v3618
    %v5011 = vpack.c.b16 %v3635, %v3619
    %v5012 = vpack.c.b16 %v3636, %v3620
    %v5013 = vpack.c.b16 %v3637, %v3621
    %v5014 = vpack.c.b16 %v3638, %v3622
    %v5015 = vpack.c.b16 %v3639, %v3623
    %v5016 = vpack.c.b16 %v3640, %v3624
    %v5017 = vpack.c.b16 %v3641, %v3625
    %v5018 = vpack.c.b16 %v3658, %v3642
    %v5019 = vpack.c.b16 %v3659, %v3643
    %v5020 = vpack.c.b16 %v3660, %v3644
    %v5021 = vpack.c.b16 %v3661, %v3645
    %v5022 = vpack.c.b16 %v3662, %v3646
    %v5023 = vpack.c.b16 %v3663, %v3647
    %v5024 = vpack.c.b16 %v3664, %v3648
    %v5025 = vpack.c.b16 %v3665, %v3649
    %v5026 = vpack.c.b16 %v3666, %v3650
    %v5027 = vpack.c.b16 %v3667, %v3651
    %v5028 = vpack.c.b16 %v3668, %v3652
    %v5029 = vpack.c.b16 %v3669, %v3653
    %v5030 = vpack.c.b16 %v3670, %v3654
    %v5031 = vpack.c.b16 %v3671, %v3655
    %v5032 = vpack.c.b16 %v3672, %v3656
    %v5033 = vpack.c.b16 %v3673, %v3657
    %v5034 = vpack.c.b16 %v3690, %v3674
    %v5035 = vpack.c.b16 %v3691, %v3675
    %v5036 = vpack.c.b16 %v3692, %v3676
    %v5037 = vpack.c.b16 %v3693, %v3677
    %v5038 = vpack.c.b16 %v3694, %v3678
    %v5039 = vpack.c.b16 %v3695, %v3679
    %v5040 = vpack.c.b16 %v3696, %v3680
    %v5041 = vpack.c.b16 %v3697, %v3681
    %v5042 = vpack.c.b16 %v3698, %v3682
    %v5043 = vpack.c.b16 %v3699, %v3683
    %v5044 = vpack.c.b16 %v3700, %v3684
    %v5045 = vpack.c.b16 %v3701, %v3685
    %v5046 = vpack.c.b16 %v3702, %v3686
    %v5047 = vpack.c.b16 %v3703, %v3687
    %v5048 = vpack.c.b16 %v3704, %v3688
    %v5049 = vpack.c.b16 %v3705, %v3689
    %v5050 = vpack.c.b16 %v3722, %v3706
    %v5051 = vpack.c.b16 %v3723, %v3707
    %v5052 = vpack.c.b16 %v3724, %v3708
    %v5053 = vpack.c.b16 %v3725, %v3709
    %v5054 = vpack.c.b16 %v3726, %v3710
    %v5055 = vpack.c.b16 %v3727, %v3711
    %v5056 = vpack.c.b16 %v3728, %v3712
    %v5057 = vpack.c.b16 %v3729, %v3713
    %v5058 = vpack.c.b16 %v3730, %v3714
    %v5059 = vpack.c.b16 %v3731, %v3715
    %v5060 = vpack.c.b16 %v3732, %v3716
    %v5061 = vpack.c.b16 %v3733, %v3717
    %v5062 = vpack.c.b16 %v3734, %v3718
    %v5063 = vpack.c.b16 %v3735, %v3719
    %v5064 = vpack.c.b16 %v3736, %v3720
    %v5065 = vpack.c.b16 %v3737, %v3721
    %v5066 = vpack.c.b16 %v3754, %v3738
    %v5067 = vpack.c.b16 %v3755, %v3739
    %v5068 = vpack.c.b16 %v3756, %v3740
    %v5069 = vpack.c.b16 %v3757, %v3741
    %v5070 = vpack.c.b16 %v3758, %v3742
    %v5071 = vpack.c.b16 %v3759, %v3743
    %v5072 = vpack.c.b16 %v3760, %v3744
    %v5073 = vpack.c.b16 %v3761, %v3745
    %v5074 = vpack.c.b16 %v3762, %v3746
    %v5075 = vpack.c.b16 %v3763, %v3747
    %v5076 = vpack.c.b16 %v3764, %v3748
    %v5077 = vpack.c.b16 %v3765, %v3749
    %v5078 = vpack.c.b16 %v3766, %v3750
    %v5079 = vpack.c.b16 %v3767, %v3751
    %v5080 = vpack.c.b16 %v3768, %v3752
    %v5081 = vpack.c.b16 %v3769, %v3753
    %v5082 = vpack.c.b16 %v3786, %v3770
    %v5083 = vpack.c.b16 %v3787, %v3771
    %v5084 = vpack.c.b16 %v3788, %v3772
    %v5085 = vpack.c.b16 %v3789, %v3773
    %v5086 = vpack.c.b16 %v3790, %v3774
    %v5087 = vpack.c.b16 %v3791, %v3775
    %v5088 = vpack.c.b16 %v3792, %v3776
    %v5089 = vpack.c.b16 %v3793, %v3777
    %v5090 = vpack.c.b16 %v3794, %v3778
    %v5091 = vpack.c.b16 %v3795, %v3779
    %v5092 = vpack.c.b16 %v3796, %v3780
    %v5093 = vpack.c.b16 %v3797, %v3781
    %v5094 = vpack.c.b16 %v3798, %v3782
    %v5095 = vpack.c.b16 %v3799, %v3783
    %v5096 = vpack.c.b16 %v3800, %v3784
    %v5097 = vpack.c.b16 %v3801, %v3785
    %v5098 = vpack.c.b16 %v3818, %v3802
    %v5099 = vpack.c.b16 %v3819, %v3803
    %v5100 = vpack.c.b16 %v3820, %v3804
    %v5101 = vpack.c.b16 %v3821, %v3805
    %v5102 = vpack.c.b16 %v3822, %v3806
    %v5103 = vpack.c.b16 %v3823, %v3807
    %v5104 = vpack.c.b16 %v3824, %v3808
    %v5105 = vpack.c.b16 %v3825, %v3809
    %v5106 = vpack.c.b16 %v3826, %v3810
    %v5107 = vpack.c.b16 %v3827, %v3811
    %v5108 = vpack.c.b16 %v3828, %v3812
    %v5109 = vpack.c.b16 %v3829, %v3813
    %v5110 = vpack.c.b16 %v3830, %v3814
    %v5111 = vpack.c.b16 %v3831, %v3815
    %v5112 = vpack.c.b16 %v3832, %v3816
    %v5113 = vpack.c.b16 %v3833, %v3817
    %v5114 = vpack.c.b16 %v3850, %v3834
    %v5115 = vpack.c.b16 %v3851, %v3835
    %v5116 = vpack.c.b16 %v3852, %v3836
    %v5117 = vpack.c.b16 %v3853, %v3837
    %v5118 = vpack.c.b16 %v3854, %v3838
    %v5119 = vpack.c.b16 %v3855, %v3839
    %v5120 = vpack.c.b16 %v3856, %v3840
    %v5121 = vpack.c.b16 %v3857, %v3841
    %v5122 = vpack.c.b16 %v3858, %v3842
    %v5123 = vpack.c.b16 %v3859, %v3843
    %v5124 = vpack.c.b16 %v3860, %v3844
    %v5125 = vpack.c.b16 %v3861, %v3845
    %v5126 = vpack.c.b16 %v3862, %v3846
    %v5127 = vpack.c.b16 %v3863, %v3847
    %v5128 = vpack.c.b16 %v3864, %v3848
    %v5129 = vpack.c.b16 %v3865, %v3849
    %v5130 = vpack.c.b16 %v3882, %v3866
    %v5131 = vpack.c.b16 %v3883, %v3867
    %v5132 = vpack.c.b16 %v3884, %v3868
    %v5133 = vpack.c.b16 %v3885, %v3869
    %v5134 = vpack.c.b16 %v3886, %v3870
    %v5135 = vpack.c.b16 %v3887, %v3871
    %v5136 = vpack.c.b16 %v3888, %v3872
    %v5137 = vpack.c.b16 %v3889, %v3873
    %v5138 = vpack.c.b16 %v3890, %v3874
    %v5139 = vpack.c.b16 %v3891, %v3875
    %v5140 = vpack.c.b16 %v3892, %v3876
    %v5141 = vpack.c.b16 %v3893, %v3877
    %v5142 = vpack.c.b16 %v3894, %v3878
    %v5143 = vpack.c.b16 %v3895, %v3879
    %v5144 = vpack.c.b16 %v3896, %v3880
    %v5145 = vpack.c.b16 %v3897, %v3881
    %v5146 = vpack.c.b16 %v3914, %v3898
    %v5147 = vpack.c.b16 %v3915, %v3899
    %v5148 = vpack.c.b16 %v3916, %v3900
    %v5149 = vpack.c.b16 %v3917, %v3901
    %v5150 = vpack.c.b16 %v3918, %v3902
    %v5151 = vpack.c.b16 %v3919, %v3903
    %v5152 = vpack.c.b16 %v3920, %v3904
    %v5153 = vpack.c.b16 %v3921, %v3905
    %v5154 = vpack.c.b16 %v3922, %v3906
    %v5155 = vpack.c.b16 %v3923, %v3907
    %v5156 = vpack.c.b16 %v3924, %v3908
    %v5157 = vpack.c.b16 %v3925, %v3909
    %v5158 = vpack.c.b16 %v3926, %v3910
    %v5159 = vpack.c.b16 %v3927, %v3911
    %v5160 = vpack.c.b16 %v3928, %v3912
    %v5161 = vpack.c.b16 %v3929, %v3913
    %v5162 = vpack.c.b16 %v3946, %v3930
    %v5163 = vpack.c.b16 %v3947, %v3931
    %v5164 = vpack.c.b16 %v3948, %v3932
    %v5165 = vpack.c.b16 %v3949, %v3933
    %v5166 = vpack.c.b16 %v3950, %v3934
    %v5167 = vpack.c.b16 %v3951, %v3935
    %v5168 = vpack.c.b16 %v3952, %v3936
    %v5169 = vpack.c.b16 %v3953, %v3937
    %v5170 = vpack.c.b16 %v3954, %v3938
    %v5171 = vpack.c.b16 %v3955, %v3939
    %v5172 = vpack.c.b16 %v3956, %v3940
    %v5173 = vpack.c.b16 %v3957, %v3941
    %v5174 = vpack.c.b16 %v3958, %v3942
    %v5175 = vpack.c.b16 %v3959, %v3943
    %v5176 = vpack.c.b16 %v3960, %v3944
    %v5177 = vpack.c.b16 %v3961, %v3945
    %v5178 = vpack.c.b16 %v3978, %v3962
    %v5179 = vpack.c.b16 %v3979, %v3963
    %v5180 = vpack.c.b16 %v3980, %v3964
    %v5181 = vpack.c.b16 %v3981, %v3965
    %v5182 = vpack.c.b16 %v3982, %v3966
    %v5183 = vpack.c.b16 %v3983, %v3967
    %v5184 = vpack.c.b16 %v3984, %v3968
    %v5185 = vpack.c.b16 %v3985, %v3969
    %v5186 = vpack.c.b16 %v3986, %v3970
    %v5187 = vpack.c.b16 %v3987, %v3971
    %v5188 = vpack.c.b16 %v3988, %v3972
    %v5189 = vpack.c.b16 %v3989, %v3973
    %v5190 = vpack.c.b16 %v3990, %v3974
    %v5191 = vpack.c.b16 %v3991, %v3975
    %v5192 = vpack.c.b16 %v3992, %v3976
    %v5193 = vpack.c.b16 %v3993, %v3977
    %v5194 = vpack.c.b16 %v4010, %v3994
    %v5195 = vpack.c.b16 %v4011, %v3995
    %v5196 = vpack.c.b16 %v4012, %v3996
    %v5197 = vpack.c.b16 %v4013, %v3997
    %v5198 = vpack.c.b16 %v4014, %v3998
    %v5199 = vpack.c.b16 %v4015, %v3999
    %v5200 = vpack.c.b16 %v4016, %v4000
    %v5201 = vpack.c.b16 %v4017, %v4001
    %v5202 = vpack.c.b16 %v4018, %v4002
    %v5203 = vpack.c.b16 %v4019, %v4003
    %v5204 = vpack.c.b16 %v4020, %v4004
    %v5205 = vpack.c.b16 %v4021, %v4005
    %v5206 = vpack.c.b16 %v4022, %v4006
    %v5207 = vpack.c.b16 %v4023, %v4007
    %v5208 = vpack.c.b16 %v4024, %v4008
    %v5209 = vpack.c.b16 %v4025, %v4009
    %v5210 = vpack.c.b16 %v4042, %v4026
    %v5211 = vpack.c.b16 %v4043, %v4027
    %v5212 = vpack.c.b16 %v4044, %v4028
    %v5213 = vpack.c.b16 %v4045, %v4029
    %v5214 = vpack.c.b16 %v4046, %v4030
    %v5215 = vpack.c.b16 %v4047, %v4031
    %v5216 = vpack.c.b16 %v4048, %v4032
    %v5217 = vpack.c.b16 %v4049, %v4033
    %v5218 = vpack.c.b16 %v4050, %v4034
    %v5219 = vpack.c.b16 %v4051, %v4035
    %v5220 = vpack.c.b16 %v4052, %v4036
    %v5221 = vpack.c.b16 %v4053, %v4037
    %v5222 = vpack.c.b16 %v4054, %v4038
    %v5223 = vpack.c.b16 %v4055, %v4039
    %v5224 = vpack.c.b16 %v4056, %v4040
    %v5225 = vpack.c.b16 %v4057, %v4041
    %v5226 = vpack.c.b16 %v4074, %v4058
    %v5227 = vpack.c.b16 %v4075, %v4059
    %v5228 = vpack.c.b16 %v4076, %v4060
    %v5229 = vpack.c.b16 %v4077, %v4061
    %v5230 = vpack.c.b16 %v4078, %v4062
    %v5231 = vpack.c.b16 %v4079, %v4063
    %v5232 = vpack.c.b16 %v4080, %v4064
    %v5233 = vpack.c.b16 %v4081, %v4065
    %v5234 = vpack.c.b16 %v4082, %v4066
    %v5235 = vpack.c.b16 %v4083, %v4067
    %v5236 = vpack.c.b16 %v4084, %v4068
    %v5237 = vpack.c.b16 %v4085, %v4069
    %v5238 = vpack.c.b16 %v4086, %v4070
    %v5239 = vpack.c.b16 %v4087, %v4071
    %v5240 = vpack.c.b16 %v4088, %v4072
    %v5241 = vpack.c.b16 %v4089, %v4073
    %v5242 = vpack.c.b16 %v4106, %v4090
    %v5243 = vpack.c.b16 %v4107, %v4091
    %v5244 = vpack.c.b16 %v4108, %v4092
    %v5245 = vpack.c.b16 %v4109, %v4093
    %v5246 = vpack.c.b16 %v4110, %v4094
    %v5247 = vpack.c.b16 %v4111, %v4095
    %v5248 = vpack.c.b16 %v4112, %v4096
    %v5249 = vpack.c.b16 %v4113, %v4097
    %v5250 = vpack.c.b16 %v4114, %v4098
    %v5251 = vpack.c.b16 %v4115, %v4099
    %v5252 = vpack.c.b16 %v4116, %v4100
    %v5253 = vpack.c.b16 %v4117, %v4101
    %v5254 = vpack.c.b16 %v4118, %v4102
    %v5255 = vpack.c.b16 %v4119, %v4103
    %v5256 = vpack.c.b16 %v4120, %v4104
    %v5257 = vpack.c.b16 %v4121, %v4105
    %v5258 = vpack.c.b16 %v4138, %v4122
    %v5259 = vpack.c.b16 %v4139, %v4123
    %v5260 = vpack.c.b16 %v4140, %v4124
    %v5261 = vpack.c.b16 %v4141, %v4125
    %v5262 = vpack.c.b16 %v4142, %v4126
    %v5263 = vpack.c.b16 %v4143, %v4127
    %v5264 = vpack.c.b16 %v4144, %v4128
    %v5265 = vpack.c.b16 %v4145, %v4129
    %v5266 = vpack.c.b16 %v4146, %v4130
    %v5267 = vpack.c.b16 %v4147, %v4131
    %v5268 = vpack.c.b16 %v4148, %v4132
    %v5269 = vpack.c.b16 %v4149, %v4133
    %v5270 = vpack.c.b16 %v4150, %v4134
    %v5271 = vpack.c.b16 %v4151, %v4135
    %v5272 = vpack.c.b16 %v4152, %v4136
    %v5273 = vpack.c.b16 %v4153, %v4137
    %v5274 = vpack.c.b16 %v4170, %v4154
    %v5275 = vpack.c.b16 %v4171, %v4155
    %v5276 = vpack.c.b16 %v4172, %v4156
    %v5277 = vpack.c.b16 %v4173, %v4157
    %v5278 = vpack.c.b16 %v4174, %v4158
    %v5279 = vpack.c.b16 %v4175, %v4159
    %v5280 = vpack.c.b16 %v4176, %v4160
    %v5281 = vpack.c.b16 %v4177, %v4161
    %v5282 = vpack.c.b16 %v4178, %v4162
    %v5283 = vpack.c.b16 %v4179, %v4163
    %v5284 = vpack.c.b16 %v4180, %v4164
    %v5285 = vpack.c.b16 %v4181, %v4165
    %v5286 = vpack.c.b16 %v4182, %v4166
    %v5287 = vpack.c.b16 %v4183, %v4167
    %v5288 = vpack.c.b16 %v4184, %v4168
    %v5289 = vpack.c.b16 %v4185, %v4169
    %v5290 = vpack.c.b16 %v4202, %v4186
    %v5291 = vpack.c.b16 %v4203, %v4187
    %v5292 = vpack.c.b16 %v4204, %v4188
    %v5293 = vpack.c.b16 %v4205, %v4189
    %v5294 = vpack.c.b16 %v4206, %v4190
    %v5295 = vpack.c.b16 %v4207, %v4191
    %v5296 = vpack.c.b16 %v4208, %v4192
    %v5297 = vpack.c.b16 %v4209, %v4193
    %v5298 = vpack.c.b16 %v4210, %v4194
    %v5299 = vpack.c.b16 %v4211, %v4195
    %v5300 = vpack.c.b16 %v4212, %v4196
    %v5301 = vpack.c.b16 %v4213, %v4197
    %v5302 = vpack.c.b16 %v4214, %v4198
    %v5303 = vpack.c.b16 %v4215, %v4199
    %v5304 = vpack.c.b16 %v4216, %v4200
    %v5305 = vpack.c.b16 %v4217, %v4201
    %v5306 = vpack.c.b16 %v4234, %v4218
    %v5307 = vpack.c.b16 %v4235, %v4219
    %v5308 = vpack.c.b16 %v4236, %v4220
    %v5309 = vpack.c.b16 %v4237, %v4221
    %v5310 = vpack.c.b16 %v4238, %v4222
    %v5311 = vpack.c.b16 %v4239, %v4223
    %v5312 = vpack.c.b16 %v4240, %v4224
    %v5313 = vpack.c.b16 %v4241, %v4225
    %v5314 = vpack.c.b16 %v4242, %v4226
    %v5315 = vpack.c.b16 %v4243, %v4227
    %v5316 = vpack.c.b16 %v4244, %v4228
    %v5317 = vpack.c.b16 %v4245, %v4229
    %v5318 = vpack.c.b16 %v4246, %v4230
    %v5319 = vpack.c.b16 %v4247, %v4231
    %v5320 = vpack.c.b16 %v4248, %v4232
    %v5321 = vpack.c.b16 %v4249, %v4233
    %v5322 = vpack.c.b16 %v4266, %v4250
    %v5323 = vpack.c.b16 %v4267, %v4251
    %v5324 = vpack.c.b16 %v4268, %v4252
    %v5325 = vpack.c.b16 %v4269, %v4253
    %v5326 = vpack.c.b16 %v4270, %v4254
    %v5327 = vpack.c.b16 %v4271, %v4255
    %v5328 = vpack.c.b16 %v4272, %v4256
    %v5329 = vpack.c.b16 %v4273, %v4257
    %v5330 = vpack.c.b16 %v4274, %v4258
    %v5331 = vpack.c.b16 %v4275, %v4259
    %v5332 = vpack.c.b16 %v4276, %v4260
    %v5333 = vpack.c.b16 %v4277, %v4261
    %v5334 = vpack.c.b16 %v4278, %v4262
    %v5335 = vpack.c.b16 %v4279, %v4263
    %v5336 = vpack.c.b16 %v4280, %v4264
    %v5337 = vpack.c.b16 %v4281, %v4265
    %v5338 = vpack.c.b16 %v4298, %v4282
    %v5339 = vpack.c.b16 %v4299, %v4283
    %v5340 = vpack.c.b16 %v4300, %v4284
    %v5341 = vpack.c.b16 %v4301, %v4285
    %v5342 = vpack.c.b16 %v4302, %v4286
    %v5343 = vpack.c.b16 %v4303, %v4287
    %v5344 = vpack.c.b16 %v4304, %v4288
    %v5345 = vpack.c.b16 %v4305, %v4289
    %v5346 = vpack.c.b16 %v4306, %v4290
    %v5347 = vpack.c.b16 %v4307, %v4291
    %v5348 = vpack.c.b16 %v4308, %v4292
    %v5349 = vpack.c.b16 %v4309, %v4293
    %v5350 = vpack.c.b16 %v4310, %v4294
    %v5351 = vpack.c.b16 %v4311, %v4295
    %v5352 = vpack.c.b16 %v4312, %v4296
    %v5353 = vpack.c.b16 %v4313, %v4297
    %v5354 = vpack.c.b16 %v4330, %v4314
    %v5355 = vpack.c.b16 %v4331, %v4315
    %v5356 = vpack.c.b16 %v4332, %v4316
    %v5357 = vpack.c.b16 %v4333, %v4317
    %v5358 = vpack.c.b16 %v4334, %v4318
    %v5359 = vpack.c.b16 %v4335, %v4319
    %v5360 = vpack.c.b16 %v4336, %v4320
    %v5361 = vpack.c.b16 %v4337, %v4321
    %v5362 = vpack.c.b16 %v4338, %v4322
    %v5363 = vpack.c.b16 %v4339, %v4323
    %v5364 = vpack.c.b16 %v4340, %v4324
    %v5365 = vpack.c.b16 %v4341, %v4325
    %v5366 = vpack.c.b16 %v4342, %v4326
    %v5367 = vpack.c.b16 %v4343, %v4327
    %v5368 = vpack.c.b16 %v4344, %v4328
    %v5369 = vpack.c.b16 %v4345, %v4329
    %6394 = vmatprep.subr.bf16.mxu0 %v4459
    %6395 = vmatpush1.bf16.msra.mxu0 %v4458
    %6396 = vmatprep.subr.bf16.mxu0 %v4443
    %6397 = vmatpush1.bf16.msra.mxu0 %v4442
    %6398 = vmatprep.subr.bf16.mxu0 %v4427
    %6399 = vmatpush1.bf16.msra.mxu0 %v4426
    %6400 = vmatprep.subr.bf16.mxu0 %v4411
    %6401 = vmatpush1.bf16.msra.mxu0 %v4410
    %6402 = vmatprep.subr.bf16.mxu0 %v4395
    %6403 = vmatpush1.bf16.msra.mxu0 %v4394
    %6404 = vmatprep.subr.bf16.mxu0 %v4379
    %6405 = vmatpush1.bf16.msra.mxu0 %v4378
    %6406 = vmatprep.subr.bf16.mxu0 %v4363
    %6407 = vmatpush1.bf16.msra.mxu0 %v4362
    %6408 = vmatprep.subr.bf16.mxu0 %v4347
    %6409 = vmatpush1.bf16.msra.mxu0 %v4346
    %6410 = vmatprep.subr.bf16.mxu0 %v4587
    %6411 = vmatpush2.bf16.msra.mxu0 %v4586
    %6412 = vmatprep.subr.bf16.mxu0 %v4571
    %6413 = vmatpush2.bf16.msra.mxu0 %v4570
    %6414 = vmatprep.subr.bf16.mxu0 %v4555
    %6415 = vmatpush2.bf16.msra.mxu0 %v4554
    %6416 = vmatprep.subr.bf16.mxu0 %v4539
    %6417 = vmatpush2.bf16.msra.mxu0 %v4538
    %6418 = vmatprep.subr.bf16.mxu0 %v4523
    %6419 = vmatpush2.bf16.msra.mxu0 %v4522
    %6420 = vmatprep.subr.bf16.mxu0 %v4507
    %6421 = vmatpush2.bf16.msra.mxu0 %v4506
    %6422 = vmatprep.subr.bf16.mxu0 %v4491
    %6423 = vmatpush2.bf16.msra.mxu0 %v4490
    %6424 = vmatprep.subr.bf16.mxu0 %v4475
    %6425 = vmatpush2.bf16.msra.mxu0 %v4474
    %6426 = vmatprep.mubr.bf16.mxu0 %v1259
    %6427 = vmatmul.mubr.bf16.gmra.mxu0 %v1258
    %v6428 = vpop.f32.mrf.mxu0
    %v6429 = vadd.f32 %v1169, %v6428
    %v6430 = vpop.f32.mrf.mxu0
    %v6431 = vadd.f32 %v1173, %v6430
    %v6432 = vpop.f32.mrf.mxu0
    %v6433 = vpop.f32.mrf.mxu0
    %6434 = vdwg.mxu0
    %6435 = vmatprep.subr.bf16.mxu0 %v4715
    %6436 = vmatpush1.bf16.msra.mxu0 %v4714
    %6437 = vmatprep.subr.bf16.mxu0 %v4699
    %6438 = vmatpush1.bf16.msra.mxu0 %v4698
    %6439 = vmatprep.subr.bf16.mxu0 %v4683
    %6440 = vmatpush1.bf16.msra.mxu0 %v4682
    %6441 = vmatprep.subr.bf16.mxu0 %v4667
    %6442 = vmatpush1.bf16.msra.mxu0 %v4666
    %6443 = vmatprep.subr.bf16.mxu0 %v4651
    %6444 = vmatpush1.bf16.msra.mxu0 %v4650
    %6445 = vmatprep.subr.bf16.mxu0 %v4635
    %6446 = vmatpush1.bf16.msra.mxu0 %v4634
    %6447 = vmatprep.subr.bf16.mxu0 %v4619
    %6448 = vmatpush1.bf16.msra.mxu0 %v4618
    %6449 = vmatprep.subr.bf16.mxu0 %v4603
    %6450 = vmatpush1.bf16.msra.mxu0 %v4602
    %6451 = vmatprep.subr.bf16.mxu0 %v4843
    %6452 = vmatpush2.bf16.msra.mxu0 %v4842
    %6453 = vmatprep.subr.bf16.mxu0 %v4827
    %6454 = vmatpush2.bf16.msra.mxu0 %v4826
    %6455 = vmatprep.subr.bf16.mxu0 %v4811
    %6456 = vmatpush2.bf16.msra.mxu0 %v4810
    %6457 = vmatprep.subr.bf16.mxu0 %v4795
    %6458 = vmatpush2.bf16.msra.mxu0 %v4794
    %6459 = vmatprep.subr.bf16.mxu0 %v4779
    %6460 = vmatpush2.bf16.msra.mxu0 %v4778
    %6461 = vmatprep.subr.bf16.mxu0 %v4763
    %6462 = vmatpush2.bf16.msra.mxu0 %v4762
    %6463 = vmatprep.subr.bf16.mxu0 %v4747
    %6464 = vmatpush2.bf16.msra.mxu0 %v4746
    %6465 = vmatprep.subr.bf16.mxu0 %v4731
    %6466 = vmatpush2.bf16.msra.mxu0 %v4730
    %6467 = vmatprep.mubr.bf16.mxu0 %v1261
    %6468 = vmatmul.mubr.bf16.gmra.mxu0 %v1260
    %v6469 = vpop.f32.mrf.mxu0
    %v6470 = vadd.f32 %v6429, %v6469
    %v6471 = vpop.f32.mrf.mxu0
    %v6472 = vadd.f32 %v6431, %v6471
    %v6473 = vpop.f32.mrf.mxu0
    %v6474 = vpop.f32.mrf.mxu0
    %6475 = vdwg.mxu0
    %6476 = vmatprep.subr.bf16.mxu0 %v4971
    %6477 = vmatpush1.bf16.msra.mxu0 %v4970
    %6478 = vmatprep.subr.bf16.mxu0 %v4955
    %6479 = vmatpush1.bf16.msra.mxu0 %v4954
    %6480 = vmatprep.subr.bf16.mxu0 %v4939
    %6481 = vmatpush1.bf16.msra.mxu0 %v4938
    %6482 = vmatprep.subr.bf16.mxu0 %v4923
    %6483 = vmatpush1.bf16.msra.mxu0 %v4922
    %6484 = vmatprep.subr.bf16.mxu0 %v4907
    %6485 = vmatpush1.bf16.msra.mxu0 %v4906
    %6486 = vmatprep.subr.bf16.mxu0 %v4891
    %6487 = vmatpush1.bf16.msra.mxu0 %v4890
    %6488 = vmatprep.subr.bf16.mxu0 %v4875
    %6489 = vmatpush1.bf16.msra.mxu0 %v4874
    %6490 = vmatprep.subr.bf16.mxu0 %v4859
    %6491 = vmatpush1.bf16.msra.mxu0 %v4858
    %6492 = vmatprep.subr.bf16.mxu0 %v5099
    %6493 = vmatpush2.bf16.msra.mxu0 %v5098
    %6494 = vmatprep.subr.bf16.mxu0 %v5083
    %6495 = vmatpush2.bf16.msra.mxu0 %v5082
    %6496 = vmatprep.subr.bf16.mxu0 %v5067
    %6497 = vmatpush2.bf16.msra.mxu0 %v5066
    %6498 = vmatprep.subr.bf16.mxu0 %v5051
    %6499 = vmatpush2.bf16.msra.mxu0 %v5050
    %6500 = vmatprep.subr.bf16.mxu0 %v5035
    %6501 = vmatpush2.bf16.msra.mxu0 %v5034
    %6502 = vmatprep.subr.bf16.mxu0 %v5019
    %6503 = vmatpush2.bf16.msra.mxu0 %v5018
    %6504 = vmatprep.subr.bf16.mxu0 %v5003
    %6505 = vmatpush2.bf16.msra.mxu0 %v5002
    %6506 = vmatprep.subr.bf16.mxu0 %v4987
    %6507 = vmatpush2.bf16.msra.mxu0 %v4986
    %6508 = vmatprep.mubr.bf16.mxu0 %v1263
    %6509 = vmatmul.mubr.bf16.gmra.mxu0 %v1262
    %v6510 = vpop.f32.mrf.mxu0
    %v6511 = vadd.f32 %v6470, %v6510
    %v6512 = vpop.f32.mrf.mxu0
    %v6513 = vadd.f32 %v6472, %v6512
    %v6514 = vpop.f32.mrf.mxu0
    %v6515 = vpop.f32.mrf.mxu0
    %6516 = vdwg.mxu0
    %6517 = vmatprep.subr.bf16.mxu0 %v5227
    %6518 = vmatpush1.bf16.msra.mxu0 %v5226
    %6519 = vmatprep.subr.bf16.mxu0 %v5211
    %6520 = vmatpush1.bf16.msra.mxu0 %v5210
    %6521 = vmatprep.subr.bf16.mxu0 %v5195
    %6522 = vmatpush1.bf16.msra.mxu0 %v5194
    %6523 = vmatprep.subr.bf16.mxu0 %v5179
    %6524 = vmatpush1.bf16.msra.mxu0 %v5178
    %6525 = vmatprep.subr.bf16.mxu0 %v5163
    %6526 = vmatpush1.bf16.msra.mxu0 %v5162
    %6527 = vmatprep.subr.bf16.mxu0 %v5147
    %6528 = vmatpush1.bf16.msra.mxu0 %v5146
    %6529 = vmatprep.subr.bf16.mxu0 %v5131
    %6530 = vmatpush1.bf16.msra.mxu0 %v5130
    %6531 = vmatprep.subr.bf16.mxu0 %v5115
    %6532 = vmatpush1.bf16.msra.mxu0 %v5114
    %6533 = vmatprep.subr.bf16.mxu0 %v5355
    %6534 = vmatpush2.bf16.msra.mxu0 %v5354
    %6535 = vmatprep.subr.bf16.mxu0 %v5339
    %6536 = vmatpush2.bf16.msra.mxu0 %v5338
    %6537 = vmatprep.subr.bf16.mxu0 %v5323
    %6538 = vmatpush2.bf16.msra.mxu0 %v5322
    %6539 = vmatprep.subr.bf16.mxu0 %v5307
    %6540 = vmatpush2.bf16.msra.mxu0 %v5306
    %6541 = vmatprep.subr.bf16.mxu0 %v5291
    %6542 = vmatpush2.bf16.msra.mxu0 %v5290
    %6543 = vmatprep.subr.bf16.mxu0 %v5275
    %6544 = vmatpush2.bf16.msra.mxu0 %v5274
    %6545 = vmatprep.subr.bf16.mxu0 %v5259
    %6546 = vmatpush2.bf16.msra.mxu0 %v5258
    %6547 = vmatprep.subr.bf16.mxu0 %v5243
    %6548 = vmatpush2.bf16.msra.mxu0 %v5242
    %6549 = vmatprep.mubr.bf16.mxu0 %v1265
    %6550 = vmatmul.mubr.bf16.gmra.mxu0 %v1264
    %v6551 = vpop.f32.mrf.mxu0
    %v6552 = vadd.f32 %v6511, %v6551
    %v6553 = vpop.f32.mrf.mxu0
    %v6554 = vadd.f32 %v6513, %v6553
    %v6555 = vpop.f32.mrf.mxu0
    %v6556 = vpop.f32.mrf.mxu0
    %6557 = vdwg.mxu0
    %6558 = vmatprep.subr.bf16.mxu0 %v4461
    %6559 = vmatpush1.bf16.msra.mxu0 %v4460
    %6560 = vmatprep.subr.bf16.mxu0 %v4445
    %6561 = vmatpush1.bf16.msra.mxu0 %v4444
    %6562 = vmatprep.subr.bf16.mxu0 %v4429
    %6563 = vmatpush1.bf16.msra.mxu0 %v4428
    %6564 = vmatprep.subr.bf16.mxu0 %v4413
    %6565 = vmatpush1.bf16.msra.mxu0 %v4412
    %6566 = vmatprep.subr.bf16.mxu0 %v4397
    %6567 = vmatpush1.bf16.msra.mxu0 %v4396
    %6568 = vmatprep.subr.bf16.mxu0 %v4381
    %6569 = vmatpush1.bf16.msra.mxu0 %v4380
    %6570 = vmatprep.subr.bf16.mxu0 %v4365
    %6571 = vmatpush1.bf16.msra.mxu0 %v4364
    %6572 = vmatprep.subr.bf16.mxu0 %v4349
    %6573 = vmatpush1.bf16.msra.mxu0 %v4348
    %6574 = vmatprep.subr.bf16.mxu0 %v4589
    %6575 = vmatpush2.bf16.msra.mxu0 %v4588
    %6576 = vmatprep.subr.bf16.mxu0 %v4573
    %6577 = vmatpush2.bf16.msra.mxu0 %v4572
    %6578 = vmatprep.subr.bf16.mxu0 %v4557
    %6579 = vmatpush2.bf16.msra.mxu0 %v4556
    %6580 = vmatprep.subr.bf16.mxu0 %v4541
    %6581 = vmatpush2.bf16.msra.mxu0 %v4540
    %6582 = vmatprep.subr.bf16.mxu0 %v4525
    %6583 = vmatpush2.bf16.msra.mxu0 %v4524
    %6584 = vmatprep.subr.bf16.mxu0 %v4509
    %6585 = vmatpush2.bf16.msra.mxu0 %v4508
    %6586 = vmatprep.subr.bf16.mxu0 %v4493
    %6587 = vmatpush2.bf16.msra.mxu0 %v4492
    %6588 = vmatprep.subr.bf16.mxu0 %v4477
    %6589 = vmatpush2.bf16.msra.mxu0 %v4476
    %6590 = vmatprep.mubr.bf16.mxu0 %v1259
    %6591 = vmatmul.mubr.bf16.gmra.mxu0 %v1258
    %v6592 = vpop.f32.mrf.mxu0
    %v6593 = vadd.f32 %v1177, %v6592
    %v6594 = vpop.f32.mrf.mxu0
    %v6595 = vadd.f32 %v1181, %v6594
    %v6596 = vpop.f32.mrf.mxu0
    %v6597 = vpop.f32.mrf.mxu0
    %6598 = vdwg.mxu0
    %6599 = vmatprep.subr.bf16.mxu0 %v4717
    %6600 = vmatpush1.bf16.msra.mxu0 %v4716
    %6601 = vmatprep.subr.bf16.mxu0 %v4701
    %6602 = vmatpush1.bf16.msra.mxu0 %v4700
    %6603 = vmatprep.subr.bf16.mxu0 %v4685
    %6604 = vmatpush1.bf16.msra.mxu0 %v4684
    %6605 = vmatprep.subr.bf16.mxu0 %v4669
    %6606 = vmatpush1.bf16.msra.mxu0 %v4668
    %6607 = vmatprep.subr.bf16.mxu0 %v4653
    %6608 = vmatpush1.bf16.msra.mxu0 %v4652
    %6609 = vmatprep.subr.bf16.mxu0 %v4637
    %6610 = vmatpush1.bf16.msra.mxu0 %v4636
    %6611 = vmatprep.subr.bf16.mxu0 %v4621
    %6612 = vmatpush1.bf16.msra.mxu0 %v4620
    %6613 = vmatprep.subr.bf16.mxu0 %v4605
    %6614 = vmatpush1.bf16.msra.mxu0 %v4604
    %6615 = vmatprep.subr.bf16.mxu0 %v4845
    %6616 = vmatpush2.bf16.msra.mxu0 %v4844
    %6617 = vmatprep.subr.bf16.mxu0 %v4829
    %6618 = vmatpush2.bf16.msra.mxu0 %v4828
    %6619 = vmatprep.subr.bf16.mxu0 %v4813
    %6620 = vmatpush2.bf16.msra.mxu0 %v4812
    %6621 = vmatprep.subr.bf16.mxu0 %v4797
    %6622 = vmatpush2.bf16.msra.mxu0 %v4796
    %6623 = vmatprep.subr.bf16.mxu0 %v4781
    %6624 = vmatpush2.bf16.msra.mxu0 %v4780
    %6625 = vmatprep.subr.bf16.mxu0 %v4765
    %6626 = vmatpush2.bf16.msra.mxu0 %v4764
    %6627 = vmatprep.subr.bf16.mxu0 %v4749
    %6628 = vmatpush2.bf16.msra.mxu0 %v4748
    %6629 = vmatprep.subr.bf16.mxu0 %v4733
    %6630 = vmatpush2.bf16.msra.mxu0 %v4732
    %6631 = vmatprep.mubr.bf16.mxu0 %v1261
    %6632 = vmatmul.mubr.bf16.gmra.mxu0 %v1260
    %v6633 = vpop.f32.mrf.mxu0
    %v6634 = vadd.f32 %v6593, %v6633
    %v6635 = vpop.f32.mrf.mxu0
    %v6636 = vadd.f32 %v6595, %v6635
    %v6637 = vpop.f32.mrf.mxu0
    %v6638 = vpop.f32.mrf.mxu0
    %6639 = vdwg.mxu0
    %6640 = vmatprep.subr.bf16.mxu0 %v4973
    %6641 = vmatpush1.bf16.msra.mxu0 %v4972
    %6642 = vmatprep.subr.bf16.mxu0 %v4957
    %6643 = vmatpush1.bf16.msra.mxu0 %v4956
    %6644 = vmatprep.subr.bf16.mxu0 %v4941
    %6645 = vmatpush1.bf16.msra.mxu0 %v4940
    %6646 = vmatprep.subr.bf16.mxu0 %v4925
    %6647 = vmatpush1.bf16.msra.mxu0 %v4924
    %6648 = vmatprep.subr.bf16.mxu0 %v4909
    %6649 = vmatpush1.bf16.msra.mxu0 %v4908
    %6650 = vmatprep.subr.bf16.mxu0 %v4893
    %6651 = vmatpush1.bf16.msra.mxu0 %v4892
    %6652 = vmatprep.subr.bf16.mxu0 %v4877
    %6653 = vmatpush1.bf16.msra.mxu0 %v4876
    %6654 = vmatprep.subr.bf16.mxu0 %v4861
    %6655 = vmatpush1.bf16.msra.mxu0 %v4860
    %6656 = vmatprep.subr.bf16.mxu0 %v5101
    %6657 = vmatpush2.bf16.msra.mxu0 %v5100
    %6658 = vmatprep.subr.bf16.mxu0 %v5085
    %6659 = vmatpush2.bf16.msra.mxu0 %v5084
    %6660 = vmatprep.subr.bf16.mxu0 %v5069
    %6661 = vmatpush2.bf16.msra.mxu0 %v5068
    %6662 = vmatprep.subr.bf16.mxu0 %v5053
    %6663 = vmatpush2.bf16.msra.mxu0 %v5052
    %6664 = vmatprep.subr.bf16.mxu0 %v5037
    %6665 = vmatpush2.bf16.msra.mxu0 %v5036
    %6666 = vmatprep.subr.bf16.mxu0 %v5021
    %6667 = vmatpush2.bf16.msra.mxu0 %v5020
    %6668 = vmatprep.subr.bf16.mxu0 %v5005
    %6669 = vmatpush2.bf16.msra.mxu0 %v5004
    %6670 = vmatprep.subr.bf16.mxu0 %v4989
    %6671 = vmatpush2.bf16.msra.mxu0 %v4988
    %6672 = vmatprep.mubr.bf16.mxu0 %v1263
    %6673 = vmatmul.mubr.bf16.gmra.mxu0 %v1262
    %v6674 = vpop.f32.mrf.mxu0
    %v6675 = vadd.f32 %v6634, %v6674
    %v6676 = vpop.f32.mrf.mxu0
    %v6677 = vadd.f32 %v6636, %v6676
    %v6678 = vpop.f32.mrf.mxu0
    %v6679 = vpop.f32.mrf.mxu0
    %6680 = vdwg.mxu0
    %6681 = vmatprep.subr.bf16.mxu0 %v5229
    %6682 = vmatpush1.bf16.msra.mxu0 %v5228
    %6683 = vmatprep.subr.bf16.mxu0 %v5213
    %6684 = vmatpush1.bf16.msra.mxu0 %v5212
    %6685 = vmatprep.subr.bf16.mxu0 %v5197
    %6686 = vmatpush1.bf16.msra.mxu0 %v5196
    %6687 = vmatprep.subr.bf16.mxu0 %v5181
    %6688 = vmatpush1.bf16.msra.mxu0 %v5180
    %6689 = vmatprep.subr.bf16.mxu0 %v5165
    %6690 = vmatpush1.bf16.msra.mxu0 %v5164
    %6691 = vmatprep.subr.bf16.mxu0 %v5149
    %6692 = vmatpush1.bf16.msra.mxu0 %v5148
    %6693 = vmatprep.subr.bf16.mxu0 %v5133
    %6694 = vmatpush1.bf16.msra.mxu0 %v5132
    %6695 = vmatprep.subr.bf16.mxu0 %v5117
    %6696 = vmatpush1.bf16.msra.mxu0 %v5116
    %6697 = vmatprep.subr.bf16.mxu0 %v5357
    %6698 = vmatpush2.bf16.msra.mxu0 %v5356
    %6699 = vmatprep.subr.bf16.mxu0 %v5341
    %6700 = vmatpush2.bf16.msra.mxu0 %v5340
    %6701 = vmatprep.subr.bf16.mxu0 %v5325
    %6702 = vmatpush2.bf16.msra.mxu0 %v5324
    %6703 = vmatprep.subr.bf16.mxu0 %v5309
    %6704 = vmatpush2.bf16.msra.mxu0 %v5308
    %6705 = vmatprep.subr.bf16.mxu0 %v5293
    %6706 = vmatpush2.bf16.msra.mxu0 %v5292
    %6707 = vmatprep.subr.bf16.mxu0 %v5277
    %6708 = vmatpush2.bf16.msra.mxu0 %v5276
    %6709 = vmatprep.subr.bf16.mxu0 %v5261
    %6710 = vmatpush2.bf16.msra.mxu0 %v5260
    %6711 = vmatprep.subr.bf16.mxu0 %v5245
    %6712 = vmatpush2.bf16.msra.mxu0 %v5244
    %6713 = vmatprep.mubr.bf16.mxu0 %v1265
    %6714 = vmatmul.mubr.bf16.gmra.mxu0 %v1264
    %v6715 = vpop.f32.mrf.mxu0
    %v6716 = vadd.f32 %v6675, %v6715
    %v6717 = vpop.f32.mrf.mxu0
    %v6718 = vadd.f32 %v6677, %v6717
    %v6719 = vpop.f32.mrf.mxu0
    %v6720 = vpop.f32.mrf.mxu0
    %6721 = vdwg.mxu0
    %6722 = vmatprep.subr.bf16.mxu0 %v4463
    %6723 = vmatpush1.bf16.msra.mxu0 %v4462
    %6724 = vmatprep.subr.bf16.mxu0 %v4447
    %6725 = vmatpush1.bf16.msra.mxu0 %v4446
    %6726 = vmatprep.subr.bf16.mxu0 %v4431
    %6727 = vmatpush1.bf16.msra.mxu0 %v4430
    %6728 = vmatprep.subr.bf16.mxu0 %v4415
    %6729 = vmatpush1.bf16.msra.mxu0 %v4414
    %6730 = vmatprep.subr.bf16.mxu0 %v4399
    %6731 = vmatpush1.bf16.msra.mxu0 %v4398
    %6732 = vmatprep.subr.bf16.mxu0 %v4383
    %6733 = vmatpush1.bf16.msra.mxu0 %v4382
    %6734 = vmatprep.subr.bf16.mxu0 %v4367
    %6735 = vmatpush1.bf16.msra.mxu0 %v4366
    %6736 = vmatprep.subr.bf16.mxu0 %v4351
    %6737 = vmatpush1.bf16.msra.mxu0 %v4350
    %6738 = vmatprep.subr.bf16.mxu0 %v4591
    %6739 = vmatpush2.bf16.msra.mxu0 %v4590
    %6740 = vmatprep.subr.bf16.mxu0 %v4575
    %6741 = vmatpush2.bf16.msra.mxu0 %v4574
    %6742 = vmatprep.subr.bf16.mxu0 %v4559
    %6743 = vmatpush2.bf16.msra.mxu0 %v4558
    %6744 = vmatprep.subr.bf16.mxu0 %v4543
    %6745 = vmatpush2.bf16.msra.mxu0 %v4542
    %6746 = vmatprep.subr.bf16.mxu0 %v4527
    %6747 = vmatpush2.bf16.msra.mxu0 %v4526
    %6748 = vmatprep.subr.bf16.mxu0 %v4511
    %6749 = vmatpush2.bf16.msra.mxu0 %v4510
    %6750 = vmatprep.subr.bf16.mxu0 %v4495
    %6751 = vmatpush2.bf16.msra.mxu0 %v4494
    %6752 = vmatprep.subr.bf16.mxu0 %v4479
    %6753 = vmatpush2.bf16.msra.mxu0 %v4478
    %6754 = vmatprep.mubr.bf16.mxu0 %v1259
    %6755 = vmatmul.mubr.bf16.gmra.mxu0 %v1258
    %v6756 = vpop.f32.mrf.mxu0
    %v6757 = vadd.f32 %v1185, %v6756
    %v6758 = vpop.f32.mrf.mxu0
    %v6759 = vadd.f32 %v1189, %v6758
    %v6760 = vpop.f32.mrf.mxu0
    %v6761 = vpop.f32.mrf.mxu0
    %6762 = vdwg.mxu0
    %6763 = vmatprep.subr.bf16.mxu0 %v4719
    %6764 = vmatpush1.bf16.msra.mxu0 %v4718
    %6765 = vmatprep.subr.bf16.mxu0 %v4703
    %6766 = vmatpush1.bf16.msra.mxu0 %v4702
    %6767 = vmatprep.subr.bf16.mxu0 %v4687
    %6768 = vmatpush1.bf16.msra.mxu0 %v4686
    %6769 = vmatprep.subr.bf16.mxu0 %v4671
    %6770 = vmatpush1.bf16.msra.mxu0 %v4670
    %6771 = vmatprep.subr.bf16.mxu0 %v4655
    %6772 = vmatpush1.bf16.msra.mxu0 %v4654
    %6773 = vmatprep.subr.bf16.mxu0 %v4639
    %6774 = vmatpush1.bf16.msra.mxu0 %v4638
    %6775 = vmatprep.subr.bf16.mxu0 %v4623
    %6776 = vmatpush1.bf16.msra.mxu0 %v4622
    %6777 = vmatprep.subr.bf16.mxu0 %v4607
    %6778 = vmatpush1.bf16.msra.mxu0 %v4606
    %6779 = vmatprep.subr.bf16.mxu0 %v4847
    %6780 = vmatpush2.bf16.msra.mxu0 %v4846
    %6781 = vmatprep.subr.bf16.mxu0 %v4831
    %6782 = vmatpush2.bf16.msra.mxu0 %v4830
    %6783 = vmatprep.subr.bf16.mxu0 %v4815
    %6784 = vmatpush2.bf16.msra.mxu0 %v4814
    %6785 = vmatprep.subr.bf16.mxu0 %v4799
    %6786 = vmatpush2.bf16.msra.mxu0 %v4798
    %6787 = vmatprep.subr.bf16.mxu0 %v4783
    %6788 = vmatpush2.bf16.msra.mxu0 %v4782
    %6789 = vmatprep.subr.bf16.mxu0 %v4767
    %6790 = vmatpush2.bf16.msra.mxu0 %v4766
    %6791 = vmatprep.subr.bf16.mxu0 %v4751
    %6792 = vmatpush2.bf16.msra.mxu0 %v4750
    %6793 = vmatprep.subr.bf16.mxu0 %v4735
    %6794 = vmatpush2.bf16.msra.mxu0 %v4734
    %6795 = vmatprep.mubr.bf16.mxu0 %v1261
    %6796 = vmatmul.mubr.bf16.gmra.mxu0 %v1260
    %v6797 = vpop.f32.mrf.mxu0
    %v6798 = vadd.f32 %v6757, %v6797
    %v6799 = vpop.f32.mrf.mxu0
    %v6800 = vadd.f32 %v6759, %v6799
    %v6801 = vpop.f32.mrf.mxu0
    %v6802 = vpop.f32.mrf.mxu0
    %6803 = vdwg.mxu0
    %6804 = vmatprep.subr.bf16.mxu0 %v4975
    %6805 = vmatpush1.bf16.msra.mxu0 %v4974
    %6806 = vmatprep.subr.bf16.mxu0 %v4959
    %6807 = vmatpush1.bf16.msra.mxu0 %v4958
    %6808 = vmatprep.subr.bf16.mxu0 %v4943
    %6809 = vmatpush1.bf16.msra.mxu0 %v4942
    %6810 = vmatprep.subr.bf16.mxu0 %v4927
    %6811 = vmatpush1.bf16.msra.mxu0 %v4926
    %6812 = vmatprep.subr.bf16.mxu0 %v4911
    %6813 = vmatpush1.bf16.msra.mxu0 %v4910
    %6814 = vmatprep.subr.bf16.mxu0 %v4895
    %6815 = vmatpush1.bf16.msra.mxu0 %v4894
    %6816 = vmatprep.subr.bf16.mxu0 %v4879
    %6817 = vmatpush1.bf16.msra.mxu0 %v4878
    %6818 = vmatprep.subr.bf16.mxu0 %v4863
    %6819 = vmatpush1.bf16.msra.mxu0 %v4862
    %6820 = vmatprep.subr.bf16.mxu0 %v5103
    %6821 = vmatpush2.bf16.msra.mxu0 %v5102
    %6822 = vmatprep.subr.bf16.mxu0 %v5087
    %6823 = vmatpush2.bf16.msra.mxu0 %v5086
    %6824 = vmatprep.subr.bf16.mxu0 %v5071
    %6825 = vmatpush2.bf16.msra.mxu0 %v5070
    %6826 = vmatprep.subr.bf16.mxu0 %v5055
    %6827 = vmatpush2.bf16.msra.mxu0 %v5054
    %6828 = vmatprep.subr.bf16.mxu0 %v5039
    %6829 = vmatpush2.bf16.msra.mxu0 %v5038
    %6830 = vmatprep.subr.bf16.mxu0 %v5023
    %6831 = vmatpush2.bf16.msra.mxu0 %v5022
    %6832 = vmatprep.subr.bf16.mxu0 %v5007
    %6833 = vmatpush2.bf16.msra.mxu0 %v5006
    %6834 = vmatprep.subr.bf16.mxu0 %v4991
    %6835 = vmatpush2.bf16.msra.mxu0 %v4990
    %6836 = vmatprep.mubr.bf16.mxu0 %v1263
    %6837 = vmatmul.mubr.bf16.gmra.mxu0 %v1262
    %v6838 = vpop.f32.mrf.mxu0
    %v6839 = vadd.f32 %v6798, %v6838
    %v6840 = vpop.f32.mrf.mxu0
    %v6841 = vadd.f32 %v6800, %v6840
    %v6842 = vpop.f32.mrf.mxu0
    %v6843 = vpop.f32.mrf.mxu0
    %6844 = vdwg.mxu0
    %6845 = vmatprep.subr.bf16.mxu0 %v5231
    %6846 = vmatpush1.bf16.msra.mxu0 %v5230
    %6847 = vmatprep.subr.bf16.mxu0 %v5215
    %6848 = vmatpush1.bf16.msra.mxu0 %v5214
    %6849 = vmatprep.subr.bf16.mxu0 %v5199
    %6850 = vmatpush1.bf16.msra.mxu0 %v5198
    %6851 = vmatprep.subr.bf16.mxu0 %v5183
    %6852 = vmatpush1.bf16.msra.mxu0 %v5182
    %6853 = vmatprep.subr.bf16.mxu0 %v5167
    %6854 = vmatpush1.bf16.msra.mxu0 %v5166
    %6855 = vmatprep.subr.bf16.mxu0 %v5151
    %6856 = vmatpush1.bf16.msra.mxu0 %v5150
    %6857 = vmatprep.subr.bf16.mxu0 %v5135
    %6858 = vmatpush1.bf16.msra.mxu0 %v5134
    %6859 = vmatprep.subr.bf16.mxu0 %v5119
    %6860 = vmatpush1.bf16.msra.mxu0 %v5118
    %6861 = vmatprep.subr.bf16.mxu0 %v5359
    %6862 = vmatpush2.bf16.msra.mxu0 %v5358
    %6863 = vmatprep.subr.bf16.mxu0 %v5343
    %6864 = vmatpush2.bf16.msra.mxu0 %v5342
    %6865 = vmatprep.subr.bf16.mxu0 %v5327
    %6866 = vmatpush2.bf16.msra.mxu0 %v5326
    %6867 = vmatprep.subr.bf16.mxu0 %v5311
    %6868 = vmatpush2.bf16.msra.mxu0 %v5310
    %6869 = vmatprep.subr.bf16.mxu0 %v5295
    %6870 = vmatpush2.bf16.msra.mxu0 %v5294
    %6871 = vmatprep.subr.bf16.mxu0 %v5279
    %6872 = vmatpush2.bf16.msra.mxu0 %v5278
    %6873 = vmatprep.subr.bf16.mxu0 %v5263
    %6874 = vmatpush2.bf16.msra.mxu0 %v5262
    %6875 = vmatprep.subr.bf16.mxu0 %v5247
    %6876 = vmatpush2.bf16.msra.mxu0 %v5246
    %6877 = vmatprep.mubr.bf16.mxu0 %v1265
    %6878 = vmatmul.mubr.bf16.gmra.mxu0 %v1264
    %v6879 = vpop.f32.mrf.mxu0
    %v6880 = vadd.f32 %v6839, %v6879
    %v6881 = vpop.f32.mrf.mxu0
    %v6882 = vadd.f32 %v6841, %v6881
    %v6883 = vpop.f32.mrf.mxu0
    %v6884 = vpop.f32.mrf.mxu0
    %6885 = vdwg.mxu0
    %6886 = vmatprep.subr.bf16.mxu0 %v4465
    %6887 = vmatpush1.bf16.msra.mxu0 %v4464
    %6888 = vmatprep.subr.bf16.mxu0 %v4449
    %6889 = vmatpush1.bf16.msra.mxu0 %v4448
    %6890 = vmatprep.subr.bf16.mxu0 %v4433
    %6891 = vmatpush1.bf16.msra.mxu0 %v4432
    %6892 = vmatprep.subr.bf16.mxu0 %v4417
    %6893 = vmatpush1.bf16.msra.mxu0 %v4416
    %6894 = vmatprep.subr.bf16.mxu0 %v4401
    %6895 = vmatpush1.bf16.msra.mxu0 %v4400
    %6896 = vmatprep.subr.bf16.mxu0 %v4385
    %6897 = vmatpush1.bf16.msra.mxu0 %v4384
    %6898 = vmatprep.subr.bf16.mxu0 %v4369
    %6899 = vmatpush1.bf16.msra.mxu0 %v4368
    %6900 = vmatprep.subr.bf16.mxu0 %v4353
    %6901 = vmatpush1.bf16.msra.mxu0 %v4352
    %6902 = vmatprep.subr.bf16.mxu0 %v4593
    %6903 = vmatpush2.bf16.msra.mxu0 %v4592
    %6904 = vmatprep.subr.bf16.mxu0 %v4577
    %6905 = vmatpush2.bf16.msra.mxu0 %v4576
    %6906 = vmatprep.subr.bf16.mxu0 %v4561
    %6907 = vmatpush2.bf16.msra.mxu0 %v4560
    %6908 = vmatprep.subr.bf16.mxu0 %v4545
    %6909 = vmatpush2.bf16.msra.mxu0 %v4544
    %6910 = vmatprep.subr.bf16.mxu0 %v4529
    %6911 = vmatpush2.bf16.msra.mxu0 %v4528
    %6912 = vmatprep.subr.bf16.mxu0 %v4513
    %6913 = vmatpush2.bf16.msra.mxu0 %v4512
    %6914 = vmatprep.subr.bf16.mxu0 %v4497
    %6915 = vmatpush2.bf16.msra.mxu0 %v4496
    %6916 = vmatprep.subr.bf16.mxu0 %v4481
    %6917 = vmatpush2.bf16.msra.mxu0 %v4480
    %6918 = vmatprep.mubr.bf16.mxu0 %v1259
    %6919 = vmatmul.mubr.bf16.gmra.mxu0 %v1258
    %v6920 = vpop.f32.mrf.mxu0
    %v6921 = vadd.f32 %v1193, %v6920
    %v6922 = vpop.f32.mrf.mxu0
    %v6923 = vadd.f32 %v1197, %v6922
    %v6924 = vpop.f32.mrf.mxu0
    %v6925 = vpop.f32.mrf.mxu0
    %6926 = vdwg.mxu0
    %6927 = vmatprep.subr.bf16.mxu0 %v4721
    %6928 = vmatpush1.bf16.msra.mxu0 %v4720
    %6929 = vmatprep.subr.bf16.mxu0 %v4705
    %6930 = vmatpush1.bf16.msra.mxu0 %v4704
    %6931 = vmatprep.subr.bf16.mxu0 %v4689
    %6932 = vmatpush1.bf16.msra.mxu0 %v4688
    %6933 = vmatprep.subr.bf16.mxu0 %v4673
    %6934 = vmatpush1.bf16.msra.mxu0 %v4672
    %6935 = vmatprep.subr.bf16.mxu0 %v4657
    %6936 = vmatpush1.bf16.msra.mxu0 %v4656
    %6937 = vmatprep.subr.bf16.mxu0 %v4641
    %6938 = vmatpush1.bf16.msra.mxu0 %v4640
    %6939 = vmatprep.subr.bf16.mxu0 %v4625
    %6940 = vmatpush1.bf16.msra.mxu0 %v4624
    %6941 = vmatprep.subr.bf16.mxu0 %v4609
    %6942 = vmatpush1.bf16.msra.mxu0 %v4608
    %6943 = vmatprep.subr.bf16.mxu0 %v4849
    %6944 = vmatpush2.bf16.msra.mxu0 %v4848
    %6945 = vmatprep.subr.bf16.mxu0 %v4833
    %6946 = vmatpush2.bf16.msra.mxu0 %v4832
    %6947 = vmatprep.subr.bf16.mxu0 %v4817
    %6948 = vmatpush2.bf16.msra.mxu0 %v4816
    %6949 = vmatprep.subr.bf16.mxu0 %v4801
    %6950 = vmatpush2.bf16.msra.mxu0 %v4800
    %6951 = vmatprep.subr.bf16.mxu0 %v4785
    %6952 = vmatpush2.bf16.msra.mxu0 %v4784
    %6953 = vmatprep.subr.bf16.mxu0 %v4769
    %6954 = vmatpush2.bf16.msra.mxu0 %v4768
    %6955 = vmatprep.subr.bf16.mxu0 %v4753
    %6956 = vmatpush2.bf16.msra.mxu0 %v4752
    %6957 = vmatprep.subr.bf16.mxu0 %v4737
    %6958 = vmatpush2.bf16.msra.mxu0 %v4736
    %6959 = vmatprep.mubr.bf16.mxu0 %v1261
    %6960 = vmatmul.mubr.bf16.gmra.mxu0 %v1260
    %v6961 = vpop.f32.mrf.mxu0
    %v6962 = vadd.f32 %v6921, %v6961
    %v6963 = vpop.f32.mrf.mxu0
    %v6964 = vadd.f32 %v6923, %v6963
    %v6965 = vpop.f32.mrf.mxu0
    %v6966 = vpop.f32.mrf.mxu0
    %6967 = vdwg.mxu0
    %6968 = vmatprep.subr.bf16.mxu0 %v4977
    %6969 = vmatpush1.bf16.msra.mxu0 %v4976
    %6970 = vmatprep.subr.bf16.mxu0 %v4961
    %6971 = vmatpush1.bf16.msra.mxu0 %v4960
    %6972 = vmatprep.subr.bf16.mxu0 %v4945
    %6973 = vmatpush1.bf16.msra.mxu0 %v4944
    %6974 = vmatprep.subr.bf16.mxu0 %v4929
    %6975 = vmatpush1.bf16.msra.mxu0 %v4928
    %6976 = vmatprep.subr.bf16.mxu0 %v4913
    %6977 = vmatpush1.bf16.msra.mxu0 %v4912
    %6978 = vmatprep.subr.bf16.mxu0 %v4897
    %6979 = vmatpush1.bf16.msra.mxu0 %v4896
    %6980 = vmatprep.subr.bf16.mxu0 %v4881
    %6981 = vmatpush1.bf16.msra.mxu0 %v4880
    %6982 = vmatprep.subr.bf16.mxu0 %v4865
    %6983 = vmatpush1.bf16.msra.mxu0 %v4864
    %6984 = vmatprep.subr.bf16.mxu0 %v5105
    %6985 = vmatpush2.bf16.msra.mxu0 %v5104
    %6986 = vmatprep.subr.bf16.mxu0 %v5089
    %6987 = vmatpush2.bf16.msra.mxu0 %v5088
    %6988 = vmatprep.subr.bf16.mxu0 %v5073
    %6989 = vmatpush2.bf16.msra.mxu0 %v5072
    %6990 = vmatprep.subr.bf16.mxu0 %v5057
    %6991 = vmatpush2.bf16.msra.mxu0 %v5056
    %6992 = vmatprep.subr.bf16.mxu0 %v5041
    %6993 = vmatpush2.bf16.msra.mxu0 %v5040
    %6994 = vmatprep.subr.bf16.mxu0 %v5025
    %6995 = vmatpush2.bf16.msra.mxu0 %v5024
    %6996 = vmatprep.subr.bf16.mxu0 %v5009
    %6997 = vmatpush2.bf16.msra.mxu0 %v5008
    %6998 = vmatprep.subr.bf16.mxu0 %v4993
    %6999 = vmatpush2.bf16.msra.mxu0 %v4992
    %7000 = vmatprep.mubr.bf16.mxu0 %v1263
    %7001 = vmatmul.mubr.bf16.gmra.mxu0 %v1262
    %v7002 = vpop.f32.mrf.mxu0
    %v7003 = vadd.f32 %v6962, %v7002
    %v7004 = vpop.f32.mrf.mxu0
    %v7005 = vadd.f32 %v6964, %v7004
    %v7006 = vpop.f32.mrf.mxu0
    %v7007 = vpop.f32.mrf.mxu0
    %7008 = vdwg.mxu0
    %7009 = vmatprep.subr.bf16.mxu0 %v5233
    %7010 = vmatpush1.bf16.msra.mxu0 %v5232
    %7011 = vmatprep.subr.bf16.mxu0 %v5217
    %7012 = vmatpush1.bf16.msra.mxu0 %v5216
    %7013 = vmatprep.subr.bf16.mxu0 %v5201
    %7014 = vmatpush1.bf16.msra.mxu0 %v5200
    %7015 = vmatprep.subr.bf16.mxu0 %v5185
    %7016 = vmatpush1.bf16.msra.mxu0 %v5184
    %7017 = vmatprep.subr.bf16.mxu0 %v5169
    %7018 = vmatpush1.bf16.msra.mxu0 %v5168
    %7019 = vmatprep.subr.bf16.mxu0 %v5153
    %7020 = vmatpush1.bf16.msra.mxu0 %v5152
    %7021 = vmatprep.subr.bf16.mxu0 %v5137
    %7022 = vmatpush1.bf16.msra.mxu0 %v5136
    %7023 = vmatprep.subr.bf16.mxu0 %v5121
    %7024 = vmatpush1.bf16.msra.mxu0 %v5120
    %7025 = vmatprep.subr.bf16.mxu0 %v5361
    %7026 = vmatpush2.bf16.msra.mxu0 %v5360
    %7027 = vmatprep.subr.bf16.mxu0 %v5345
    %7028 = vmatpush2.bf16.msra.mxu0 %v5344
    %7029 = vmatprep.subr.bf16.mxu0 %v5329
    %7030 = vmatpush2.bf16.msra.mxu0 %v5328
    %7031 = vmatprep.subr.bf16.mxu0 %v5313
    %7032 = vmatpush2.bf16.msra.mxu0 %v5312
    %7033 = vmatprep.subr.bf16.mxu0 %v5297
    %7034 = vmatpush2.bf16.msra.mxu0 %v5296
    %7035 = vmatprep.subr.bf16.mxu0 %v5281
    %7036 = vmatpush2.bf16.msra.mxu0 %v5280
    %7037 = vmatprep.subr.bf16.mxu0 %v5265
    %7038 = vmatpush2.bf16.msra.mxu0 %v5264
    %7039 = vmatprep.subr.bf16.mxu0 %v5249
    %7040 = vmatpush2.bf16.msra.mxu0 %v5248
    %7041 = vmatprep.mubr.bf16.mxu0 %v1265
    %7042 = vmatmul.mubr.bf16.gmra.mxu0 %v1264
    %v7043 = vpop.f32.mrf.mxu0
    %v7044 = vadd.f32 %v7003, %v7043
    %v7045 = vpop.f32.mrf.mxu0
    %v7046 = vadd.f32 %v7005, %v7045
    %v7047 = vpop.f32.mrf.mxu0
    %v7048 = vpop.f32.mrf.mxu0
    %7049 = vdwg.mxu0
    %7050 = vmatprep.subr.bf16.mxu0 %v4467
    %7051 = vmatpush1.bf16.msra.mxu0 %v4466
    %7052 = vmatprep.subr.bf16.mxu0 %v4451
    %7053 = vmatpush1.bf16.msra.mxu0 %v4450
    %7054 = vmatprep.subr.bf16.mxu0 %v4435
    %7055 = vmatpush1.bf16.msra.mxu0 %v4434
    %7056 = vmatprep.subr.bf16.mxu0 %v4419
    %7057 = vmatpush1.bf16.msra.mxu0 %v4418
    %7058 = vmatprep.subr.bf16.mxu0 %v4403
    %7059 = vmatpush1.bf16.msra.mxu0 %v4402
    %7060 = vmatprep.subr.bf16.mxu0 %v4387
    %7061 = vmatpush1.bf16.msra.mxu0 %v4386
    %7062 = vmatprep.subr.bf16.mxu0 %v4371
    %7063 = vmatpush1.bf16.msra.mxu0 %v4370
    %7064 = vmatprep.subr.bf16.mxu0 %v4355
    %7065 = vmatpush1.bf16.msra.mxu0 %v4354
    %7066 = vmatprep.subr.bf16.mxu0 %v4595
    %7067 = vmatpush2.bf16.msra.mxu0 %v4594
    %7068 = vmatprep.subr.bf16.mxu0 %v4579
    %7069 = vmatpush2.bf16.msra.mxu0 %v4578
    %7070 = vmatprep.subr.bf16.mxu0 %v4563
    %7071 = vmatpush2.bf16.msra.mxu0 %v4562
    %7072 = vmatprep.subr.bf16.mxu0 %v4547
    %7073 = vmatpush2.bf16.msra.mxu0 %v4546
    %7074 = vmatprep.subr.bf16.mxu0 %v4531
    %7075 = vmatpush2.bf16.msra.mxu0 %v4530
    %7076 = vmatprep.subr.bf16.mxu0 %v4515
    %7077 = vmatpush2.bf16.msra.mxu0 %v4514
    %7078 = vmatprep.subr.bf16.mxu0 %v4499
    %7079 = vmatpush2.bf16.msra.mxu0 %v4498
    %7080 = vmatprep.subr.bf16.mxu0 %v4483
    %7081 = vmatpush2.bf16.msra.mxu0 %v4482
    %7082 = vmatprep.mubr.bf16.mxu0 %v1259
    %7083 = vmatmul.mubr.bf16.gmra.mxu0 %v1258
    %v7084 = vpop.f32.mrf.mxu0
    %v7085 = vadd.f32 %v1201, %v7084
    %v7086 = vpop.f32.mrf.mxu0
    %v7087 = vadd.f32 %v1205, %v7086
    %v7088 = vpop.f32.mrf.mxu0
    %v7089 = vpop.f32.mrf.mxu0
    %7090 = vdwg.mxu0
    %7091 = vmatprep.subr.bf16.mxu0 %v4723
    %7092 = vmatpush1.bf16.msra.mxu0 %v4722
    %7093 = vmatprep.subr.bf16.mxu0 %v4707
    %7094 = vmatpush1.bf16.msra.mxu0 %v4706
    %7095 = vmatprep.subr.bf16.mxu0 %v4691
    %7096 = vmatpush1.bf16.msra.mxu0 %v4690
    %7097 = vmatprep.subr.bf16.mxu0 %v4675
    %7098 = vmatpush1.bf16.msra.mxu0 %v4674
    %7099 = vmatprep.subr.bf16.mxu0 %v4659
    %7100 = vmatpush1.bf16.msra.mxu0 %v4658
    %7101 = vmatprep.subr.bf16.mxu0 %v4643
    %7102 = vmatpush1.bf16.msra.mxu0 %v4642
    %7103 = vmatprep.subr.bf16.mxu0 %v4627
    %7104 = vmatpush1.bf16.msra.mxu0 %v4626
    %7105 = vmatprep.subr.bf16.mxu0 %v4611
    %7106 = vmatpush1.bf16.msra.mxu0 %v4610
    %7107 = vmatprep.subr.bf16.mxu0 %v4851
    %7108 = vmatpush2.bf16.msra.mxu0 %v4850
    %7109 = vmatprep.subr.bf16.mxu0 %v4835
    %7110 = vmatpush2.bf16.msra.mxu0 %v4834
    %7111 = vmatprep.subr.bf16.mxu0 %v4819
    %7112 = vmatpush2.bf16.msra.mxu0 %v4818
    %7113 = vmatprep.subr.bf16.mxu0 %v4803
    %7114 = vmatpush2.bf16.msra.mxu0 %v4802
    %7115 = vmatprep.subr.bf16.mxu0 %v4787
    %7116 = vmatpush2.bf16.msra.mxu0 %v4786
    %7117 = vmatprep.subr.bf16.mxu0 %v4771
    %7118 = vmatpush2.bf16.msra.mxu0 %v4770
    %7119 = vmatprep.subr.bf16.mxu0 %v4755
    %7120 = vmatpush2.bf16.msra.mxu0 %v4754
    %7121 = vmatprep.subr.bf16.mxu0 %v4739
    %7122 = vmatpush2.bf16.msra.mxu0 %v4738
    %7123 = vmatprep.mubr.bf16.mxu0 %v1261
    %7124 = vmatmul.mubr.bf16.gmra.mxu0 %v1260
    %v7125 = vpop.f32.mrf.mxu0
    %v7126 = vadd.f32 %v7085, %v7125
    %v7127 = vpop.f32.mrf.mxu0
    %v7128 = vadd.f32 %v7087, %v7127
    %v7129 = vpop.f32.mrf.mxu0
    %v7130 = vpop.f32.mrf.mxu0
    %7131 = vdwg.mxu0
    %7132 = vmatprep.subr.bf16.mxu0 %v4979
    %7133 = vmatpush1.bf16.msra.mxu0 %v4978
    %7134 = vmatprep.subr.bf16.mxu0 %v4963
    %7135 = vmatpush1.bf16.msra.mxu0 %v4962
    %7136 = vmatprep.subr.bf16.mxu0 %v4947
    %7137 = vmatpush1.bf16.msra.mxu0 %v4946
    %7138 = vmatprep.subr.bf16.mxu0 %v4931
    %7139 = vmatpush1.bf16.msra.mxu0 %v4930
    %7140 = vmatprep.subr.bf16.mxu0 %v4915
    %7141 = vmatpush1.bf16.msra.mxu0 %v4914
    %7142 = vmatprep.subr.bf16.mxu0 %v4899
    %7143 = vmatpush1.bf16.msra.mxu0 %v4898
    %7144 = vmatprep.subr.bf16.mxu0 %v4883
    %7145 = vmatpush1.bf16.msra.mxu0 %v4882
    %7146 = vmatprep.subr.bf16.mxu0 %v4867
    %7147 = vmatpush1.bf16.msra.mxu0 %v4866
    %7148 = vmatprep.subr.bf16.mxu0 %v5107
    %7149 = vmatpush2.bf16.msra.mxu0 %v5106
    %7150 = vmatprep.subr.bf16.mxu0 %v5091
    %7151 = vmatpush2.bf16.msra.mxu0 %v5090
    %7152 = vmatprep.subr.bf16.mxu0 %v5075
    %7153 = vmatpush2.bf16.msra.mxu0 %v5074
    %7154 = vmatprep.subr.bf16.mxu0 %v5059
    %7155 = vmatpush2.bf16.msra.mxu0 %v5058
    %7156 = vmatprep.subr.bf16.mxu0 %v5043
    %7157 = vmatpush2.bf16.msra.mxu0 %v5042
    %7158 = vmatprep.subr.bf16.mxu0 %v5027
    %7159 = vmatpush2.bf16.msra.mxu0 %v5026
    %7160 = vmatprep.subr.bf16.mxu0 %v5011
    %7161 = vmatpush2.bf16.msra.mxu0 %v5010
    %7162 = vmatprep.subr.bf16.mxu0 %v4995
    %7163 = vmatpush2.bf16.msra.mxu0 %v4994
    %7164 = vmatprep.mubr.bf16.mxu0 %v1263
    %7165 = vmatmul.mubr.bf16.gmra.mxu0 %v1262
    %v7166 = vpop.f32.mrf.mxu0
    %v7167 = vadd.f32 %v7126, %v7166
    %v7168 = vpop.f32.mrf.mxu0
    %v7169 = vadd.f32 %v7128, %v7168
    %v7170 = vpop.f32.mrf.mxu0
    %v7171 = vpop.f32.mrf.mxu0
    %7172 = vdwg.mxu0
    %7173 = vmatprep.subr.bf16.mxu0 %v5235
    %7174 = vmatpush1.bf16.msra.mxu0 %v5234
    %7175 = vmatprep.subr.bf16.mxu0 %v5219
    %7176 = vmatpush1.bf16.msra.mxu0 %v5218
    %7177 = vmatprep.subr.bf16.mxu0 %v5203
    %7178 = vmatpush1.bf16.msra.mxu0 %v5202
    %7179 = vmatprep.subr.bf16.mxu0 %v5187
    %7180 = vmatpush1.bf16.msra.mxu0 %v5186
    %7181 = vmatprep.subr.bf16.mxu0 %v5171
    %7182 = vmatpush1.bf16.msra.mxu0 %v5170
    %7183 = vmatprep.subr.bf16.mxu0 %v5155
    %7184 = vmatpush1.bf16.msra.mxu0 %v5154
    %7185 = vmatprep.subr.bf16.mxu0 %v5139
    %7186 = vmatpush1.bf16.msra.mxu0 %v5138
    %7187 = vmatprep.subr.bf16.mxu0 %v5123
    %7188 = vmatpush1.bf16.msra.mxu0 %v5122
    %7189 = vmatprep.subr.bf16.mxu0 %v5363
    %7190 = vmatpush2.bf16.msra.mxu0 %v5362
    %7191 = vmatprep.subr.bf16.mxu0 %v5347
    %7192 = vmatpush2.bf16.msra.mxu0 %v5346
    %7193 = vmatprep.subr.bf16.mxu0 %v5331
    %7194 = vmatpush2.bf16.msra.mxu0 %v5330
    %7195 = vmatprep.subr.bf16.mxu0 %v5315
    %7196 = vmatpush2.bf16.msra.mxu0 %v5314
    %7197 = vmatprep.subr.bf16.mxu0 %v5299
    %7198 = vmatpush2.bf16.msra.mxu0 %v5298
    %7199 = vmatprep.subr.bf16.mxu0 %v5283
    %7200 = vmatpush2.bf16.msra.mxu0 %v5282
    %7201 = vmatprep.subr.bf16.mxu0 %v5267
    %7202 = vmatpush2.bf16.msra.mxu0 %v5266
    %7203 = vmatprep.subr.bf16.mxu0 %v5251
    %7204 = vmatpush2.bf16.msra.mxu0 %v5250
    %7205 = vmatprep.mubr.bf16.mxu0 %v1265
    %7206 = vmatmul.mubr.bf16.gmra.mxu0 %v1264
    %v7207 = vpop.f32.mrf.mxu0
    %v7208 = vadd.f32 %v7167, %v7207
    %v7209 = vpop.f32.mrf.mxu0
    %v7210 = vadd.f32 %v7169, %v7209
    %v7211 = vpop.f32.mrf.mxu0
    %v7212 = vpop.f32.mrf.mxu0
    %7213 = vdwg.mxu0
    %7214 = vmatprep.subr.bf16.mxu0 %v4469
    %7215 = vmatpush1.bf16.msra.mxu0 %v4468
    %7216 = vmatprep.subr.bf16.mxu0 %v4453
    %7217 = vmatpush1.bf16.msra.mxu0 %v4452
    %7218 = vmatprep.subr.bf16.mxu0 %v4437
    %7219 = vmatpush1.bf16.msra.mxu0 %v4436
    %7220 = vmatprep.subr.bf16.mxu0 %v4421
    %7221 = vmatpush1.bf16.msra.mxu0 %v4420
    %7222 = vmatprep.subr.bf16.mxu0 %v4405
    %7223 = vmatpush1.bf16.msra.mxu0 %v4404
    %7224 = vmatprep.subr.bf16.mxu0 %v4389
    %7225 = vmatpush1.bf16.msra.mxu0 %v4388
    %7226 = vmatprep.subr.bf16.mxu0 %v4373
    %7227 = vmatpush1.bf16.msra.mxu0 %v4372
    %7228 = vmatprep.subr.bf16.mxu0 %v4357
    %7229 = vmatpush1.bf16.msra.mxu0 %v4356
    %7230 = vmatprep.subr.bf16.mxu0 %v4597
    %7231 = vmatpush2.bf16.msra.mxu0 %v4596
    %7232 = vmatprep.subr.bf16.mxu0 %v4581
    %7233 = vmatpush2.bf16.msra.mxu0 %v4580
    %7234 = vmatprep.subr.bf16.mxu0 %v4565
    %7235 = vmatpush2.bf16.msra.mxu0 %v4564
    %7236 = vmatprep.subr.bf16.mxu0 %v4549
    %7237 = vmatpush2.bf16.msra.mxu0 %v4548
    %7238 = vmatprep.subr.bf16.mxu0 %v4533
    %7239 = vmatpush2.bf16.msra.mxu0 %v4532
    %7240 = vmatprep.subr.bf16.mxu0 %v4517
    %7241 = vmatpush2.bf16.msra.mxu0 %v4516
    %7242 = vmatprep.subr.bf16.mxu0 %v4501
    %7243 = vmatpush2.bf16.msra.mxu0 %v4500
    %7244 = vmatprep.subr.bf16.mxu0 %v4485
    %7245 = vmatpush2.bf16.msra.mxu0 %v4484
    %7246 = vmatprep.mubr.bf16.mxu0 %v1259
    %7247 = vmatmul.mubr.bf16.gmra.mxu0 %v1258
    %v7248 = vpop.f32.mrf.mxu0
    %v7249 = vadd.f32 %v1209, %v7248
    %v7250 = vpop.f32.mrf.mxu0
    %v7251 = vadd.f32 %v1213, %v7250
    %v7252 = vpop.f32.mrf.mxu0
    %v7253 = vpop.f32.mrf.mxu0
    %7254 = vdwg.mxu0
    %7255 = vmatprep.subr.bf16.mxu0 %v4725
    %7256 = vmatpush1.bf16.msra.mxu0 %v4724
    %7257 = vmatprep.subr.bf16.mxu0 %v4709
    %7258 = vmatpush1.bf16.msra.mxu0 %v4708
    %7259 = vmatprep.subr.bf16.mxu0 %v4693
    %7260 = vmatpush1.bf16.msra.mxu0 %v4692
    %7261 = vmatprep.subr.bf16.mxu0 %v4677
    %7262 = vmatpush1.bf16.msra.mxu0 %v4676
    %7263 = vmatprep.subr.bf16.mxu0 %v4661
    %7264 = vmatpush1.bf16.msra.mxu0 %v4660
    %7265 = vmatprep.subr.bf16.mxu0 %v4645
    %7266 = vmatpush1.bf16.msra.mxu0 %v4644
    %7267 = vmatprep.subr.bf16.mxu0 %v4629
    %7268 = vmatpush1.bf16.msra.mxu0 %v4628
    %7269 = vmatprep.subr.bf16.mxu0 %v4613
    %7270 = vmatpush1.bf16.msra.mxu0 %v4612
    %7271 = vmatprep.subr.bf16.mxu0 %v4853
    %7272 = vmatpush2.bf16.msra.mxu0 %v4852
    %7273 = vmatprep.subr.bf16.mxu0 %v4837
    %7274 = vmatpush2.bf16.msra.mxu0 %v4836
    %7275 = vmatprep.subr.bf16.mxu0 %v4821
    %7276 = vmatpush2.bf16.msra.mxu0 %v4820
    %7277 = vmatprep.subr.bf16.mxu0 %v4805
    %7278 = vmatpush2.bf16.msra.mxu0 %v4804
    %7279 = vmatprep.subr.bf16.mxu0 %v4789
    %7280 = vmatpush2.bf16.msra.mxu0 %v4788
    %7281 = vmatprep.subr.bf16.mxu0 %v4773
    %7282 = vmatpush2.bf16.msra.mxu0 %v4772
    %7283 = vmatprep.subr.bf16.mxu0 %v4757
    %7284 = vmatpush2.bf16.msra.mxu0 %v4756
    %7285 = vmatprep.subr.bf16.mxu0 %v4741
    %7286 = vmatpush2.bf16.msra.mxu0 %v4740
    %7287 = vmatprep.mubr.bf16.mxu0 %v1261
    %7288 = vmatmul.mubr.bf16.gmra.mxu0 %v1260
    %v7289 = vpop.f32.mrf.mxu0
    %v7290 = vadd.f32 %v7249, %v7289
    %v7291 = vpop.f32.mrf.mxu0
    %v7292 = vadd.f32 %v7251, %v7291
    %v7293 = vpop.f32.mrf.mxu0
    %v7294 = vpop.f32.mrf.mxu0
    %7295 = vdwg.mxu0
    %7296 = vmatprep.subr.bf16.mxu0 %v4981
    %7297 = vmatpush1.bf16.msra.mxu0 %v4980
    %7298 = vmatprep.subr.bf16.mxu0 %v4965
    %7299 = vmatpush1.bf16.msra.mxu0 %v4964
    %7300 = vmatprep.subr.bf16.mxu0 %v4949
    %7301 = vmatpush1.bf16.msra.mxu0 %v4948
    %7302 = vmatprep.subr.bf16.mxu0 %v4933
    %7303 = vmatpush1.bf16.msra.mxu0 %v4932
    %7304 = vmatprep.subr.bf16.mxu0 %v4917
    %7305 = vmatpush1.bf16.msra.mxu0 %v4916
    %7306 = vmatprep.subr.bf16.mxu0 %v4901
    %7307 = vmatpush1.bf16.msra.mxu0 %v4900
    %7308 = vmatprep.subr.bf16.mxu0 %v4885
    %7309 = vmatpush1.bf16.msra.mxu0 %v4884
    %7310 = vmatprep.subr.bf16.mxu0 %v4869
    %7311 = vmatpush1.bf16.msra.mxu0 %v4868
    %7312 = vmatprep.subr.bf16.mxu0 %v5109
    %7313 = vmatpush2.bf16.msra.mxu0 %v5108
    %7314 = vmatprep.subr.bf16.mxu0 %v5093
    %7315 = vmatpush2.bf16.msra.mxu0 %v5092
    %7316 = vmatprep.subr.bf16.mxu0 %v5077
    %7317 = vmatpush2.bf16.msra.mxu0 %v5076
    %7318 = vmatprep.subr.bf16.mxu0 %v5061
    %7319 = vmatpush2.bf16.msra.mxu0 %v5060
    %7320 = vmatprep.subr.bf16.mxu0 %v5045
    %7321 = vmatpush2.bf16.msra.mxu0 %v5044
    %7322 = vmatprep.subr.bf16.mxu0 %v5029
    %7323 = vmatpush2.bf16.msra.mxu0 %v5028
    %7324 = vmatprep.subr.bf16.mxu0 %v5013
    %7325 = vmatpush2.bf16.msra.mxu0 %v5012
    %7326 = vmatprep.subr.bf16.mxu0 %v4997
    %7327 = vmatpush2.bf16.msra.mxu0 %v4996
    %7328 = vmatprep.mubr.bf16.mxu0 %v1263
    %7329 = vmatmul.mubr.bf16.gmra.mxu0 %v1262
    %v7330 = vpop.f32.mrf.mxu0
    %v7331 = vadd.f32 %v7290, %v7330
    %v7332 = vpop.f32.mrf.mxu0
    %v7333 = vadd.f32 %v7292, %v7332
    %v7334 = vpop.f32.mrf.mxu0
    %v7335 = vpop.f32.mrf.mxu0
    %7336 = vdwg.mxu0
    %7337 = vmatprep.subr.bf16.mxu0 %v5237
    %7338 = vmatpush1.bf16.msra.mxu0 %v5236
    %7339 = vmatprep.subr.bf16.mxu0 %v5221
    %7340 = vmatpush1.bf16.msra.mxu0 %v5220
    %7341 = vmatprep.subr.bf16.mxu0 %v5205
    %7342 = vmatpush1.bf16.msra.mxu0 %v5204
    %7343 = vmatprep.subr.bf16.mxu0 %v5189
    %7344 = vmatpush1.bf16.msra.mxu0 %v5188
    %7345 = vmatprep.subr.bf16.mxu0 %v5173
    %7346 = vmatpush1.bf16.msra.mxu0 %v5172
    %7347 = vmatprep.subr.bf16.mxu0 %v5157
    %7348 = vmatpush1.bf16.msra.mxu0 %v5156
    %7349 = vmatprep.subr.bf16.mxu0 %v5141
    %7350 = vmatpush1.bf16.msra.mxu0 %v5140
    %7351 = vmatprep.subr.bf16.mxu0 %v5125
    %7352 = vmatpush1.bf16.msra.mxu0 %v5124
    %7353 = vmatprep.subr.bf16.mxu0 %v5365
    %7354 = vmatpush2.bf16.msra.mxu0 %v5364
    %7355 = vmatprep.subr.bf16.mxu0 %v5349
    %7356 = vmatpush2.bf16.msra.mxu0 %v5348
    %7357 = vmatprep.subr.bf16.mxu0 %v5333
    %7358 = vmatpush2.bf16.msra.mxu0 %v5332
    %7359 = vmatprep.subr.bf16.mxu0 %v5317
    %7360 = vmatpush2.bf16.msra.mxu0 %v5316
    %7361 = vmatprep.subr.bf16.mxu0 %v5301
    %7362 = vmatpush2.bf16.msra.mxu0 %v5300
    %7363 = vmatprep.subr.bf16.mxu0 %v5285
    %7364 = vmatpush2.bf16.msra.mxu0 %v5284
    %7365 = vmatprep.subr.bf16.mxu0 %v5269
    %7366 = vmatpush2.bf16.msra.mxu0 %v5268
    %7367 = vmatprep.subr.bf16.mxu0 %v5253
    %7368 = vmatpush2.bf16.msra.mxu0 %v5252
    %7369 = vmatprep.mubr.bf16.mxu0 %v1265
    %7370 = vmatmul.mubr.bf16.gmra.mxu0 %v1264
    %v7371 = vpop.f32.mrf.mxu0
    %v7372 = vadd.f32 %v7331, %v7371
    %v7373 = vpop.f32.mrf.mxu0
    %v7374 = vadd.f32 %v7333, %v7373
    %v7375 = vpop.f32.mrf.mxu0
    %v7376 = vpop.f32.mrf.mxu0
    %7377 = vdwg.mxu0
    %7378 = vmatprep.subr.bf16.mxu0 %v4471
    %7379 = vmatpush1.bf16.msra.mxu0 %v4470
    %7380 = vmatprep.subr.bf16.mxu0 %v4455
    %7381 = vmatpush1.bf16.msra.mxu0 %v4454
    %7382 = vmatprep.subr.bf16.mxu0 %v4439
    %7383 = vmatpush1.bf16.msra.mxu0 %v4438
    %7384 = vmatprep.subr.bf16.mxu0 %v4423
    %7385 = vmatpush1.bf16.msra.mxu0 %v4422
    %7386 = vmatprep.subr.bf16.mxu0 %v4407
    %7387 = vmatpush1.bf16.msra.mxu0 %v4406
    %7388 = vmatprep.subr.bf16.mxu0 %v4391
    %7389 = vmatpush1.bf16.msra.mxu0 %v4390
    %7390 = vmatprep.subr.bf16.mxu0 %v4375
    %7391 = vmatpush1.bf16.msra.mxu0 %v4374
    %7392 = vmatprep.subr.bf16.mxu0 %v4359
    %7393 = vmatpush1.bf16.msra.mxu0 %v4358
    %7394 = vmatprep.subr.bf16.mxu0 %v4599
    %7395 = vmatpush2.bf16.msra.mxu0 %v4598
    %7396 = vmatprep.subr.bf16.mxu0 %v4583
    %7397 = vmatpush2.bf16.msra.mxu0 %v4582
    %7398 = vmatprep.subr.bf16.mxu0 %v4567
    %7399 = vmatpush2.bf16.msra.mxu0 %v4566
    %7400 = vmatprep.subr.bf16.mxu0 %v4551
    %7401 = vmatpush2.bf16.msra.mxu0 %v4550
    %7402 = vmatprep.subr.bf16.mxu0 %v4535
    %7403 = vmatpush2.bf16.msra.mxu0 %v4534
    %7404 = vmatprep.subr.bf16.mxu0 %v4519
    %7405 = vmatpush2.bf16.msra.mxu0 %v4518
    %7406 = vmatprep.subr.bf16.mxu0 %v4503
    %7407 = vmatpush2.bf16.msra.mxu0 %v4502
    %7408 = vmatprep.subr.bf16.mxu0 %v4487
    %7409 = vmatpush2.bf16.msra.mxu0 %v4486
    %7410 = vmatprep.mubr.bf16.mxu0 %v1259
    %7411 = vmatmul.mubr.bf16.gmra.mxu0 %v1258
    %v7412 = vpop.f32.mrf.mxu0
    %v7413 = vadd.f32 %v1217, %v7412
    %v7414 = vpop.f32.mrf.mxu0
    %v7415 = vadd.f32 %v1221, %v7414
    %v7416 = vpop.f32.mrf.mxu0
    %v7417 = vpop.f32.mrf.mxu0
    %7418 = vdwg.mxu0
    %7419 = vmatprep.subr.bf16.mxu0 %v4727
    %7420 = vmatpush1.bf16.msra.mxu0 %v4726
    %7421 = vmatprep.subr.bf16.mxu0 %v4711
    %7422 = vmatpush1.bf16.msra.mxu0 %v4710
    %7423 = vmatprep.subr.bf16.mxu0 %v4695
    %7424 = vmatpush1.bf16.msra.mxu0 %v4694
    %7425 = vmatprep.subr.bf16.mxu0 %v4679
    %7426 = vmatpush1.bf16.msra.mxu0 %v4678
    %7427 = vmatprep.subr.bf16.mxu0 %v4663
    %7428 = vmatpush1.bf16.msra.mxu0 %v4662
    %7429 = vmatprep.subr.bf16.mxu0 %v4647
    %7430 = vmatpush1.bf16.msra.mxu0 %v4646
    %7431 = vmatprep.subr.bf16.mxu0 %v4631
    %7432 = vmatpush1.bf16.msra.mxu0 %v4630
    %7433 = vmatprep.subr.bf16.mxu0 %v4615
    %7434 = vmatpush1.bf16.msra.mxu0 %v4614
    %7435 = vmatprep.subr.bf16.mxu0 %v4855
    %7436 = vmatpush2.bf16.msra.mxu0 %v4854
    %7437 = vmatprep.subr.bf16.mxu0 %v4839
    %7438 = vmatpush2.bf16.msra.mxu0 %v4838
    %7439 = vmatprep.subr.bf16.mxu0 %v4823
    %7440 = vmatpush2.bf16.msra.mxu0 %v4822
    %7441 = vmatprep.subr.bf16.mxu0 %v4807
    %7442 = vmatpush2.bf16.msra.mxu0 %v4806
    %7443 = vmatprep.subr.bf16.mxu0 %v4791
    %7444 = vmatpush2.bf16.msra.mxu0 %v4790
    %7445 = vmatprep.subr.bf16.mxu0 %v4775
    %7446 = vmatpush2.bf16.msra.mxu0 %v4774
    %7447 = vmatprep.subr.bf16.mxu0 %v4759
    %7448 = vmatpush2.bf16.msra.mxu0 %v4758
    %7449 = vmatprep.subr.bf16.mxu0 %v4743
    %7450 = vmatpush2.bf16.msra.mxu0 %v4742
    %7451 = vmatprep.mubr.bf16.mxu0 %v1261
    %7452 = vmatmul.mubr.bf16.gmra.mxu0 %v1260
    %v7453 = vpop.f32.mrf.mxu0
    %v7454 = vadd.f32 %v7413, %v7453
    %v7455 = vpop.f32.mrf.mxu0
    %v7456 = vadd.f32 %v7415, %v7455
    %v7457 = vpop.f32.mrf.mxu0
    %v7458 = vpop.f32.mrf.mxu0
    %7459 = vdwg.mxu0
    %7460 = vmatprep.subr.bf16.mxu0 %v4983
    %7461 = vmatpush1.bf16.msra.mxu0 %v4982
    %7462 = vmatprep.subr.bf16.mxu0 %v4967
    %7463 = vmatpush1.bf16.msra.mxu0 %v4966
    %7464 = vmatprep.subr.bf16.mxu0 %v4951
    %7465 = vmatpush1.bf16.msra.mxu0 %v4950
    %7466 = vmatprep.subr.bf16.mxu0 %v4935
    %7467 = vmatpush1.bf16.msra.mxu0 %v4934
    %7468 = vmatprep.subr.bf16.mxu0 %v4919
    %7469 = vmatpush1.bf16.msra.mxu0 %v4918
    %7470 = vmatprep.subr.bf16.mxu0 %v4903
    %7471 = vmatpush1.bf16.msra.mxu0 %v4902
    %7472 = vmatprep.subr.bf16.mxu0 %v4887
    %7473 = vmatpush1.bf16.msra.mxu0 %v4886
    %7474 = vmatprep.subr.bf16.mxu0 %v4871
    %7475 = vmatpush1.bf16.msra.mxu0 %v4870
    %7476 = vmatprep.subr.bf16.mxu0 %v5111
    %7477 = vmatpush2.bf16.msra.mxu0 %v5110
    %7478 = vmatprep.subr.bf16.mxu0 %v5095
    %7479 = vmatpush2.bf16.msra.mxu0 %v5094
    %7480 = vmatprep.subr.bf16.mxu0 %v5079
    %7481 = vmatpush2.bf16.msra.mxu0 %v5078
    %7482 = vmatprep.subr.bf16.mxu0 %v5063
    %7483 = vmatpush2.bf16.msra.mxu0 %v5062
    %7484 = vmatprep.subr.bf16.mxu0 %v5047
    %7485 = vmatpush2.bf16.msra.mxu0 %v5046
    %7486 = vmatprep.subr.bf16.mxu0 %v5031
    %7487 = vmatpush2.bf16.msra.mxu0 %v5030
    %7488 = vmatprep.subr.bf16.mxu0 %v5015
    %7489 = vmatpush2.bf16.msra.mxu0 %v5014
    %7490 = vmatprep.subr.bf16.mxu0 %v4999
    %7491 = vmatpush2.bf16.msra.mxu0 %v4998
    %7492 = vmatprep.mubr.bf16.mxu0 %v1263
    %7493 = vmatmul.mubr.bf16.gmra.mxu0 %v1262
    %v7494 = vpop.f32.mrf.mxu0
    %v7495 = vadd.f32 %v7454, %v7494
    %v7496 = vpop.f32.mrf.mxu0
    %v7497 = vadd.f32 %v7456, %v7496
    %v7498 = vpop.f32.mrf.mxu0
    %v7499 = vpop.f32.mrf.mxu0
    %7500 = vdwg.mxu0
    %7501 = vmatprep.subr.bf16.mxu0 %v5239
    %7502 = vmatpush1.bf16.msra.mxu0 %v5238
    %7503 = vmatprep.subr.bf16.mxu0 %v5223
    %7504 = vmatpush1.bf16.msra.mxu0 %v5222
    %7505 = vmatprep.subr.bf16.mxu0 %v5207
    %7506 = vmatpush1.bf16.msra.mxu0 %v5206
    %7507 = vmatprep.subr.bf16.mxu0 %v5191
    %7508 = vmatpush1.bf16.msra.mxu0 %v5190
    %7509 = vmatprep.subr.bf16.mxu0 %v5175
    %7510 = vmatpush1.bf16.msra.mxu0 %v5174
    %7511 = vmatprep.subr.bf16.mxu0 %v5159
    %7512 = vmatpush1.bf16.msra.mxu0 %v5158
    %7513 = vmatprep.subr.bf16.mxu0 %v5143
    %7514 = vmatpush1.bf16.msra.mxu0 %v5142
    %7515 = vmatprep.subr.bf16.mxu0 %v5127
    %7516 = vmatpush1.bf16.msra.mxu0 %v5126
    %7517 = vmatprep.subr.bf16.mxu0 %v5367
    %7518 = vmatpush2.bf16.msra.mxu0 %v5366
    %7519 = vmatprep.subr.bf16.mxu0 %v5351
    %7520 = vmatpush2.bf16.msra.mxu0 %v5350
    %7521 = vmatprep.subr.bf16.mxu0 %v5335
    %7522 = vmatpush2.bf16.msra.mxu0 %v5334
    %7523 = vmatprep.subr.bf16.mxu0 %v5319
    %7524 = vmatpush2.bf16.msra.mxu0 %v5318
    %7525 = vmatprep.subr.bf16.mxu0 %v5303
    %7526 = vmatpush2.bf16.msra.mxu0 %v5302
    %7527 = vmatprep.subr.bf16.mxu0 %v5287
    %7528 = vmatpush2.bf16.msra.mxu0 %v5286
    %7529 = vmatprep.subr.bf16.mxu0 %v5271
    %7530 = vmatpush2.bf16.msra.mxu0 %v5270
    %7531 = vmatprep.subr.bf16.mxu0 %v5255
    %7532 = vmatpush2.bf16.msra.mxu0 %v5254
    %7533 = vmatprep.mubr.bf16.mxu0 %v1265
    %7534 = vmatmul.mubr.bf16.gmra.mxu0 %v1264
    %v7535 = vpop.f32.mrf.mxu0
    %v7536 = vadd.f32 %v7495, %v7535
    %v7537 = vpop.f32.mrf.mxu0
    %v7538 = vadd.f32 %v7497, %v7537
    %v7539 = vpop.f32.mrf.mxu0
    %v7540 = vpop.f32.mrf.mxu0
    %7541 = vdwg.mxu0
    %7542 = vmatprep.subr.bf16.mxu0 %v4473
    %7543 = vmatpush1.bf16.msra.mxu0 %v4472
    %7544 = vmatprep.subr.bf16.mxu0 %v4457
    %7545 = vmatpush1.bf16.msra.mxu0 %v4456
    %7546 = vmatprep.subr.bf16.mxu0 %v4441
    %7547 = vmatpush1.bf16.msra.mxu0 %v4440
    %7548 = vmatprep.subr.bf16.mxu0 %v4425
    %7549 = vmatpush1.bf16.msra.mxu0 %v4424
    %7550 = vmatprep.subr.bf16.mxu0 %v4409
    %7551 = vmatpush1.bf16.msra.mxu0 %v4408
    %7552 = vmatprep.subr.bf16.mxu0 %v4393
    %7553 = vmatpush1.bf16.msra.mxu0 %v4392
    %7554 = vmatprep.subr.bf16.mxu0 %v4377
    %7555 = vmatpush1.bf16.msra.mxu0 %v4376
    %7556 = vmatprep.subr.bf16.mxu0 %v4361
    %7557 = vmatpush1.bf16.msra.mxu0 %v4360
    %7558 = vmatprep.subr.bf16.mxu0 %v4601
    %7559 = vmatpush2.bf16.msra.mxu0 %v4600
    %7560 = vmatprep.subr.bf16.mxu0 %v4585
    %7561 = vmatpush2.bf16.msra.mxu0 %v4584
    %7562 = vmatprep.subr.bf16.mxu0 %v4569
    %7563 = vmatpush2.bf16.msra.mxu0 %v4568
    %7564 = vmatprep.subr.bf16.mxu0 %v4553
    %7565 = vmatpush2.bf16.msra.mxu0 %v4552
    %7566 = vmatprep.subr.bf16.mxu0 %v4537
    %7567 = vmatpush2.bf16.msra.mxu0 %v4536
    %7568 = vmatprep.subr.bf16.mxu0 %v4521
    %7569 = vmatpush2.bf16.msra.mxu0 %v4520
    %7570 = vmatprep.subr.bf16.mxu0 %v4505
    %7571 = vmatpush2.bf16.msra.mxu0 %v4504
    %7572 = vmatprep.subr.bf16.mxu0 %v4489
    %7573 = vmatpush2.bf16.msra.mxu0 %v4488
    %7574 = vmatprep.mubr.bf16.mxu0 %v1259
    %7575 = vmatmul.mubr.bf16.gmra.mxu0 %v1258
    %v7576 = vpop.f32.mrf.mxu0
    %v7577 = vadd.f32 %v1225, %v7576
    %v7578 = vpop.f32.mrf.mxu0
    %v7579 = vadd.f32 %v1229, %v7578
    %v7580 = vpop.f32.mrf.mxu0
    %v7581 = vpop.f32.mrf.mxu0
    %7582 = vdwg.mxu0
    %7583 = vmatprep.subr.bf16.mxu0 %v4729
    %7584 = vmatpush1.bf16.msra.mxu0 %v4728
    %7585 = vmatprep.subr.bf16.mxu0 %v4713
    %7586 = vmatpush1.bf16.msra.mxu0 %v4712
    %7587 = vmatprep.subr.bf16.mxu0 %v4697
    %7588 = vmatpush1.bf16.msra.mxu0 %v4696
    %7589 = vmatprep.subr.bf16.mxu0 %v4681
    %7590 = vmatpush1.bf16.msra.mxu0 %v4680
    %7591 = vmatprep.subr.bf16.mxu0 %v4665
    %7592 = vmatpush1.bf16.msra.mxu0 %v4664
    %7593 = vmatprep.subr.bf16.mxu0 %v4649
    %7594 = vmatpush1.bf16.msra.mxu0 %v4648
    %7595 = vmatprep.subr.bf16.mxu0 %v4633
    %7596 = vmatpush1.bf16.msra.mxu0 %v4632
    %7597 = vmatprep.subr.bf16.mxu0 %v4617
    %7598 = vmatpush1.bf16.msra.mxu0 %v4616
    %7599 = vmatprep.subr.bf16.mxu0 %v4857
    %7600 = vmatpush2.bf16.msra.mxu0 %v4856
    %7601 = vmatprep.subr.bf16.mxu0 %v4841
    %7602 = vmatpush2.bf16.msra.mxu0 %v4840
    %7603 = vmatprep.subr.bf16.mxu0 %v4825
    %7604 = vmatpush2.bf16.msra.mxu0 %v4824
    %7605 = vmatprep.subr.bf16.mxu0 %v4809
    %7606 = vmatpush2.bf16.msra.mxu0 %v4808
    %7607 = vmatprep.subr.bf16.mxu0 %v4793
    %7608 = vmatpush2.bf16.msra.mxu0 %v4792
    %7609 = vmatprep.subr.bf16.mxu0 %v4777
    %7610 = vmatpush2.bf16.msra.mxu0 %v4776
    %7611 = vmatprep.subr.bf16.mxu0 %v4761
    %7612 = vmatpush2.bf16.msra.mxu0 %v4760
    %7613 = vmatprep.subr.bf16.mxu0 %v4745
    %7614 = vmatpush2.bf16.msra.mxu0 %v4744
    %7615 = vmatprep.mubr.bf16.mxu0 %v1261
    %7616 = vmatmul.mubr.bf16.gmra.mxu0 %v1260
    %v7617 = vpop.f32.mrf.mxu0
    %v7618 = vadd.f32 %v7577, %v7617
    %v7619 = vpop.f32.mrf.mxu0
    %v7620 = vadd.f32 %v7579, %v7619
    %v7621 = vpop.f32.mrf.mxu0
    %v7622 = vpop.f32.mrf.mxu0
    %7623 = vdwg.mxu0
    %7624 = vmatprep.subr.bf16.mxu0 %v4985
    %7625 = vmatpush1.bf16.msra.mxu0 %v4984
    %7626 = vmatprep.subr.bf16.mxu0 %v4969
    %7627 = vmatpush1.bf16.msra.mxu0 %v4968
    %7628 = vmatprep.subr.bf16.mxu0 %v4953
    %7629 = vmatpush1.bf16.msra.mxu0 %v4952
    %7630 = vmatprep.subr.bf16.mxu0 %v4937
    %7631 = vmatpush1.bf16.msra.mxu0 %v4936
    %7632 = vmatprep.subr.bf16.mxu0 %v4921
    %7633 = vmatpush1.bf16.msra.mxu0 %v4920
    %7634 = vmatprep.subr.bf16.mxu0 %v4905
    %7635 = vmatpush1.bf16.msra.mxu0 %v4904
    %7636 = vmatprep.subr.bf16.mxu0 %v4889
    %7637 = vmatpush1.bf16.msra.mxu0 %v4888
    %7638 = vmatprep.subr.bf16.mxu0 %v4873
    %7639 = vmatpush1.bf16.msra.mxu0 %v4872
    %7640 = vmatprep.subr.bf16.mxu0 %v5113
    %7641 = vmatpush2.bf16.msra.mxu0 %v5112
    %7642 = vmatprep.subr.bf16.mxu0 %v5097
    %7643 = vmatpush2.bf16.msra.mxu0 %v5096
    %7644 = vmatprep.subr.bf16.mxu0 %v5081
    %7645 = vmatpush2.bf16.msra.mxu0 %v5080
    %7646 = vmatprep.subr.bf16.mxu0 %v5065
    %7647 = vmatpush2.bf16.msra.mxu0 %v5064
    %7648 = vmatprep.subr.bf16.mxu0 %v5049
    %7649 = vmatpush2.bf16.msra.mxu0 %v5048
    %7650 = vmatprep.subr.bf16.mxu0 %v5033
    %7651 = vmatpush2.bf16.msra.mxu0 %v5032
    %7652 = vmatprep.subr.bf16.mxu0 %v5017
    %7653 = vmatpush2.bf16.msra.mxu0 %v5016
    %7654 = vmatprep.subr.bf16.mxu0 %v5001
    %7655 = vmatpush2.bf16.msra.mxu0 %v5000
    %7656 = vmatprep.mubr.bf16.mxu0 %v1263
    %7657 = vmatmul.mubr.bf16.gmra.mxu0 %v1262
    %v7658 = vpop.f32.mrf.mxu0
    %v7659 = vadd.f32 %v7618, %v7658
    %v7660 = vpop.f32.mrf.mxu0
    %v7661 = vadd.f32 %v7620, %v7660
    %v7662 = vpop.f32.mrf.mxu0
    %v7663 = vpop.f32.mrf.mxu0
    %7664 = vdwg.mxu0
    %7665 = vmatprep.subr.bf16.mxu0 %v5241
    %7666 = vmatpush1.bf16.msra.mxu0 %v5240
    %7667 = vmatprep.subr.bf16.mxu0 %v5225
    %7668 = vmatpush1.bf16.msra.mxu0 %v5224
    %7669 = vmatprep.subr.bf16.mxu0 %v5209
    %7670 = vmatpush1.bf16.msra.mxu0 %v5208
    %7671 = vmatprep.subr.bf16.mxu0 %v5193
    %7672 = vmatpush1.bf16.msra.mxu0 %v5192
    %7673 = vmatprep.subr.bf16.mxu0 %v5177
    %7674 = vmatpush1.bf16.msra.mxu0 %v5176
    %7675 = vmatprep.subr.bf16.mxu0 %v5161
    %7676 = vmatpush1.bf16.msra.mxu0 %v5160
    %7677 = vmatprep.subr.bf16.mxu0 %v5145
    %7678 = vmatpush1.bf16.msra.mxu0 %v5144
    %7679 = vmatprep.subr.bf16.mxu0 %v5129
    %7680 = vmatpush1.bf16.msra.mxu0 %v5128
    %7681 = vmatprep.subr.bf16.mxu0 %v5369
    %7682 = vmatpush2.bf16.msra.mxu0 %v5368
    %7683 = vmatprep.subr.bf16.mxu0 %v5353
    %7684 = vmatpush2.bf16.msra.mxu0 %v5352
    %7685 = vmatprep.subr.bf16.mxu0 %v5337
    %7686 = vmatpush2.bf16.msra.mxu0 %v5336
    %7687 = vmatprep.subr.bf16.mxu0 %v5321
    %7688 = vmatpush2.bf16.msra.mxu0 %v5320
    %7689 = vmatprep.subr.bf16.mxu0 %v5305
    %7690 = vmatpush2.bf16.msra.mxu0 %v5304
    %7691 = vmatprep.subr.bf16.mxu0 %v5289
    %7692 = vmatpush2.bf16.msra.mxu0 %v5288
    %7693 = vmatprep.subr.bf16.mxu0 %v5273
    %7694 = vmatpush2.bf16.msra.mxu0 %v5272
    %7695 = vmatprep.subr.bf16.mxu0 %v5257
    %7696 = vmatpush2.bf16.msra.mxu0 %v5256
    %7697 = vmatprep.mubr.bf16.mxu0 %v1265
    %7698 = vmatmul.mubr.bf16.gmra.mxu0 %v1264
    %v7699 = vpop.f32.mrf.mxu0
    %v7700 = vadd.f32 %v7659, %v7699
    %v7701 = vpop.f32.mrf.mxu0
    %v7702 = vadd.f32 %v7661, %v7701
    %v7703 = vpop.f32.mrf.mxu0
    %v7704 = vpop.f32.mrf.mxu0
    %7705 = vdwg.mxu0
    %v7706 = vmax.f32 %v6552, 0.0
    %v7707 = vmax.f32 %v6554, 0.0
    %v7708 = vmax.f32 %v6716, 0.0
    %v7709 = vmax.f32 %v6718, 0.0
    %v7710 = vmax.f32 %v6880, 0.0
    %v7711 = vmax.f32 %v6882, 0.0
    %v7712 = vmax.f32 %v7044, 0.0
    %v7713 = vmax.f32 %v7046, 0.0
    %v7714 = vmax.f32 %v7208, 0.0
    %v7715 = vmax.f32 %v7210, 0.0
    %v7716 = vmax.f32 %v7372, 0.0
    %v7717 = vmax.f32 %v7374, 0.0
    %v7718 = vmax.f32 %v7536, 0.0
    %v7719 = vmax.f32 %v7538, 0.0
    %v7720 = vmax.f32 %v7700, 0.0
    %v7721 = vmax.f32 %v7702, 0.0
    %v7722 = vmax.f32 %v7706, %v7710
    %v7723 = vmax.f32 %v7707, %v7711
    %v7724 = vmax.f32 %v7708, %v7712
    %v7725 = vmax.f32 %v7709, %v7713
    %v7726 = vmax.f32 %v7714, %v7718
    %v7727 = vmax.f32 %v7715, %v7719
    %v7728 = vmax.f32 %v7716, %v7720
    %v7729 = vmax.f32 %v7717, %v7721
    %v7730 = vmax.f32 %v7722, %v7726
    %v7731 = vmax.f32 %v7723, %v7727
    %v7732 = vmax.f32 %v7724, %v7728
    %v7733 = vmax.f32 %v7725, %v7729
    %v7734 = vpack.c.bf16 %v7730, %v7730
    %v7735 = vpack.c.bf16 %v7731, %v7731
    %v7736 = vpack.c.bf16 %v7732, %v7732
    %v7737 = vpack.c.bf16 %v7733, %v7733
    %v7738 = vld [vmem:[#allocation6] sm:$0xff]
    %v7739 = vld [vmem:[#allocation6 + $0x8] sm:$0xff]
    %v7740 = vld [vmem:[#allocation6 + $0x10] sm:$0xff]
    %v7741 = vld [vmem:[#allocation6 + $0x18] sm:$0xff]
    %v7742 = vld [vmem:[#allocation6 + $0x20] sm:$0xff]
    %v7743 = vld [vmem:[#allocation6 + $0x28] sm:$0xff]
    %v7744 = vld [vmem:[#allocation6 + $0x30] sm:$0xff]
    %v7745 = vld [vmem:[#allocation6 + $0x38] sm:$0xff]
    %v7746 = vld [vmem:[#allocation6 + $0x40] sm:$0xff]
    %v7747 = vld [vmem:[#allocation6 + $0x48] sm:$0xff]
    %v7748 = vld [vmem:[#allocation6 + $0x50] sm:$0xff]
    %v7749 = vld [vmem:[#allocation6 + $0x58] sm:$0xff]
    %v7750 = vld [vmem:[#allocation6 + $0x60] sm:$0xff]
    %v7751 = vld [vmem:[#allocation6 + $0x68] sm:$0xff]
    %v7752 = vld [vmem:[#allocation6 + $0x70] sm:$0xff]
    %v7753 = vld [vmem:[#allocation6 + $0x78] sm:$0xff]
    %v7754 = vld [vmem:[#allocation6 + $0x80] sm:$0xff]
    %v7755 = vld [vmem:[#allocation6 + $0x88] sm:$0xff]
    %v7756 = vld [vmem:[#allocation6 + $0x90] sm:$0xff]
    %v7757 = vld [vmem:[#allocation6 + $0x98] sm:$0xff]
    %v7758 = vld [vmem:[#allocation6 + $0xa0] sm:$0xff]
    %v7759 = vld [vmem:[#allocation6 + $0xa8] sm:$0xff]
    %v7760 = vld [vmem:[#allocation6 + $0xb0] sm:$0xff]
    %v7761 = vld [vmem:[#allocation6 + $0xb8] sm:$0xff]
    %v7762 = vld [vmem:[#allocation6 + $0xc0] sm:$0xff]
    %v7763 = vld [vmem:[#allocation6 + $0xc8] sm:$0xff]
    %v7764 = vld [vmem:[#allocation6 + $0xd0] sm:$0xff]
    %v7765 = vld [vmem:[#allocation6 + $0xd8] sm:$0xff]
    %v7766 = vld [vmem:[#allocation6 + $0xe0] sm:$0xff]
    %v7767 = vld [vmem:[#allocation6 + $0xe8] sm:$0xff]
    %v7768 = vld [vmem:[#allocation6 + $0xf0] sm:$0xff]
    %v7769 = vld [vmem:[#allocation6 + $0xf8] sm:$0xff]
    %v7770 = vld [vmem:[#allocation6 + $0x100] sm:$0xff]
    %v7771 = vld [vmem:[#allocation6 + $0x108] sm:$0xff]
    %v7772 = vld [vmem:[#allocation6 + $0x110] sm:$0xff]
    %v7773 = vld [vmem:[#allocation6 + $0x118] sm:$0xff]
    %v7774 = vld [vmem:[#allocation6 + $0x120] sm:$0xff]
    %v7775 = vld [vmem:[#allocation6 + $0x128] sm:$0xff]
    %v7776 = vld [vmem:[#allocation6 + $0x130] sm:$0xff]
    %v7777 = vld [vmem:[#allocation6 + $0x138] sm:$0xff]
    %v7778 = vld [vmem:[#allocation6 + $0x140] sm:$0xff]
    %v7779 = vld [vmem:[#allocation6 + $0x148] sm:$0xff]
    %v7780 = vld [vmem:[#allocation6 + $0x150] sm:$0xff]
    %v7781 = vld [vmem:[#allocation6 + $0x158] sm:$0xff]
    %v7782 = vld [vmem:[#allocation6 + $0x160] sm:$0xff]
    %v7783 = vld [vmem:[#allocation6 + $0x168] sm:$0xff]
    %v7784 = vld [vmem:[#allocation6 + $0x170] sm:$0xff]
    %v7785 = vld [vmem:[#allocation6 + $0x178] sm:$0xff]
    %v7786 = vld [vmem:[#allocation6 + $0x180] sm:$0xff]
    %v7787 = vld [vmem:[#allocation6 + $0x188] sm:$0xff]
    %v7788 = vld [vmem:[#allocation6 + $0x190] sm:$0xff]
    %v7789 = vld [vmem:[#allocation6 + $0x198] sm:$0xff]
    %v7790 = vld [vmem:[#allocation6 + $0x1a0] sm:$0xff]
    %v7791 = vld [vmem:[#allocation6 + $0x1a8] sm:$0xff]
    %v7792 = vld [vmem:[#allocation6 + $0x1b0] sm:$0xff]
    %v7793 = vld [vmem:[#allocation6 + $0x1b8] sm:$0xff]
    %v7794 = vld [vmem:[#allocation6 + $0x1c0] sm:$0xff]
    %v7795 = vld [vmem:[#allocation6 + $0x1c8] sm:$0xff]
    %v7796 = vld [vmem:[#allocation6 + $0x1d0] sm:$0xff]
    %v7797 = vld [vmem:[#allocation6 + $0x1d8] sm:$0xff]
    %v7798 = vld [vmem:[#allocation6 + $0x1e0] sm:$0xff]
    %v7799 = vld [vmem:[#allocation6 + $0x1e8] sm:$0xff]
    %v7800 = vld [vmem:[#allocation6 + $0x1f0] sm:$0xff]
    %v7801 = vld [vmem:[#allocation6 + $0x1f8] sm:$0xff]
    %v7802 = vld [vmem:[#allocation6 + $0x200] sm:$0xff]
    %v7803 = vld [vmem:[#allocation6 + $0x208] sm:$0xff]
    %v7804 = vld [vmem:[#allocation6 + $0x210] sm:$0xff]
    %v7805 = vld [vmem:[#allocation6 + $0x218] sm:$0xff]
    %v7806 = vld [vmem:[#allocation6 + $0x220] sm:$0xff]
    %v7807 = vld [vmem:[#allocation6 + $0x228] sm:$0xff]
    %v7808 = vld [vmem:[#allocation6 + $0x230] sm:$0xff]
    %v7809 = vld [vmem:[#allocation6 + $0x238] sm:$0xff]
    %v7810 = vld [vmem:[#allocation6 + $0x240] sm:$0xff]
    %v7811 = vld [vmem:[#allocation6 + $0x248] sm:$0xff]
    %v7812 = vld [vmem:[#allocation6 + $0x250] sm:$0xff]
    %v7813 = vld [vmem:[#allocation6 + $0x258] sm:$0xff]
    %v7814 = vld [vmem:[#allocation6 + $0x260] sm:$0xff]
    %v7815 = vld [vmem:[#allocation6 + $0x268] sm:$0xff]
    %v7816 = vld [vmem:[#allocation6 + $0x270] sm:$0xff]
    %v7817 = vld [vmem:[#allocation6 + $0x278] sm:$0xff]
    %v7818 = vld [vmem:[#allocation6 + $0x280] sm:$0xff]
    %v7819 = vld [vmem:[#allocation6 + $0x288] sm:$0xff]
    %v7820 = vld [vmem:[#allocation6 + $0x290] sm:$0xff]
    %v7821 = vld [vmem:[#allocation6 + $0x298] sm:$0xff]
    %v7822 = vld [vmem:[#allocation6 + $0x2a0] sm:$0xff]
    %v7823 = vld [vmem:[#allocation6 + $0x2a8] sm:$0xff]
    %v7824 = vld [vmem:[#allocation6 + $0x2b0] sm:$0xff]
    %v7825 = vld [vmem:[#allocation6 + $0x2b8] sm:$0xff]
    %v7826 = vld [vmem:[#allocation6 + $0x2c0] sm:$0xff]
    %v7827 = vld [vmem:[#allocation6 + $0x2c8] sm:$0xff]
    %v7828 = vld [vmem:[#allocation6 + $0x2d0] sm:$0xff]
    %v7829 = vld [vmem:[#allocation6 + $0x2d8] sm:$0xff]
    %v7830 = vld [vmem:[#allocation6 + $0x2e0] sm:$0xff]
    %v7831 = vld [vmem:[#allocation6 + $0x2e8] sm:$0xff]
    %v7832 = vld [vmem:[#allocation6 + $0x2f0] sm:$0xff]
    %v7833 = vld [vmem:[#allocation6 + $0x2f8] sm:$0xff]
    %v7834 = vld [vmem:[#allocation6 + $0x300] sm:$0xff]
    %v7835 = vld [vmem:[#allocation6 + $0x308] sm:$0xff]
    %v7836 = vld [vmem:[#allocation6 + $0x310] sm:$0xff]
    %v7837 = vld [vmem:[#allocation6 + $0x318] sm:$0xff]
    %v7838 = vld [vmem:[#allocation6 + $0x320] sm:$0xff]
    %v7839 = vld [vmem:[#allocation6 + $0x328] sm:$0xff]
    %v7840 = vld [vmem:[#allocation6 + $0x330] sm:$0xff]
    %v7841 = vld [vmem:[#allocation6 + $0x338] sm:$0xff]
    %v7842 = vld [vmem:[#allocation6 + $0x340] sm:$0xff]
    %v7843 = vld [vmem:[#allocation6 + $0x348] sm:$0xff]
    %v7844 = vld [vmem:[#allocation6 + $0x350] sm:$0xff]
    %v7845 = vld [vmem:[#allocation6 + $0x358] sm:$0xff]
    %v7846 = vld [vmem:[#allocation6 + $0x360] sm:$0xff]
    %v7847 = vld [vmem:[#allocation6 + $0x368] sm:$0xff]
    %v7848 = vld [vmem:[#allocation6 + $0x370] sm:$0xff]
    %v7849 = vld [vmem:[#allocation6 + $0x378] sm:$0xff]
    %v7850 = vld [vmem:[#allocation6 + $0x380] sm:$0xff]
    %v7851 = vld [vmem:[#allocation6 + $0x388] sm:$0xff]
    %v7852 = vld [vmem:[#allocation6 + $0x390] sm:$0xff]
    %v7853 = vld [vmem:[#allocation6 + $0x398] sm:$0xff]
    %v7854 = vld [vmem:[#allocation6 + $0x3a0] sm:$0xff]
    %v7855 = vld [vmem:[#allocation6 + $0x3a8] sm:$0xff]
    %v7856 = vld [vmem:[#allocation6 + $0x3b0] sm:$0xff]
    %v7857 = vld [vmem:[#allocation6 + $0x3b8] sm:$0xff]
    %v7858 = vld [vmem:[#allocation6 + $0x3c0] sm:$0xff]
    %v7859 = vld [vmem:[#allocation6 + $0x3c8] sm:$0xff]
    %v7860 = vld [vmem:[#allocation6 + $0x3d0] sm:$0xff]
    %v7861 = vld [vmem:[#allocation6 + $0x3d8] sm:$0xff]
    %v7862 = vld [vmem:[#allocation6 + $0x3e0] sm:$0xff]
    %v7863 = vld [vmem:[#allocation6 + $0x3e8] sm:$0xff]
    %v7864 = vld [vmem:[#allocation6 + $0x3f0] sm:$0xff]
    %v7865 = vld [vmem:[#allocation6 + $0x3f8] sm:$0xff]
    %v7866 = vld [vmem:[#allocation6 + $0x400] sm:$0xff]
    %v7867 = vld [vmem:[#allocation6 + $0x408] sm:$0xff]
    %v7868 = vld [vmem:[#allocation6 + $0x410] sm:$0xff]
    %v7869 = vld [vmem:[#allocation6 + $0x418] sm:$0xff]
    %v7870 = vld [vmem:[#allocation6 + $0x420] sm:$0xff]
    %v7871 = vld [vmem:[#allocation6 + $0x428] sm:$0xff]
    %v7872 = vld [vmem:[#allocation6 + $0x430] sm:$0xff]
    %v7873 = vld [vmem:[#allocation6 + $0x438] sm:$0xff]
    %v7874 = vld [vmem:[#allocation6 + $0x440] sm:$0xff]
    %v7875 = vld [vmem:[#allocation6 + $0x448] sm:$0xff]
    %v7876 = vld [vmem:[#allocation6 + $0x450] sm:$0xff]
    %v7877 = vld [vmem:[#allocation6 + $0x458] sm:$0xff]
    %v7878 = vld [vmem:[#allocation6 + $0x460] sm:$0xff]
    %v7879 = vld [vmem:[#allocation6 + $0x468] sm:$0xff]
    %v7880 = vld [vmem:[#allocation6 + $0x470] sm:$0xff]
    %v7881 = vld [vmem:[#allocation6 + $0x478] sm:$0xff]
    %v7882 = vld [vmem:[#allocation6 + $0x480] sm:$0xff]
    %v7883 = vld [vmem:[#allocation6 + $0x488] sm:$0xff]
    %v7884 = vld [vmem:[#allocation6 + $0x490] sm:$0xff]
    %v7885 = vld [vmem:[#allocation6 + $0x498] sm:$0xff]
    %v7886 = vld [vmem:[#allocation6 + $0x4a0] sm:$0xff]
    %v7887 = vld [vmem:[#allocation6 + $0x4a8] sm:$0xff]
    %v7888 = vld [vmem:[#allocation6 + $0x4b0] sm:$0xff]
    %v7889 = vld [vmem:[#allocation6 + $0x4b8] sm:$0xff]
    %v7890 = vld [vmem:[#allocation6 + $0x4c0] sm:$0xff]
    %v7891 = vld [vmem:[#allocation6 + $0x4c8] sm:$0xff]
    %v7892 = vld [vmem:[#allocation6 + $0x4d0] sm:$0xff]
    %v7893 = vld [vmem:[#allocation6 + $0x4d8] sm:$0xff]
    %v7894 = vld [vmem:[#allocation6 + $0x4e0] sm:$0xff]
    %v7895 = vld [vmem:[#allocation6 + $0x4e8] sm:$0xff]
    %v7896 = vld [vmem:[#allocation6 + $0x4f0] sm:$0xff]
    %v7897 = vld [vmem:[#allocation6 + $0x4f8] sm:$0xff]
    %v7898 = vld [vmem:[#allocation6 + $0x500] sm:$0xff]
    %v7899 = vld [vmem:[#allocation6 + $0x508] sm:$0xff]
    %v7900 = vld [vmem:[#allocation6 + $0x510] sm:$0xff]
    %v7901 = vld [vmem:[#allocation6 + $0x518] sm:$0xff]
    %v7902 = vld [vmem:[#allocation6 + $0x520] sm:$0xff]
    %v7903 = vld [vmem:[#allocation6 + $0x528] sm:$0xff]
    %v7904 = vld [vmem:[#allocation6 + $0x530] sm:$0xff]
    %v7905 = vld [vmem:[#allocation6 + $0x538] sm:$0xff]
    %v7906 = vld [vmem:[#allocation6 + $0x540] sm:$0xff]
    %v7907 = vld [vmem:[#allocation6 + $0x548] sm:$0xff]
    %v7908 = vld [vmem:[#allocation6 + $0x550] sm:$0xff]
    %v7909 = vld [vmem:[#allocation6 + $0x558] sm:$0xff]
    %v7910 = vld [vmem:[#allocation6 + $0x560] sm:$0xff]
    %v7911 = vld [vmem:[#allocation6 + $0x568] sm:$0xff]
    %v7912 = vld [vmem:[#allocation6 + $0x570] sm:$0xff]
    %v7913 = vld [vmem:[#allocation6 + $0x578] sm:$0xff]
    %v7914 = vld [vmem:[#allocation6 + $0x580] sm:$0xff]
    %v7915 = vld [vmem:[#allocation6 + $0x588] sm:$0xff]
    %v7916 = vld [vmem:[#allocation6 + $0x590] sm:$0xff]
    %v7917 = vld [vmem:[#allocation6 + $0x598] sm:$0xff]
    %v7918 = vld [vmem:[#allocation6 + $0x5a0] sm:$0xff]
    %v7919 = vld [vmem:[#allocation6 + $0x5a8] sm:$0xff]
    %v7920 = vld [vmem:[#allocation6 + $0x5b0] sm:$0xff]
    %v7921 = vld [vmem:[#allocation6 + $0x5b8] sm:$0xff]
    %v7922 = vld [vmem:[#allocation6 + $0x5c0] sm:$0xff]
    %v7923 = vld [vmem:[#allocation6 + $0x5c8] sm:$0xff]
    %v7924 = vld [vmem:[#allocation6 + $0x5d0] sm:$0xff]
    %v7925 = vld [vmem:[#allocation6 + $0x5d8] sm:$0xff]
    %v7926 = vld [vmem:[#allocation6 + $0x5e0] sm:$0xff]
    %v7927 = vld [vmem:[#allocation6 + $0x5e8] sm:$0xff]
    %v7928 = vld [vmem:[#allocation6 + $0x5f0] sm:$0xff]
    %v7929 = vld [vmem:[#allocation6 + $0x5f8] sm:$0xff]
    %v7930 = vld [vmem:[#allocation6 + $0x600] sm:$0xff]
    %v7931 = vld [vmem:[#allocation6 + $0x608] sm:$0xff]
    %v7932 = vld [vmem:[#allocation6 + $0x610] sm:$0xff]
    %v7933 = vld [vmem:[#allocation6 + $0x618] sm:$0xff]
    %v7934 = vld [vmem:[#allocation6 + $0x620] sm:$0xff]
    %v7935 = vld [vmem:[#allocation6 + $0x628] sm:$0xff]
    %v7936 = vld [vmem:[#allocation6 + $0x630] sm:$0xff]
    %v7937 = vld [vmem:[#allocation6 + $0x638] sm:$0xff]
    %v7938 = vld [vmem:[#allocation6 + $0x640] sm:$0xff]
    %v7939 = vld [vmem:[#allocation6 + $0x648] sm:$0xff]
    %v7940 = vld [vmem:[#allocation6 + $0x650] sm:$0xff]
    %v7941 = vld [vmem:[#allocation6 + $0x658] sm:$0xff]
    %v7942 = vld [vmem:[#allocation6 + $0x660] sm:$0xff]
    %v7943 = vld [vmem:[#allocation6 + $0x668] sm:$0xff]
    %v7944 = vld [vmem:[#allocation6 + $0x670] sm:$0xff]
    %v7945 = vld [vmem:[#allocation6 + $0x678] sm:$0xff]
    %v7946 = vld [vmem:[#allocation6 + $0x680] sm:$0xff]
    %v7947 = vld [vmem:[#allocation6 + $0x688] sm:$0xff]
    %v7948 = vld [vmem:[#allocation6 + $0x690] sm:$0xff]
    %v7949 = vld [vmem:[#allocation6 + $0x698] sm:$0xff]
    %v7950 = vld [vmem:[#allocation6 + $0x6a0] sm:$0xff]
    %v7951 = vld [vmem:[#allocation6 + $0x6a8] sm:$0xff]
    %v7952 = vld [vmem:[#allocation6 + $0x6b0] sm:$0xff]
    %v7953 = vld [vmem:[#allocation6 + $0x6b8] sm:$0xff]
    %v7954 = vld [vmem:[#allocation6 + $0x6c0] sm:$0xff]
    %v7955 = vld [vmem:[#allocation6 + $0x6c8] sm:$0xff]
    %v7956 = vld [vmem:[#allocation6 + $0x6d0] sm:$0xff]
    %v7957 = vld [vmem:[#allocation6 + $0x6d8] sm:$0xff]
    %v7958 = vld [vmem:[#allocation6 + $0x6e0] sm:$0xff]
    %v7959 = vld [vmem:[#allocation6 + $0x6e8] sm:$0xff]
    %v7960 = vld [vmem:[#allocation6 + $0x6f0] sm:$0xff]
    %v7961 = vld [vmem:[#allocation6 + $0x6f8] sm:$0xff]
    %v7962 = vld [vmem:[#allocation6 + $0x700] sm:$0xff]
    %v7963 = vld [vmem:[#allocation6 + $0x708] sm:$0xff]
    %v7964 = vld [vmem:[#allocation6 + $0x710] sm:$0xff]
    %v7965 = vld [vmem:[#allocation6 + $0x718] sm:$0xff]
    %v7966 = vld [vmem:[#allocation6 + $0x720] sm:$0xff]
    %v7967 = vld [vmem:[#allocation6 + $0x728] sm:$0xff]
    %v7968 = vld [vmem:[#allocation6 + $0x730] sm:$0xff]
    %v7969 = vld [vmem:[#allocation6 + $0x738] sm:$0xff]
    %v7970 = vld [vmem:[#allocation6 + $0x740] sm:$0xff]
    %v7971 = vld [vmem:[#allocation6 + $0x748] sm:$0xff]
    %v7972 = vld [vmem:[#allocation6 + $0x750] sm:$0xff]
    %v7973 = vld [vmem:[#allocation6 + $0x758] sm:$0xff]
    %v7974 = vld [vmem:[#allocation6 + $0x760] sm:$0xff]
    %v7975 = vld [vmem:[#allocation6 + $0x768] sm:$0xff]
    %v7976 = vld [vmem:[#allocation6 + $0x770] sm:$0xff]
    %v7977 = vld [vmem:[#allocation6 + $0x778] sm:$0xff]
    %v7978 = vld [vmem:[#allocation6 + $0x780] sm:$0xff]
    %v7979 = vld [vmem:[#allocation6 + $0x788] sm:$0xff]
    %v7980 = vld [vmem:[#allocation6 + $0x790] sm:$0xff]
    %v7981 = vld [vmem:[#allocation6 + $0x798] sm:$0xff]
    %v7982 = vld [vmem:[#allocation6 + $0x7a0] sm:$0xff]
    %v7983 = vld [vmem:[#allocation6 + $0x7a8] sm:$0xff]
    %v7984 = vld [vmem:[#allocation6 + $0x7b0] sm:$0xff]
    %v7985 = vld [vmem:[#allocation6 + $0x7b8] sm:$0xff]
    %v7986 = vld [vmem:[#allocation6 + $0x7c0] sm:$0xff]
    %v7987 = vld [vmem:[#allocation6 + $0x7c8] sm:$0xff]
    %v7988 = vld [vmem:[#allocation6 + $0x7d0] sm:$0xff]
    %v7989 = vld [vmem:[#allocation6 + $0x7d8] sm:$0xff]
    %v7990 = vld [vmem:[#allocation6 + $0x7e0] sm:$0xff]
    %v7991 = vld [vmem:[#allocation6 + $0x7e8] sm:$0xff]
    %v7992 = vld [vmem:[#allocation6 + $0x7f0] sm:$0xff]
    %v7993 = vld [vmem:[#allocation6 + $0x7f8] sm:$0xff]
    %v7994 = vld [vmem:[#allocation7] sm:$0xff]
    %v7996 = vlaneseq
    %v7997 = vshrl.u32 %v7996, 7
    %v7998 = vsub.s32 0, %v7997
    %v7999 = vrot.slane %v7994, %v7998
    %v8000 = vlaneseq
    %v8001 = vshrl.u32 %v8000, 7
    %v8002 = vsub.s32 1, %v8001
    %v8003 = vrot.slane %v7994, %v8002
    %v8004 = vlaneseq
    %v8005 = vshrl.u32 %v8004, 7
    %v8006 = vsub.s32 2, %v8005
    %v8007 = vrot.slane %v7994, %v8006
    %v8008 = vlaneseq
    %v8009 = vshrl.u32 %v8008, 7
    %v8010 = vsub.s32 3, %v8009
    %v8011 = vrot.slane %v7994, %v8010
    %v8012 = vlaneseq
    %v8013 = vshrl.u32 %v8012, 7
    %v8014 = vsub.s32 4, %v8013
    %v8015 = vrot.slane %v7994, %v8014
    %v8016 = vlaneseq
    %v8017 = vshrl.u32 %v8016, 7
    %v8018 = vsub.s32 5, %v8017
    %v8019 = vrot.slane %v7994, %v8018
    %v8020 = vlaneseq
    %v8021 = vshrl.u32 %v8020, 7
    %v8022 = vsub.s32 6, %v8021
    %v8023 = vrot.slane %v7994, %v8022
    %v8024 = vlaneseq
    %v8025 = vshrl.u32 %v8024, 7
    %v8026 = vsub.s32 7, %v8025
    %v8027 = vrot.slane %v7994, %v8026
    %v8292 = vunpack.c.l.b16 %v7738
    %v8293 = vunpack.c.h.b16 %v7738
    %v8294 = vunpack.c.l.b16 %v7739
    %v8295 = vunpack.c.h.b16 %v7739
    %v8296 = vunpack.c.l.b16 %v7740
    %v8297 = vunpack.c.h.b16 %v7740
    %v8298 = vunpack.c.l.b16 %v7741
    %v8299 = vunpack.c.h.b16 %v7741
    %v8300 = vunpack.c.l.b16 %v7742
    %v8301 = vunpack.c.h.b16 %v7742
    %v8302 = vunpack.c.l.b16 %v7743
    %v8303 = vunpack.c.h.b16 %v7743
    %v8304 = vunpack.c.l.b16 %v7744
    %v8305 = vunpack.c.h.b16 %v7744
    %v8306 = vunpack.c.l.b16 %v7745
    %v8307 = vunpack.c.h.b16 %v7745
    %v8308 = vunpack.c.l.b16 %v7746
    %v8309 = vunpack.c.h.b16 %v7746
    %v8310 = vunpack.c.l.b16 %v7747
    %v8311 = vunpack.c.h.b16 %v7747
    %v8312 = vunpack.c.l.b16 %v7748
    %v8313 = vunpack.c.h.b16 %v7748
    %v8314 = vunpack.c.l.b16 %v7749
    %v8315 = vunpack.c.h.b16 %v7749
    %v8316 = vunpack.c.l.b16 %v7750
    %v8317 = vunpack.c.h.b16 %v7750
    %v8318 = vunpack.c.l.b16 %v7751
    %v8319 = vunpack.c.h.b16 %v7751
    %v8320 = vunpack.c.l.b16 %v7752
    %v8321 = vunpack.c.h.b16 %v7752
    %v8322 = vunpack.c.l.b16 %v7753
    %v8323 = vunpack.c.h.b16 %v7753
    %v8324 = vunpack.c.l.b16 %v7754
    %v8325 = vunpack.c.h.b16 %v7754
    %v8326 = vunpack.c.l.b16 %v7755
    %v8327 = vunpack.c.h.b16 %v7755
    %v8328 = vunpack.c.l.b16 %v7756
    %v8329 = vunpack.c.h.b16 %v7756
    %v8330 = vunpack.c.l.b16 %v7757
    %v8331 = vunpack.c.h.b16 %v7757
    %v8332 = vunpack.c.l.b16 %v7758
    %v8333 = vunpack.c.h.b16 %v7758
    %v8334 = vunpack.c.l.b16 %v7759
    %v8335 = vunpack.c.h.b16 %v7759
    %v8336 = vunpack.c.l.b16 %v7760
    %v8337 = vunpack.c.h.b16 %v7760
    %v8338 = vunpack.c.l.b16 %v7761
    %v8339 = vunpack.c.h.b16 %v7761
    %v8340 = vunpack.c.l.b16 %v7762
    %v8341 = vunpack.c.h.b16 %v7762
    %v8342 = vunpack.c.l.b16 %v7763
    %v8343 = vunpack.c.h.b16 %v7763
    %v8344 = vunpack.c.l.b16 %v7764
    %v8345 = vunpack.c.h.b16 %v7764
    %v8346 = vunpack.c.l.b16 %v7765
    %v8347 = vunpack.c.h.b16 %v7765
    %v8348 = vunpack.c.l.b16 %v7766
    %v8349 = vunpack.c.h.b16 %v7766
    %v8350 = vunpack.c.l.b16 %v7767
    %v8351 = vunpack.c.h.b16 %v7767
    %v8352 = vunpack.c.l.b16 %v7768
    %v8353 = vunpack.c.h.b16 %v7768
    %v8354 = vunpack.c.l.b16 %v7769
    %v8355 = vunpack.c.h.b16 %v7769
    %v8356 = vunpack.c.l.b16 %v7770
    %v8357 = vunpack.c.h.b16 %v7770
    %v8358 = vunpack.c.l.b16 %v7771
    %v8359 = vunpack.c.h.b16 %v7771
    %v8360 = vunpack.c.l.b16 %v7772
    %v8361 = vunpack.c.h.b16 %v7772
    %v8362 = vunpack.c.l.b16 %v7773
    %v8363 = vunpack.c.h.b16 %v7773
    %v8364 = vunpack.c.l.b16 %v7774
    %v8365 = vunpack.c.h.b16 %v7774
    %v8366 = vunpack.c.l.b16 %v7775
    %v8367 = vunpack.c.h.b16 %v7775
    %v8368 = vunpack.c.l.b16 %v7776
    %v8369 = vunpack.c.h.b16 %v7776
    %v8370 = vunpack.c.l.b16 %v7777
    %v8371 = vunpack.c.h.b16 %v7777
    %v8372 = vunpack.c.l.b16 %v7778
    %v8373 = vunpack.c.h.b16 %v7778
    %v8374 = vunpack.c.l.b16 %v7779
    %v8375 = vunpack.c.h.b16 %v7779
    %v8376 = vunpack.c.l.b16 %v7780
    %v8377 = vunpack.c.h.b16 %v7780
    %v8378 = vunpack.c.l.b16 %v7781
    %v8379 = vunpack.c.h.b16 %v7781
    %v8380 = vunpack.c.l.b16 %v7782
    %v8381 = vunpack.c.h.b16 %v7782
    %v8382 = vunpack.c.l.b16 %v7783
    %v8383 = vunpack.c.h.b16 %v7783
    %v8384 = vunpack.c.l.b16 %v7784
    %v8385 = vunpack.c.h.b16 %v7784
    %v8386 = vunpack.c.l.b16 %v7785
    %v8387 = vunpack.c.h.b16 %v7785
    %v8388 = vunpack.c.l.b16 %v7786
    %v8389 = vunpack.c.h.b16 %v7786
    %v8390 = vunpack.c.l.b16 %v7787
    %v8391 = vunpack.c.h.b16 %v7787
    %v8392 = vunpack.c.l.b16 %v7788
    %v8393 = vunpack.c.h.b16 %v7788
    %v8394 = vunpack.c.l.b16 %v7789
    %v8395 = vunpack.c.h.b16 %v7789
    %v8396 = vunpack.c.l.b16 %v7790
    %v8397 = vunpack.c.h.b16 %v7790
    %v8398 = vunpack.c.l.b16 %v7791
    %v8399 = vunpack.c.h.b16 %v7791
    %v8400 = vunpack.c.l.b16 %v7792
    %v8401 = vunpack.c.h.b16 %v7792
    %v8402 = vunpack.c.l.b16 %v7793
    %v8403 = vunpack.c.h.b16 %v7793
    %v8404 = vunpack.c.l.b16 %v7794
    %v8405 = vunpack.c.h.b16 %v7794
    %v8406 = vunpack.c.l.b16 %v7795
    %v8407 = vunpack.c.h.b16 %v7795
    %v8408 = vunpack.c.l.b16 %v7796
    %v8409 = vunpack.c.h.b16 %v7796
    %v8410 = vunpack.c.l.b16 %v7797
    %v8411 = vunpack.c.h.b16 %v7797
    %v8412 = vunpack.c.l.b16 %v7798
    %v8413 = vunpack.c.h.b16 %v7798
    %v8414 = vunpack.c.l.b16 %v7799
    %v8415 = vunpack.c.h.b16 %v7799
    %v8416 = vunpack.c.l.b16 %v7800
    %v8417 = vunpack.c.h.b16 %v7800
    %v8418 = vunpack.c.l.b16 %v7801
    %v8419 = vunpack.c.h.b16 %v7801
    %v8420 = vunpack.c.l.b16 %v7802
    %v8421 = vunpack.c.h.b16 %v7802
    %v8422 = vunpack.c.l.b16 %v7803
    %v8423 = vunpack.c.h.b16 %v7803
    %v8424 = vunpack.c.l.b16 %v7804
    %v8425 = vunpack.c.h.b16 %v7804
    %v8426 = vunpack.c.l.b16 %v7805
    %v8427 = vunpack.c.h.b16 %v7805
    %v8428 = vunpack.c.l.b16 %v7806
    %v8429 = vunpack.c.h.b16 %v7806
    %v8430 = vunpack.c.l.b16 %v7807
    %v8431 = vunpack.c.h.b16 %v7807
    %v8432 = vunpack.c.l.b16 %v7808
    %v8433 = vunpack.c.h.b16 %v7808
    %v8434 = vunpack.c.l.b16 %v7809
    %v8435 = vunpack.c.h.b16 %v7809
    %v8436 = vunpack.c.l.b16 %v7810
    %v8437 = vunpack.c.h.b16 %v7810
    %v8438 = vunpack.c.l.b16 %v7811
    %v8439 = vunpack.c.h.b16 %v7811
    %v8440 = vunpack.c.l.b16 %v7812
    %v8441 = vunpack.c.h.b16 %v7812
    %v8442 = vunpack.c.l.b16 %v7813
    %v8443 = vunpack.c.h.b16 %v7813
    %v8444 = vunpack.c.l.b16 %v7814
    %v8445 = vunpack.c.h.b16 %v7814
    %v8446 = vunpack.c.l.b16 %v7815
    %v8447 = vunpack.c.h.b16 %v7815
    %v8448 = vunpack.c.l.b16 %v7816
    %v8449 = vunpack.c.h.b16 %v7816
    %v8450 = vunpack.c.l.b16 %v7817
    %v8451 = vunpack.c.h.b16 %v7817
    %v8452 = vunpack.c.l.b16 %v7818
    %v8453 = vunpack.c.h.b16 %v7818
    %v8454 = vunpack.c.l.b16 %v7819
    %v8455 = vunpack.c.h.b16 %v7819
    %v8456 = vunpack.c.l.b16 %v7820
    %v8457 = vunpack.c.h.b16 %v7820
    %v8458 = vunpack.c.l.b16 %v7821
    %v8459 = vunpack.c.h.b16 %v7821
    %v8460 = vunpack.c.l.b16 %v7822
    %v8461 = vunpack.c.h.b16 %v7822
    %v8462 = vunpack.c.l.b16 %v7823
    %v8463 = vunpack.c.h.b16 %v7823
    %v8464 = vunpack.c.l.b16 %v7824
    %v8465 = vunpack.c.h.b16 %v7824
    %v8466 = vunpack.c.l.b16 %v7825
    %v8467 = vunpack.c.h.b16 %v7825
    %v8468 = vunpack.c.l.b16 %v7826
    %v8469 = vunpack.c.h.b16 %v7826
    %v8470 = vunpack.c.l.b16 %v7827
    %v8471 = vunpack.c.h.b16 %v7827
    %v8472 = vunpack.c.l.b16 %v7828
    %v8473 = vunpack.c.h.b16 %v7828
    %v8474 = vunpack.c.l.b16 %v7829
    %v8475 = vunpack.c.h.b16 %v7829
    %v8476 = vunpack.c.l.b16 %v7830
    %v8477 = vunpack.c.h.b16 %v7830
    %v8478 = vunpack.c.l.b16 %v7831
    %v8479 = vunpack.c.h.b16 %v7831
    %v8480 = vunpack.c.l.b16 %v7832
    %v8481 = vunpack.c.h.b16 %v7832
    %v8482 = vunpack.c.l.b16 %v7833
    %v8483 = vunpack.c.h.b16 %v7833
    %v8484 = vunpack.c.l.b16 %v7834
    %v8485 = vunpack.c.h.b16 %v7834
    %v8486 = vunpack.c.l.b16 %v7835
    %v8487 = vunpack.c.h.b16 %v7835
    %v8488 = vunpack.c.l.b16 %v7836
    %v8489 = vunpack.c.h.b16 %v7836
    %v8490 = vunpack.c.l.b16 %v7837
    %v8491 = vunpack.c.h.b16 %v7837
    %v8492 = vunpack.c.l.b16 %v7838
    %v8493 = vunpack.c.h.b16 %v7838
    %v8494 = vunpack.c.l.b16 %v7839
    %v8495 = vunpack.c.h.b16 %v7839
    %v8496 = vunpack.c.l.b16 %v7840
    %v8497 = vunpack.c.h.b16 %v7840
    %v8498 = vunpack.c.l.b16 %v7841
    %v8499 = vunpack.c.h.b16 %v7841
    %v8500 = vunpack.c.l.b16 %v7842
    %v8501 = vunpack.c.h.b16 %v7842
    %v8502 = vunpack.c.l.b16 %v7843
    %v8503 = vunpack.c.h.b16 %v7843
    %v8504 = vunpack.c.l.b16 %v7844
    %v8505 = vunpack.c.h.b16 %v7844
    %v8506 = vunpack.c.l.b16 %v7845
    %v8507 = vunpack.c.h.b16 %v7845
    %v8508 = vunpack.c.l.b16 %v7846
    %v8509 = vunpack.c.h.b16 %v7846
    %v8510 = vunpack.c.l.b16 %v7847
    %v8511 = vunpack.c.h.b16 %v7847
    %v8512 = vunpack.c.l.b16 %v7848
    %v8513 = vunpack.c.h.b16 %v7848
    %v8514 = vunpack.c.l.b16 %v7849
    %v8515 = vunpack.c.h.b16 %v7849
    %v8516 = vunpack.c.l.b16 %v7850
    %v8517 = vunpack.c.h.b16 %v7850
    %v8518 = vunpack.c.l.b16 %v7851
    %v8519 = vunpack.c.h.b16 %v7851
    %v8520 = vunpack.c.l.b16 %v7852
    %v8521 = vunpack.c.h.b16 %v7852
    %v8522 = vunpack.c.l.b16 %v7853
    %v8523 = vunpack.c.h.b16 %v7853
    %v8524 = vunpack.c.l.b16 %v7854
    %v8525 = vunpack.c.h.b16 %v7854
    %v8526 = vunpack.c.l.b16 %v7855
    %v8527 = vunpack.c.h.b16 %v7855
    %v8528 = vunpack.c.l.b16 %v7856
    %v8529 = vunpack.c.h.b16 %v7856
    %v8530 = vunpack.c.l.b16 %v7857
    %v8531 = vunpack.c.h.b16 %v7857
    %v8532 = vunpack.c.l.b16 %v7858
    %v8533 = vunpack.c.h.b16 %v7858
    %v8534 = vunpack.c.l.b16 %v7859
    %v8535 = vunpack.c.h.b16 %v7859
    %v8536 = vunpack.c.l.b16 %v7860
    %v8537 = vunpack.c.h.b16 %v7860
    %v8538 = vunpack.c.l.b16 %v7861
    %v8539 = vunpack.c.h.b16 %v7861
    %v8540 = vunpack.c.l.b16 %v7862
    %v8541 = vunpack.c.h.b16 %v7862
    %v8542 = vunpack.c.l.b16 %v7863
    %v8543 = vunpack.c.h.b16 %v7863
    %v8544 = vunpack.c.l.b16 %v7864
    %v8545 = vunpack.c.h.b16 %v7864
    %v8546 = vunpack.c.l.b16 %v7865
    %v8547 = vunpack.c.h.b16 %v7865
    %v8548 = vunpack.c.l.b16 %v7866
    %v8549 = vunpack.c.h.b16 %v7866
    %v8550 = vunpack.c.l.b16 %v7867
    %v8551 = vunpack.c.h.b16 %v7867
    %v8552 = vunpack.c.l.b16 %v7868
    %v8553 = vunpack.c.h.b16 %v7868
    %v8554 = vunpack.c.l.b16 %v7869
    %v8555 = vunpack.c.h.b16 %v7869
    %v8556 = vunpack.c.l.b16 %v7870
    %v8557 = vunpack.c.h.b16 %v7870
    %v8558 = vunpack.c.l.b16 %v7871
    %v8559 = vunpack.c.h.b16 %v7871
    %v8560 = vunpack.c.l.b16 %v7872
    %v8561 = vunpack.c.h.b16 %v7872
    %v8562 = vunpack.c.l.b16 %v7873
    %v8563 = vunpack.c.h.b16 %v7873
    %v8564 = vunpack.c.l.b16 %v7874
    %v8565 = vunpack.c.h.b16 %v7874
    %v8566 = vunpack.c.l.b16 %v7875
    %v8567 = vunpack.c.h.b16 %v7875
    %v8568 = vunpack.c.l.b16 %v7876
    %v8569 = vunpack.c.h.b16 %v7876
    %v8570 = vunpack.c.l.b16 %v7877
    %v8571 = vunpack.c.h.b16 %v7877
    %v8572 = vunpack.c.l.b16 %v7878
    %v8573 = vunpack.c.h.b16 %v7878
    %v8574 = vunpack.c.l.b16 %v7879
    %v8575 = vunpack.c.h.b16 %v7879
    %v8576 = vunpack.c.l.b16 %v7880
    %v8577 = vunpack.c.h.b16 %v7880
    %v8578 = vunpack.c.l.b16 %v7881
    %v8579 = vunpack.c.h.b16 %v7881
    %v8580 = vunpack.c.l.b16 %v7882
    %v8581 = vunpack.c.h.b16 %v7882
    %v8582 = vunpack.c.l.b16 %v7883
    %v8583 = vunpack.c.h.b16 %v7883
    %v8584 = vunpack.c.l.b16 %v7884
    %v8585 = vunpack.c.h.b16 %v7884
    %v8586 = vunpack.c.l.b16 %v7885
    %v8587 = vunpack.c.h.b16 %v7885
    %v8588 = vunpack.c.l.b16 %v7886
    %v8589 = vunpack.c.h.b16 %v7886
    %v8590 = vunpack.c.l.b16 %v7887
    %v8591 = vunpack.c.h.b16 %v7887
    %v8592 = vunpack.c.l.b16 %v7888
    %v8593 = vunpack.c.h.b16 %v7888
    %v8594 = vunpack.c.l.b16 %v7889
    %v8595 = vunpack.c.h.b16 %v7889
    %v8596 = vunpack.c.l.b16 %v7890
    %v8597 = vunpack.c.h.b16 %v7890
    %v8598 = vunpack.c.l.b16 %v7891
    %v8599 = vunpack.c.h.b16 %v7891
    %v8600 = vunpack.c.l.b16 %v7892
    %v8601 = vunpack.c.h.b16 %v7892
    %v8602 = vunpack.c.l.b16 %v7893
    %v8603 = vunpack.c.h.b16 %v7893
    %v8604 = vunpack.c.l.b16 %v7894
    %v8605 = vunpack.c.h.b16 %v7894
    %v8606 = vunpack.c.l.b16 %v7895
    %v8607 = vunpack.c.h.b16 %v7895
    %v8608 = vunpack.c.l.b16 %v7896
    %v8609 = vunpack.c.h.b16 %v7896
    %v8610 = vunpack.c.l.b16 %v7897
    %v8611 = vunpack.c.h.b16 %v7897
    %v8612 = vunpack.c.l.b16 %v7898
    %v8613 = vunpack.c.h.b16 %v7898
    %v8614 = vunpack.c.l.b16 %v7899
    %v8615 = vunpack.c.h.b16 %v7899
    %v8616 = vunpack.c.l.b16 %v7900
    %v8617 = vunpack.c.h.b16 %v7900
    %v8618 = vunpack.c.l.b16 %v7901
    %v8619 = vunpack.c.h.b16 %v7901
    %v8620 = vunpack.c.l.b16 %v7902
    %v8621 = vunpack.c.h.b16 %v7902
    %v8622 = vunpack.c.l.b16 %v7903
    %v8623 = vunpack.c.h.b16 %v7903
    %v8624 = vunpack.c.l.b16 %v7904
    %v8625 = vunpack.c.h.b16 %v7904
    %v8626 = vunpack.c.l.b16 %v7905
    %v8627 = vunpack.c.h.b16 %v7905
    %v8628 = vunpack.c.l.b16 %v7906
    %v8629 = vunpack.c.h.b16 %v7906
    %v8630 = vunpack.c.l.b16 %v7907
    %v8631 = vunpack.c.h.b16 %v7907
    %v8632 = vunpack.c.l.b16 %v7908
    %v8633 = vunpack.c.h.b16 %v7908
    %v8634 = vunpack.c.l.b16 %v7909
    %v8635 = vunpack.c.h.b16 %v7909
    %v8636 = vunpack.c.l.b16 %v7910
    %v8637 = vunpack.c.h.b16 %v7910
    %v8638 = vunpack.c.l.b16 %v7911
    %v8639 = vunpack.c.h.b16 %v7911
    %v8640 = vunpack.c.l.b16 %v7912
    %v8641 = vunpack.c.h.b16 %v7912
    %v8642 = vunpack.c.l.b16 %v7913
    %v8643 = vunpack.c.h.b16 %v7913
    %v8644 = vunpack.c.l.b16 %v7914
    %v8645 = vunpack.c.h.b16 %v7914
    %v8646 = vunpack.c.l.b16 %v7915
    %v8647 = vunpack.c.h.b16 %v7915
    %v8648 = vunpack.c.l.b16 %v7916
    %v8649 = vunpack.c.h.b16 %v7916
    %v8650 = vunpack.c.l.b16 %v7917
    %v8651 = vunpack.c.h.b16 %v7917
    %v8652 = vunpack.c.l.b16 %v7918
    %v8653 = vunpack.c.h.b16 %v7918
    %v8654 = vunpack.c.l.b16 %v7919
    %v8655 = vunpack.c.h.b16 %v7919
    %v8656 = vunpack.c.l.b16 %v7920
    %v8657 = vunpack.c.h.b16 %v7920
    %v8658 = vunpack.c.l.b16 %v7921
    %v8659 = vunpack.c.h.b16 %v7921
    %v8660 = vunpack.c.l.b16 %v7922
    %v8661 = vunpack.c.h.b16 %v7922
    %v8662 = vunpack.c.l.b16 %v7923
    %v8663 = vunpack.c.h.b16 %v7923
    %v8664 = vunpack.c.l.b16 %v7924
    %v8665 = vunpack.c.h.b16 %v7924
    %v8666 = vunpack.c.l.b16 %v7925
    %v8667 = vunpack.c.h.b16 %v7925
    %v8668 = vunpack.c.l.b16 %v7926
    %v8669 = vunpack.c.h.b16 %v7926
    %v8670 = vunpack.c.l.b16 %v7927
    %v8671 = vunpack.c.h.b16 %v7927
    %v8672 = vunpack.c.l.b16 %v7928
    %v8673 = vunpack.c.h.b16 %v7928
    %v8674 = vunpack.c.l.b16 %v7929
    %v8675 = vunpack.c.h.b16 %v7929
    %v8676 = vunpack.c.l.b16 %v7930
    %v8677 = vunpack.c.h.b16 %v7930
    %v8678 = vunpack.c.l.b16 %v7931
    %v8679 = vunpack.c.h.b16 %v7931
    %v8680 = vunpack.c.l.b16 %v7932
    %v8681 = vunpack.c.h.b16 %v7932
    %v8682 = vunpack.c.l.b16 %v7933
    %v8683 = vunpack.c.h.b16 %v7933
    %v8684 = vunpack.c.l.b16 %v7934
    %v8685 = vunpack.c.h.b16 %v7934
    %v8686 = vunpack.c.l.b16 %v7935
    %v8687 = vunpack.c.h.b16 %v7935
    %v8688 = vunpack.c.l.b16 %v7936
    %v8689 = vunpack.c.h.b16 %v7936
    %v8690 = vunpack.c.l.b16 %v7937
    %v8691 = vunpack.c.h.b16 %v7937
    %v8692 = vunpack.c.l.b16 %v7938
    %v8693 = vunpack.c.h.b16 %v7938
    %v8694 = vunpack.c.l.b16 %v7939
    %v8695 = vunpack.c.h.b16 %v7939
    %v8696 = vunpack.c.l.b16 %v7940
    %v8697 = vunpack.c.h.b16 %v7940
    %v8698 = vunpack.c.l.b16 %v7941
    %v8699 = vunpack.c.h.b16 %v7941
    %v8700 = vunpack.c.l.b16 %v7942
    %v8701 = vunpack.c.h.b16 %v7942
    %v8702 = vunpack.c.l.b16 %v7943
    %v8703 = vunpack.c.h.b16 %v7943
    %v8704 = vunpack.c.l.b16 %v7944
    %v8705 = vunpack.c.h.b16 %v7944
    %v8706 = vunpack.c.l.b16 %v7945
    %v8707 = vunpack.c.h.b16 %v7945
    %v8708 = vunpack.c.l.b16 %v7946
    %v8709 = vunpack.c.h.b16 %v7946
    %v8710 = vunpack.c.l.b16 %v7947
    %v8711 = vunpack.c.h.b16 %v7947
    %v8712 = vunpack.c.l.b16 %v7948
    %v8713 = vunpack.c.h.b16 %v7948
    %v8714 = vunpack.c.l.b16 %v7949
    %v8715 = vunpack.c.h.b16 %v7949
    %v8716 = vunpack.c.l.b16 %v7950
    %v8717 = vunpack.c.h.b16 %v7950
    %v8718 = vunpack.c.l.b16 %v7951
    %v8719 = vunpack.c.h.b16 %v7951
    %v8720 = vunpack.c.l.b16 %v7952
    %v8721 = vunpack.c.h.b16 %v7952
    %v8722 = vunpack.c.l.b16 %v7953
    %v8723 = vunpack.c.h.b16 %v7953
    %v8724 = vunpack.c.l.b16 %v7954
    %v8725 = vunpack.c.h.b16 %v7954
    %v8726 = vunpack.c.l.b16 %v7955
    %v8727 = vunpack.c.h.b16 %v7955
    %v8728 = vunpack.c.l.b16 %v7956
    %v8729 = vunpack.c.h.b16 %v7956
    %v8730 = vunpack.c.l.b16 %v7957
    %v8731 = vunpack.c.h.b16 %v7957
    %v8732 = vunpack.c.l.b16 %v7958
    %v8733 = vunpack.c.h.b16 %v7958
    %v8734 = vunpack.c.l.b16 %v7959
    %v8735 = vunpack.c.h.b16 %v7959
    %v8736 = vunpack.c.l.b16 %v7960
    %v8737 = vunpack.c.h.b16 %v7960
    %v8738 = vunpack.c.l.b16 %v7961
    %v8739 = vunpack.c.h.b16 %v7961
    %v8740 = vunpack.c.l.b16 %v7962
    %v8741 = vunpack.c.h.b16 %v7962
    %v8742 = vunpack.c.l.b16 %v7963
    %v8743 = vunpack.c.h.b16 %v7963
    %v8744 = vunpack.c.l.b16 %v7964
    %v8745 = vunpack.c.h.b16 %v7964
    %v8746 = vunpack.c.l.b16 %v7965
    %v8747 = vunpack.c.h.b16 %v7965
    %v8748 = vunpack.c.l.b16 %v7966
    %v8749 = vunpack.c.h.b16 %v7966
    %v8750 = vunpack.c.l.b16 %v7967
    %v8751 = vunpack.c.h.b16 %v7967
    %v8752 = vunpack.c.l.b16 %v7968
    %v8753 = vunpack.c.h.b16 %v7968
    %v8754 = vunpack.c.l.b16 %v7969
    %v8755 = vunpack.c.h.b16 %v7969
    %v8756 = vunpack.c.l.b16 %v7970
    %v8757 = vunpack.c.h.b16 %v7970
    %v8758 = vunpack.c.l.b16 %v7971
    %v8759 = vunpack.c.h.b16 %v7971
    %v8760 = vunpack.c.l.b16 %v7972
    %v8761 = vunpack.c.h.b16 %v7972
    %v8762 = vunpack.c.l.b16 %v7973
    %v8763 = vunpack.c.h.b16 %v7973
    %v8764 = vunpack.c.l.b16 %v7974
    %v8765 = vunpack.c.h.b16 %v7974
    %v8766 = vunpack.c.l.b16 %v7975
    %v8767 = vunpack.c.h.b16 %v7975
    %v8768 = vunpack.c.l.b16 %v7976
    %v8769 = vunpack.c.h.b16 %v7976
    %v8770 = vunpack.c.l.b16 %v7977
    %v8771 = vunpack.c.h.b16 %v7977
    %v8772 = vunpack.c.l.b16 %v7978
    %v8773 = vunpack.c.h.b16 %v7978
    %v8774 = vunpack.c.l.b16 %v7979
    %v8775 = vunpack.c.h.b16 %v7979
    %v8776 = vunpack.c.l.b16 %v7980
    %v8777 = vunpack.c.h.b16 %v7980
    %v8778 = vunpack.c.l.b16 %v7981
    %v8779 = vunpack.c.h.b16 %v7981
    %v8780 = vunpack.c.l.b16 %v7982
    %v8781 = vunpack.c.h.b16 %v7982
    %v8782 = vunpack.c.l.b16 %v7983
    %v8783 = vunpack.c.h.b16 %v7983
    %v8784 = vunpack.c.l.b16 %v7984
    %v8785 = vunpack.c.h.b16 %v7984
    %v8786 = vunpack.c.l.b16 %v7985
    %v8787 = vunpack.c.h.b16 %v7985
    %v8788 = vunpack.c.l.b16 %v7986
    %v8789 = vunpack.c.h.b16 %v7986
    %v8790 = vunpack.c.l.b16 %v7987
    %v8791 = vunpack.c.h.b16 %v7987
    %v8792 = vunpack.c.l.b16 %v7988
    %v8793 = vunpack.c.h.b16 %v7988
    %v8794 = vunpack.c.l.b16 %v7989
    %v8795 = vunpack.c.h.b16 %v7989
    %v8796 = vunpack.c.l.b16 %v7990
    %v8797 = vunpack.c.h.b16 %v7990
    %v8798 = vunpack.c.l.b16 %v7991
    %v8799 = vunpack.c.h.b16 %v7991
    %v8800 = vunpack.c.l.b16 %v7992
    %v8801 = vunpack.c.h.b16 %v7992
    %v8802 = vunpack.c.l.b16 %v7993
    %v8803 = vunpack.c.h.b16 %v7993
    %v8804 = vpack.c.b16 %v8300, %v8292
    %v8805 = vpack.c.b16 %v8301, %v8293
    %v8806 = vpack.c.b16 %v8302, %v8294
    %v8807 = vpack.c.b16 %v8303, %v8295
    %v8808 = vpack.c.b16 %v8304, %v8296
    %v8809 = vpack.c.b16 %v8305, %v8297
    %v8810 = vpack.c.b16 %v8306, %v8298
    %v8811 = vpack.c.b16 %v8307, %v8299
    %v8812 = vpack.c.b16 %v8316, %v8308
    %v8813 = vpack.c.b16 %v8317, %v8309
    %v8814 = vpack.c.b16 %v8318, %v8310
    %v8815 = vpack.c.b16 %v8319, %v8311
    %v8816 = vpack.c.b16 %v8320, %v8312
    %v8817 = vpack.c.b16 %v8321, %v8313
    %v8818 = vpack.c.b16 %v8322, %v8314
    %v8819 = vpack.c.b16 %v8323, %v8315
    %v8820 = vpack.c.b16 %v8332, %v8324
    %v8821 = vpack.c.b16 %v8333, %v8325
    %v8822 = vpack.c.b16 %v8334, %v8326
    %v8823 = vpack.c.b16 %v8335, %v8327
    %v8824 = vpack.c.b16 %v8336, %v8328
    %v8825 = vpack.c.b16 %v8337, %v8329
    %v8826 = vpack.c.b16 %v8338, %v8330
    %v8827 = vpack.c.b16 %v8339, %v8331
    %v8828 = vpack.c.b16 %v8348, %v8340
    %v8829 = vpack.c.b16 %v8349, %v8341
    %v8830 = vpack.c.b16 %v8350, %v8342
    %v8831 = vpack.c.b16 %v8351, %v8343
    %v8832 = vpack.c.b16 %v8352, %v8344
    %v8833 = vpack.c.b16 %v8353, %v8345
    %v8834 = vpack.c.b16 %v8354, %v8346
    %v8835 = vpack.c.b16 %v8355, %v8347
    %v8836 = vpack.c.b16 %v8364, %v8356
    %v8837 = vpack.c.b16 %v8365, %v8357
    %v8838 = vpack.c.b16 %v8366, %v8358
    %v8839 = vpack.c.b16 %v8367, %v8359
    %v8840 = vpack.c.b16 %v8368, %v8360
    %v8841 = vpack.c.b16 %v8369, %v8361
    %v8842 = vpack.c.b16 %v8370, %v8362
    %v8843 = vpack.c.b16 %v8371, %v8363
    %v8844 = vpack.c.b16 %v8380, %v8372
    %v8845 = vpack.c.b16 %v8381, %v8373
    %v8846 = vpack.c.b16 %v8382, %v8374
    %v8847 = vpack.c.b16 %v8383, %v8375
    %v8848 = vpack.c.b16 %v8384, %v8376
    %v8849 = vpack.c.b16 %v8385, %v8377
    %v8850 = vpack.c.b16 %v8386, %v8378
    %v8851 = vpack.c.b16 %v8387, %v8379
    %v8852 = vpack.c.b16 %v8396, %v8388
    %v8853 = vpack.c.b16 %v8397, %v8389
    %v8854 = vpack.c.b16 %v8398, %v8390
    %v8855 = vpack.c.b16 %v8399, %v8391
    %v8856 = vpack.c.b16 %v8400, %v8392
    %v8857 = vpack.c.b16 %v8401, %v8393
    %v8858 = vpack.c.b16 %v8402, %v8394
    %v8859 = vpack.c.b16 %v8403, %v8395
    %v8860 = vpack.c.b16 %v8412, %v8404
    %v8861 = vpack.c.b16 %v8413, %v8405
    %v8862 = vpack.c.b16 %v8414, %v8406
    %v8863 = vpack.c.b16 %v8415, %v8407
    %v8864 = vpack.c.b16 %v8416, %v8408
    %v8865 = vpack.c.b16 %v8417, %v8409
    %v8866 = vpack.c.b16 %v8418, %v8410
    %v8867 = vpack.c.b16 %v8419, %v8411
    %v8868 = vpack.c.b16 %v8428, %v8420
    %v8869 = vpack.c.b16 %v8429, %v8421
    %v8870 = vpack.c.b16 %v8430, %v8422
    %v8871 = vpack.c.b16 %v8431, %v8423
    %v8872 = vpack.c.b16 %v8432, %v8424
    %v8873 = vpack.c.b16 %v8433, %v8425
    %v8874 = vpack.c.b16 %v8434, %v8426
    %v8875 = vpack.c.b16 %v8435, %v8427
    %v8876 = vpack.c.b16 %v8444, %v8436
    %v8877 = vpack.c.b16 %v8445, %v8437
    %v8878 = vpack.c.b16 %v8446, %v8438
    %v8879 = vpack.c.b16 %v8447, %v8439
    %v8880 = vpack.c.b16 %v8448, %v8440
    %v8881 = vpack.c.b16 %v8449, %v8441
    %v8882 = vpack.c.b16 %v8450, %v8442
    %v8883 = vpack.c.b16 %v8451, %v8443
    %v8884 = vpack.c.b16 %v8460, %v8452
    %v8885 = vpack.c.b16 %v8461, %v8453
    %v8886 = vpack.c.b16 %v8462, %v8454
    %v8887 = vpack.c.b16 %v8463, %v8455
    %v8888 = vpack.c.b16 %v8464, %v8456
    %v8889 = vpack.c.b16 %v8465, %v8457
    %v8890 = vpack.c.b16 %v8466, %v8458
    %v8891 = vpack.c.b16 %v8467, %v8459
    %v8892 = vpack.c.b16 %v8476, %v8468
    %v8893 = vpack.c.b16 %v8477, %v8469
    %v8894 = vpack.c.b16 %v8478, %v8470
    %v8895 = vpack.c.b16 %v8479, %v8471
    %v8896 = vpack.c.b16 %v8480, %v8472
    %v8897 = vpack.c.b16 %v8481, %v8473
    %v8898 = vpack.c.b16 %v8482, %v8474
    %v8899 = vpack.c.b16 %v8483, %v8475
    %v8900 = vpack.c.b16 %v8492, %v8484
    %v8901 = vpack.c.b16 %v8493, %v8485
    %v8902 = vpack.c.b16 %v8494, %v8486
    %v8903 = vpack.c.b16 %v8495, %v8487
    %v8904 = vpack.c.b16 %v8496, %v8488
    %v8905 = vpack.c.b16 %v8497, %v8489
    %v8906 = vpack.c.b16 %v8498, %v8490
    %v8907 = vpack.c.b16 %v8499, %v8491
    %v8908 = vpack.c.b16 %v8508, %v8500
    %v8909 = vpack.c.b16 %v8509, %v8501
    %v8910 = vpack.c.b16 %v8510, %v8502
    %v8911 = vpack.c.b16 %v8511, %v8503
    %v8912 = vpack.c.b16 %v8512, %v8504
    %v8913 = vpack.c.b16 %v8513, %v8505
    %v8914 = vpack.c.b16 %v8514, %v8506
    %v8915 = vpack.c.b16 %v8515, %v8507
    %v8916 = vpack.c.b16 %v8524, %v8516
    %v8917 = vpack.c.b16 %v8525, %v8517
    %v8918 = vpack.c.b16 %v8526, %v8518
    %v8919 = vpack.c.b16 %v8527, %v8519
    %v8920 = vpack.c.b16 %v8528, %v8520
    %v8921 = vpack.c.b16 %v8529, %v8521
    %v8922 = vpack.c.b16 %v8530, %v8522
    %v8923 = vpack.c.b16 %v8531, %v8523
    %v8924 = vpack.c.b16 %v8540, %v8532
    %v8925 = vpack.c.b16 %v8541, %v8533
    %v8926 = vpack.c.b16 %v8542, %v8534
    %v8927 = vpack.c.b16 %v8543, %v8535
    %v8928 = vpack.c.b16 %v8544, %v8536
    %v8929 = vpack.c.b16 %v8545, %v8537
    %v8930 = vpack.c.b16 %v8546, %v8538
    %v8931 = vpack.c.b16 %v8547, %v8539
    %v8932 = vpack.c.b16 %v8556, %v8548
    %v8933 = vpack.c.b16 %v8557, %v8549
    %v8934 = vpack.c.b16 %v8558, %v8550
    %v8935 = vpack.c.b16 %v8559, %v8551
    %v8936 = vpack.c.b16 %v8560, %v8552
    %v8937 = vpack.c.b16 %v8561, %v8553
    %v8938 = vpack.c.b16 %v8562, %v8554
    %v8939 = vpack.c.b16 %v8563, %v8555
    %v8940 = vpack.c.b16 %v8572, %v8564
    %v8941 = vpack.c.b16 %v8573, %v8565
    %v8942 = vpack.c.b16 %v8574, %v8566
    %v8943 = vpack.c.b16 %v8575, %v8567
    %v8944 = vpack.c.b16 %v8576, %v8568
    %v8945 = vpack.c.b16 %v8577, %v8569
    %v8946 = vpack.c.b16 %v8578, %v8570
    %v8947 = vpack.c.b16 %v8579, %v8571
    %v8948 = vpack.c.b16 %v8588, %v8580
    %v8949 = vpack.c.b16 %v8589, %v8581
    %v8950 = vpack.c.b16 %v8590, %v8582
    %v8951 = vpack.c.b16 %v8591, %v8583
    %v8952 = vpack.c.b16 %v8592, %v8584
    %v8953 = vpack.c.b16 %v8593, %v8585
    %v8954 = vpack.c.b16 %v8594, %v8586
    %v8955 = vpack.c.b16 %v8595, %v8587
    %v8956 = vpack.c.b16 %v8604, %v8596
    %v8957 = vpack.c.b16 %v8605, %v8597
    %v8958 = vpack.c.b16 %v8606, %v8598
    %v8959 = vpack.c.b16 %v8607, %v8599
    %v8960 = vpack.c.b16 %v8608, %v8600
    %v8961 = vpack.c.b16 %v8609, %v8601
    %v8962 = vpack.c.b16 %v8610, %v8602
    %v8963 = vpack.c.b16 %v8611, %v8603
    %v8964 = vpack.c.b16 %v8620, %v8612
    %v8965 = vpack.c.b16 %v8621, %v8613
    %v8966 = vpack.c.b16 %v8622, %v8614
    %v8967 = vpack.c.b16 %v8623, %v8615
    %v8968 = vpack.c.b16 %v8624, %v8616
    %v8969 = vpack.c.b16 %v8625, %v8617
    %v8970 = vpack.c.b16 %v8626, %v8618
    %v8971 = vpack.c.b16 %v8627, %v8619
    %v8972 = vpack.c.b16 %v8636, %v8628
    %v8973 = vpack.c.b16 %v8637, %v8629
    %v8974 = vpack.c.b16 %v8638, %v8630
    %v8975 = vpack.c.b16 %v8639, %v8631
    %v8976 = vpack.c.b16 %v8640, %v8632
    %v8977 = vpack.c.b16 %v8641, %v8633
    %v8978 = vpack.c.b16 %v8642, %v8634
    %v8979 = vpack.c.b16 %v8643, %v8635
    %v8980 = vpack.c.b16 %v8652, %v8644
    %v8981 = vpack.c.b16 %v8653, %v8645
    %v8982 = vpack.c.b16 %v8654, %v8646
    %v8983 = vpack.c.b16 %v8655, %v8647
    %v8984 = vpack.c.b16 %v8656, %v8648
    %v8985 = vpack.c.b16 %v8657, %v8649
    %v8986 = vpack.c.b16 %v8658, %v8650
    %v8987 = vpack.c.b16 %v8659, %v8651
    %v8988 = vpack.c.b16 %v8668, %v8660
    %v8989 = vpack.c.b16 %v8669, %v8661
    %v8990 = vpack.c.b16 %v8670, %v8662
    %v8991 = vpack.c.b16 %v8671, %v8663
    %v8992 = vpack.c.b16 %v8672, %v8664
    %v8993 = vpack.c.b16 %v8673, %v8665
    %v8994 = vpack.c.b16 %v8674, %v8666
    %v8995 = vpack.c.b16 %v8675, %v8667
    %v8996 = vpack.c.b16 %v8684, %v8676
    %v8997 = vpack.c.b16 %v8685, %v8677
    %v8998 = vpack.c.b16 %v8686, %v8678
    %v8999 = vpack.c.b16 %v8687, %v8679
    %v9000 = vpack.c.b16 %v8688, %v8680
    %v9001 = vpack.c.b16 %v8689, %v8681
    %v9002 = vpack.c.b16 %v8690, %v8682
    %v9003 = vpack.c.b16 %v8691, %v8683
    %v9004 = vpack.c.b16 %v8700, %v8692
    %v9005 = vpack.c.b16 %v8701, %v8693
    %v9006 = vpack.c.b16 %v8702, %v8694
    %v9007 = vpack.c.b16 %v8703, %v8695
    %v9008 = vpack.c.b16 %v8704, %v8696
    %v9009 = vpack.c.b16 %v8705, %v8697
    %v9010 = vpack.c.b16 %v8706, %v8698
    %v9011 = vpack.c.b16 %v8707, %v8699
    %v9012 = vpack.c.b16 %v8716, %v8708
    %v9013 = vpack.c.b16 %v8717, %v8709
    %v9014 = vpack.c.b16 %v8718, %v8710
    %v9015 = vpack.c.b16 %v8719, %v8711
    %v9016 = vpack.c.b16 %v8720, %v8712
    %v9017 = vpack.c.b16 %v8721, %v8713
    %v9018 = vpack.c.b16 %v8722, %v8714
    %v9019 = vpack.c.b16 %v8723, %v8715
    %v9020 = vpack.c.b16 %v8732, %v8724
    %v9021 = vpack.c.b16 %v8733, %v8725
    %v9022 = vpack.c.b16 %v8734, %v8726
    %v9023 = vpack.c.b16 %v8735, %v8727
    %v9024 = vpack.c.b16 %v8736, %v8728
    %v9025 = vpack.c.b16 %v8737, %v8729
    %v9026 = vpack.c.b16 %v8738, %v8730
    %v9027 = vpack.c.b16 %v8739, %v8731
    %v9028 = vpack.c.b16 %v8748, %v8740
    %v9029 = vpack.c.b16 %v8749, %v8741
    %v9030 = vpack.c.b16 %v8750, %v8742
    %v9031 = vpack.c.b16 %v8751, %v8743
    %v9032 = vpack.c.b16 %v8752, %v8744
    %v9033 = vpack.c.b16 %v8753, %v8745
    %v9034 = vpack.c.b16 %v8754, %v8746
    %v9035 = vpack.c.b16 %v8755, %v8747
    %v9036 = vpack.c.b16 %v8764, %v8756
    %v9037 = vpack.c.b16 %v8765, %v8757
    %v9038 = vpack.c.b16 %v8766, %v8758
    %v9039 = vpack.c.b16 %v8767, %v8759
    %v9040 = vpack.c.b16 %v8768, %v8760
    %v9041 = vpack.c.b16 %v8769, %v8761
    %v9042 = vpack.c.b16 %v8770, %v8762
    %v9043 = vpack.c.b16 %v8771, %v8763
    %v9044 = vpack.c.b16 %v8780, %v8772
    %v9045 = vpack.c.b16 %v8781, %v8773
    %v9046 = vpack.c.b16 %v8782, %v8774
    %v9047 = vpack.c.b16 %v8783, %v8775
    %v9048 = vpack.c.b16 %v8784, %v8776
    %v9049 = vpack.c.b16 %v8785, %v8777
    %v9050 = vpack.c.b16 %v8786, %v8778
    %v9051 = vpack.c.b16 %v8787, %v8779
    %v9052 = vpack.c.b16 %v8796, %v8788
    %v9053 = vpack.c.b16 %v8797, %v8789
    %v9054 = vpack.c.b16 %v8798, %v8790
    %v9055 = vpack.c.b16 %v8799, %v8791
    %v9056 = vpack.c.b16 %v8800, %v8792
    %v9057 = vpack.c.b16 %v8801, %v8793
    %v9058 = vpack.c.b16 %v8802, %v8794
    %v9059 = vpack.c.b16 %v8803, %v8795
    %9316 = vmatprep.subr.bf16.mxu0 %v8861
    %9317 = vmatpush1.bf16.msra.mxu0 %v8860
    %9318 = vmatprep.subr.bf16.mxu0 %v8853
    %9319 = vmatpush1.bf16.msra.mxu0 %v8852
    %9320 = vmatprep.subr.bf16.mxu0 %v8845
    %9321 = vmatpush1.bf16.msra.mxu0 %v8844
    %9322 = vmatprep.subr.bf16.mxu0 %v8837
    %9323 = vmatpush1.bf16.msra.mxu0 %v8836
    %9324 = vmatprep.subr.bf16.mxu0 %v8829
    %9325 = vmatpush1.bf16.msra.mxu0 %v8828
    %9326 = vmatprep.subr.bf16.mxu0 %v8821
    %9327 = vmatpush1.bf16.msra.mxu0 %v8820
    %9328 = vmatprep.subr.bf16.mxu0 %v8813
    %9329 = vmatpush1.bf16.msra.mxu0 %v8812
    %9330 = vmatprep.subr.bf16.mxu0 %v8805
    %9331 = vmatpush1.bf16.msra.mxu0 %v8804
    %9332 = vmatprep.subr.bf16.mxu0 %v8925
    %9333 = vmatpush2.bf16.msra.mxu0 %v8924
    %9334 = vmatprep.subr.bf16.mxu0 %v8917
    %9335 = vmatpush2.bf16.msra.mxu0 %v8916
    %9336 = vmatprep.subr.bf16.mxu0 %v8909
    %9337 = vmatpush2.bf16.msra.mxu0 %v8908
    %9338 = vmatprep.subr.bf16.mxu0 %v8901
    %9339 = vmatpush2.bf16.msra.mxu0 %v8900
    %9340 = vmatprep.subr.bf16.mxu0 %v8893
    %9341 = vmatpush2.bf16.msra.mxu0 %v8892
    %9342 = vmatprep.subr.bf16.mxu0 %v8885
    %9343 = vmatpush2.bf16.msra.mxu0 %v8884
    %9344 = vmatprep.subr.bf16.mxu0 %v8877
    %9345 = vmatpush2.bf16.msra.mxu0 %v8876
    %9346 = vmatprep.subr.bf16.mxu0 %v8869
    %9347 = vmatpush2.bf16.msra.mxu0 %v8868
    %9348 = vmatprep.mubr.bf16.mxu0 %v7735
    %9349 = vmatmul.mubr.bf16.gmra.mxu0 %v7734
    %v9350 = vpop.f32.mrf.mxu0
    %v9351 = vadd.f32 %v7999, %v9350
    %v9352 = vpop.f32.mrf.mxu0
    %v9353 = vadd.f32 %v8003, %v9352
    %v9354 = vpop.f32.mrf.mxu0
    %v9355 = vpop.f32.mrf.mxu0
    %9356 = vdwg.mxu0
    %9357 = vmatprep.subr.bf16.mxu0 %v8989
    %9358 = vmatpush1.bf16.msra.mxu0 %v8988
    %9359 = vmatprep.subr.bf16.mxu0 %v8981
    %9360 = vmatpush1.bf16.msra.mxu0 %v8980
    %9361 = vmatprep.subr.bf16.mxu0 %v8973
    %9362 = vmatpush1.bf16.msra.mxu0 %v8972
    %9363 = vmatprep.subr.bf16.mxu0 %v8965
    %9364 = vmatpush1.bf16.msra.mxu0 %v8964
    %9365 = vmatprep.subr.bf16.mxu0 %v8957
    %9366 = vmatpush1.bf16.msra.mxu0 %v8956
    %9367 = vmatprep.subr.bf16.mxu0 %v8949
    %9368 = vmatpush1.bf16.msra.mxu0 %v8948
    %9369 = vmatprep.subr.bf16.mxu0 %v8941
    %9370 = vmatpush1.bf16.msra.mxu0 %v8940
    %9371 = vmatprep.subr.bf16.mxu0 %v8933
    %9372 = vmatpush1.bf16.msra.mxu0 %v8932
    %9373 = vmatprep.subr.bf16.mxu0 %v9053
    %9374 = vmatpush2.bf16.msra.mxu0 %v9052
    %9375 = vmatprep.subr.bf16.mxu0 %v9045
    %9376 = vmatpush2.bf16.msra.mxu0 %v9044
    %9377 = vmatprep.subr.bf16.mxu0 %v9037
    %9378 = vmatpush2.bf16.msra.mxu0 %v9036
    %9379 = vmatprep.subr.bf16.mxu0 %v9029
    %9380 = vmatpush2.bf16.msra.mxu0 %v9028
    %9381 = vmatprep.subr.bf16.mxu0 %v9021
    %9382 = vmatpush2.bf16.msra.mxu0 %v9020
    %9383 = vmatprep.subr.bf16.mxu0 %v9013
    %9384 = vmatpush2.bf16.msra.mxu0 %v9012
    %9385 = vmatprep.subr.bf16.mxu0 %v9005
    %9386 = vmatpush2.bf16.msra.mxu0 %v9004
    %9387 = vmatprep.subr.bf16.mxu0 %v8997
    %9388 = vmatpush2.bf16.msra.mxu0 %v8996
    %9389 = vmatprep.mubr.bf16.mxu0 %v7737
    %9390 = vmatmul.mubr.bf16.gmra.mxu0 %v7736
    %v9391 = vpop.f32.mrf.mxu0
    %v9392 = vadd.f32 %v9351, %v9391
    %v9393 = vpop.f32.mrf.mxu0
    %v9394 = vadd.f32 %v9353, %v9393
    %v9395 = vpop.f32.mrf.mxu0
    %v9396 = vpop.f32.mrf.mxu0
    %9397 = vdwg.mxu0
    %9398 = vmatprep.subr.bf16.mxu0 %v8863
    %9399 = vmatpush1.bf16.msra.mxu0 %v8862
    %9400 = vmatprep.subr.bf16.mxu0 %v8855
    %9401 = vmatpush1.bf16.msra.mxu0 %v8854
    %9402 = vmatprep.subr.bf16.mxu0 %v8847
    %9403 = vmatpush1.bf16.msra.mxu0 %v8846
    %9404 = vmatprep.subr.bf16.mxu0 %v8839
    %9405 = vmatpush1.bf16.msra.mxu0 %v8838
    %9406 = vmatprep.subr.bf16.mxu0 %v8831
    %9407 = vmatpush1.bf16.msra.mxu0 %v8830
    %9408 = vmatprep.subr.bf16.mxu0 %v8823
    %9409 = vmatpush1.bf16.msra.mxu0 %v8822
    %9410 = vmatprep.subr.bf16.mxu0 %v8815
    %9411 = vmatpush1.bf16.msra.mxu0 %v8814
    %9412 = vmatprep.subr.bf16.mxu0 %v8807
    %9413 = vmatpush1.bf16.msra.mxu0 %v8806
    %9414 = vmatprep.subr.bf16.mxu0 %v8927
    %9415 = vmatpush2.bf16.msra.mxu0 %v8926
    %9416 = vmatprep.subr.bf16.mxu0 %v8919
    %9417 = vmatpush2.bf16.msra.mxu0 %v8918
    %9418 = vmatprep.subr.bf16.mxu0 %v8911
    %9419 = vmatpush2.bf16.msra.mxu0 %v8910
    %9420 = vmatprep.subr.bf16.mxu0 %v8903
    %9421 = vmatpush2.bf16.msra.mxu0 %v8902
    %9422 = vmatprep.subr.bf16.mxu0 %v8895
    %9423 = vmatpush2.bf16.msra.mxu0 %v8894
    %9424 = vmatprep.subr.bf16.mxu0 %v8887
    %9425 = vmatpush2.bf16.msra.mxu0 %v8886
    %9426 = vmatprep.subr.bf16.mxu0 %v8879
    %9427 = vmatpush2.bf16.msra.mxu0 %v8878
    %9428 = vmatprep.subr.bf16.mxu0 %v8871
    %9429 = vmatpush2.bf16.msra.mxu0 %v8870
    %9430 = vmatprep.mubr.bf16.mxu0 %v7735
    %9431 = vmatmul.mubr.bf16.gmra.mxu0 %v7734
    %v9432 = vpop.f32.mrf.mxu0
    %v9433 = vadd.f32 %v8007, %v9432
    %v9434 = vpop.f32.mrf.mxu0
    %v9435 = vadd.f32 %v8011, %v9434
    %v9436 = vpop.f32.mrf.mxu0
    %v9437 = vpop.f32.mrf.mxu0
    %9438 = vdwg.mxu0
    %9439 = vmatprep.subr.bf16.mxu0 %v8991
    %9440 = vmatpush1.bf16.msra.mxu0 %v8990
    %9441 = vmatprep.subr.bf16.mxu0 %v8983
    %9442 = vmatpush1.bf16.msra.mxu0 %v8982
    %9443 = vmatprep.subr.bf16.mxu0 %v8975
    %9444 = vmatpush1.bf16.msra.mxu0 %v8974
    %9445 = vmatprep.subr.bf16.mxu0 %v8967
    %9446 = vmatpush1.bf16.msra.mxu0 %v8966
    %9447 = vmatprep.subr.bf16.mxu0 %v8959
    %9448 = vmatpush1.bf16.msra.mxu0 %v8958
    %9449 = vmatprep.subr.bf16.mxu0 %v8951
    %9450 = vmatpush1.bf16.msra.mxu0 %v8950
    %9451 = vmatprep.subr.bf16.mxu0 %v8943
    %9452 = vmatpush1.bf16.msra.mxu0 %v8942
    %9453 = vmatprep.subr.bf16.mxu0 %v8935
    %9454 = vmatpush1.bf16.msra.mxu0 %v8934
    %9455 = vmatprep.subr.bf16.mxu0 %v9055
    %9456 = vmatpush2.bf16.msra.mxu0 %v9054
    %9457 = vmatprep.subr.bf16.mxu0 %v9047
    %9458 = vmatpush2.bf16.msra.mxu0 %v9046
    %9459 = vmatprep.subr.bf16.mxu0 %v9039
    %9460 = vmatpush2.bf16.msra.mxu0 %v9038
    %9461 = vmatprep.subr.bf16.mxu0 %v9031
    %9462 = vmatpush2.bf16.msra.mxu0 %v9030
    %9463 = vmatprep.subr.bf16.mxu0 %v9023
    %9464 = vmatpush2.bf16.msra.mxu0 %v9022
    %9465 = vmatprep.subr.bf16.mxu0 %v9015
    %9466 = vmatpush2.bf16.msra.mxu0 %v9014
    %9467 = vmatprep.subr.bf16.mxu0 %v9007
    %9468 = vmatpush2.bf16.msra.mxu0 %v9006
    %9469 = vmatprep.subr.bf16.mxu0 %v8999
    %9470 = vmatpush2.bf16.msra.mxu0 %v8998
    %9471 = vmatprep.mubr.bf16.mxu0 %v7737
    %9472 = vmatmul.mubr.bf16.gmra.mxu0 %v7736
    %v9473 = vpop.f32.mrf.mxu0
    %v9474 = vadd.f32 %v9433, %v9473
    %v9475 = vpop.f32.mrf.mxu0
    %v9476 = vadd.f32 %v9435, %v9475
    %v9477 = vpop.f32.mrf.mxu0
    %v9478 = vpop.f32.mrf.mxu0
    %9479 = vdwg.mxu0
    %9480 = vmatprep.subr.bf16.mxu0 %v8865
    %9481 = vmatpush1.bf16.msra.mxu0 %v8864
    %9482 = vmatprep.subr.bf16.mxu0 %v8857
    %9483 = vmatpush1.bf16.msra.mxu0 %v8856
    %9484 = vmatprep.subr.bf16.mxu0 %v8849
    %9485 = vmatpush1.bf16.msra.mxu0 %v8848
    %9486 = vmatprep.subr.bf16.mxu0 %v8841
    %9487 = vmatpush1.bf16.msra.mxu0 %v8840
    %9488 = vmatprep.subr.bf16.mxu0 %v8833
    %9489 = vmatpush1.bf16.msra.mxu0 %v8832
    %9490 = vmatprep.subr.bf16.mxu0 %v8825
    %9491 = vmatpush1.bf16.msra.mxu0 %v8824
    %9492 = vmatprep.subr.bf16.mxu0 %v8817
    %9493 = vmatpush1.bf16.msra.mxu0 %v8816
    %9494 = vmatprep.subr.bf16.mxu0 %v8809
    %9495 = vmatpush1.bf16.msra.mxu0 %v8808
    %9496 = vmatprep.subr.bf16.mxu0 %v8929
    %9497 = vmatpush2.bf16.msra.mxu0 %v8928
    %9498 = vmatprep.subr.bf16.mxu0 %v8921
    %9499 = vmatpush2.bf16.msra.mxu0 %v8920
    %9500 = vmatprep.subr.bf16.mxu0 %v8913
    %9501 = vmatpush2.bf16.msra.mxu0 %v8912
    %9502 = vmatprep.subr.bf16.mxu0 %v8905
    %9503 = vmatpush2.bf16.msra.mxu0 %v8904
    %9504 = vmatprep.subr.bf16.mxu0 %v8897
    %9505 = vmatpush2.bf16.msra.mxu0 %v8896
    %9506 = vmatprep.subr.bf16.mxu0 %v8889
    %9507 = vmatpush2.bf16.msra.mxu0 %v8888
    %9508 = vmatprep.subr.bf16.mxu0 %v8881
    %9509 = vmatpush2.bf16.msra.mxu0 %v8880
    %9510 = vmatprep.subr.bf16.mxu0 %v8873
    %9511 = vmatpush2.bf16.msra.mxu0 %v8872
    %9512 = vmatprep.mubr.bf16.mxu0 %v7735
    %9513 = vmatmul.mubr.bf16.gmra.mxu0 %v7734
    %v9514 = vpop.f32.mrf.mxu0
    %v9515 = vadd.f32 %v8015, %v9514
    %v9516 = vpop.f32.mrf.mxu0
    %v9517 = vadd.f32 %v8019, %v9516
    %v9518 = vpop.f32.mrf.mxu0
    %v9519 = vpop.f32.mrf.mxu0
    %9520 = vdwg.mxu0
    %9521 = vmatprep.subr.bf16.mxu0 %v8993
    %9522 = vmatpush1.bf16.msra.mxu0 %v8992
    %9523 = vmatprep.subr.bf16.mxu0 %v8985
    %9524 = vmatpush1.bf16.msra.mxu0 %v8984
    %9525 = vmatprep.subr.bf16.mxu0 %v8977
    %9526 = vmatpush1.bf16.msra.mxu0 %v8976
    %9527 = vmatprep.subr.bf16.mxu0 %v8969
    %9528 = vmatpush1.bf16.msra.mxu0 %v8968
    %9529 = vmatprep.subr.bf16.mxu0 %v8961
    %9530 = vmatpush1.bf16.msra.mxu0 %v8960
    %9531 = vmatprep.subr.bf16.mxu0 %v8953
    %9532 = vmatpush1.bf16.msra.mxu0 %v8952
    %9533 = vmatprep.subr.bf16.mxu0 %v8945
    %9534 = vmatpush1.bf16.msra.mxu0 %v8944
    %9535 = vmatprep.subr.bf16.mxu0 %v8937
    %9536 = vmatpush1.bf16.msra.mxu0 %v8936
    %9537 = vmatprep.subr.bf16.mxu0 %v9057
    %9538 = vmatpush2.bf16.msra.mxu0 %v9056
    %9539 = vmatprep.subr.bf16.mxu0 %v9049
    %9540 = vmatpush2.bf16.msra.mxu0 %v9048
    %9541 = vmatprep.subr.bf16.mxu0 %v9041
    %9542 = vmatpush2.bf16.msra.mxu0 %v9040
    %9543 = vmatprep.subr.bf16.mxu0 %v9033
    %9544 = vmatpush2.bf16.msra.mxu0 %v9032
    %9545 = vmatprep.subr.bf16.mxu0 %v9025
    %9546 = vmatpush2.bf16.msra.mxu0 %v9024
    %9547 = vmatprep.subr.bf16.mxu0 %v9017
    %9548 = vmatpush2.bf16.msra.mxu0 %v9016
    %9549 = vmatprep.subr.bf16.mxu0 %v9009
    %9550 = vmatpush2.bf16.msra.mxu0 %v9008
    %9551 = vmatprep.subr.bf16.mxu0 %v9001
    %9552 = vmatpush2.bf16.msra.mxu0 %v9000
    %9553 = vmatprep.mubr.bf16.mxu0 %v7737
    %9554 = vmatmul.mubr.bf16.gmra.mxu0 %v7736
    %v9555 = vpop.f32.mrf.mxu0
    %v9556 = vadd.f32 %v9515, %v9555
    %v9557 = vpop.f32.mrf.mxu0
    %v9558 = vadd.f32 %v9517, %v9557
    %v9559 = vpop.f32.mrf.mxu0
    %v9560 = vpop.f32.mrf.mxu0
    %9561 = vdwg.mxu0
    %9562 = vmatprep.subr.bf16.mxu0 %v8867
    %9563 = vmatpush1.bf16.msra.mxu0 %v8866
    %9564 = vmatprep.subr.bf16.mxu0 %v8859
    %9565 = vmatpush1.bf16.msra.mxu0 %v8858
    %9566 = vmatprep.subr.bf16.mxu0 %v8851
    %9567 = vmatpush1.bf16.msra.mxu0 %v8850
    %9568 = vmatprep.subr.bf16.mxu0 %v8843
    %9569 = vmatpush1.bf16.msra.mxu0 %v8842
    %9570 = vmatprep.subr.bf16.mxu0 %v8835
    %9571 = vmatpush1.bf16.msra.mxu0 %v8834
    %9572 = vmatprep.subr.bf16.mxu0 %v8827
    %9573 = vmatpush1.bf16.msra.mxu0 %v8826
    %9574 = vmatprep.subr.bf16.mxu0 %v8819
    %9575 = vmatpush1.bf16.msra.mxu0 %v8818
    %9576 = vmatprep.subr.bf16.mxu0 %v8811
    %9577 = vmatpush1.bf16.msra.mxu0 %v8810
    %9578 = vmatprep.subr.bf16.mxu0 %v8931
    %9579 = vmatpush2.bf16.msra.mxu0 %v8930
    %9580 = vmatprep.subr.bf16.mxu0 %v8923
    %9581 = vmatpush2.bf16.msra.mxu0 %v8922
    %9582 = vmatprep.subr.bf16.mxu0 %v8915
    %9583 = vmatpush2.bf16.msra.mxu0 %v8914
    %9584 = vmatprep.subr.bf16.mxu0 %v8907
    %9585 = vmatpush2.bf16.msra.mxu0 %v8906
    %9586 = vmatprep.subr.bf16.mxu0 %v8899
    %9587 = vmatpush2.bf16.msra.mxu0 %v8898
    %9588 = vmatprep.subr.bf16.mxu0 %v8891
    %9589 = vmatpush2.bf16.msra.mxu0 %v8890
    %9590 = vmatprep.subr.bf16.mxu0 %v8883
    %9591 = vmatpush2.bf16.msra.mxu0 %v8882
    %9592 = vmatprep.subr.bf16.mxu0 %v8875
    %9593 = vmatpush2.bf16.msra.mxu0 %v8874
    %9594 = vmatprep.mubr.bf16.mxu0 %v7735
    %9595 = vmatmul.mubr.bf16.gmra.mxu0 %v7734
    %v9596 = vpop.f32.mrf.mxu0
    %v9597 = vadd.f32 %v8023, %v9596
    %v9598 = vpop.f32.mrf.mxu0
    %v9599 = vadd.f32 %v8027, %v9598
    %v9600 = vpop.f32.mrf.mxu0
    %v9601 = vpop.f32.mrf.mxu0
    %9602 = vdwg.mxu0
    %9603 = vmatprep.subr.bf16.mxu0 %v8995
    %9604 = vmatpush1.bf16.msra.mxu0 %v8994
    %9605 = vmatprep.subr.bf16.mxu0 %v8987
    %9606 = vmatpush1.bf16.msra.mxu0 %v8986
    %9607 = vmatprep.subr.bf16.mxu0 %v8979
    %9608 = vmatpush1.bf16.msra.mxu0 %v8978
    %9609 = vmatprep.subr.bf16.mxu0 %v8971
    %9610 = vmatpush1.bf16.msra.mxu0 %v8970
    %9611 = vmatprep.subr.bf16.mxu0 %v8963
    %9612 = vmatpush1.bf16.msra.mxu0 %v8962
    %9613 = vmatprep.subr.bf16.mxu0 %v8955
    %9614 = vmatpush1.bf16.msra.mxu0 %v8954
    %9615 = vmatprep.subr.bf16.mxu0 %v8947
    %9616 = vmatpush1.bf16.msra.mxu0 %v8946
    %9617 = vmatprep.subr.bf16.mxu0 %v8939
    %9618 = vmatpush1.bf16.msra.mxu0 %v8938
    %9619 = vmatprep.subr.bf16.mxu0 %v9059
    %9620 = vmatpush2.bf16.msra.mxu0 %v9058
    %9621 = vmatprep.subr.bf16.mxu0 %v9051
    %9622 = vmatpush2.bf16.msra.mxu0 %v9050
    %9623 = vmatprep.subr.bf16.mxu0 %v9043
    %9624 = vmatpush2.bf16.msra.mxu0 %v9042
    %9625 = vmatprep.subr.bf16.mxu0 %v9035
    %9626 = vmatpush2.bf16.msra.mxu0 %v9034
    %9627 = vmatprep.subr.bf16.mxu0 %v9027
    %9628 = vmatpush2.bf16.msra.mxu0 %v9026
    %9629 = vmatprep.subr.bf16.mxu0 %v9019
    %9630 = vmatpush2.bf16.msra.mxu0 %v9018
    %9631 = vmatprep.subr.bf16.mxu0 %v9011
    %9632 = vmatpush2.bf16.msra.mxu0 %v9010
    %9633 = vmatprep.subr.bf16.mxu0 %v9003
    %9634 = vmatpush2.bf16.msra.mxu0 %v9002
    %9635 = vmatprep.mubr.bf16.mxu0 %v7737
    %9636 = vmatmul.mubr.bf16.gmra.mxu0 %v7736
    %v9637 = vpop.f32.mrf.mxu0
    %v9638 = vadd.f32 %v9597, %v9637
    %v9639 = vpop.f32.mrf.mxu0
    %v9640 = vadd.f32 %v9599, %v9639
    %v9641 = vpop.f32.mrf.mxu0
    %v9642 = vpop.f32.mrf.mxu0
    %9643 = vdwg.mxu0
    %v9644 = vmax.f32 %v9392, 0.0
    %v9645 = vmax.f32 %v9394, 0.0
    %v9646 = vmax.f32 %v9474, 0.0
    %v9647 = vmax.f32 %v9476, 0.0
    %v9648 = vmax.f32 %v9556, 0.0
    %v9649 = vmax.f32 %v9558, 0.0
    %v9650 = vmax.f32 %v9638, 0.0
    %v9651 = vmax.f32 %v9640, 0.0
    %v9652 = vmax.f32 %v9644, %v9646
    %v9653 = vmax.f32 %v9645, %v9647
    %v9654 = vmax.f32 %v9648, %v9650
    %v9655 = vmax.f32 %v9649, %v9651
    %v9656 = vmax.f32 %v9652, %v9654
    %v9657 = vmax.f32 %v9653, %v9655
    %v9658 = vpack.c.bf16 %v9656, %v9656
    %v9659 = vpack.c.bf16 %v9657, %v9657
    %v9660 = vld [vmem:[#allocation9] sm:$0xff]
    %v9661 = vld [vmem:[#allocation9 + $0x8] sm:$0xff]
    %v9662 = vld [vmem:[#allocation9 + $0x10] sm:$0xff]
    %v9663 = vld [vmem:[#allocation9 + $0x18] sm:$0xff]
    %v9664 = vld [vmem:[#allocation9 + $0x20] sm:$0xff]
    %v9665 = vld [vmem:[#allocation9 + $0x28] sm:$0xff]
    %v9666 = vld [vmem:[#allocation9 + $0x30] sm:$0xff]
    %v9667 = vld [vmem:[#allocation9 + $0x38] sm:$0xff]
    %v9668 = vld [vmem:[#allocation9 + $0x40] sm:$0xff]
    %v9669 = vld [vmem:[#allocation9 + $0x48] sm:$0xff]
    %v9670 = vld [vmem:[#allocation9 + $0x50] sm:$0xff]
    %v9671 = vld [vmem:[#allocation9 + $0x58] sm:$0xff]
    %v9672 = vld [vmem:[#allocation9 + $0x60] sm:$0xff]
    %v9673 = vld [vmem:[#allocation9 + $0x68] sm:$0xff]
    %v9674 = vld [vmem:[#allocation9 + $0x70] sm:$0xff]
    %v9675 = vld [vmem:[#allocation9 + $0x78] sm:$0xff]
    %v9676 = vld [vmem:[#allocation9 + $0x80] sm:$0xff]
    %v9677 = vld [vmem:[#allocation9 + $0x88] sm:$0xff]
    %v9678 = vld [vmem:[#allocation9 + $0x90] sm:$0xff]
    %v9679 = vld [vmem:[#allocation9 + $0x98] sm:$0xff]
    %v9680 = vld [vmem:[#allocation9 + $0xa0] sm:$0xff]
    %v9681 = vld [vmem:[#allocation9 + $0xa8] sm:$0xff]
    %v9682 = vld [vmem:[#allocation9 + $0xb0] sm:$0xff]
    %v9683 = vld [vmem:[#allocation9 + $0xb8] sm:$0xff]
    %v9684 = vld [vmem:[#allocation9 + $0xc0] sm:$0xff]
    %v9685 = vld [vmem:[#allocation9 + $0xc8] sm:$0xff]
    %v9686 = vld [vmem:[#allocation9 + $0xd0] sm:$0xff]
    %v9687 = vld [vmem:[#allocation9 + $0xd8] sm:$0xff]
    %v9688 = vld [vmem:[#allocation9 + $0xe0] sm:$0xff]
    %v9689 = vld [vmem:[#allocation9 + $0xe8] sm:$0xff]
    %v9690 = vld [vmem:[#allocation9 + $0xf0] sm:$0xff]
    %v9691 = vld [vmem:[#allocation9 + $0xf8] sm:$0xff]
    %v9692 = vld [vmem:[#allocation9 + $0x100] sm:$0xff]
    %v9693 = vld [vmem:[#allocation9 + $0x108] sm:$0xff]
    %v9694 = vld [vmem:[#allocation9 + $0x110] sm:$0xff]
    %v9695 = vld [vmem:[#allocation9 + $0x118] sm:$0xff]
    %v9696 = vld [vmem:[#allocation9 + $0x120] sm:$0xff]
    %v9697 = vld [vmem:[#allocation9 + $0x128] sm:$0xff]
    %v9698 = vld [vmem:[#allocation9 + $0x130] sm:$0xff]
    %v9699 = vld [vmem:[#allocation9 + $0x138] sm:$0xff]
    %v9700 = vld [vmem:[#allocation9 + $0x140] sm:$0xff]
    %v9701 = vld [vmem:[#allocation9 + $0x148] sm:$0xff]
    %v9702 = vld [vmem:[#allocation9 + $0x150] sm:$0xff]
    %v9703 = vld [vmem:[#allocation9 + $0x158] sm:$0xff]
    %v9704 = vld [vmem:[#allocation9 + $0x160] sm:$0xff]
    %v9705 = vld [vmem:[#allocation9 + $0x168] sm:$0xff]
    %v9706 = vld [vmem:[#allocation9 + $0x170] sm:$0xff]
    %v9707 = vld [vmem:[#allocation9 + $0x178] sm:$0xff]
    %v9708 = vld [vmem:[#allocation9 + $0x180] sm:$0xff]
    %v9709 = vld [vmem:[#allocation9 + $0x188] sm:$0xff]
    %v9710 = vld [vmem:[#allocation9 + $0x190] sm:$0xff]
    %v9711 = vld [vmem:[#allocation9 + $0x198] sm:$0xff]
    %v9712 = vld [vmem:[#allocation9 + $0x1a0] sm:$0xff]
    %v9713 = vld [vmem:[#allocation9 + $0x1a8] sm:$0xff]
    %v9714 = vld [vmem:[#allocation9 + $0x1b0] sm:$0xff]
    %v9715 = vld [vmem:[#allocation9 + $0x1b8] sm:$0xff]
    %v9716 = vld [vmem:[#allocation9 + $0x1c0] sm:$0xff]
    %v9717 = vld [vmem:[#allocation9 + $0x1c8] sm:$0xff]
    %v9718 = vld [vmem:[#allocation9 + $0x1d0] sm:$0xff]
    %v9719 = vld [vmem:[#allocation9 + $0x1d8] sm:$0xff]
    %v9720 = vld [vmem:[#allocation9 + $0x1e0] sm:$0xff]
    %v9721 = vld [vmem:[#allocation9 + $0x1e8] sm:$0xff]
    %v9722 = vld [vmem:[#allocation9 + $0x1f0] sm:$0xff]
    %v9723 = vld [vmem:[#allocation9 + $0x1f8] sm:$0xff]
    %v9724 = vld [vmem:[#allocation9 + $0x200] sm:$0xff]
    %v9725 = vld [vmem:[#allocation9 + $0x208] sm:$0xff]
    %v9726 = vld [vmem:[#allocation9 + $0x210] sm:$0xff]
    %v9727 = vld [vmem:[#allocation9 + $0x218] sm:$0xff]
    %v9728 = vld [vmem:[#allocation9 + $0x220] sm:$0xff]
    %v9729 = vld [vmem:[#allocation9 + $0x228] sm:$0xff]
    %v9730 = vld [vmem:[#allocation9 + $0x230] sm:$0xff]
    %v9731 = vld [vmem:[#allocation9 + $0x238] sm:$0xff]
    %v9732 = vld [vmem:[#allocation9 + $0x240] sm:$0xff]
    %v9733 = vld [vmem:[#allocation9 + $0x248] sm:$0xff]
    %v9734 = vld [vmem:[#allocation9 + $0x250] sm:$0xff]
    %v9735 = vld [vmem:[#allocation9 + $0x258] sm:$0xff]
    %v9736 = vld [vmem:[#allocation9 + $0x260] sm:$0xff]
    %v9737 = vld [vmem:[#allocation9 + $0x268] sm:$0xff]
    %v9738 = vld [vmem:[#allocation9 + $0x270] sm:$0xff]
    %v9739 = vld [vmem:[#allocation9 + $0x278] sm:$0xff]
    %v9740 = vld [vmem:[#allocation9 + $0x280] sm:$0xff]
    %v9741 = vld [vmem:[#allocation9 + $0x288] sm:$0xff]
    %v9742 = vld [vmem:[#allocation9 + $0x290] sm:$0xff]
    %v9743 = vld [vmem:[#allocation9 + $0x298] sm:$0xff]
    %v9744 = vld [vmem:[#allocation9 + $0x2a0] sm:$0xff]
    %v9745 = vld [vmem:[#allocation9 + $0x2a8] sm:$0xff]
    %v9746 = vld [vmem:[#allocation9 + $0x2b0] sm:$0xff]
    %v9747 = vld [vmem:[#allocation9 + $0x2b8] sm:$0xff]
    %v9748 = vld [vmem:[#allocation9 + $0x2c0] sm:$0xff]
    %v9749 = vld [vmem:[#allocation9 + $0x2c8] sm:$0xff]
    %v9750 = vld [vmem:[#allocation9 + $0x2d0] sm:$0xff]
    %v9751 = vld [vmem:[#allocation9 + $0x2d8] sm:$0xff]
    %v9752 = vld [vmem:[#allocation9 + $0x2e0] sm:$0xff]
    %v9753 = vld [vmem:[#allocation9 + $0x2e8] sm:$0xff]
    %v9754 = vld [vmem:[#allocation9 + $0x2f0] sm:$0xff]
    %v9755 = vld [vmem:[#allocation9 + $0x2f8] sm:$0xff]
    %v9756 = vld [vmem:[#allocation9 + $0x300] sm:$0xff]
    %v9757 = vld [vmem:[#allocation9 + $0x308] sm:$0xff]
    %v9758 = vld [vmem:[#allocation9 + $0x310] sm:$0xff]
    %v9759 = vld [vmem:[#allocation9 + $0x318] sm:$0xff]
    %v9760 = vld [vmem:[#allocation9 + $0x320] sm:$0xff]
    %v9761 = vld [vmem:[#allocation9 + $0x328] sm:$0xff]
    %v9762 = vld [vmem:[#allocation9 + $0x330] sm:$0xff]
    %v9763 = vld [vmem:[#allocation9 + $0x338] sm:$0xff]
    %v9764 = vld [vmem:[#allocation9 + $0x340] sm:$0xff]
    %v9765 = vld [vmem:[#allocation9 + $0x348] sm:$0xff]
    %v9766 = vld [vmem:[#allocation9 + $0x350] sm:$0xff]
    %v9767 = vld [vmem:[#allocation9 + $0x358] sm:$0xff]
    %v9768 = vld [vmem:[#allocation9 + $0x360] sm:$0xff]
    %v9769 = vld [vmem:[#allocation9 + $0x368] sm:$0xff]
    %v9770 = vld [vmem:[#allocation9 + $0x370] sm:$0xff]
    %v9771 = vld [vmem:[#allocation9 + $0x378] sm:$0xff]
    %v9772 = vld [vmem:[#allocation9 + $0x380] sm:$0xff]
    %v9773 = vld [vmem:[#allocation9 + $0x388] sm:$0xff]
    %v9774 = vld [vmem:[#allocation9 + $0x390] sm:$0xff]
    %v9775 = vld [vmem:[#allocation9 + $0x398] sm:$0xff]
    %v9776 = vld [vmem:[#allocation9 + $0x3a0] sm:$0xff]
    %v9777 = vld [vmem:[#allocation9 + $0x3a8] sm:$0xff]
    %v9778 = vld [vmem:[#allocation9 + $0x3b0] sm:$0xff]
    %v9779 = vld [vmem:[#allocation9 + $0x3b8] sm:$0xff]
    %v9780 = vld [vmem:[#allocation9 + $0x3c0] sm:$0xff]
    %v9781 = vld [vmem:[#allocation9 + $0x3c8] sm:$0xff]
    %v9782 = vld [vmem:[#allocation9 + $0x3d0] sm:$0xff]
    %v9783 = vld [vmem:[#allocation9 + $0x3d8] sm:$0xff]
    %v9784 = vld [vmem:[#allocation9 + $0x3e0] sm:$0xff]
    %v9785 = vld [vmem:[#allocation9 + $0x3e8] sm:$0xff]
    %v9786 = vld [vmem:[#allocation9 + $0x3f0] sm:$0xff]
    %v9787 = vld [vmem:[#allocation9 + $0x3f8] sm:$0xff]
    %v9788 = vld [vmem:[#allocation10] sm:$0xff]
    %v9790 = vlaneseq
    %v9791 = vshrl.u32 %v9790, 7
    %v9792 = vsub.s32 0, %v9791
    %v9793 = vrot.slane %v9788, %v9792
    %v9794 = vlaneseq
    %v9795 = vshrl.u32 %v9794, 7
    %v9796 = vsub.s32 1, %v9795
    %v9797 = vrot.slane %v9788, %v9796
    %v9798 = vlaneseq
    %v9799 = vshrl.u32 %v9798, 7
    %v9800 = vsub.s32 2, %v9799
    %v9801 = vrot.slane %v9788, %v9800
    %v9802 = vlaneseq
    %v9803 = vshrl.u32 %v9802, 7
    %v9804 = vsub.s32 3, %v9803
    %v9805 = vrot.slane %v9788, %v9804
    %v9806 = vlaneseq
    %v9807 = vshrl.u32 %v9806, 7
    %v9808 = vsub.s32 4, %v9807
    %v9809 = vrot.slane %v9788, %v9808
    %v9810 = vlaneseq
    %v9811 = vshrl.u32 %v9810, 7
    %v9812 = vsub.s32 5, %v9811
    %v9813 = vrot.slane %v9788, %v9812
    %v9814 = vlaneseq
    %v9815 = vshrl.u32 %v9814, 7
    %v9816 = vsub.s32 6, %v9815
    %v9817 = vrot.slane %v9788, %v9816
    %v9818 = vlaneseq
    %v9819 = vshrl.u32 %v9818, 7
    %v9820 = vsub.s32 7, %v9819
    %v9821 = vrot.slane %v9788, %v9820
    %v9958 = vunpack.c.l.b16 %v9660
    %v9959 = vunpack.c.h.b16 %v9660
    %v9960 = vunpack.c.l.b16 %v9661
    %v9961 = vunpack.c.h.b16 %v9661
    %v9962 = vunpack.c.l.b16 %v9662
    %v9963 = vunpack.c.h.b16 %v9662
    %v9964 = vunpack.c.l.b16 %v9663
    %v9965 = vunpack.c.h.b16 %v9663
    %v9966 = vunpack.c.l.b16 %v9664
    %v9967 = vunpack.c.h.b16 %v9664
    %v9968 = vunpack.c.l.b16 %v9665
    %v9969 = vunpack.c.h.b16 %v9665
    %v9970 = vunpack.c.l.b16 %v9666
    %v9971 = vunpack.c.h.b16 %v9666
    %v9972 = vunpack.c.l.b16 %v9667
    %v9973 = vunpack.c.h.b16 %v9667
    %v9974 = vunpack.c.l.b16 %v9668
    %v9975 = vunpack.c.h.b16 %v9668
    %v9976 = vunpack.c.l.b16 %v9669
    %v9977 = vunpack.c.h.b16 %v9669
    %v9978 = vunpack.c.l.b16 %v9670
    %v9979 = vunpack.c.h.b16 %v9670
    %v9980 = vunpack.c.l.b16 %v9671
    %v9981 = vunpack.c.h.b16 %v9671
    %v9982 = vunpack.c.l.b16 %v9672
    %v9983 = vunpack.c.h.b16 %v9672
    %v9984 = vunpack.c.l.b16 %v9673
    %v9985 = vunpack.c.h.b16 %v9673
    %v9986 = vunpack.c.l.b16 %v9674
    %v9987 = vunpack.c.h.b16 %v9674
    %v9988 = vunpack.c.l.b16 %v9675
    %v9989 = vunpack.c.h.b16 %v9675
    %v9990 = vunpack.c.l.b16 %v9676
    %v9991 = vunpack.c.h.b16 %v9676
    %v9992 = vunpack.c.l.b16 %v9677
    %v9993 = vunpack.c.h.b16 %v9677
    %v9994 = vunpack.c.l.b16 %v9678
    %v9995 = vunpack.c.h.b16 %v9678
    %v9996 = vunpack.c.l.b16 %v9679
    %v9997 = vunpack.c.h.b16 %v9679
    %v9998 = vunpack.c.l.b16 %v9680
    %v9999 = vunpack.c.h.b16 %v9680
    %v10000 = vunpack.c.l.b16 %v9681
    %v10001 = vunpack.c.h.b16 %v9681
    %v10002 = vunpack.c.l.b16 %v9682
    %v10003 = vunpack.c.h.b16 %v9682
    %v10004 = vunpack.c.l.b16 %v9683
    %v10005 = vunpack.c.h.b16 %v9683
    %v10006 = vunpack.c.l.b16 %v9684
    %v10007 = vunpack.c.h.b16 %v9684
    %v10008 = vunpack.c.l.b16 %v9685
    %v10009 = vunpack.c.h.b16 %v9685
    %v10010 = vunpack.c.l.b16 %v9686
    %v10011 = vunpack.c.h.b16 %v9686
    %v10012 = vunpack.c.l.b16 %v9687
    %v10013 = vunpack.c.h.b16 %v9687
    %v10014 = vunpack.c.l.b16 %v9688
    %v10015 = vunpack.c.h.b16 %v9688
    %v10016 = vunpack.c.l.b16 %v9689
    %v10017 = vunpack.c.h.b16 %v9689
    %v10018 = vunpack.c.l.b16 %v9690
    %v10019 = vunpack.c.h.b16 %v9690
    %v10020 = vunpack.c.l.b16 %v9691
    %v10021 = vunpack.c.h.b16 %v9691
    %v10022 = vunpack.c.l.b16 %v9692
    %v10023 = vunpack.c.h.b16 %v9692
    %v10024 = vunpack.c.l.b16 %v9693
    %v10025 = vunpack.c.h.b16 %v9693
    %v10026 = vunpack.c.l.b16 %v9694
    %v10027 = vunpack.c.h.b16 %v9694
    %v10028 = vunpack.c.l.b16 %v9695
    %v10029 = vunpack.c.h.b16 %v9695
    %v10030 = vunpack.c.l.b16 %v9696
    %v10031 = vunpack.c.h.b16 %v9696
    %v10032 = vunpack.c.l.b16 %v9697
    %v10033 = vunpack.c.h.b16 %v9697
    %v10034 = vunpack.c.l.b16 %v9698
    %v10035 = vunpack.c.h.b16 %v9698
    %v10036 = vunpack.c.l.b16 %v9699
    %v10037 = vunpack.c.h.b16 %v9699
    %v10038 = vunpack.c.l.b16 %v9700
    %v10039 = vunpack.c.h.b16 %v9700
    %v10040 = vunpack.c.l.b16 %v9701
    %v10041 = vunpack.c.h.b16 %v9701
    %v10042 = vunpack.c.l.b16 %v9702
    %v10043 = vunpack.c.h.b16 %v9702
    %v10044 = vunpack.c.l.b16 %v9703
    %v10045 = vunpack.c.h.b16 %v9703
    %v10046 = vunpack.c.l.b16 %v9704
    %v10047 = vunpack.c.h.b16 %v9704
    %v10048 = vunpack.c.l.b16 %v9705
    %v10049 = vunpack.c.h.b16 %v9705
    %v10050 = vunpack.c.l.b16 %v9706
    %v10051 = vunpack.c.h.b16 %v9706
    %v10052 = vunpack.c.l.b16 %v9707
    %v10053 = vunpack.c.h.b16 %v9707
    %v10054 = vunpack.c.l.b16 %v9708
    %v10055 = vunpack.c.h.b16 %v9708
    %v10056 = vunpack.c.l.b16 %v9709
    %v10057 = vunpack.c.h.b16 %v9709
    %v10058 = vunpack.c.l.b16 %v9710
    %v10059 = vunpack.c.h.b16 %v9710
    %v10060 = vunpack.c.l.b16 %v9711
    %v10061 = vunpack.c.h.b16 %v9711
    %v10062 = vunpack.c.l.b16 %v9712
    %v10063 = vunpack.c.h.b16 %v9712
    %v10064 = vunpack.c.l.b16 %v9713
    %v10065 = vunpack.c.h.b16 %v9713
    %v10066 = vunpack.c.l.b16 %v9714
    %v10067 = vunpack.c.h.b16 %v9714
    %v10068 = vunpack.c.l.b16 %v9715
    %v10069 = vunpack.c.h.b16 %v9715
    %v10070 = vunpack.c.l.b16 %v9716
    %v10071 = vunpack.c.h.b16 %v9716
    %v10072 = vunpack.c.l.b16 %v9717
    %v10073 = vunpack.c.h.b16 %v9717
    %v10074 = vunpack.c.l.b16 %v9718
    %v10075 = vunpack.c.h.b16 %v9718
    %v10076 = vunpack.c.l.b16 %v9719
    %v10077 = vunpack.c.h.b16 %v9719
    %v10078 = vunpack.c.l.b16 %v9720
    %v10079 = vunpack.c.h.b16 %v9720
    %v10080 = vunpack.c.l.b16 %v9721
    %v10081 = vunpack.c.h.b16 %v9721
    %v10082 = vunpack.c.l.b16 %v9722
    %v10083 = vunpack.c.h.b16 %v9722
    %v10084 = vunpack.c.l.b16 %v9723
    %v10085 = vunpack.c.h.b16 %v9723
    %v10086 = vunpack.c.l.b16 %v9724
    %v10087 = vunpack.c.h.b16 %v9724
    %v10088 = vunpack.c.l.b16 %v9725
    %v10089 = vunpack.c.h.b16 %v9725
    %v10090 = vunpack.c.l.b16 %v9726
    %v10091 = vunpack.c.h.b16 %v9726
    %v10092 = vunpack.c.l.b16 %v9727
    %v10093 = vunpack.c.h.b16 %v9727
    %v10094 = vunpack.c.l.b16 %v9728
    %v10095 = vunpack.c.h.b16 %v9728
    %v10096 = vunpack.c.l.b16 %v9729
    %v10097 = vunpack.c.h.b16 %v9729
    %v10098 = vunpack.c.l.b16 %v9730
    %v10099 = vunpack.c.h.b16 %v9730
    %v10100 = vunpack.c.l.b16 %v9731
    %v10101 = vunpack.c.h.b16 %v9731
    %v10102 = vunpack.c.l.b16 %v9732
    %v10103 = vunpack.c.h.b16 %v9732
    %v10104 = vunpack.c.l.b16 %v9733
    %v10105 = vunpack.c.h.b16 %v9733
    %v10106 = vunpack.c.l.b16 %v9734
    %v10107 = vunpack.c.h.b16 %v9734
    %v10108 = vunpack.c.l.b16 %v9735
    %v10109 = vunpack.c.h.b16 %v9735
    %v10110 = vunpack.c.l.b16 %v9736
    %v10111 = vunpack.c.h.b16 %v9736
    %v10112 = vunpack.c.l.b16 %v9737
    %v10113 = vunpack.c.h.b16 %v9737
    %v10114 = vunpack.c.l.b16 %v9738
    %v10115 = vunpack.c.h.b16 %v9738
    %v10116 = vunpack.c.l.b16 %v9739
    %v10117 = vunpack.c.h.b16 %v9739
    %v10118 = vunpack.c.l.b16 %v9740
    %v10119 = vunpack.c.h.b16 %v9740
    %v10120 = vunpack.c.l.b16 %v9741
    %v10121 = vunpack.c.h.b16 %v9741
    %v10122 = vunpack.c.l.b16 %v9742
    %v10123 = vunpack.c.h.b16 %v9742
    %v10124 = vunpack.c.l.b16 %v9743
    %v10125 = vunpack.c.h.b16 %v9743
    %v10126 = vunpack.c.l.b16 %v9744
    %v10127 = vunpack.c.h.b16 %v9744
    %v10128 = vunpack.c.l.b16 %v9745
    %v10129 = vunpack.c.h.b16 %v9745
    %v10130 = vunpack.c.l.b16 %v9746
    %v10131 = vunpack.c.h.b16 %v9746
    %v10132 = vunpack.c.l.b16 %v9747
    %v10133 = vunpack.c.h.b16 %v9747
    %v10134 = vunpack.c.l.b16 %v9748
    %v10135 = vunpack.c.h.b16 %v9748
    %v10136 = vunpack.c.l.b16 %v9749
    %v10137 = vunpack.c.h.b16 %v9749
    %v10138 = vunpack.c.l.b16 %v9750
    %v10139 = vunpack.c.h.b16 %v9750
    %v10140 = vunpack.c.l.b16 %v9751
    %v10141 = vunpack.c.h.b16 %v9751
    %v10142 = vunpack.c.l.b16 %v9752
    %v10143 = vunpack.c.h.b16 %v9752
    %v10144 = vunpack.c.l.b16 %v9753
    %v10145 = vunpack.c.h.b16 %v9753
    %v10146 = vunpack.c.l.b16 %v9754
    %v10147 = vunpack.c.h.b16 %v9754
    %v10148 = vunpack.c.l.b16 %v9755
    %v10149 = vunpack.c.h.b16 %v9755
    %v10150 = vunpack.c.l.b16 %v9756
    %v10151 = vunpack.c.h.b16 %v9756
    %v10152 = vunpack.c.l.b16 %v9757
    %v10153 = vunpack.c.h.b16 %v9757
    %v10154 = vunpack.c.l.b16 %v9758
    %v10155 = vunpack.c.h.b16 %v9758
    %v10156 = vunpack.c.l.b16 %v9759
    %v10157 = vunpack.c.h.b16 %v9759
    %v10158 = vunpack.c.l.b16 %v9760
    %v10159 = vunpack.c.h.b16 %v9760
    %v10160 = vunpack.c.l.b16 %v9761
    %v10161 = vunpack.c.h.b16 %v9761
    %v10162 = vunpack.c.l.b16 %v9762
    %v10163 = vunpack.c.h.b16 %v9762
    %v10164 = vunpack.c.l.b16 %v9763
    %v10165 = vunpack.c.h.b16 %v9763
    %v10166 = vunpack.c.l.b16 %v9764
    %v10167 = vunpack.c.h.b16 %v9764
    %v10168 = vunpack.c.l.b16 %v9765
    %v10169 = vunpack.c.h.b16 %v9765
    %v10170 = vunpack.c.l.b16 %v9766
    %v10171 = vunpack.c.h.b16 %v9766
    %v10172 = vunpack.c.l.b16 %v9767
    %v10173 = vunpack.c.h.b16 %v9767
    %v10174 = vunpack.c.l.b16 %v9768
    %v10175 = vunpack.c.h.b16 %v9768
    %v10176 = vunpack.c.l.b16 %v9769
    %v10177 = vunpack.c.h.b16 %v9769
    %v10178 = vunpack.c.l.b16 %v9770
    %v10179 = vunpack.c.h.b16 %v9770
    %v10180 = vunpack.c.l.b16 %v9771
    %v10181 = vunpack.c.h.b16 %v9771
    %v10182 = vunpack.c.l.b16 %v9772
    %v10183 = vunpack.c.h.b16 %v9772
    %v10184 = vunpack.c.l.b16 %v9773
    %v10185 = vunpack.c.h.b16 %v9773
    %v10186 = vunpack.c.l.b16 %v9774
    %v10187 = vunpack.c.h.b16 %v9774
    %v10188 = vunpack.c.l.b16 %v9775
    %v10189 = vunpack.c.h.b16 %v9775
    %v10190 = vunpack.c.l.b16 %v9776
    %v10191 = vunpack.c.h.b16 %v9776
    %v10192 = vunpack.c.l.b16 %v9777
    %v10193 = vunpack.c.h.b16 %v9777
    %v10194 = vunpack.c.l.b16 %v9778
    %v10195 = vunpack.c.h.b16 %v9778
    %v10196 = vunpack.c.l.b16 %v9779
    %v10197 = vunpack.c.h.b16 %v9779
    %v10198 = vunpack.c.l.b16 %v9780
    %v10199 = vunpack.c.h.b16 %v9780
    %v10200 = vunpack.c.l.b16 %v9781
    %v10201 = vunpack.c.h.b16 %v9781
    %v10202 = vunpack.c.l.b16 %v9782
    %v10203 = vunpack.c.h.b16 %v9782
    %v10204 = vunpack.c.l.b16 %v9783
    %v10205 = vunpack.c.h.b16 %v9783
    %v10206 = vunpack.c.l.b16 %v9784
    %v10207 = vunpack.c.h.b16 %v9784
    %v10208 = vunpack.c.l.b16 %v9785
    %v10209 = vunpack.c.h.b16 %v9785
    %v10210 = vunpack.c.l.b16 %v9786
    %v10211 = vunpack.c.h.b16 %v9786
    %v10212 = vunpack.c.l.b16 %v9787
    %v10213 = vunpack.c.h.b16 %v9787
    %v10214 = vpack.c.b16 %v9966, %v9958
    %v10215 = vpack.c.b16 %v9967, %v9959
    %v10216 = vpack.c.b16 %v9968, %v9960
    %v10217 = vpack.c.b16 %v9969, %v9961
    %v10218 = vpack.c.b16 %v9970, %v9962
    %v10219 = vpack.c.b16 %v9971, %v9963
    %v10220 = vpack.c.b16 %v9972, %v9964
    %v10221 = vpack.c.b16 %v9973, %v9965
    %v10222 = vpack.c.b16 %v9982, %v9974
    %v10223 = vpack.c.b16 %v9983, %v9975
    %v10224 = vpack.c.b16 %v9984, %v9976
    %v10225 = vpack.c.b16 %v9985, %v9977
    %v10226 = vpack.c.b16 %v9986, %v9978
    %v10227 = vpack.c.b16 %v9987, %v9979
    %v10228 = vpack.c.b16 %v9988, %v9980
    %v10229 = vpack.c.b16 %v9989, %v9981
    %v10230 = vpack.c.b16 %v9998, %v9990
    %v10231 = vpack.c.b16 %v9999, %v9991
    %v10232 = vpack.c.b16 %v10000, %v9992
    %v10233 = vpack.c.b16 %v10001, %v9993
    %v10234 = vpack.c.b16 %v10002, %v9994
    %v10235 = vpack.c.b16 %v10003, %v9995
    %v10236 = vpack.c.b16 %v10004, %v9996
    %v10237 = vpack.c.b16 %v10005, %v9997
    %v10238 = vpack.c.b16 %v10014, %v10006
    %v10239 = vpack.c.b16 %v10015, %v10007
    %v10240 = vpack.c.b16 %v10016, %v10008
    %v10241 = vpack.c.b16 %v10017, %v10009
    %v10242 = vpack.c.b16 %v10018, %v10010
    %v10243 = vpack.c.b16 %v10019, %v10011
    %v10244 = vpack.c.b16 %v10020, %v10012
    %v10245 = vpack.c.b16 %v10021, %v10013
    %v10246 = vpack.c.b16 %v10030, %v10022
    %v10247 = vpack.c.b16 %v10031, %v10023
    %v10248 = vpack.c.b16 %v10032, %v10024
    %v10249 = vpack.c.b16 %v10033, %v10025
    %v10250 = vpack.c.b16 %v10034, %v10026
    %v10251 = vpack.c.b16 %v10035, %v10027
    %v10252 = vpack.c.b16 %v10036, %v10028
    %v10253 = vpack.c.b16 %v10037, %v10029
    %v10254 = vpack.c.b16 %v10046, %v10038
    %v10255 = vpack.c.b16 %v10047, %v10039
    %v10256 = vpack.c.b16 %v10048, %v10040
    %v10257 = vpack.c.b16 %v10049, %v10041
    %v10258 = vpack.c.b16 %v10050, %v10042
    %v10259 = vpack.c.b16 %v10051, %v10043
    %v10260 = vpack.c.b16 %v10052, %v10044
    %v10261 = vpack.c.b16 %v10053, %v10045
    %v10262 = vpack.c.b16 %v10062, %v10054
    %v10263 = vpack.c.b16 %v10063, %v10055
    %v10264 = vpack.c.b16 %v10064, %v10056
    %v10265 = vpack.c.b16 %v10065, %v10057
    %v10266 = vpack.c.b16 %v10066, %v10058
    %v10267 = vpack.c.b16 %v10067, %v10059
    %v10268 = vpack.c.b16 %v10068, %v10060
    %v10269 = vpack.c.b16 %v10069, %v10061
    %v10270 = vpack.c.b16 %v10078, %v10070
    %v10271 = vpack.c.b16 %v10079, %v10071
    %v10272 = vpack.c.b16 %v10080, %v10072
    %v10273 = vpack.c.b16 %v10081, %v10073
    %v10274 = vpack.c.b16 %v10082, %v10074
    %v10275 = vpack.c.b16 %v10083, %v10075
    %v10276 = vpack.c.b16 %v10084, %v10076
    %v10277 = vpack.c.b16 %v10085, %v10077
    %v10278 = vpack.c.b16 %v10094, %v10086
    %v10279 = vpack.c.b16 %v10095, %v10087
    %v10280 = vpack.c.b16 %v10096, %v10088
    %v10281 = vpack.c.b16 %v10097, %v10089
    %v10282 = vpack.c.b16 %v10098, %v10090
    %v10283 = vpack.c.b16 %v10099, %v10091
    %v10284 = vpack.c.b16 %v10100, %v10092
    %v10285 = vpack.c.b16 %v10101, %v10093
    %v10286 = vpack.c.b16 %v10110, %v10102
    %v10287 = vpack.c.b16 %v10111, %v10103
    %v10288 = vpack.c.b16 %v10112, %v10104
    %v10289 = vpack.c.b16 %v10113, %v10105
    %v10290 = vpack.c.b16 %v10114, %v10106
    %v10291 = vpack.c.b16 %v10115, %v10107
    %v10292 = vpack.c.b16 %v10116, %v10108
    %v10293 = vpack.c.b16 %v10117, %v10109
    %v10294 = vpack.c.b16 %v10126, %v10118
    %v10295 = vpack.c.b16 %v10127, %v10119
    %v10296 = vpack.c.b16 %v10128, %v10120
    %v10297 = vpack.c.b16 %v10129, %v10121
    %v10298 = vpack.c.b16 %v10130, %v10122
    %v10299 = vpack.c.b16 %v10131, %v10123
    %v10300 = vpack.c.b16 %v10132, %v10124
    %v10301 = vpack.c.b16 %v10133, %v10125
    %v10302 = vpack.c.b16 %v10142, %v10134
    %v10303 = vpack.c.b16 %v10143, %v10135
    %v10304 = vpack.c.b16 %v10144, %v10136
    %v10305 = vpack.c.b16 %v10145, %v10137
    %v10306 = vpack.c.b16 %v10146, %v10138
    %v10307 = vpack.c.b16 %v10147, %v10139
    %v10308 = vpack.c.b16 %v10148, %v10140
    %v10309 = vpack.c.b16 %v10149, %v10141
    %v10310 = vpack.c.b16 %v10158, %v10150
    %v10311 = vpack.c.b16 %v10159, %v10151
    %v10312 = vpack.c.b16 %v10160, %v10152
    %v10313 = vpack.c.b16 %v10161, %v10153
    %v10314 = vpack.c.b16 %v10162, %v10154
    %v10315 = vpack.c.b16 %v10163, %v10155
    %v10316 = vpack.c.b16 %v10164, %v10156
    %v10317 = vpack.c.b16 %v10165, %v10157
    %v10318 = vpack.c.b16 %v10174, %v10166
    %v10319 = vpack.c.b16 %v10175, %v10167
    %v10320 = vpack.c.b16 %v10176, %v10168
    %v10321 = vpack.c.b16 %v10177, %v10169
    %v10322 = vpack.c.b16 %v10178, %v10170
    %v10323 = vpack.c.b16 %v10179, %v10171
    %v10324 = vpack.c.b16 %v10180, %v10172
    %v10325 = vpack.c.b16 %v10181, %v10173
    %v10326 = vpack.c.b16 %v10190, %v10182
    %v10327 = vpack.c.b16 %v10191, %v10183
    %v10328 = vpack.c.b16 %v10192, %v10184
    %v10329 = vpack.c.b16 %v10193, %v10185
    %v10330 = vpack.c.b16 %v10194, %v10186
    %v10331 = vpack.c.b16 %v10195, %v10187
    %v10332 = vpack.c.b16 %v10196, %v10188
    %v10333 = vpack.c.b16 %v10197, %v10189
    %v10334 = vpack.c.b16 %v10206, %v10198
    %v10335 = vpack.c.b16 %v10207, %v10199
    %v10336 = vpack.c.b16 %v10208, %v10200
    %v10337 = vpack.c.b16 %v10209, %v10201
    %v10338 = vpack.c.b16 %v10210, %v10202
    %v10339 = vpack.c.b16 %v10211, %v10203
    %v10340 = vpack.c.b16 %v10212, %v10204
    %v10341 = vpack.c.b16 %v10213, %v10205
    %10470 = vmatprep.subr.bf16.mxu0 %v10271
    %10471 = vmatpush1.bf16.msra.mxu0 %v10270
    %10472 = vmatprep.subr.bf16.mxu0 %v10263
    %10473 = vmatpush1.bf16.msra.mxu0 %v10262
    %10474 = vmatprep.subr.bf16.mxu0 %v10255
    %10475 = vmatpush1.bf16.msra.mxu0 %v10254
    %10476 = vmatprep.subr.bf16.mxu0 %v10247
    %10477 = vmatpush1.bf16.msra.mxu0 %v10246
    %10478 = vmatprep.subr.bf16.mxu0 %v10239
    %10479 = vmatpush1.bf16.msra.mxu0 %v10238
    %10480 = vmatprep.subr.bf16.mxu0 %v10231
    %10481 = vmatpush1.bf16.msra.mxu0 %v10230
    %10482 = vmatprep.subr.bf16.mxu0 %v10223
    %10483 = vmatpush1.bf16.msra.mxu0 %v10222
    %10484 = vmatprep.subr.bf16.mxu0 %v10215
    %10485 = vmatpush1.bf16.msra.mxu0 %v10214
    %10486 = vmatprep.subr.bf16.mxu0 %v10335
    %10487 = vmatpush2.bf16.msra.mxu0 %v10334
    %10488 = vmatprep.subr.bf16.mxu0 %v10327
    %10489 = vmatpush2.bf16.msra.mxu0 %v10326
    %10490 = vmatprep.subr.bf16.mxu0 %v10319
    %10491 = vmatpush2.bf16.msra.mxu0 %v10318
    %10492 = vmatprep.subr.bf16.mxu0 %v10311
    %10493 = vmatpush2.bf16.msra.mxu0 %v10310
    %10494 = vmatprep.subr.bf16.mxu0 %v10303
    %10495 = vmatpush2.bf16.msra.mxu0 %v10302
    %10496 = vmatprep.subr.bf16.mxu0 %v10295
    %10497 = vmatpush2.bf16.msra.mxu0 %v10294
    %10498 = vmatprep.subr.bf16.mxu0 %v10287
    %10499 = vmatpush2.bf16.msra.mxu0 %v10286
    %10500 = vmatprep.subr.bf16.mxu0 %v10279
    %10501 = vmatpush2.bf16.msra.mxu0 %v10278
    %10502 = vmatprep.mubr.bf16.mxu0 %v9659
    %10503 = vmatmul.mubr.bf16.gmra.mxu0 %v9658
    %v10504 = vpop.f32.mrf.mxu0
    %v10505 = vadd.f32 %v9793, %v10504
    %v10506 = vpop.f32.mrf.mxu0
    %v10507 = vadd.f32 %v9797, %v10506
    %v10508 = vpop.f32.mrf.mxu0
    %v10509 = vpop.f32.mrf.mxu0
    %10510 = vdwg.mxu0
    %10511 = vmatprep.subr.bf16.mxu0 %v10273
    %10512 = vmatpush1.bf16.msra.mxu0 %v10272
    %10513 = vmatprep.subr.bf16.mxu0 %v10265
    %10514 = vmatpush1.bf16.msra.mxu0 %v10264
    %10515 = vmatprep.subr.bf16.mxu0 %v10257
    %10516 = vmatpush1.bf16.msra.mxu0 %v10256
    %10517 = vmatprep.subr.bf16.mxu0 %v10249
    %10518 = vmatpush1.bf16.msra.mxu0 %v10248
    %10519 = vmatprep.subr.bf16.mxu0 %v10241
    %10520 = vmatpush1.bf16.msra.mxu0 %v10240
    %10521 = vmatprep.subr.bf16.mxu0 %v10233
    %10522 = vmatpush1.bf16.msra.mxu0 %v10232
    %10523 = vmatprep.subr.bf16.mxu0 %v10225
    %10524 = vmatpush1.bf16.msra.mxu0 %v10224
    %10525 = vmatprep.subr.bf16.mxu0 %v10217
    %10526 = vmatpush1.bf16.msra.mxu0 %v10216
    %10527 = vmatprep.subr.bf16.mxu0 %v10337
    %10528 = vmatpush2.bf16.msra.mxu0 %v10336
    %10529 = vmatprep.subr.bf16.mxu0 %v10329
    %10530 = vmatpush2.bf16.msra.mxu0 %v10328
    %10531 = vmatprep.subr.bf16.mxu0 %v10321
    %10532 = vmatpush2.bf16.msra.mxu0 %v10320
    %10533 = vmatprep.subr.bf16.mxu0 %v10313
    %10534 = vmatpush2.bf16.msra.mxu0 %v10312
    %10535 = vmatprep.subr.bf16.mxu0 %v10305
    %10536 = vmatpush2.bf16.msra.mxu0 %v10304
    %10537 = vmatprep.subr.bf16.mxu0 %v10297
    %10538 = vmatpush2.bf16.msra.mxu0 %v10296
    %10539 = vmatprep.subr.bf16.mxu0 %v10289
    %10540 = vmatpush2.bf16.msra.mxu0 %v10288
    %10541 = vmatprep.subr.bf16.mxu0 %v10281
    %10542 = vmatpush2.bf16.msra.mxu0 %v10280
    %10543 = vmatprep.mubr.bf16.mxu0 %v9659
    %10544 = vmatmul.mubr.bf16.gmra.mxu0 %v9658
    %v10545 = vpop.f32.mrf.mxu0
    %v10546 = vadd.f32 %v9801, %v10545
    %v10547 = vpop.f32.mrf.mxu0
    %v10548 = vadd.f32 %v9805, %v10547
    %v10549 = vpop.f32.mrf.mxu0
    %v10550 = vpop.f32.mrf.mxu0
    %10551 = vdwg.mxu0
    %10552 = vmatprep.subr.bf16.mxu0 %v10275
    %10553 = vmatpush1.bf16.msra.mxu0 %v10274
    %10554 = vmatprep.subr.bf16.mxu0 %v10267
    %10555 = vmatpush1.bf16.msra.mxu0 %v10266
    %10556 = vmatprep.subr.bf16.mxu0 %v10259
    %10557 = vmatpush1.bf16.msra.mxu0 %v10258
    %10558 = vmatprep.subr.bf16.mxu0 %v10251
    %10559 = vmatpush1.bf16.msra.mxu0 %v10250
    %10560 = vmatprep.subr.bf16.mxu0 %v10243
    %10561 = vmatpush1.bf16.msra.mxu0 %v10242
    %10562 = vmatprep.subr.bf16.mxu0 %v10235
    %10563 = vmatpush1.bf16.msra.mxu0 %v10234
    %10564 = vmatprep.subr.bf16.mxu0 %v10227
    %10565 = vmatpush1.bf16.msra.mxu0 %v10226
    %10566 = vmatprep.subr.bf16.mxu0 %v10219
    %10567 = vmatpush1.bf16.msra.mxu0 %v10218
    %10568 = vmatprep.subr.bf16.mxu0 %v10339
    %10569 = vmatpush2.bf16.msra.mxu0 %v10338
    %10570 = vmatprep.subr.bf16.mxu0 %v10331
    %10571 = vmatpush2.bf16.msra.mxu0 %v10330
    %10572 = vmatprep.subr.bf16.mxu0 %v10323
    %10573 = vmatpush2.bf16.msra.mxu0 %v10322
    %10574 = vmatprep.subr.bf16.mxu0 %v10315
    %10575 = vmatpush2.bf16.msra.mxu0 %v10314
    %10576 = vmatprep.subr.bf16.mxu0 %v10307
    %10577 = vmatpush2.bf16.msra.mxu0 %v10306
    %10578 = vmatprep.subr.bf16.mxu0 %v10299
    %10579 = vmatpush2.bf16.msra.mxu0 %v10298
    %10580 = vmatprep.subr.bf16.mxu0 %v10291
    %10581 = vmatpush2.bf16.msra.mxu0 %v10290
    %10582 = vmatprep.subr.bf16.mxu0 %v10283
    %10583 = vmatpush2.bf16.msra.mxu0 %v10282
    %10584 = vmatprep.mubr.bf16.mxu0 %v9659
    %10585 = vmatmul.mubr.bf16.gmra.mxu0 %v9658
    %v10586 = vpop.f32.mrf.mxu0
    %v10587 = vadd.f32 %v9809, %v10586
    %v10588 = vpop.f32.mrf.mxu0
    %v10589 = vadd.f32 %v9813, %v10588
    %v10590 = vpop.f32.mrf.mxu0
    %v10591 = vpop.f32.mrf.mxu0
    %10592 = vdwg.mxu0
    %10593 = vmatprep.subr.bf16.mxu0 %v10277
    %10594 = vmatpush1.bf16.msra.mxu0 %v10276
    %10595 = vmatprep.subr.bf16.mxu0 %v10269
    %10596 = vmatpush1.bf16.msra.mxu0 %v10268
    %10597 = vmatprep.subr.bf16.mxu0 %v10261
    %10598 = vmatpush1.bf16.msra.mxu0 %v10260
    %10599 = vmatprep.subr.bf16.mxu0 %v10253
    %10600 = vmatpush1.bf16.msra.mxu0 %v10252
    %10601 = vmatprep.subr.bf16.mxu0 %v10245
    %10602 = vmatpush1.bf16.msra.mxu0 %v10244
    %10603 = vmatprep.subr.bf16.mxu0 %v10237
    %10604 = vmatpush1.bf16.msra.mxu0 %v10236
    %10605 = vmatprep.subr.bf16.mxu0 %v10229
    %10606 = vmatpush1.bf16.msra.mxu0 %v10228
    %10607 = vmatprep.subr.bf16.mxu0 %v10221
    %10608 = vmatpush1.bf16.msra.mxu0 %v10220
    %10609 = vmatprep.subr.bf16.mxu0 %v10341
    %10610 = vmatpush2.bf16.msra.mxu0 %v10340
    %10611 = vmatprep.subr.bf16.mxu0 %v10333
    %10612 = vmatpush2.bf16.msra.mxu0 %v10332
    %10613 = vmatprep.subr.bf16.mxu0 %v10325
    %10614 = vmatpush2.bf16.msra.mxu0 %v10324
    %10615 = vmatprep.subr.bf16.mxu0 %v10317
    %10616 = vmatpush2.bf16.msra.mxu0 %v10316
    %10617 = vmatprep.subr.bf16.mxu0 %v10309
    %10618 = vmatpush2.bf16.msra.mxu0 %v10308
    %10619 = vmatprep.subr.bf16.mxu0 %v10301
    %10620 = vmatpush2.bf16.msra.mxu0 %v10300
    %10621 = vmatprep.subr.bf16.mxu0 %v10293
    %10622 = vmatpush2.bf16.msra.mxu0 %v10292
    %10623 = vmatprep.subr.bf16.mxu0 %v10285
    %10624 = vmatpush2.bf16.msra.mxu0 %v10284
    %10625 = vmatprep.mubr.bf16.mxu0 %v9659
    %10626 = vmatmul.mubr.bf16.gmra.mxu0 %v9658
    %v10627 = vpop.f32.mrf.mxu0
    %v10628 = vadd.f32 %v9817, %v10627
    %v10629 = vpop.f32.mrf.mxu0
    %v10630 = vadd.f32 %v9821, %v10629
    %v10631 = vpop.f32.mrf.mxu0
    %v10632 = vpop.f32.mrf.mxu0
    %10633 = vdwg.mxu0
    %v10634 = vmax.f32 %v10505, 0.0
    %v10635 = vmax.f32 %v10507, 0.0
    %v10636 = vmax.f32 %v10546, 0.0
    %v10637 = vmax.f32 %v10548, 0.0
    %v10638 = vmax.f32 %v10587, 0.0
    %v10639 = vmax.f32 %v10589, 0.0
    %v10640 = vmax.f32 %v10628, 0.0
    %v10641 = vmax.f32 %v10630, 0.0
    %v10642 = vpack.c.bf16 %v10634, %v10634
    %v10643 = vpack.c.bf16 %v10635, %v10635
    %v10644 = vpack.c.bf16 %v10636, %v10636
    %v10645 = vpack.c.bf16 %v10637, %v10637
    %v10646 = vpack.c.bf16 %v10638, %v10638
    %v10647 = vpack.c.bf16 %v10639, %v10639
    %v10648 = vpack.c.bf16 %v10640, %v10640
    %v10649 = vpack.c.bf16 %v10641, %v10641
    %v10650 = vld [vmem:[#allocation12] sm:$0xf]
    %v10651 = vld [vmem:[#allocation12 + $0x4] sm:$0xf]
    %v10652 = vld [vmem:[#allocation12 + $0x8] sm:$0xf]
    %v10653 = vld [vmem:[#allocation12 + $0xc] sm:$0xf]
    %v10654 = vld [vmem:[#allocation12 + $0x10] sm:$0xf]
    %v10655 = vld [vmem:[#allocation12 + $0x14] sm:$0xf]
    %v10656 = vld [vmem:[#allocation12 + $0x18] sm:$0xf]
    %v10657 = vld [vmem:[#allocation12 + $0x1c] sm:$0xf]
    %v10658 = vld [vmem:[#allocation12 + $0x20] sm:$0xf]
    %v10659 = vld [vmem:[#allocation12 + $0x24] sm:$0xf]
    %v10660 = vld [vmem:[#allocation12 + $0x28] sm:$0xf]
    %v10661 = vld [vmem:[#allocation12 + $0x2c] sm:$0xf]
    %v10662 = vld [vmem:[#allocation12 + $0x30] sm:$0xf]
    %v10663 = vld [vmem:[#allocation12 + $0x34] sm:$0xf]
    %v10664 = vld [vmem:[#allocation12 + $0x38] sm:$0xf]
    %v10665 = vld [vmem:[#allocation12 + $0x3c] sm:$0xf]
    %v10666 = vld [vmem:[#allocation12 + $0x40] sm:$0xf]
    %v10667 = vld [vmem:[#allocation12 + $0x44] sm:$0xf]
    %v10668 = vld [vmem:[#allocation12 + $0x48] sm:$0xf]
    %v10669 = vld [vmem:[#allocation12 + $0x4c] sm:$0xf]
    %v10670 = vld [vmem:[#allocation12 + $0x50] sm:$0xf]
    %v10671 = vld [vmem:[#allocation12 + $0x54] sm:$0xf]
    %v10672 = vld [vmem:[#allocation12 + $0x58] sm:$0xf]
    %v10673 = vld [vmem:[#allocation12 + $0x5c] sm:$0xf]
    %v10674 = vld [vmem:[#allocation12 + $0x60] sm:$0xf]
    %v10675 = vld [vmem:[#allocation12 + $0x64] sm:$0xf]
    %v10676 = vld [vmem:[#allocation12 + $0x68] sm:$0xf]
    %v10677 = vld [vmem:[#allocation12 + $0x6c] sm:$0xf]
    %v10678 = vld [vmem:[#allocation12 + $0x70] sm:$0xf]
    %v10679 = vld [vmem:[#allocation12 + $0x74] sm:$0xf]
    %v10680 = vld [vmem:[#allocation12 + $0x78] sm:$0xf]
    %v10681 = vld [vmem:[#allocation12 + $0x7c] sm:$0xf]
    %v10682 = vld [vmem:[#allocation12 + $0x80] sm:$0xf]
    %v10683 = vld [vmem:[#allocation12 + $0x84] sm:$0xf]
    %v10684 = vld [vmem:[#allocation12 + $0x88] sm:$0xf]
    %v10685 = vld [vmem:[#allocation12 + $0x8c] sm:$0xf]
    %v10686 = vld [vmem:[#allocation12 + $0x90] sm:$0xf]
    %v10687 = vld [vmem:[#allocation12 + $0x94] sm:$0xf]
    %v10688 = vld [vmem:[#allocation12 + $0x98] sm:$0xf]
    %v10689 = vld [vmem:[#allocation12 + $0x9c] sm:$0xf]
    %v10690 = vld [vmem:[#allocation12 + $0xa0] sm:$0xf]
    %v10691 = vld [vmem:[#allocation12 + $0xa4] sm:$0xf]
    %v10692 = vld [vmem:[#allocation12 + $0xa8] sm:$0xf]
    %v10693 = vld [vmem:[#allocation12 + $0xac] sm:$0xf]
    %v10694 = vld [vmem:[#allocation12 + $0xb0] sm:$0xf]
    %v10695 = vld [vmem:[#allocation12 + $0xb4] sm:$0xf]
    %v10696 = vld [vmem:[#allocation12 + $0xb8] sm:$0xf]
    %v10697 = vld [vmem:[#allocation12 + $0xbc] sm:$0xf]
    %v10698 = vld [vmem:[#allocation12 + $0xc0] sm:$0xf]
    %v10699 = vld [vmem:[#allocation12 + $0xc4] sm:$0xf]
    %v10700 = vld [vmem:[#allocation12 + $0xc8] sm:$0xf]
    %v10701 = vld [vmem:[#allocation12 + $0xcc] sm:$0xf]
    %v10702 = vld [vmem:[#allocation12 + $0xd0] sm:$0xf]
    %v10703 = vld [vmem:[#allocation12 + $0xd4] sm:$0xf]
    %v10704 = vld [vmem:[#allocation12 + $0xd8] sm:$0xf]
    %v10705 = vld [vmem:[#allocation12 + $0xdc] sm:$0xf]
    %v10706 = vld [vmem:[#allocation12 + $0xe0] sm:$0xf]
    %v10707 = vld [vmem:[#allocation12 + $0xe4] sm:$0xf]
    %v10708 = vld [vmem:[#allocation12 + $0xe8] sm:$0xf]
    %v10709 = vld [vmem:[#allocation12 + $0xec] sm:$0xf]
    %v10710 = vld [vmem:[#allocation12 + $0xf0] sm:$0xf]
    %v10711 = vld [vmem:[#allocation12 + $0xf4] sm:$0xf]
    %v10712 = vld [vmem:[#allocation12 + $0xf8] sm:$0xf]
    %v10713 = vld [vmem:[#allocation12 + $0xfc] sm:$0xf]
    %v10714 = vld [vmem:[#allocation12 + $0x100] sm:$0xf]
    %v10715 = vld [vmem:[#allocation12 + $0x104] sm:$0xf]
    %v10716 = vld [vmem:[#allocation12 + $0x108] sm:$0xf]
    %v10717 = vld [vmem:[#allocation12 + $0x10c] sm:$0xf]
    %v10718 = vld [vmem:[#allocation12 + $0x110] sm:$0xf]
    %v10719 = vld [vmem:[#allocation12 + $0x114] sm:$0xf]
    %v10720 = vld [vmem:[#allocation12 + $0x118] sm:$0xf]
    %v10721 = vld [vmem:[#allocation12 + $0x11c] sm:$0xf]
    %v10722 = vld [vmem:[#allocation12 + $0x120] sm:$0xf]
    %v10723 = vld [vmem:[#allocation12 + $0x124] sm:$0xf]
    %v10724 = vld [vmem:[#allocation12 + $0x128] sm:$0xf]
    %v10725 = vld [vmem:[#allocation12 + $0x12c] sm:$0xf]
    %v10726 = vld [vmem:[#allocation12 + $0x130] sm:$0xf]
    %v10727 = vld [vmem:[#allocation12 + $0x134] sm:$0xf]
    %v10728 = vld [vmem:[#allocation12 + $0x138] sm:$0xf]
    %v10729 = vld [vmem:[#allocation12 + $0x13c] sm:$0xf]
    %v10730 = vld [vmem:[#allocation12 + $0x140] sm:$0xf]
    %v10731 = vld [vmem:[#allocation12 + $0x144] sm:$0xf]
    %v10732 = vld [vmem:[#allocation12 + $0x148] sm:$0xf]
    %v10733 = vld [vmem:[#allocation12 + $0x14c] sm:$0xf]
    %v10734 = vld [vmem:[#allocation12 + $0x150] sm:$0xf]
    %v10735 = vld [vmem:[#allocation12 + $0x154] sm:$0xf]
    %v10736 = vld [vmem:[#allocation12 + $0x158] sm:$0xf]
    %v10737 = vld [vmem:[#allocation12 + $0x15c] sm:$0xf]
    %v10738 = vld [vmem:[#allocation12 + $0x160] sm:$0xf]
    %v10739 = vld [vmem:[#allocation12 + $0x164] sm:$0xf]
    %v10740 = vld [vmem:[#allocation12 + $0x168] sm:$0xf]
    %v10741 = vld [vmem:[#allocation12 + $0x16c] sm:$0xf]
    %v10742 = vld [vmem:[#allocation12 + $0x170] sm:$0xf]
    %v10743 = vld [vmem:[#allocation12 + $0x174] sm:$0xf]
    %v10744 = vld [vmem:[#allocation12 + $0x178] sm:$0xf]
    %v10745 = vld [vmem:[#allocation12 + $0x17c] sm:$0xf]
    %v10746 = vld [vmem:[#allocation12 + $0x180] sm:$0xf]
    %v10747 = vld [vmem:[#allocation12 + $0x184] sm:$0xf]
    %v10748 = vld [vmem:[#allocation12 + $0x188] sm:$0xf]
    %v10749 = vld [vmem:[#allocation12 + $0x18c] sm:$0xf]
    %v10750 = vld [vmem:[#allocation12 + $0x190] sm:$0xf]
    %v10751 = vld [vmem:[#allocation12 + $0x194] sm:$0xf]
    %v10752 = vld [vmem:[#allocation12 + $0x198] sm:$0xf]
    %v10753 = vld [vmem:[#allocation12 + $0x19c] sm:$0xf]
    %v10754 = vld [vmem:[#allocation12 + $0x1a0] sm:$0xf]
    %v10755 = vld [vmem:[#allocation12 + $0x1a4] sm:$0xf]
    %v10756 = vld [vmem:[#allocation12 + $0x1a8] sm:$0xf]
    %v10757 = vld [vmem:[#allocation12 + $0x1ac] sm:$0xf]
    %v10758 = vld [vmem:[#allocation12 + $0x1b0] sm:$0xf]
    %v10759 = vld [vmem:[#allocation12 + $0x1b4] sm:$0xf]
    %v10760 = vld [vmem:[#allocation12 + $0x1b8] sm:$0xf]
    %v10761 = vld [vmem:[#allocation12 + $0x1bc] sm:$0xf]
    %v10762 = vld [vmem:[#allocation12 + $0x1c0] sm:$0xf]
    %v10763 = vld [vmem:[#allocation12 + $0x1c4] sm:$0xf]
    %v10764 = vld [vmem:[#allocation12 + $0x1c8] sm:$0xf]
    %v10765 = vld [vmem:[#allocation12 + $0x1cc] sm:$0xf]
    %v10766 = vld [vmem:[#allocation12 + $0x1d0] sm:$0xf]
    %v10767 = vld [vmem:[#allocation12 + $0x1d4] sm:$0xf]
    %v10768 = vld [vmem:[#allocation12 + $0x1d8] sm:$0xf]
    %v10769 = vld [vmem:[#allocation12 + $0x1dc] sm:$0xf]
    %v10770 = vld [vmem:[#allocation12 + $0x1e0] sm:$0xf]
    %v10771 = vld [vmem:[#allocation12 + $0x1e4] sm:$0xf]
    %v10772 = vld [vmem:[#allocation12 + $0x1e8] sm:$0xf]
    %v10773 = vld [vmem:[#allocation12 + $0x1ec] sm:$0xf]
    %v10774 = vld [vmem:[#allocation12 + $0x1f0] sm:$0xf]
    %v10775 = vld [vmem:[#allocation12 + $0x1f4] sm:$0xf]
    %v10776 = vld [vmem:[#allocation12 + $0x1f8] sm:$0xf]
    %v10777 = vld [vmem:[#allocation12 + $0x1fc] sm:$0xf]
    %v10778 = vld [vmem:[#allocation13] sm:$0x1]
    %v10780 = vlaneseq
    %v10781 = vshrl.u32 %v10780, 7
    %v10782 = vsub.s32 0, %v10781
    %v10783 = vrot.slane %v10778, %v10782
    %v10913 = vunpack.c.l.b16 %v10650
    %v10914 = vunpack.c.l.b16 %v10651
    %v10915 = vunpack.c.l.b16 %v10652
    %v10916 = vunpack.c.l.b16 %v10653
    %v10917 = vunpack.c.l.b16 %v10654
    %v10918 = vunpack.c.l.b16 %v10655
    %v10919 = vunpack.c.l.b16 %v10656
    %v10920 = vunpack.c.l.b16 %v10657
    %v10921 = vunpack.c.l.b16 %v10658
    %v10922 = vunpack.c.l.b16 %v10659
    %v10923 = vunpack.c.l.b16 %v10660
    %v10924 = vunpack.c.l.b16 %v10661
    %v10925 = vunpack.c.l.b16 %v10662
    %v10926 = vunpack.c.l.b16 %v10663
    %v10927 = vunpack.c.l.b16 %v10664
    %v10928 = vunpack.c.l.b16 %v10665
    %v10929 = vunpack.c.l.b16 %v10666
    %v10930 = vunpack.c.l.b16 %v10667
    %v10931 = vunpack.c.l.b16 %v10668
    %v10932 = vunpack.c.l.b16 %v10669
    %v10933 = vunpack.c.l.b16 %v10670
    %v10934 = vunpack.c.l.b16 %v10671
    %v10935 = vunpack.c.l.b16 %v10672
    %v10936 = vunpack.c.l.b16 %v10673
    %v10937 = vunpack.c.l.b16 %v10674
    %v10938 = vunpack.c.l.b16 %v10675
    %v10939 = vunpack.c.l.b16 %v10676
    %v10940 = vunpack.c.l.b16 %v10677
    %v10941 = vunpack.c.l.b16 %v10678
    %v10942 = vunpack.c.l.b16 %v10679
    %v10943 = vunpack.c.l.b16 %v10680
    %v10944 = vunpack.c.l.b16 %v10681
    %v10945 = vunpack.c.l.b16 %v10682
    %v10946 = vunpack.c.l.b16 %v10683
    %v10947 = vunpack.c.l.b16 %v10684
    %v10948 = vunpack.c.l.b16 %v10685
    %v10949 = vunpack.c.l.b16 %v10686
    %v10950 = vunpack.c.l.b16 %v10687
    %v10951 = vunpack.c.l.b16 %v10688
    %v10952 = vunpack.c.l.b16 %v10689
    %v10953 = vunpack.c.l.b16 %v10690
    %v10954 = vunpack.c.l.b16 %v10691
    %v10955 = vunpack.c.l.b16 %v10692
    %v10956 = vunpack.c.l.b16 %v10693
    %v10957 = vunpack.c.l.b16 %v10694
    %v10958 = vunpack.c.l.b16 %v10695
    %v10959 = vunpack.c.l.b16 %v10696
    %v10960 = vunpack.c.l.b16 %v10697
    %v10961 = vunpack.c.l.b16 %v10698
    %v10962 = vunpack.c.l.b16 %v10699
    %v10963 = vunpack.c.l.b16 %v10700
    %v10964 = vunpack.c.l.b16 %v10701
    %v10965 = vunpack.c.l.b16 %v10702
    %v10966 = vunpack.c.l.b16 %v10703
    %v10967 = vunpack.c.l.b16 %v10704
    %v10968 = vunpack.c.l.b16 %v10705
    %v10969 = vunpack.c.l.b16 %v10706
    %v10970 = vunpack.c.l.b16 %v10707
    %v10971 = vunpack.c.l.b16 %v10708
    %v10972 = vunpack.c.l.b16 %v10709
    %v10973 = vunpack.c.l.b16 %v10710
    %v10974 = vunpack.c.l.b16 %v10711
    %v10975 = vunpack.c.l.b16 %v10712
    %v10976 = vunpack.c.l.b16 %v10713
    %v10977 = vunpack.c.l.b16 %v10714
    %v10978 = vunpack.c.l.b16 %v10715
    %v10979 = vunpack.c.l.b16 %v10716
    %v10980 = vunpack.c.l.b16 %v10717
    %v10981 = vunpack.c.l.b16 %v10718
    %v10982 = vunpack.c.l.b16 %v10719
    %v10983 = vunpack.c.l.b16 %v10720
    %v10984 = vunpack.c.l.b16 %v10721
    %v10985 = vunpack.c.l.b16 %v10722
    %v10986 = vunpack.c.l.b16 %v10723
    %v10987 = vunpack.c.l.b16 %v10724
    %v10988 = vunpack.c.l.b16 %v10725
    %v10989 = vunpack.c.l.b16 %v10726
    %v10990 = vunpack.c.l.b16 %v10727
    %v10991 = vunpack.c.l.b16 %v10728
    %v10992 = vunpack.c.l.b16 %v10729
    %v10993 = vunpack.c.l.b16 %v10730
    %v10994 = vunpack.c.l.b16 %v10731
    %v10995 = vunpack.c.l.b16 %v10732
    %v10996 = vunpack.c.l.b16 %v10733
    %v10997 = vunpack.c.l.b16 %v10734
    %v10998 = vunpack.c.l.b16 %v10735
    %v10999 = vunpack.c.l.b16 %v10736
    %v11000 = vunpack.c.l.b16 %v10737
    %v11001 = vunpack.c.l.b16 %v10738
    %v11002 = vunpack.c.l.b16 %v10739
    %v11003 = vunpack.c.l.b16 %v10740
    %v11004 = vunpack.c.l.b16 %v10741
    %v11005 = vunpack.c.l.b16 %v10742
    %v11006 = vunpack.c.l.b16 %v10743
    %v11007 = vunpack.c.l.b16 %v10744
    %v11008 = vunpack.c.l.b16 %v10745
    %v11009 = vunpack.c.l.b16 %v10746
    %v11010 = vunpack.c.l.b16 %v10747
    %v11011 = vunpack.c.l.b16 %v10748
    %v11012 = vunpack.c.l.b16 %v10749
    %v11013 = vunpack.c.l.b16 %v10750
    %v11014 = vunpack.c.l.b16 %v10751
    %v11015 = vunpack.c.l.b16 %v10752
    %v11016 = vunpack.c.l.b16 %v10753
    %v11017 = vunpack.c.l.b16 %v10754
    %v11018 = vunpack.c.l.b16 %v10755
    %v11019 = vunpack.c.l.b16 %v10756
    %v11020 = vunpack.c.l.b16 %v10757
    %v11021 = vunpack.c.l.b16 %v10758
    %v11022 = vunpack.c.l.b16 %v10759
    %v11023 = vunpack.c.l.b16 %v10760
    %v11024 = vunpack.c.l.b16 %v10761
    %v11025 = vunpack.c.l.b16 %v10762
    %v11026 = vunpack.c.l.b16 %v10763
    %v11027 = vunpack.c.l.b16 %v10764
    %v11028 = vunpack.c.l.b16 %v10765
    %v11029 = vunpack.c.l.b16 %v10766
    %v11030 = vunpack.c.l.b16 %v10767
    %v11031 = vunpack.c.l.b16 %v10768
    %v11032 = vunpack.c.l.b16 %v10769
    %v11033 = vunpack.c.l.b16 %v10770
    %v11034 = vunpack.c.l.b16 %v10771
    %v11035 = vunpack.c.l.b16 %v10772
    %v11036 = vunpack.c.l.b16 %v10773
    %v11037 = vunpack.c.l.b16 %v10774
    %v11038 = vunpack.c.l.b16 %v10775
    %v11039 = vunpack.c.l.b16 %v10776
    %v11040 = vunpack.c.l.b16 %v10777
    %v11041 = vpack.c.b16 %v10914, %v10913
    %v11042 = vpack.c.b16 %v10916, %v10915
    %v11043 = vpack.c.b16 %v10918, %v10917
    %v11044 = vpack.c.b16 %v10920, %v10919
    %v11045 = vpack.c.b16 %v10922, %v10921
    %v11046 = vpack.c.b16 %v10924, %v10923
    %v11047 = vpack.c.b16 %v10926, %v10925
    %v11048 = vpack.c.b16 %v10928, %v10927
    %v11049 = vpack.c.b16 %v10930, %v10929
    %v11050 = vpack.c.b16 %v10932, %v10931
    %v11051 = vpack.c.b16 %v10934, %v10933
    %v11052 = vpack.c.b16 %v10936, %v10935
    %v11053 = vpack.c.b16 %v10938, %v10937
    %v11054 = vpack.c.b16 %v10940, %v10939
    %v11055 = vpack.c.b16 %v10942, %v10941
    %v11056 = vpack.c.b16 %v10944, %v10943
    %v11057 = vpack.c.b16 %v10946, %v10945
    %v11058 = vpack.c.b16 %v10948, %v10947
    %v11059 = vpack.c.b16 %v10950, %v10949
    %v11060 = vpack.c.b16 %v10952, %v10951
    %v11061 = vpack.c.b16 %v10954, %v10953
    %v11062 = vpack.c.b16 %v10956, %v10955
    %v11063 = vpack.c.b16 %v10958, %v10957
    %v11064 = vpack.c.b16 %v10960, %v10959
    %v11065 = vpack.c.b16 %v10962, %v10961
    %v11066 = vpack.c.b16 %v10964, %v10963
    %v11067 = vpack.c.b16 %v10966, %v10965
    %v11068 = vpack.c.b16 %v10968, %v10967
    %v11069 = vpack.c.b16 %v10970, %v10969
    %v11070 = vpack.c.b16 %v10972, %v10971
    %v11071 = vpack.c.b16 %v10974, %v10973
    %v11072 = vpack.c.b16 %v10976, %v10975
    %v11073 = vpack.c.b16 %v10978, %v10977
    %v11074 = vpack.c.b16 %v10980, %v10979
    %v11075 = vpack.c.b16 %v10982, %v10981
    %v11076 = vpack.c.b16 %v10984, %v10983
    %v11077 = vpack.c.b16 %v10986, %v10985
    %v11078 = vpack.c.b16 %v10988, %v10987
    %v11079 = vpack.c.b16 %v10990, %v10989
    %v11080 = vpack.c.b16 %v10992, %v10991
    %v11081 = vpack.c.b16 %v10994, %v10993
    %v11082 = vpack.c.b16 %v10996, %v10995
    %v11083 = vpack.c.b16 %v10998, %v10997
    %v11084 = vpack.c.b16 %v11000, %v10999
    %v11085 = vpack.c.b16 %v11002, %v11001
    %v11086 = vpack.c.b16 %v11004, %v11003
    %v11087 = vpack.c.b16 %v11006, %v11005
    %v11088 = vpack.c.b16 %v11008, %v11007
    %v11089 = vpack.c.b16 %v11010, %v11009
    %v11090 = vpack.c.b16 %v11012, %v11011
    %v11091 = vpack.c.b16 %v11014, %v11013
    %v11092 = vpack.c.b16 %v11016, %v11015
    %v11093 = vpack.c.b16 %v11018, %v11017
    %v11094 = vpack.c.b16 %v11020, %v11019
    %v11095 = vpack.c.b16 %v11022, %v11021
    %v11096 = vpack.c.b16 %v11024, %v11023
    %v11097 = vpack.c.b16 %v11026, %v11025
    %v11098 = vpack.c.b16 %v11028, %v11027
    %v11099 = vpack.c.b16 %v11030, %v11029
    %v11100 = vpack.c.b16 %v11032, %v11031
    %v11101 = vpack.c.b16 %v11034, %v11033
    %v11102 = vpack.c.b16 %v11036, %v11035
    %v11103 = vpack.c.b16 %v11038, %v11037
    %v11104 = vpack.c.b16 %v11040, %v11039
    %11169 = vmatprep.subr.bf16.mxu0 0
    %11170 = vmatpush1.bf16.msra.mxu0 %v11048
    %11171 = vmatprep.subr.bf16.mxu0 0
    %11172 = vmatpush1.bf16.msra.mxu0 %v11047
    %11173 = vmatprep.subr.bf16.mxu0 0
    %11174 = vmatpush1.bf16.msra.mxu0 %v11046
    %11175 = vmatprep.subr.bf16.mxu0 0
    %11176 = vmatpush1.bf16.msra.mxu0 %v11045
    %11177 = vmatprep.subr.bf16.mxu0 0
    %11178 = vmatpush1.bf16.msra.mxu0 %v11044
    %11179 = vmatprep.subr.bf16.mxu0 0
    %11180 = vmatpush1.bf16.msra.mxu0 %v11043
    %11181 = vmatprep.subr.bf16.mxu0 0
    %11182 = vmatpush1.bf16.msra.mxu0 %v11042
    %11183 = vmatprep.subr.bf16.mxu0 0
    %11184 = vmatpush1.bf16.msra.mxu0 %v11041
    %11185 = vmatprep.subr.bf16.mxu0 0
    %11186 = vmatpush2.bf16.msra.mxu0 %v11056
    %11187 = vmatprep.subr.bf16.mxu0 0
    %11188 = vmatpush2.bf16.msra.mxu0 %v11055
    %11189 = vmatprep.subr.bf16.mxu0 0
    %11190 = vmatpush2.bf16.msra.mxu0 %v11054
    %11191 = vmatprep.subr.bf16.mxu0 0
    %11192 = vmatpush2.bf16.msra.mxu0 %v11053
    %11193 = vmatprep.subr.bf16.mxu0 0
    %11194 = vmatpush2.bf16.msra.mxu0 %v11052
    %11195 = vmatprep.subr.bf16.mxu0 0
    %11196 = vmatpush2.bf16.msra.mxu0 %v11051
    %11197 = vmatprep.subr.bf16.mxu0 0
    %11198 = vmatpush2.bf16.msra.mxu0 %v11050
    %11199 = vmatprep.subr.bf16.mxu0 0
    %11200 = vmatpush2.bf16.msra.mxu0 %v11049
    %11201 = vmatprep.mubr.bf16.mxu0 %v10643
    %11202 = vmatmul.mubr.bf16.gmra.mxu0 %v10642
    %v11203 = vpop.f32.mrf.mxu0
    %v11204 = vadd.f32 %v10783, %v11203
    %v11205 = vpop.f32.mrf.mxu0
    %v11206 = vpop.f32.mrf.mxu0
    %v11207 = vpop.f32.mrf.mxu0
    %11208 = vdwg.mxu0
    %11209 = vmatprep.subr.bf16.mxu0 0
    %11210 = vmatpush1.bf16.msra.mxu0 %v11064
    %11211 = vmatprep.subr.bf16.mxu0 0
    %11212 = vmatpush1.bf16.msra.mxu0 %v11063
    %11213 = vmatprep.subr.bf16.mxu0 0
    %11214 = vmatpush1.bf16.msra.mxu0 %v11062
    %11215 = vmatprep.subr.bf16.mxu0 0
    %11216 = vmatpush1.bf16.msra.mxu0 %v11061
    %11217 = vmatprep.subr.bf16.mxu0 0
    %11218 = vmatpush1.bf16.msra.mxu0 %v11060
    %11219 = vmatprep.subr.bf16.mxu0 0
    %11220 = vmatpush1.bf16.msra.mxu0 %v11059
    %11221 = vmatprep.subr.bf16.mxu0 0
    %11222 = vmatpush1.bf16.msra.mxu0 %v11058
    %11223 = vmatprep.subr.bf16.mxu0 0
    %11224 = vmatpush1.bf16.msra.mxu0 %v11057
    %11225 = vmatprep.subr.bf16.mxu0 0
    %11226 = vmatpush2.bf16.msra.mxu0 %v11072
    %11227 = vmatprep.subr.bf16.mxu0 0
    %11228 = vmatpush2.bf16.msra.mxu0 %v11071
    %11229 = vmatprep.subr.bf16.mxu0 0
    %11230 = vmatpush2.bf16.msra.mxu0 %v11070
    %11231 = vmatprep.subr.bf16.mxu0 0
    %11232 = vmatpush2.bf16.msra.mxu0 %v11069
    %11233 = vmatprep.subr.bf16.mxu0 0
    %11234 = vmatpush2.bf16.msra.mxu0 %v11068
    %11235 = vmatprep.subr.bf16.mxu0 0
    %11236 = vmatpush2.bf16.msra.mxu0 %v11067
    %11237 = vmatprep.subr.bf16.mxu0 0
    %11238 = vmatpush2.bf16.msra.mxu0 %v11066
    %11239 = vmatprep.subr.bf16.mxu0 0
    %11240 = vmatpush2.bf16.msra.mxu0 %v11065
    %11241 = vmatprep.mubr.bf16.mxu0 %v10645
    %11242 = vmatmul.mubr.bf16.gmra.mxu0 %v10644
    %v11243 = vpop.f32.mrf.mxu0
    %v11244 = vadd.f32 %v11204, %v11243
    %v11245 = vpop.f32.mrf.mxu0
    %v11246 = vpop.f32.mrf.mxu0
    %v11247 = vpop.f32.mrf.mxu0
    %11248 = vdwg.mxu0
    %11249 = vmatprep.subr.bf16.mxu0 0
    %11250 = vmatpush1.bf16.msra.mxu0 %v11080
    %11251 = vmatprep.subr.bf16.mxu0 0
    %11252 = vmatpush1.bf16.msra.mxu0 %v11079
    %11253 = vmatprep.subr.bf16.mxu0 0
    %11254 = vmatpush1.bf16.msra.mxu0 %v11078
    %11255 = vmatprep.subr.bf16.mxu0 0
    %11256 = vmatpush1.bf16.msra.mxu0 %v11077
    %11257 = vmatprep.subr.bf16.mxu0 0
    %11258 = vmatpush1.bf16.msra.mxu0 %v11076
    %11259 = vmatprep.subr.bf16.mxu0 0
    %11260 = vmatpush1.bf16.msra.mxu0 %v11075
    %11261 = vmatprep.subr.bf16.mxu0 0
    %11262 = vmatpush1.bf16.msra.mxu0 %v11074
    %11263 = vmatprep.subr.bf16.mxu0 0
    %11264 = vmatpush1.bf16.msra.mxu0 %v11073
    %11265 = vmatprep.subr.bf16.mxu0 0
    %11266 = vmatpush2.bf16.msra.mxu0 %v11088
    %11267 = vmatprep.subr.bf16.mxu0 0
    %11268 = vmatpush2.bf16.msra.mxu0 %v11087
    %11269 = vmatprep.subr.bf16.mxu0 0
    %11270 = vmatpush2.bf16.msra.mxu0 %v11086
    %11271 = vmatprep.subr.bf16.mxu0 0
    %11272 = vmatpush2.bf16.msra.mxu0 %v11085
    %11273 = vmatprep.subr.bf16.mxu0 0
    %11274 = vmatpush2.bf16.msra.mxu0 %v11084
    %11275 = vmatprep.subr.bf16.mxu0 0
    %11276 = vmatpush2.bf16.msra.mxu0 %v11083
    %11277 = vmatprep.subr.bf16.mxu0 0
    %11278 = vmatpush2.bf16.msra.mxu0 %v11082
    %11279 = vmatprep.subr.bf16.mxu0 0
    %11280 = vmatpush2.bf16.msra.mxu0 %v11081
    %11281 = vmatprep.mubr.bf16.mxu0 %v10647
    %11282 = vmatmul.mubr.bf16.gmra.mxu0 %v10646
    %v11283 = vpop.f32.mrf.mxu0
    %v11284 = vadd.f32 %v11244, %v11283
    %v11285 = vpop.f32.mrf.mxu0
    %v11286 = vpop.f32.mrf.mxu0
    %v11287 = vpop.f32.mrf.mxu0
    %11288 = vdwg.mxu0
    %11289 = vmatprep.subr.bf16.mxu0 0
    %11290 = vmatpush1.bf16.msra.mxu0 %v11096
    %11291 = vmatprep.subr.bf16.mxu0 0
    %11292 = vmatpush1.bf16.msra.mxu0 %v11095
    %11293 = vmatprep.subr.bf16.mxu0 0
    %11294 = vmatpush1.bf16.msra.mxu0 %v11094
    %11295 = vmatprep.subr.bf16.mxu0 0
    %11296 = vmatpush1.bf16.msra.mxu0 %v11093
    %11297 = vmatprep.subr.bf16.mxu0 0
    %11298 = vmatpush1.bf16.msra.mxu0 %v11092
    %11299 = vmatprep.subr.bf16.mxu0 0
    %11300 = vmatpush1.bf16.msra.mxu0 %v11091
    %11301 = vmatprep.subr.bf16.mxu0 0
    %11302 = vmatpush1.bf16.msra.mxu0 %v11090
    %11303 = vmatprep.subr.bf16.mxu0 0
    %11304 = vmatpush1.bf16.msra.mxu0 %v11089
    %11305 = vmatprep.subr.bf16.mxu0 0
    %11306 = vmatpush2.bf16.msra.mxu0 %v11104
    %11307 = vmatprep.subr.bf16.mxu0 0
    %11308 = vmatpush2.bf16.msra.mxu0 %v11103
    %11309 = vmatprep.subr.bf16.mxu0 0
    %11310 = vmatpush2.bf16.msra.mxu0 %v11102
    %11311 = vmatprep.subr.bf16.mxu0 0
    %11312 = vmatpush2.bf16.msra.mxu0 %v11101
    %11313 = vmatprep.subr.bf16.mxu0 0
    %11314 = vmatpush2.bf16.msra.mxu0 %v11100
    %11315 = vmatprep.subr.bf16.mxu0 0
    %11316 = vmatpush2.bf16.msra.mxu0 %v11099
    %11317 = vmatprep.subr.bf16.mxu0 0
    %11318 = vmatpush2.bf16.msra.mxu0 %v11098
    %11319 = vmatprep.subr.bf16.mxu0 0
    %11320 = vmatpush2.bf16.msra.mxu0 %v11097
    %11321 = vmatprep.mubr.bf16.mxu0 %v10649
    %11322 = vmatmul.mubr.bf16.gmra.mxu0 %v10648
    %v11323 = vpop.f32.mrf.mxu0
    %v11324 = vadd.f32 %v11284, %v11323
    %v11325 = vpop.f32.mrf.mxu0
    %v11326 = vpop.f32.mrf.mxu0
    %v11327 = vpop.f32.mrf.mxu0
    %11328 = vdwg.mxu0
    %11329 = vst [vmem:[%s9] sm:$0xff] %v11324
    // Predicated region
    $region70: #{vgg_forward.1} parent=1 // pred_check
      _
    $region71: #{vgg_forward.1} parent=1 // pred_check_branch
      %11331 = sbr.rel (0) target = $region73
    $region72: #{vgg_forward.1} parent=1 // pred_region
      _
    $region73: #{vgg_forward.1} parent=1 // pred_fallthru
      _
    // Predicated region
    $region74: #{vgg_forward.1} parent=1 // pred_check
      _
    $region75: #{vgg_forward.1} parent=1 // pred_check_branch
      %11333 = sbr.rel (0) target = $region77
    $region76: #{vgg_forward.1} parent=1 // pred_region
      _
    $region77: #{vgg_forward.1} parent=1 // pred_fallthru
      _
    %11334 = vsyncpa [#allocation3], 1
    %11335 = vsyncpa [#allocation5], 1
    %11336 = vsyncpa [#allocation8], 1
    %11337 = vsyncpa [#allocation11], 1
    %11338 = vsyncpa [#allocation14], 1

</llo_original>
